<compile_context>
chip_gen: v7x
topology: tpu7x:2x2x1
jax: 0.10.0
libtpu: 0.0.40
codegen_flags: <defaults>
</compile_context>

<pallas_src>
import jax
import jax.numpy as jnp
from jax.experimental import pallas as pl
from jax.experimental.pallas import tpu as pltpu

LANE = 128


def _round_up(x, m):
    return ((x + m - 1) // m) * m


def _cdiv(a, b):
    return -(-a // b)


# ----------------------------------------------------------------------------
# Kernel 1: conv1 (im2col matmul) + bias + ReLU + 2x2 max-pool, bf16 output
# ----------------------------------------------------------------------------
def conv_relu_pool_kernel(p_ref, w_ref, b_ref, o_ref):
    """p_ref: (4, TM, K) bf16  -- the four 2x2-pool branches
       w_ref: (K, 128)  bf16   -- weights, Cout zero-padded to 128 lanes
       b_ref: (1, 128)  f32
       o_ref: (TM, 128) bf16
    """
    # Four (TM,K)x(K,128) dots with a running max: keeps the live f32
    # intermediate at TM*128 (not 4*TM*128) and lets the VPU max overlap the
    # next MXU issue.
    m = jnp.dot(p_ref[0], w_ref[...], preferred_element_type=jnp.float32)
    for br in range(1, 4):
        m = jnp.maximum(
            m, jnp.dot(p_ref[br], w_ref[...], preferred_element_type=jnp.float32))
    # Bias + ReLU hoisted after the max (per-channel constant, monotone).
    o_ref[...] = jnp.maximum(m + b_ref[...], 0.0).astype(o_ref.dtype)


# ----------------------------------------------------------------------------
# Kernel 2: fused conv2 + pool + fc1/fc2/fc3 + log-softmax for TB images
# ----------------------------------------------------------------------------
def conv2_mlp_kernel(p_ref, w2_ref, b2_ref, w1_ref, b1_ref, wf2_ref, bf2_ref,
                     wf3_ref, bf3_ref, o_ref):
    """p_ref : (4, S*TB, K2) bf16 -- conv2 im2col patches, 4 pool branches,
                                     rows ordered (spatial s, image t)
       w2_ref: (K2, 128) bf16, b2_ref: (1, 128) f32       (conv2, Cout->128)
       w1_ref: (S*128, H1p) bf16 -- fc1 weights permuted to (s, c) row order
       b1_ref: (1, H1p) f32
       wf2_ref: (H1p, H2p) bf16, bf2_ref: (1, H2p) f32
       wf3_ref: (H2p, Cp) bf16,  bf3_ref: (1, Cp) f32 (padded lanes = -1e30)
       o_ref : (TB, Cp) f32     -- log-probabilities
    """
    TB = o_ref.shape[0]
    S = p_ref.shape[1] // TB

    # conv2 as one matmul per pool branch, running max across branches.
    m = jnp.dot(p_ref[0], w2_ref[...], preferred_element_type=jnp.float32)
    for br in range(1, 4):
        m = jnp.maximum(
            m, jnp.dot(p_ref[br], w2_ref[...], preferred_element_type=jnp.float32))
    feat = jnp.maximum(m + b2_ref[...], 0.0).astype(jnp.bfloat16)   # (S*TB, 128)

    # fc1: contract over (spatial, channel) as S accumulated (TB,128)x(128,H1p)
    # matmuls -- avoids any lane-relayout flatten of the pooled activation and
    # replaces the torch NCHW .view() with a one-time weight permutation.
    h = jnp.dot(feat[0:TB, :], w1_ref[0:LANE, :],
                preferred_element_type=jnp.float32)
    for s in range(1, S):
        h = h + jnp.dot(feat[s * TB:(s + 1) * TB, :],
                        w1_ref[s * LANE:(s + 1) * LANE, :],
                        preferred_element_type=jnp.float32)
    h = jnp.maximum(h + b1_ref[...], 0.0).astype(jnp.bfloat16)

    h = jnp.dot(h, wf2_ref[...], preferred_element_type=jnp.float32) + bf2_ref[...]
    h = jnp.maximum(h, 0.0).astype(jnp.bfloat16)
    z = jnp.dot(h, wf3_ref[...], preferred_element_type=jnp.float32) + bf3_ref[...]

    # log-softmax; padded class lanes carry bias -1e30 -> exp underflows to 0.
    zmax = jnp.max(z, axis=1, keepdims=True)
    lse = jnp.log(jnp.sum(jnp.exp(z - zmax), axis=1, keepdims=True)) + zmax
    o_ref[...] = z - lse


# ----------------------------------------------------------------------------
# Wrappers (glue in plain JAX, fused by the surrounding jit)
# ----------------------------------------------------------------------------
def _im2col_nhwc(x, KH, KW):
    """x: (N, H, W, C) -> (N, OH, OW, KH*KW*C) with K ordered (kh, kw, c)."""
    N, H, W, C = x.shape
    OH, OW = H - KH + 1, W - KW + 1
    cols = [x[:, kh:kh + OH, kw:kw + OW, :] for kh in range(KH) for kw in range(KW)]
    p = jnp.stack(cols, axis=3)                     # (N, OH, OW, KH*KW, C)
    return p.reshape(N, OH, OW, KH * KW * C)


def _pool_branches(patches):
    """(N, OH, OW, K) -> (4, N, PH, PW, K): the four 2x2 max-pool branches."""
    return jnp.stack([patches[:, dh::2, dw::2, :]
                      for dh in range(2) for dw in range(2)], axis=0)


def conv1_relu_pool(x_nhwc, w, b, *, tile_m=1024):
    """x: (N,32,32,3) NHWC f32 -> (N,14,14,128) bf16 (channels 12 real)."""
    # TODO(synk): build the 5x5 patches inside the kernel from an NHWC input
    # block (static shifted slices) to remove the remaining KH*KW im2col
    # read-amplification through HBM; bounded here since the raw input is tiny.
    N, H, W, Cin = x_nhwc.shape
    Cout, _, KH, KW = w.shape
    OH, OW = H - KH + 1, W - KW + 1
    PH, PW = OH // 2, OW // 2
    K = KH * KW * Cin
    M = N * PH * PW

    # Big tiles (mem-bound amortization), but always >=2 grid steps when the
    # problem allows it so the "parallel" axis splits across v7x's 2 TCs.
    TM = min(_round_up(tile_m, 64), _round_up(max(_cdiv(M, 2), 64), 64))
    M_pad = _round_up(M, TM)
    G = M_pad // TM

    patches = _im2col_nhwc(x_nhwc, KH, KW)                     # (N, OH, OW, K)
    pb = _pool_branches(patches).reshape(4, M, K)
    pb = jnp.pad(pb, ((0, 0), (0, M_pad - M), (0, 0))).astype(jnp.bfloat16)

    wt = w.transpose(2, 3, 1, 0).reshape(K, Cout)              # rows (kh, kw, c)
    wt = jnp.pad(wt, ((0, 0), (0, LANE - Cout))).astype(jnp.bfloat16)
    bb = jnp.pad(b, (0, LANE - Cout)).reshape(1, LANE).astype(jnp.float32)

    flops = 2 * 4 * M_pad * K * LANE
    bytes_acc = 4 * M_pad * K * 2 + K * LANE * 2 + LANE * 4 + M_pad * LANE * 2

    out = pl.pallas_call(
        conv_relu_pool_kernel,
        out_shape=jax.ShapeDtypeStruct((M_pad, LANE), jnp.bfloat16),
        grid=(G,),
        in_specs=[
            pl.BlockSpec((4, TM, K), lambda i: (0, i, 0)),
            pl.BlockSpec((K, LANE), lambda i: (0, 0)),         # weights resident
            pl.BlockSpec((1, LANE), lambda i: (0, 0)),
        ],
        out_specs=pl.BlockSpec((TM, LANE), lambda i: (i, 0)),
        compiler_params=pltpu.CompilerParams(
            dimension_semantics=("parallel",),
            vmem_limit_bytes=32 * 1024 * 1024,
        ),
        cost_estimate=pl.CostEstimate(flops=flops, transcendentals=0,
                                      bytes_accessed=bytes_acc),
    )(pb, wt, bb)

    return out[:M].reshape(N, PH, PW, LANE)                    # stay NHWC, bf16


def conv2_mlp_logsoftmax(feat1, c2w, c2b, fc_params, *, tile_b=128):
    """feat1: (N,14,14,128) bf16 (first 12 channels real) -> (N,n_classes) f32."""
    (w1, b1), (w2, b2), (w3, b3) = fc_params
    N = feat1.shape[0]
    Cout, Cin, KH, KW = c2w.shape
    OH, OW = feat1.shape[1] - KH + 1, feat1.shape[2] - KW + 1
    PH, PW = OH // 2, OW // 2
    S = PH * PW                                                # 36
    K2 = KH * KW * Cin                                         # 108

    H1, H2, C = w1.shape[0], w2.shape[0], w3.shape[0]
    H1p, H2p, Cp = _round_up(H1, LANE), _round_up(H2, LANE), _round_up(C, LANE)

    # Batch tiling: TB multiple of 8 whenever the grid is split (sublane-aligned
    # (TB,Cp) output block); tiny batches run as a single fused step (latency).
    if N < 16:
        TB = N
    else:
        TB = min(_round_up(tile_b, 8), _round_up(_cdiv(N, 2), 8))
    N_pad = _round_up(N, TB)
    G = N_pad // TB

    # conv2 im2col over the 12 real channels only (K2=108), four pool branches
    # stacked, rows ordered (batch-tile, spatial, image) so fc1 contracts per
    # spatial position with plain static slices inside the kernel.
    x = feat1[..., :Cin]                                       # (N, 14, 14, 12)
    patches = _im2col_nhwc(x, KH, KW)                          # (N, 12, 12, K2)
    pb = _pool_branches(patches)                               # (4, N, 6, 6, K2)
    pb = jnp.pad(pb, ((0, 0), (0, N_pad - N), (0, 0), (0, 0), (0, 0)))
    pb = pb.reshape(4, G, TB, S, K2).transpose(0, 1, 3, 2, 4)
    pb = pb.reshape(4, G * S * TB, K2).astype(jnp.bfloat16)

    wt2 = c2w.transpose(2, 3, 1, 0).reshape(K2, Cout)          # rows (kh, kw, c)
    wt2 = jnp.pad(wt2, ((0, 0), (0, LANE - Cout))).astype(jnp.bfloat16)
    bb2 = jnp.pad(c2b, (0, LANE - Cout)).reshape(1, LANE).astype(jnp.float32)

    # fc1 weights permuted ONCE (off the hot path): torch flatten order is
    # (c, h, w); the kernel consumes (s=h*6+w, c_padded) -> no activation
    # transpose on the forward path.
    w1_sc = w1.reshape(H1, Cout, S).transpose(2, 1, 0)         # (S, Cout, H1)
    w1_sc = jnp.pad(w1_sc, ((0, 0), (0, LANE - Cout), (0, H1p - H1)))
    w1p = w1_sc.reshape(S * LANE, H1p).astype(jnp.bfloat16)
    b1p = jnp.pad(b1, (0, H1p - H1)).reshape(1, H1p).astype(jnp.float32)

    wf2 = jnp.pad(w2.T, ((0, H1p - H1), (0, H2p - H2))).astype(jnp.bfloat16)
    bf2 = jnp.pad(b2, (0, H2p - H2)).reshape(1, H2p).astype(jnp.float32)
    wf3 = jnp.pad(w3.T, ((0, H2p - H2), (0, Cp - C))).astype(jnp.bfloat16)
    # Padded logit lanes must not perturb the log-softmax normalizer.
    bf3 = jnp.concatenate(
        [b3.astype(jnp.float32), jnp.full((Cp - C,), -1e30, jnp.float32)]
    ).reshape(1, Cp)

    flops = 2 * N_pad * (4 * S * K2 * LANE + S * LANE * H1p + H1p * H2p + H2p * Cp)
    transc = N_pad * (Cp + 1)
    bytes_acc = (4 * N_pad * S * K2 * 2 + (K2 + S * H1p) * LANE * 2
                 + H1p * H2p * 2 + H2p * Cp * 2
                 + (LANE + H1p + H2p + Cp) * 4 + N_pad * Cp * 4)

    out = pl.pallas_call(
        conv2_mlp_kernel,
        out_shape=jax.ShapeDtypeStruct((N_pad, Cp), jnp.float32),
        grid=(G,),
        in_specs=[
            pl.BlockSpec((4, S * TB, K2), lambda i: (0, i, 0)),
            pl.BlockSpec((K2, LANE), lambda i: (0, 0)),        # all weights
            pl.BlockSpec((1, LANE), lambda i: (0, 0)),         # VMEM-resident
            pl.BlockSpec((S * LANE, H1p), lambda i: (0, 0)),
            pl.BlockSpec((1, H1p), lambda i: (0, 0)),
            pl.BlockSpec((H1p, H2p), lambda i: (0, 0)),
            pl.BlockSpec((1, H2p), lambda i: (0, 0)),
            pl.BlockSpec((H2p, Cp), lambda i: (0, 0)),
            pl.BlockSpec((1, Cp), lambda i: (0, 0)),
        ],
        out_specs=pl.BlockSpec((TB, Cp), lambda i: (i, 0)),
        compiler_params=pltpu.CompilerParams(
            dimension_semantics=("parallel",),
            vmem_limit_bytes=32 * 1024 * 1024,
        ),
        cost_estimate=pl.CostEstimate(flops=flops, transcendentals=transc,
                                      bytes_accessed=bytes_acc),
    )(pb, wt2, bb2, w1p, b1p, wf2, bf2, wf3, bf3)

    return out[:N, :C]


@jax.jit
def simple_cnn_forward(x_nchw, params):
    (c1w, c1b), (c2w, c2b), fc = params
    x = x_nchw.transpose(0, 2, 3, 1)                 # NCHW -> NHWC (once)
    f1 = conv1_relu_pool(x, c1w, c1b)                # (N, 14, 14, 128) bf16
    return conv2_mlp_logsoftmax(f1, c2w, c2b, fc)    # (N, n_classes) log-probs


# ----------------------------------------------------------------------------
# Pure-JAX f32 reference (matches the PyTorch module)
# ----------------------------------------------------------------------------
def reference_forward(x, params):
    (c1w, c1b), (c2w, c2b), ((w1, b1), (w2, b2), (w3, b3)) = params
    dn = ('NCHW', 'OIHW', 'NCHW')
    y = jax.lax.conv_general_dilated(x, c1w, (1, 1), 'VALID', dimension_numbers=dn)
    y = jnp.maximum(y + c1b[None, :, None, None], 0.0)
    y = jax.lax.reduce_window(y, -jnp.inf, jax.lax.max, (1, 1, 2, 2), (1, 1, 2, 2), 'VALID')
    y = jax.lax.conv_general_dilated(y, c2w, (1, 1), 'VALID', dimension_numbers=dn)
    y = jnp.maximum(y + c2b[None, :, None, None], 0.0)
    y = jax.lax.reduce_window(y, -jnp.inf, jax.lax.max, (1, 1, 2, 2), (1, 1, 2, 2), 'VALID')
    y = y.reshape(y.shape[0], -1)                    # torch .view(-1, 864) order
    y = jnp.maximum(y @ w1.T + b1, 0.0)
    y = jnp.maximum(y @ w2.T + b2, 0.0)
    y = y @ w3.T + b3
    return jax.nn.log_softmax(y, axis=1)


# ----------------------------------------------------------------------------
# Deterministic parameter construction (shapes from SimpleCNN.__init__)
# ----------------------------------------------------------------------------
def init_params(n_classes):
    ks = jax.random.split(jax.random.PRNGKey(42), 10)
    f32 = jnp.float32

    conv1_w = jax.random.normal(ks[0], (12, 3, 5, 5), f32) * 0.05
    conv1_b = jax.random.normal(ks[1], (12,), f32) * 0.05
    conv2_w = jax.random.normal(ks[2], (24, 12, 3, 3), f32) * 0.05
    conv2_b = jax.random.normal(ks[3], (24,), f32) * 0.05

    fc1_w = jax.random.normal(ks[4], (120, 24 * 6 * 6), f32) * 0.05
    fc1_b = jax.random.normal(ks[5], (120,), f32) * 0.05
    fc2_w = jax.random.normal(ks[6], (60, 120), f32) * 0.05
    fc2_b = jax.random.normal(ks[7], (60,), f32) * 0.05
    fc3_w = jax.random.normal(ks[8], (n_classes, 60), f32) * 0.05
    fc3_b = jax.random.normal(ks[9], (n_classes,), f32) * 0.05

    return (
        (conv1_w, conv1_b),
        (conv2_w, conv2_b),
        ((fc1_w, fc1_b), (fc2_w, fc2_b), (fc3_w, fc3_b)),
    )


if __name__ == "__main__":
    n_classes = 10
    batch = 2
    # Input must be (N, 3, 32, 32) so the flattened feature dim equals 24*6*6.
    x = jax.random.normal(jax.random.PRNGKey(0), (batch, 3, 32, 32), jnp.float32)
    params = init_params(n_classes)

    out = jax.block_until_ready(simple_cnn_forward(x, params))
    assert out.shape == (batch, n_classes)

    # log-softmax rows must exponentiate-sum to 1 (padded class lanes removed).
    probs_sum = jnp.exp(out).sum(axis=1)
    assert bool(jnp.all(jnp.abs(probs_sum - 1.0) < 1e-3))

    # Compare against the pure-JAX f32 reference (bf16 operand tolerance).
    ref = reference_forward(x, params)
    max_err = float(jnp.max(jnp.abs(out - ref)))
    assert max_err < 5e-2, f"max |err| vs f32 reference = {max_err}"

    print("KERNEL_OK")
</pallas_src>

<mosaic_0001>
module attributes {stable_mosaic.version = 11 : i64} {
  func.func @conv_relu_pool_kernel(%arg0: i32, %arg1: memref<4x256x75xbf16, #tpu.memory_space<vmem>>, %arg2: memref<75x128xbf16, #tpu.memory_space<vmem>>, %arg3: memref<1x128xf32, #tpu.memory_space<vmem>>, %arg4: memref<256x128xbf16, #tpu.memory_space<vmem>>) attributes {dimension_semantics = [#tpu.dimension_semantics<parallel>], iteration_bounds = array<i64: 2>, scalar_prefetch = 0 : i64, scratch_operands = 0 : i64, tpu.core_type = #tpu.core_type<tc>, window_params = [{transform_indices = @transform_0, window_bounds = array<i64: 4, 256, 75>}, {pipeline_mode = #tpu.pipeline_mode<synchronous>, transform_indices = @transform_1, window_bounds = array<i64: 75, 128>}, {pipeline_mode = #tpu.pipeline_mode<synchronous>, transform_indices = @transform_2, window_bounds = array<i64: 1, 128>}, {transform_indices = @transform_3, window_bounds = array<i64: 256, 128>}]} {
    %c0 = arith.constant 0 : index
    %c0_0 = arith.constant 0 : index
    %c0_1 = arith.constant 0 : index
    %0 = vector.load %arg1[%c0, %c0_0, %c0_1] : memref<4x256x75xbf16, #tpu.memory_space<vmem>>, vector<1x256x75xbf16>
    %1 = vector.shape_cast %0 : vector<1x256x75xbf16> to vector<256x75xbf16>
    %c0_2 = arith.constant 0 : index
    %c0_3 = arith.constant 0 : index
    %2 = vector.load %arg2[%c0_2, %c0_3] : memref<75x128xbf16, #tpu.memory_space<vmem>>, vector<75x128xbf16>
    %cst = arith.constant dense<0.000000e+00> : vector<256x128xf32>
    %3 = tpu.matmul %1, %2, %cst {dimension_numbers = #tpu.dot_dimension_numbers<[1], [0], [0], [1], [0, 0, 1, 1], [], []>} : vector<256x75xbf16>, vector<75x128xbf16>, vector<256x128xf32> -> vector<256x128xf32>
    %c1 = arith.constant 1 : index
    %c0_4 = arith.constant 0 : index
    %c0_5 = arith.constant 0 : index
    %4 = vector.load %arg1[%c1, %c0_4, %c0_5] : memref<4x256x75xbf16, #tpu.memory_space<vmem>>, vector<1x256x75xbf16>
    %5 = vector.shape_cast %4 : vector<1x256x75xbf16> to vector<256x75xbf16>
    %c0_6 = arith.constant 0 : index
    %c0_7 = arith.constant 0 : index
    %6 = vector.load %arg2[%c0_6, %c0_7] : memref<75x128xbf16, #tpu.memory_space<vmem>>, vector<75x128xbf16>
    %cst_8 = arith.constant dense<0.000000e+00> : vector<256x128xf32>
    %7 = tpu.matmul %5, %6, %cst_8 {dimension_numbers = #tpu.dot_dimension_numbers<[1], [0], [0], [1], [0, 0, 1, 1], [], []>} : vector<256x75xbf16>, vector<75x128xbf16>, vector<256x128xf32> -> vector<256x128xf32>
    %8 = arith.maximumf %3, %7 : vector<256x128xf32>
    %c2 = arith.constant 2 : index
    %c0_9 = arith.constant 0 : index
    %c0_10 = arith.constant 0 : index
    %9 = vector.load %arg1[%c2, %c0_9, %c0_10] : memref<4x256x75xbf16, #tpu.memory_space<vmem>>, vector<1x256x75xbf16>
    %10 = vector.shape_cast %9 : vector<1x256x75xbf16> to vector<256x75xbf16>
    %c0_11 = arith.constant 0 : index
    %c0_12 = arith.constant 0 : index
    %11 = vector.load %arg2[%c0_11, %c0_12] : memref<75x128xbf16, #tpu.memory_space<vmem>>, vector<75x128xbf16>
    %cst_13 = arith.constant dense<0.000000e+00> : vector<256x128xf32>
    %12 = tpu.matmul %10, %11, %cst_13 {dimension_numbers = #tpu.dot_dimension_numbers<[1], [0], [0], [1], [0, 0, 1, 1], [], []>} : vector<256x75xbf16>, vector<75x128xbf16>, vector<256x128xf32> -> vector<256x128xf32>
    %13 = arith.maximumf %8, %12 : vector<256x128xf32>
    %c3 = arith.constant 3 : index
    %c0_14 = arith.constant 0 : index
    %c0_15 = arith.constant 0 : index
    %14 = vector.load %arg1[%c3, %c0_14, %c0_15] : memref<4x256x75xbf16, #tpu.memory_space<vmem>>, vector<1x256x75xbf16>
    %15 = vector.shape_cast %14 : vector<1x256x75xbf16> to vector<256x75xbf16>
    %c0_16 = arith.constant 0 : index
    %c0_17 = arith.constant 0 : index
    %16 = vector.load %arg2[%c0_16, %c0_17] : memref<75x128xbf16, #tpu.memory_space<vmem>>, vector<75x128xbf16>
    %cst_18 = arith.constant dense<0.000000e+00> : vector<256x128xf32>
    %17 = tpu.matmul %15, %16, %cst_18 {dimension_numbers = #tpu.dot_dimension_numbers<[1], [0], [0], [1], [0, 0, 1, 1], [], []>} : vector<256x75xbf16>, vector<75x128xbf16>, vector<256x128xf32> -> vector<256x128xf32>
    %18 = arith.maximumf %13, %17 : vector<256x128xf32>
    %c0_19 = arith.constant 0 : index
    %c0_20 = arith.constant 0 : index
    %19 = vector.load %arg3[%c0_19, %c0_20] : memref<1x128xf32, #tpu.memory_space<vmem>>, vector<1x128xf32>
    %20 = vector.broadcast %19 : vector<1x128xf32> to vector<256x128xf32>
    %21 = arith.addf %18, %20 : vector<256x128xf32>
    %cst_21 = arith.constant 0.000000e+00 : f32
    %22 = vector.broadcast %cst_21 : f32 to vector<256x128xf32>
    %23 = arith.maximumf %21, %22 : vector<256x128xf32>
    %24 = arith.truncf %23 : vector<256x128xf32> to vector<256x128xbf16>
    %c0_22 = arith.constant 0 : index
    %c0_23 = arith.constant 0 : index
    %25 = vector.load %arg4[%c0_22, %c0_23] : memref<256x128xbf16, #tpu.memory_space<vmem>>, vector<256x128xbf16>
    tpu.vector_store %arg4[%c0_22, %c0_23], %24 {strides = array<i32>} : memref<256x128xbf16, #tpu.memory_space<vmem>>, vector<256x128xbf16>,
    return
  }
  func.func @transform_0(%arg0: i32) -> (i32, i32, i32) {
    %c0_i32 = arith.constant 0 : i32
    %c0_i32_0 = arith.constant 0 : i32
    %c0_i32_1 = arith.constant 0 : i32
    return %c0_i32, %arg0, %c0_i32_0 : i32, i32, i32
  }
  func.func @transform_1(%arg0: i32) -> (i32, i32) {
    %c0_i32 = arith.constant 0 : i32
    %c0_i32_0 = arith.constant 0 : i32
    %c0_i32_1 = arith.constant 0 : i32
    return %c0_i32, %c0_i32_0 : i32, i32
  }
  func.func @transform_2(%arg0: i32) -> (i32, i32) {
    %c0_i32 = arith.constant 0 : i32
    %c0_i32_0 = arith.constant 0 : i32
    %c0_i32_1 = arith.constant 0 : i32
    return %c0_i32, %c0_i32_0 : i32, i32
  }
  func.func @transform_3(%arg0: i32) -> (i32, i32) {
    %c0_i32 = arith.constant 0 : i32
    %c0_i32_0 = arith.constant 0 : i32
    return %arg0, %c0_i32 : i32, i32
  }
}

module attributes {stable_mosaic.version = 11 : i64} {
  func.func @conv2_mlp_kernel(%arg0: i32, %arg1: memref<4x72x108xbf16, #tpu.memory_space<vmem>>, %arg2: memref<108x128xbf16, #tpu.memory_space<vmem>>, %arg3: memref<1x128xf32, #tpu.memory_space<vmem>>, %arg4: memref<4608x128xbf16, #tpu.memory_space<vmem>>, %arg5: memref<1x128xf32, #tpu.memory_space<vmem>>, %arg6: memref<128x128xbf16, #tpu.memory_space<vmem>>, %arg7: memref<1x128xf32, #tpu.memory_space<vmem>>, %arg8: memref<128x128xbf16, #tpu.memory_space<vmem>>, %arg9: memref<1x128xf32, #tpu.memory_space<vmem>>, %arg10: memref<2x128xf32, #tpu.memory_space<vmem>>) attributes {dimension_semantics = [#tpu.dimension_semantics<parallel>], iteration_bounds = array<i64: 1>, scalar_prefetch = 0 : i64, scratch_operands = 0 : i64, tpu.core_type = #tpu.core_type<tc>, window_params = [{transform_indices = @transform_0, window_bounds = array<i64: 4, 72, 108>}, {pipeline_mode = #tpu.pipeline_mode<synchronous>, transform_indices = @transform_1, window_bounds = array<i64: 108, 128>}, {pipeline_mode = #tpu.pipeline_mode<synchronous>, transform_indices = @transform_2, window_bounds = array<i64: 1, 128>}, {pipeline_mode = #tpu.pipeline_mode<synchronous>, transform_indices = @transform_3, window_bounds = array<i64: 4608, 128>}, {pipeline_mode = #tpu.pipeline_mode<synchronous>, transform_indices = @transform_4, window_bounds = array<i64: 1, 128>}, {pipeline_mode = #tpu.pipeline_mode<synchronous>, transform_indices = @transform_5, window_bounds = array<i64: 128, 128>}, {pipeline_mode = #tpu.pipeline_mode<synchronous>, transform_indices = @transform_6, window_bounds = array<i64: 1, 128>}, {pipeline_mode = #tpu.pipeline_mode<synchronous>, transform_indices = @transform_7, window_bounds = array<i64: 128, 128>}, {pipeline_mode = #tpu.pipeline_mode<synchronous>, transform_indices = @transform_8, window_bounds = array<i64: 1, 128>}, {transform_indices = @transform_9, window_bounds = array<i64: 2, 128>}]} {
    %c0 = arith.constant 0 : index
    %c0_0 = arith.constant 0 : index
    %c0_1 = arith.constant 0 : index
    %0 = vector.load %arg1[%c0, %c0_0, %c0_1] : memref<4x72x108xbf16, #tpu.memory_space<vmem>>, vector<1x72x108xbf16>
    %1 = vector.shape_cast %0 : vector<1x72x108xbf16> to vector<72x108xbf16>
    %c0_2 = arith.constant 0 : index
    %c0_3 = arith.constant 0 : index
    %2 = vector.load %arg2[%c0_2, %c0_3] : memref<108x128xbf16, #tpu.memory_space<vmem>>, vector<108x128xbf16>
    %cst = arith.constant dense<0.000000e+00> : vector<72x128xf32>
    %3 = tpu.matmul %1, %2, %cst {dimension_numbers = #tpu.dot_dimension_numbers<[1], [0], [0], [1], [0, 0, 1, 1], [], []>} : vector<72x108xbf16>, vector<108x128xbf16>, vector<72x128xf32> -> vector<72x128xf32>
    %c1 = arith.constant 1 : index
    %c0_4 = arith.constant 0 : index
    %c0_5 = arith.constant 0 : index
    %4 = vector.load %arg1[%c1, %c0_4, %c0_5] : memref<4x72x108xbf16, #tpu.memory_space<vmem>>, vector<1x72x108xbf16>
    %5 = vector.shape_cast %4 : vector<1x72x108xbf16> to vector<72x108xbf16>
    %c0_6 = arith.constant 0 : index
    %c0_7 = arith.constant 0 : index
    %6 = vector.load %arg2[%c0_6, %c0_7] : memref<108x128xbf16, #tpu.memory_space<vmem>>, vector<108x128xbf16>
    %cst_8 = arith.constant dense<0.000000e+00> : vector<72x128xf32>
    %7 = tpu.matmul %5, %6, %cst_8 {dimension_numbers = #tpu.dot_dimension_numbers<[1], [0], [0], [1], [0, 0, 1, 1], [], []>} : vector<72x108xbf16>, vector<108x128xbf16>, vector<72x128xf32> -> vector<72x128xf32>
    %8 = arith.maximumf %3, %7 : vector<72x128xf32>
    %c2 = arith.constant 2 : index
    %c0_9 = arith.constant 0 : index
    %c0_10 = arith.constant 0 : index
    %9 = vector.load %arg1[%c2, %c0_9, %c0_10] : memref<4x72x108xbf16, #tpu.memory_space<vmem>>, vector<1x72x108xbf16>
    %10 = vector.shape_cast %9 : vector<1x72x108xbf16> to vector<72x108xbf16>
    %c0_11 = arith.constant 0 : index
    %c0_12 = arith.constant 0 : index
    %11 = vector.load %arg2[%c0_11, %c0_12] : memref<108x128xbf16, #tpu.memory_space<vmem>>, vector<108x128xbf16>
    %cst_13 = arith.constant dense<0.000000e+00> : vector<72x128xf32>
    %12 = tpu.matmul %10, %11, %cst_13 {dimension_numbers = #tpu.dot_dimension_numbers<[1], [0], [0], [1], [0, 0, 1, 1], [], []>} : vector<72x108xbf16>, vector<108x128xbf16>, vector<72x128xf32> -> vector<72x128xf32>
    %13 = arith.maximumf %8, %12 : vector<72x128xf32>
    %c3 = arith.constant 3 : index
    %c0_14 = arith.constant 0 : index
    %c0_15 = arith.constant 0 : index
    %14 = vector.load %arg1[%c3, %c0_14, %c0_15] : memref<4x72x108xbf16, #tpu.memory_space<vmem>>, vector<1x72x108xbf16>
    %15 = vector.shape_cast %14 : vector<1x72x108xbf16> to vector<72x108xbf16>
    %c0_16 = arith.constant 0 : index
    %c0_17 = arith.constant 0 : index
    %16 = vector.load %arg2[%c0_16, %c0_17] : memref<108x128xbf16, #tpu.memory_space<vmem>>, vector<108x128xbf16>
    %cst_18 = arith.constant dense<0.000000e+00> : vector<72x128xf32>
    %17 = tpu.matmul %15, %16, %cst_18 {dimension_numbers = #tpu.dot_dimension_numbers<[1], [0], [0], [1], [0, 0, 1, 1], [], []>} : vector<72x108xbf16>, vector<108x128xbf16>, vector<72x128xf32> -> vector<72x128xf32>
    %18 = arith.maximumf %13, %17 : vector<72x128xf32>
    %c0_19 = arith.constant 0 : index
    %c0_20 = arith.constant 0 : index
    %19 = vector.load %arg3[%c0_19, %c0_20] : memref<1x128xf32, #tpu.memory_space<vmem>>, vector<1x128xf32>
    %20 = vector.broadcast %19 : vector<1x128xf32> to vector<72x128xf32>
    %21 = arith.addf %18, %20 : vector<72x128xf32>
    %cst_21 = arith.constant 0.000000e+00 : f32
    %22 = vector.broadcast %cst_21 : f32 to vector<72x128xf32>
    %23 = arith.maximumf %21, %22 : vector<72x128xf32>
    %24 = arith.truncf %23 : vector<72x128xf32> to vector<72x128xbf16>
    %25 = vector.extract_strided_slice %24 {offsets = [0, 0], sizes = [2, 128], strides = [1, 1]} : vector<72x128xbf16> to vector<2x128xbf16>
    %c0_22 = arith.constant 0 : index
    %c0_23 = arith.constant 0 : index
    %26 = vector.load %arg4[%c0_22, %c0_23] : memref<4608x128xbf16, #tpu.memory_space<vmem>>, vector<128x128xbf16>
    %cst_24 = arith.constant dense<0.000000e+00> : vector<2x128xf32>
    %27 = tpu.matmul %25, %26, %cst_24 {dimension_numbers = #tpu.dot_dimension_numbers<[1], [0], [0], [1], [0, 0, 1, 1], [], []>} : vector<2x128xbf16>, vector<128x128xbf16>, vector<2x128xf32> -> vector<2x128xf32>
    %28 = vector.extract_strided_slice %24 {offsets = [2, 0], sizes = [2, 128], strides = [1, 1]} : vector<72x128xbf16> to vector<2x128xbf16>
    %c128 = arith.constant 128 : index
    %c0_25 = arith.constant 0 : index
    %29 = vector.load %arg4[%c128, %c0_25] : memref<4608x128xbf16, #tpu.memory_space<vmem>>, vector<128x128xbf16>
    %cst_26 = arith.constant dense<0.000000e+00> : vector<2x128xf32>
    %30 = tpu.matmul %28, %29, %cst_26 {dimension_numbers = #tpu.dot_dimension_numbers<[1], [0], [0], [1], [0, 0, 1, 1], [], []>} : vector<2x128xbf16>, vector<128x128xbf16>, vector<2x128xf32> -> vector<2x128xf32>
    %31 = arith.addf %27, %30 : vector<2x128xf32>
    %32 = vector.extract_strided_slice %24 {offsets = [4, 0], sizes = [2, 128], strides = [1, 1]} : vector<72x128xbf16> to vector<2x128xbf16>
    %c256 = arith.constant 256 : index
    %c0_27 = arith.constant 0 : index
    %33 = vector.load %arg4[%c256, %c0_27] : memref<4608x128xbf16, #tpu.memory_space<vmem>>, vector<128x128xbf16>
    %cst_28 = arith.constant dense<0.000000e+00> : vector<2x128xf32>
    %34 = tpu.matmul %32, %33, %cst_28 {dimension_numbers = #tpu.dot_dimension_numbers<[1], [0], [0], [1], [0, 0, 1, 1], [], []>} : vector<2x128xbf16>, vector<128x128xbf16>, vector<2x128xf32> -> vector<2x128xf32>
    %35 = arith.addf %31, %34 : vector<2x128xf32>
    %36 = vector.extract_strided_slice %24 {offsets = [6, 0], sizes = [2, 128], strides = [1, 1]} : vector<72x128xbf16> to vector<2x128xbf16>
    %c384 = arith.constant 384 : index
    %c0_29 = arith.constant 0 : index
    %37 = vector.load %arg4[%c384, %c0_29] : memref<4608x128xbf16, #tpu.memory_space<vmem>>, vector<128x128xbf16>
    %cst_30 = arith.constant dense<0.000000e+00> : vector<2x128xf32>
    %38 = tpu.matmul %36, %37, %cst_30 {dimension_numbers = #tpu.dot_dimension_numbers<[1], [0], [0], [1], [0, 0, 1, 1], [], []>} : vector<2x128xbf16>, vector<128x128xbf16>, vector<2x128xf32> -> vector<2x128xf32>
    %39 = arith.addf %35, %38 : vector<2x128xf32>
    %40 = vector.extract_strided_slice %24 {offsets = [8, 0], sizes = [2, 128], strides = [1, 1]} : vector<72x128xbf16> to vector<2x128xbf16>
    %c512 = arith.constant 512 : index
    %c0_31 = arith.constant 0 : index
    %41 = vector.load %arg4[%c512, %c0_31] : memref<4608x128xbf16, #tpu.memory_space<vmem>>, vector<128x128xbf16>
    %cst_32 = arith.constant dense<0.000000e+00> : vector<2x128xf32>
    %42 = tpu.matmul %40, %41, %cst_32 {dimension_numbers = #tpu.dot_dimension_numbers<[1], [0], [0], [1], [0, 0, 1, 1], [], []>} : vector<2x128xbf16>, vector<128x128xbf16>, vector<2x128xf32> -> vector<2x128xf32>
    %43 = arith.addf %39, %42 : vector<2x128xf32>
    %44 = vector.extract_strided_slice %24 {offsets = [10, 0], sizes = [2, 128], strides = [1, 1]} : vector<72x128xbf16> to vector<2x128xbf16>
    %c640 = arith.constant 640 : index
    %c0_33 = arith.constant 0 : index
    %45 = vector.load %arg4[%c640, %c0_33] : memref<4608x128xbf16, #tpu.memory_space<vmem>>, vector<128x128xbf16>
    %cst_34 = arith.constant dense<0.000000e+00> : vector<2x128xf32>
    %46 = tpu.matmul %44, %45, %cst_34 {dimension_numbers = #tpu.dot_dimension_numbers<[1], [0], [0], [1], [0, 0, 1, 1], [], []>} : vector<2x128xbf16>, vector<128x128xbf16>, vector<2x128xf32> -> vector<2x128xf32>
    %47 = arith.addf %43, %46 : vector<2x128xf32>
    %48 = vector.extract_strided_slice %24 {offsets = [12, 0], sizes = [2, 128], strides = [1, 1]} : vector<72x128xbf16> to vector<2x128xbf16>
    %c768 = arith.constant 768 : index
    %c0_35 = arith.constant 0 : index
    %49 = vector.load %arg4[%c768, %c0_35] : memref<4608x128xbf16, #tpu.memory_space<vmem>>, vector<128x128xbf16>
    %cst_36 = arith.constant dense<0.000000e+00> : vector<2x128xf32>
    %50 = tpu.matmul %48, %49, %cst_36 {dimension_numbers = #tpu.dot_dimension_numbers<[1], [0], [0], [1], [0, 0, 1, 1], [], []>} : vector<2x128xbf16>, vector<128x128xbf16>, vector<2x128xf32> -> vector<2x128xf32>
    %51 = arith.addf %47, %50 : vector<2x128xf32>
    %52 = vector.extract_strided_slice %24 {offsets = [14, 0], sizes = [2, 128], strides = [1, 1]} : vector<72x128xbf16> to vector<2x128xbf16>
    %c896 = arith.constant 896 : index
    %c0_37 = arith.constant 0 : index
    %53 = vector.load %arg4[%c896, %c0_37] : memref<4608x128xbf16, #tpu.memory_space<vmem>>, vector<128x128xbf16>
    %cst_38 = arith.constant dense<0.000000e+00> : vector<2x128xf32>
    %54 = tpu.matmul %52, %53, %cst_38 {dimension_numbers = #tpu.dot_dimension_numbers<[1], [0], [0], [1], [0, 0, 1, 1], [], []>} : vector<2x128xbf16>, vector<128x128xbf16>, vector<2x128xf32> -> vector<2x128xf32>
    %55 = arith.addf %51, %54 : vector<2x128xf32>
    %56 = vector.extract_strided_slice %24 {offsets = [16, 0], sizes = [2, 128], strides = [1, 1]} : vector<72x128xbf16> to vector<2x128xbf16>
    %c1024 = arith.constant 1024 : index
    %c0_39 = arith.constant 0 : index
    %57 = vector.load %arg4[%c1024, %c0_39] : memref<4608x128xbf16, #tpu.memory_space<vmem>>, vector<128x128xbf16>
    %cst_40 = arith.constant dense<0.000000e+00> : vector<2x128xf32>
    %58 = tpu.matmul %56, %57, %cst_40 {dimension_numbers = #tpu.dot_dimension_numbers<[1], [0], [0], [1], [0, 0, 1, 1], [], []>} : vector<2x128xbf16>, vector<128x128xbf16>, vector<2x128xf32> -> vector<2x128xf32>
    %59 = arith.addf %55, %58 : vector<2x128xf32>
    %60 = vector.extract_strided_slice %24 {offsets = [18, 0], sizes = [2, 128], strides = [1, 1]} : vector<72x128xbf16> to vector<2x128xbf16>
    %c1152 = arith.constant 1152 : index
    %c0_41 = arith.constant 0 : index
    %61 = vector.load %arg4[%c1152, %c0_41] : memref<4608x128xbf16, #tpu.memory_space<vmem>>, vector<128x128xbf16>
    %cst_42 = arith.constant dense<0.000000e+00> : vector<2x128xf32>
    %62 = tpu.matmul %60, %61, %cst_42 {dimension_numbers = #tpu.dot_dimension_numbers<[1], [0], [0], [1], [0, 0, 1, 1], [], []>} : vector<2x128xbf16>, vector<128x128xbf16>, vector<2x128xf32> -> vector<2x128xf32>
    %63 = arith.addf %59, %62 : vector<2x128xf32>
    %64 = vector.extract_strided_slice %24 {offsets = [20, 0], sizes = [2, 128], strides = [1, 1]} : vector<72x128xbf16> to vector<2x128xbf16>
    %c1280 = arith.constant 1280 : index
    %c0_43 = arith.constant 0 : index
    %65 = vector.load %arg4[%c1280, %c0_43] : memref<4608x128xbf16, #tpu.memory_space<vmem>>, vector<128x128xbf16>
    %cst_44 = arith.constant dense<0.000000e+00> : vector<2x128xf32>
    %66 = tpu.matmul %64, %65, %cst_44 {dimension_numbers = #tpu.dot_dimension_numbers<[1], [0], [0], [1], [0, 0, 1, 1], [], []>} : vector<2x128xbf16>, vector<128x128xbf16>, vector<2x128xf32> -> vector<2x128xf32>
    %67 = arith.addf %63, %66 : vector<2x128xf32>
    %68 = vector.extract_strided_slice %24 {offsets = [22, 0], sizes = [2, 128], strides = [1, 1]} : vector<72x128xbf16> to vector<2x128xbf16>
    %c1408 = arith.constant 1408 : index
    %c0_45 = arith.constant 0 : index
    %69 = vector.load %arg4[%c1408, %c0_45] : memref<4608x128xbf16, #tpu.memory_space<vmem>>, vector<128x128xbf16>
    %cst_46 = arith.constant dense<0.000000e+00> : vector<2x128xf32>
    %70 = tpu.matmul %68, %69, %cst_46 {dimension_numbers = #tpu.dot_dimension_numbers<[1], [0], [0], [1], [0, 0, 1, 1], [], []>} : vector<2x128xbf16>, vector<128x128xbf16>, vector<2x128xf32> -> vector<2x128xf32>
    %71 = arith.addf %67, %70 : vector<2x128xf32>
    %72 = vector.extract_strided_slice %24 {offsets = [24, 0], sizes = [2, 128], strides = [1, 1]} : vector<72x128xbf16> to vector<2x128xbf16>
    %c1536 = arith.constant 1536 : index
    %c0_47 = arith.constant 0 : index
    %73 = vector.load %arg4[%c1536, %c0_47] : memref<4608x128xbf16, #tpu.memory_space<vmem>>, vector<128x128xbf16>
    %cst_48 = arith.constant dense<0.000000e+00> : vector<2x128xf32>
    %74 = tpu.matmul %72, %73, %cst_48 {dimension_numbers = #tpu.dot_dimension_numbers<[1], [0], [0], [1], [0, 0, 1, 1], [], []>} : vector<2x128xbf16>, vector<128x128xbf16>, vector<2x128xf32> -> vector<2x128xf32>
    %75 = arith.addf %71, %74 : vector<2x128xf32>
    %76 = vector.extract_strided_slice %24 {offsets = [26, 0], sizes = [2, 128], strides = [1, 1]} : vector<72x128xbf16> to vector<2x128xbf16>
    %c1664 = arith.constant 1664 : index
    %c0_49 = arith.constant 0 : index
    %77 = vector.load %arg4[%c1664, %c0_49] : memref<4608x128xbf16, #tpu.memory_space<vmem>>, vector<128x128xbf16>
    %cst_50 = arith.constant dense<0.000000e+00> : vector<2x128xf32>
    %78 = tpu.matmul %76, %77, %cst_50 {dimension_numbers = #tpu.dot_dimension_numbers<[1], [0], [0], [1], [0, 0, 1, 1], [], []>} : vector<2x128xbf16>, vector<128x128xbf16>, vector<2x128xf32> -> vector<2x128xf32>
    %79 = arith.addf %75, %78 : vector<2x128xf32>
    %80 = vector.extract_strided_slice %24 {offsets = [28, 0], sizes = [2, 128], strides = [1, 1]} : vector<72x128xbf16> to vector<2x128xbf16>
    %c1792 = arith.constant 1792 : index
    %c0_51 = arith.constant 0 : index
    %81 = vector.load %arg4[%c1792, %c0_51] : memref<4608x128xbf16, #tpu.memory_space<vmem>>, vector<128x128xbf16>
    %cst_52 = arith.constant dense<0.000000e+00> : vector<2x128xf32>
    %82 = tpu.matmul %80, %81, %cst_52 {dimension_numbers = #tpu.dot_dimension_numbers<[1], [0], [0], [1], [0, 0, 1, 1], [], []>} : vector<2x128xbf16>, vector<128x128xbf16>, vector<2x128xf32> -> vector<2x128xf32>
    %83 = arith.addf %79, %82 : vector<2x128xf32>
    %84 = vector.extract_strided_slice %24 {offsets = [30, 0], sizes = [2, 128], strides = [1, 1]} : vector<72x128xbf16> to vector<2x128xbf16>
    %c1920 = arith.constant 1920 : index
    %c0_53 = arith.constant 0 : index
    %85 = vector.load %arg4[%c1920, %c0_53] : memref<4608x128xbf16, #tpu.memory_space<vmem>>, vector<128x128xbf16>
    %cst_54 = arith.constant dense<0.000000e+00> : vector<2x128xf32>
    %86 = tpu.matmul %84, %85, %cst_54 {dimension_numbers = #tpu.dot_dimension_numbers<[1], [0], [0], [1], [0, 0, 1, 1], [], []>} : vector<2x128xbf16>, vector<128x128xbf16>, vector<2x128xf32> -> vector<2x128xf32>
    %87 = arith.addf %83, %86 : vector<2x128xf32>
    %88 = vector.extract_strided_slice %24 {offsets = [32, 0], sizes = [2, 128], strides = [1, 1]} : vector<72x128xbf16> to vector<2x128xbf16>
    %c2048 = arith.constant 2048 : index
    %c0_55 = arith.constant 0 : index
    %89 = vector.load %arg4[%c2048, %c0_55] : memref<4608x128xbf16, #tpu.memory_space<vmem>>, vector<128x128xbf16>
    %cst_56 = arith.constant dense<0.000000e+00> : vector<2x128xf32>
    %90 = tpu.matmul %88, %89, %cst_56 {dimension_numbers = #tpu.dot_dimension_numbers<[1], [0], [0], [1], [0, 0, 1, 1], [], []>} : vector<2x128xbf16>, vector<128x128xbf16>, vector<2x128xf32> -> vector<2x128xf32>
    %91 = arith.addf %87, %90 : vector<2x128xf32>
    %92 = vector.extract_strided_slice %24 {offsets = [34, 0], sizes = [2, 128], strides = [1, 1]} : vector<72x128xbf16> to vector<2x128xbf16>
    %c2176 = arith.constant 2176 : index
    %c0_57 = arith.constant 0 : index
    %93 = vector.load %arg4[%c2176, %c0_57] : memref<4608x128xbf16, #tpu.memory_space<vmem>>, vector<128x128xbf16>
    %cst_58 = arith.constant dense<0.000000e+00> : vector<2x128xf32>
    %94 = tpu.matmul %92, %93, %cst_58 {dimension_numbers = #tpu.dot_dimension_numbers<[1], [0], [0], [1], [0, 0, 1, 1], [], []>} : vector<2x128xbf16>, vector<128x128xbf16>, vector<2x128xf32> -> vector<2x128xf32>
    %95 = arith.addf %91, %94 : vector<2x128xf32>
    %96 = vector.extract_strided_slice %24 {offsets = [36, 0], sizes = [2, 128], strides = [1, 1]} : vector<72x128xbf16> to vector<2x128xbf16>
    %c2304 = arith.constant 2304 : index
    %c0_59 = arith.constant 0 : index
    %97 = vector.load %arg4[%c2304, %c0_59] : memref<4608x128xbf16, #tpu.memory_space<vmem>>, vector<128x128xbf16>
    %cst_60 = arith.constant dense<0.000000e+00> : vector<2x128xf32>
    %98 = tpu.matmul %96, %97, %cst_60 {dimension_numbers = #tpu.dot_dimension_numbers<[1], [0], [0], [1], [0, 0, 1, 1], [], []>} : vector<2x128xbf16>, vector<128x128xbf16>, vector<2x128xf32> -> vector<2x128xf32>
    %99 = arith.addf %95, %98 : vector<2x128xf32>
    %100 = vector.extract_strided_slice %24 {offsets = [38, 0], sizes = [2, 128], strides = [1, 1]} : vector<72x128xbf16> to vector<2x128xbf16>
    %c2432 = arith.constant 2432 : index
    %c0_61 = arith.constant 0 : index
    %101 = vector.load %arg4[%c2432, %c0_61] : memref<4608x128xbf16, #tpu.memory_space<vmem>>, vector<128x128xbf16>
    %cst_62 = arith.constant dense<0.000000e+00> : vector<2x128xf32>
    %102 = tpu.matmul %100, %101, %cst_62 {dimension_numbers = #tpu.dot_dimension_numbers<[1], [0], [0], [1], [0, 0, 1, 1], [], []>} : vector<2x128xbf16>, vector<128x128xbf16>, vector<2x128xf32> -> vector<2x128xf32>
    %103 = arith.addf %99, %102 : vector<2x128xf32>
    %104 = vector.extract_strided_slice %24 {offsets = [40, 0], sizes = [2, 128], strides = [1, 1]} : vector<72x128xbf16> to vector<2x128xbf16>
    %c2560 = arith.constant 2560 : index
    %c0_63 = arith.constant 0 : index
    %105 = vector.load %arg4[%c2560, %c0_63] : memref<4608x128xbf16, #tpu.memory_space<vmem>>, vector<128x128xbf16>
    %cst_64 = arith.constant dense<0.000000e+00> : vector<2x128xf32>
    %106 = tpu.matmul %104, %105, %cst_64 {dimension_numbers = #tpu.dot_dimension_numbers<[1], [0], [0], [1], [0, 0, 1, 1], [], []>} : vector<2x128xbf16>, vector<128x128xbf16>, vector<2x128xf32> -> vector<2x128xf32>
    %107 = arith.addf %103, %106 : vector<2x128xf32>
    %108 = vector.extract_strided_slice %24 {offsets = [42, 0], sizes = [2, 128], strides = [1, 1]} : vector<72x128xbf16> to vector<2x128xbf16>
    %c2688 = arith.constant 2688 : index
    %c0_65 = arith.constant 0 : index
    %109 = vector.load %arg4[%c2688, %c0_65] : memref<4608x128xbf16, #tpu.memory_space<vmem>>, vector<128x128xbf16>
    %cst_66 = arith.constant dense<0.000000e+00> : vector<2x128xf32>
    %110 = tpu.matmul %108, %109, %cst_66 {dimension_numbers = #tpu.dot_dimension_numbers<[1], [0], [0], [1], [0, 0, 1, 1], [], []>} : vector<2x128xbf16>, vector<128x128xbf16>, vector<2x128xf32> -> vector<2x128xf32>
    %111 = arith.addf %107, %110 : vector<2x128xf32>
    %112 = vector.extract_strided_slice %24 {offsets = [44, 0], sizes = [2, 128], strides = [1, 1]} : vector<72x128xbf16> to vector<2x128xbf16>
    %c2816 = arith.constant 2816 : index
    %c0_67 = arith.constant 0 : index
    %113 = vector.load %arg4[%c2816, %c0_67] : memref<4608x128xbf16, #tpu.memory_space<vmem>>, vector<128x128xbf16>
    %cst_68 = arith.constant dense<0.000000e+00> : vector<2x128xf32>
    %114 = tpu.matmul %112, %113, %cst_68 {dimension_numbers = #tpu.dot_dimension_numbers<[1], [0], [0], [1], [0, 0, 1, 1], [], []>} : vector<2x128xbf16>, vector<128x128xbf16>, vector<2x128xf32> -> vector<2x128xf32>
    %115 = arith.addf %111, %114 : vector<2x128xf32>
    %116 = vector.extract_strided_slice %24 {offsets = [46, 0], sizes = [2, 128], strides = [1, 1]} : vector<72x128xbf16> to vector<2x128xbf16>
    %c2944 = arith.constant 2944 : index
    %c0_69 = arith.constant 0 : index
    %117 = vector.load %arg4[%c2944, %c0_69] : memref<4608x128xbf16, #tpu.memory_space<vmem>>, vector<128x128xbf16>
    %cst_70 = arith.constant dense<0.000000e+00> : vector<2x128xf32>
    %118 = tpu.matmul %116, %117, %cst_70 {dimension_numbers = #tpu.dot_dimension_numbers<[1], [0], [0], [1], [0, 0, 1, 1], [], []>} : vector<2x128xbf16>, vector<128x128xbf16>, vector<2x128xf32> -> vector<2x128xf32>
    %119 = arith.addf %115, %118 : vector<2x128xf32>
    %120 = vector.extract_strided_slice %24 {offsets = [48, 0], sizes = [2, 128], strides = [1, 1]} : vector<72x128xbf16> to vector<2x128xbf16>
    %c3072 = arith.constant 3072 : index
    %c0_71 = arith.constant 0 : index
    %121 = vector.load %arg4[%c3072, %c0_71] : memref<4608x128xbf16, #tpu.memory_space<vmem>>, vector<128x128xbf16>
    %cst_72 = arith.constant dense<0.000000e+00> : vector<2x128xf32>
    %122 = tpu.matmul %120, %121, %cst_72 {dimension_numbers = #tpu.dot_dimension_numbers<[1], [0], [0], [1], [0, 0, 1, 1], [], []>} : vector<2x128xbf16>, vector<128x128xbf16>, vector<2x128xf32> -> vector<2x128xf32>
    %123 = arith.addf %119, %122 : vector<2x128xf32>
    %124 = vector.extract_strided_slice %24 {offsets = [50, 0], sizes = [2, 128], strides = [1, 1]} : vector<72x128xbf16> to vector<2x128xbf16>
    %c3200 = arith.constant 3200 : index
    %c0_73 = arith.constant 0 : index
    %125 = vector.load %arg4[%c3200, %c0_73] : memref<4608x128xbf16, #tpu.memory_space<vmem>>, vector<128x128xbf16>
    %cst_74 = arith.constant dense<0.000000e+00> : vector<2x128xf32>
    %126 = tpu.matmul %124, %125, %cst_74 {dimension_numbers = #tpu.dot_dimension_numbers<[1], [0], [0], [1], [0, 0, 1, 1], [], []>} : vector<2x128xbf16>, vector<128x128xbf16>, vector<2x128xf32> -> vector<2x128xf32>
    %127 = arith.addf %123, %126 : vector<2x128xf32>
    %128 = vector.extract_strided_slice %24 {offsets = [52, 0], sizes = [2, 128], strides = [1, 1]} : vector<72x128xbf16> to vector<2x128xbf16>
    %c3328 = arith.constant 3328 : index
    %c0_75 = arith.constant 0 : index
    %129 = vector.load %arg4[%c3328, %c0_75] : memref<4608x128xbf16, #tpu.memory_space<vmem>>, vector<128x128xbf16>
    %cst_76 = arith.constant dense<0.000000e+00> : vector<2x128xf32>
    %130 = tpu.matmul %128, %129, %cst_76 {dimension_numbers = #tpu.dot_dimension_numbers<[1], [0], [0], [1], [0, 0, 1, 1], [], []>} : vector<2x128xbf16>, vector<128x128xbf16>, vector<2x128xf32> -> vector<2x128xf32>
    %131 = arith.addf %127, %130 : vector<2x128xf32>
    %132 = vector.extract_strided_slice %24 {offsets = [54, 0], sizes = [2, 128], strides = [1, 1]} : vector<72x128xbf16> to vector<2x128xbf16>
    %c3456 = arith.constant 3456 : index
    %c0_77 = arith.constant 0 : index
    %133 = vector.load %arg4[%c3456, %c0_77] : memref<4608x128xbf16, #tpu.memory_space<vmem>>, vector<128x128xbf16>
    %cst_78 = arith.constant dense<0.000000e+00> : vector<2x128xf32>
    %134 = tpu.matmul %132, %133, %cst_78 {dimension_numbers = #tpu.dot_dimension_numbers<[1], [0], [0], [1], [0, 0, 1, 1], [], []>} : vector<2x128xbf16>, vector<128x128xbf16>, vector<2x128xf32> -> vector<2x128xf32>
    %135 = arith.addf %131, %134 : vector<2x128xf32>
    %136 = vector.extract_strided_slice %24 {offsets = [56, 0], sizes = [2, 128], strides = [1, 1]} : vector<72x128xbf16> to vector<2x128xbf16>
    %c3584 = arith.constant 3584 : index
    %c0_79 = arith.constant 0 : index
    %137 = vector.load %arg4[%c3584, %c0_79] : memref<4608x128xbf16, #tpu.memory_space<vmem>>, vector<128x128xbf16>
    %cst_80 = arith.constant dense<0.000000e+00> : vector<2x128xf32>
    %138 = tpu.matmul %136, %137, %cst_80 {dimension_numbers = #tpu.dot_dimension_numbers<[1], [0], [0], [1], [0, 0, 1, 1], [], []>} : vector<2x128xbf16>, vector<128x128xbf16>, vector<2x128xf32> -> vector<2x128xf32>
    %139 = arith.addf %135, %138 : vector<2x128xf32>
    %140 = vector.extract_strided_slice %24 {offsets = [58, 0], sizes = [2, 128], strides = [1, 1]} : vector<72x128xbf16> to vector<2x128xbf16>
    %c3712 = arith.constant 3712 : index
    %c0_81 = arith.constant 0 : index
    %141 = vector.load %arg4[%c3712, %c0_81] : memref<4608x128xbf16, #tpu.memory_space<vmem>>, vector<128x128xbf16>
    %cst_82 = arith.constant dense<0.000000e+00> : vector<2x128xf32>
    %142 = tpu.matmul %140, %141, %cst_82 {dimension_numbers = #tpu.dot_dimension_numbers<[1], [0], [0], [1], [0, 0, 1, 1], [], []>} : vector<2x128xbf16>, vector<128x128xbf16>, vector<2x128xf32> -> vector<2x128xf32>
    %143 = arith.addf %139, %142 : vector<2x128xf32>
    %144 = vector.extract_strided_slice %24 {offsets = [60, 0], sizes = [2, 128], strides = [1, 1]} : vector<72x128xbf16> to vector<2x128xbf16>
    %c3840 = arith.constant 3840 : index
    %c0_83 = arith.constant 0 : index
    %145 = vector.load %arg4[%c3840, %c0_83] : memref<4608x128xbf16, #tpu.memory_space<vmem>>, vector<128x128xbf16>
    %cst_84 = arith.constant dense<0.000000e+00> : vector<2x128xf32>
    %146 = tpu.matmul %144, %145, %cst_84 {dimension_numbers = #tpu.dot_dimension_numbers<[1], [0], [0], [1], [0, 0, 1, 1], [], []>} : vector<2x128xbf16>, vector<128x128xbf16>, vector<2x128xf32> -> vector<2x128xf32>
    %147 = arith.addf %143, %146 : vector<2x128xf32>
    %148 = vector.extract_strided_slice %24 {offsets = [62, 0], sizes = [2, 128], strides = [1, 1]} : vector<72x128xbf16> to vector<2x128xbf16>
    %c3968 = arith.constant 3968 : index
    %c0_85 = arith.constant 0 : index
    %149 = vector.load %arg4[%c3968, %c0_85] : memref<4608x128xbf16, #tpu.memory_space<vmem>>, vector<128x128xbf16>
    %cst_86 = arith.constant dense<0.000000e+00> : vector<2x128xf32>
    %150 = tpu.matmul %148, %149, %cst_86 {dimension_numbers = #tpu.dot_dimension_numbers<[1], [0], [0], [1], [0, 0, 1, 1], [], []>} : vector<2x128xbf16>, vector<128x128xbf16>, vector<2x128xf32> -> vector<2x128xf32>
    %151 = arith.addf %147, %150 : vector<2x128xf32>
    %152 = vector.extract_strided_slice %24 {offsets = [64, 0], sizes = [2, 128], strides = [1, 1]} : vector<72x128xbf16> to vector<2x128xbf16>
    %c4096 = arith.constant 4096 : index
    %c0_87 = arith.constant 0 : index
    %153 = vector.load %arg4[%c4096, %c0_87] : memref<4608x128xbf16, #tpu.memory_space<vmem>>, vector<128x128xbf16>
    %cst_88 = arith.constant dense<0.000000e+00> : vector<2x128xf32>
    %154 = tpu.matmul %152, %153, %cst_88 {dimension_numbers = #tpu.dot_dimension_numbers<[1], [0], [0], [1], [0, 0, 1, 1], [], []>} : vector<2x128xbf16>, vector<128x128xbf16>, vector<2x128xf32> -> vector<2x128xf32>
    %155 = arith.addf %151, %154 : vector<2x128xf32>
    %156 = vector.extract_strided_slice %24 {offsets = [66, 0], sizes = [2, 128], strides = [1, 1]} : vector<72x128xbf16> to vector<2x128xbf16>
    %c4224 = arith.constant 4224 : index
    %c0_89 = arith.constant 0 : index
    %157 = vector.load %arg4[%c4224, %c0_89] : memref<4608x128xbf16, #tpu.memory_space<vmem>>, vector<128x128xbf16>
    %cst_90 = arith.constant dense<0.000000e+00> : vector<2x128xf32>
    %158 = tpu.matmul %156, %157, %cst_90 {dimension_numbers = #tpu.dot_dimension_numbers<[1], [0], [0], [1], [0, 0, 1, 1], [], []>} : vector<2x128xbf16>, vector<128x128xbf16>, vector<2x128xf32> -> vector<2x128xf32>
    %159 = arith.addf %155, %158 : vector<2x128xf32>
    %160 = vector.extract_strided_slice %24 {offsets = [68, 0], sizes = [2, 128], strides = [1, 1]} : vector<72x128xbf16> to vector<2x128xbf16>
    %c4352 = arith.constant 4352 : index
    %c0_91 = arith.constant 0 : index
    %161 = vector.load %arg4[%c4352, %c0_91] : memref<4608x128xbf16, #tpu.memory_space<vmem>>, vector<128x128xbf16>
    %cst_92 = arith.constant dense<0.000000e+00> : vector<2x128xf32>
    %162 = tpu.matmul %160, %161, %cst_92 {dimension_numbers = #tpu.dot_dimension_numbers<[1], [0], [0], [1], [0, 0, 1, 1], [], []>} : vector<2x128xbf16>, vector<128x128xbf16>, vector<2x128xf32> -> vector<2x128xf32>
    %163 = arith.addf %159, %162 : vector<2x128xf32>
    %164 = vector.extract_strided_slice %24 {offsets = [70, 0], sizes = [2, 128], strides = [1, 1]} : vector<72x128xbf16> to vector<2x128xbf16>
    %c4480 = arith.constant 4480 : index
    %c0_93 = arith.constant 0 : index
    %165 = vector.load %arg4[%c4480, %c0_93] : memref<4608x128xbf16, #tpu.memory_space<vmem>>, vector<128x128xbf16>
    %cst_94 = arith.constant dense<0.000000e+00> : vector<2x128xf32>
    %166 = tpu.matmul %164, %165, %cst_94 {dimension_numbers = #tpu.dot_dimension_numbers<[1], [0], [0], [1], [0, 0, 1, 1], [], []>} : vector<2x128xbf16>, vector<128x128xbf16>, vector<2x128xf32> -> vector<2x128xf32>
    %167 = arith.addf %163, %166 : vector<2x128xf32>
    %c0_95 = arith.constant 0 : index
    %c0_96 = arith.constant 0 : index
    %168 = vector.load %arg5[%c0_95, %c0_96] : memref<1x128xf32, #tpu.memory_space<vmem>>, vector<1x128xf32>
    %169 = vector.broadcast %168 : vector<1x128xf32> to vector<2x128xf32>
    %170 = arith.addf %167, %169 : vector<2x128xf32>
    %cst_97 = arith.constant 0.000000e+00 : f32
    %171 = vector.broadcast %cst_97 : f32 to vector<2x128xf32>
    %172 = arith.maximumf %170, %171 : vector<2x128xf32>
    %173 = arith.truncf %172 : vector<2x128xf32> to vector<2x128xbf16>
    %c0_98 = arith.constant 0 : index
    %c0_99 = arith.constant 0 : index
    %174 = vector.load %arg6[%c0_98, %c0_99] : memref<128x128xbf16, #tpu.memory_space<vmem>>, vector<128x128xbf16>
    %cst_100 = arith.constant dense<0.000000e+00> : vector<2x128xf32>
    %175 = tpu.matmul %173, %174, %cst_100 {dimension_numbers = #tpu.dot_dimension_numbers<[1], [0], [0], [1], [0, 0, 1, 1], [], []>} : vector<2x128xbf16>, vector<128x128xbf16>, vector<2x128xf32> -> vector<2x128xf32>
    %c0_101 = arith.constant 0 : index
    %c0_102 = arith.constant 0 : index
    %176 = vector.load %arg7[%c0_101, %c0_102] : memref<1x128xf32, #tpu.memory_space<vmem>>, vector<1x128xf32>
    %177 = vector.broadcast %176 : vector<1x128xf32> to vector<2x128xf32>
    %178 = arith.addf %175, %177 : vector<2x128xf32>
    %cst_103 = arith.constant 0.000000e+00 : f32
    %179 = vector.broadcast %cst_103 : f32 to vector<2x128xf32>
    %180 = arith.maximumf %178, %179 : vector<2x128xf32>
    %181 = arith.truncf %180 : vector<2x128xf32> to vector<2x128xbf16>
    %c0_104 = arith.constant 0 : index
    %c0_105 = arith.constant 0 : index
    %182 = vector.load %arg8[%c0_104, %c0_105] : memref<128x128xbf16, #tpu.memory_space<vmem>>, vector<128x128xbf16>
    %cst_106 = arith.constant dense<0.000000e+00> : vector<2x128xf32>
    %183 = tpu.matmul %181, %182, %cst_106 {dimension_numbers = #tpu.dot_dimension_numbers<[1], [0], [0], [1], [0, 0, 1, 1], [], []>} : vector<2x128xbf16>, vector<128x128xbf16>, vector<2x128xf32> -> vector<2x128xf32>
    %c0_107 = arith.constant 0 : index
    %c0_108 = arith.constant 0 : index
    %184 = vector.load %arg9[%c0_107, %c0_108] : memref<1x128xf32, #tpu.memory_space<vmem>>, vector<1x128xf32>
    %185 = vector.broadcast %184 : vector<1x128xf32> to vector<2x128xf32>
    %186 = arith.addf %183, %185 : vector<2x128xf32>
    %cst_109 = arith.constant dense<0xFF800000> : vector<2xf32>
    %187 = vector.multi_reduction <maximumf>, %186, %cst_109 [1] : vector<2x128xf32> to vector<2xf32>
    %188 = vector.shape_cast %187 : vector<2xf32> to vector<2x1xf32>
    %189 = vector.broadcast %188 : vector<2x1xf32> to vector<2x128xf32>
    %190 = arith.subf %186, %189 : vector<2x128xf32>
    %191 = math.exp %190 : vector<2x128xf32>
    %cst_110 = arith.constant dense<0.000000e+00> : vector<2xf32>
    %192 = vector.multi_reduction <add>, %191, %cst_110 [1] : vector<2x128xf32> to vector<2xf32>
    %193 = vector.shape_cast %192 : vector<2xf32> to vector<2x1xf32>
    %194 = math.log %193 : vector<2x1xf32>
    %195 = arith.addf %194, %188 : vector<2x1xf32>
    %196 = vector.broadcast %195 : vector<2x1xf32> to vector<2x128xf32>
    %197 = arith.subf %186, %196 : vector<2x128xf32>
    %c0_111 = arith.constant 0 : index
    %c0_112 = arith.constant 0 : index
    %198 = vector.load %arg10[%c0_111, %c0_112] : memref<2x128xf32, #tpu.memory_space<vmem>>, vector<2x128xf32>
    tpu.vector_store %arg10[%c0_111, %c0_112], %197 {strides = array<i32>} : memref<2x128xf32, #tpu.memory_space<vmem>>, vector<2x128xf32>,
    return
  }
  func.func @transform_0(%arg0: i32) -> (i32, i32, i32) {
    %c0_i32 = arith.constant 0 : i32
    %c0_i32_0 = arith.constant 0 : i32
    %c0_i32_1 = arith.constant 0 : i32
    return %c0_i32, %arg0, %c0_i32_0 : i32, i32, i32
  }
  func.func @transform_1(%arg0: i32) -> (i32, i32) {
    %c0_i32 = arith.constant 0 : i32
    %c0_i32_0 = arith.constant 0 : i32
    %c0_i32_1 = arith.constant 0 : i32
    return %c0_i32, %c0_i32_0 : i32, i32
  }
  func.func @transform_2(%arg0: i32) -> (i32, i32) {
    %c0_i32 = arith.constant 0 : i32
    %c0_i32_0 = arith.constant 0 : i32
    %c0_i32_1 = arith.constant 0 : i32
    return %c0_i32, %c0_i32_0 : i32, i32
  }
  func.func @transform_3(%arg0: i32) -> (i32, i32) {
    %c0_i32 = arith.constant 0 : i32
    %c0_i32_0 = arith.constant 0 : i32
    %c0_i32_1 = arith.constant 0 : i32
    return %c0_i32, %c0_i32_0 : i32, i32
  }
  func.func @transform_4(%arg0: i32) -> (i32, i32) {
    %c0_i32 = arith.constant 0 : i32
    %c0_i32_0 = arith.constant 0 : i32
    %c0_i32_1 = arith.constant 0 : i32
    return %c0_i32, %c0_i32_0 : i32, i32
  }
  func.func @transform_5(%arg0: i32) -> (i32, i32) {
    %c0_i32 = arith.constant 0 : i32
    %c0_i32_0 = arith.constant 0 : i32
    %c0_i32_1 = arith.constant 0 : i32
    return %c0_i32, %c0_i32_0 : i32, i32
  }
  func.func @transform_6(%arg0: i32) -> (i32, i32) {
    %c0_i32 = arith.constant 0 : i32
    %c0_i32_0 = arith.constant 0 : i32
    %c0_i32_1 = arith.constant 0 : i32
    return %c0_i32, %c0_i32_0 : i32, i32
  }
  func.func @transform_7(%arg0: i32) -> (i32, i32) {
    %c0_i32 = arith.constant 0 : i32
    %c0_i32_0 = arith.constant 0 : i32
    %c0_i32_1 = arith.constant 0 : i32
    return %c0_i32, %c0_i32_0 : i32, i32
  }
  func.func @transform_8(%arg0: i32) -> (i32, i32) {
    %c0_i32 = arith.constant 0 : i32
    %c0_i32_0 = arith.constant 0 : i32
    %c0_i32_1 = arith.constant 0 : i32
    return %c0_i32, %c0_i32_0 : i32, i32
  }
  func.func @transform_9(%arg0: i32) -> (i32, i32) {
    %c0_i32 = arith.constant 0 : i32
    %c0_i32_0 = arith.constant 0 : i32
    return %arg0, %c0_i32 : i32, i32
  }
}

</mosaic_0001>

<llo_original>
// kernel: simple_cnn_forward.2
$region0: #{simple_cnn_forward.2}
  #allocation0 [shape = 'u32[]', space=smem, size = 0x4, offset = 0x4, fixed_abs, tag = 'smem constant byte address 0x4 - core index']
  #allocation1 [shape = 'u32[144,128]{1,0:T(1,128)}', space=vmem, size = 0x12000, scoped, tag = 'internal scratch']
  %s0 = inlined_call_operand.vmem [shape: bf16[4,512,75], index: 0, kind: input, shape index: {}]
  %s1 = inlined_call_operand.vmem [shape: bf16[75,128], index: 1, kind: input, shape index: {}]
  %s2 = inlined_call_operand.vmem [shape: f32[1,128], index: 2, kind: input, shape index: {}]
  %s3 = inlined_call_operand.vmem [shape: bf16[512,128], index: 3, kind: output, shape index: {}]
  %s4 = sld [smem:[#allocation0]]
  $region86: #{simple_cnn_forward.2} parent=0
    _
  %s6 = ssub.s32 1, %s4
  %s7 = scalar_select 0, %s6, %s4
  $region1: #{simple_cnn_forward.2} parent=0
    #allocation2 [shape = 'u8[524288]{0}', space=vmem, size = 0x80000, scoped, tag = 'input window, operand 0']
    loop: start=0, step=1, limit=4
    $region2: #{simple_cnn_forward.2} parent=1 // loop_pre_header
      _
    $region3: #{simple_cnn_forward.2} parent=1 // loop_header
      %s9 = sphi 0, %s13
      %p10 = scmp.ge.s32.totalorder %s9, 4
      %s19 = sphi 0, %s21
      %s22 = sphi 0, %s19
      %s23 = sphi 0, %s22
      %s39 = sphi 0, %s23
      %s43 = sphi 0, %s43
      %s45 = sphi 0, %s43
      %s46 = sphi 0, %s45
      %s60 = sphi 0, %s46
      %s64 = sphi 0, %s64
      %s66 = sphi 0, %s64
      %s67 = sphi 0, %s66
      %s81 = sphi 0, %s67
      %s87 = sphi 0, %s89
      %s90 = sphi 0, %s87
      %s91 = sphi 0, %s90
      %s107 = sphi 0, %s91
    $region4: #{simple_cnn_forward.2} parent=1 // loop_header_branch
      %12 = sbr.rel (%p10) target = $region8
    $region5: #{simple_cnn_forward.2} parent=1 // loop_body
      %s14 = ssub.s32 %s9, 1
      %s15 = ssub.s32 %s9, 2
      %s16 = sadd.s32 %s9, 1
      %s17 = ssub.s32 %s9, %s16
      %p18 = scmp.eq.s32.totalorder %s17, 0
      %s20 = sadd.s32 %s19, 1
      %s21 = scalar_select %p18, %s19, %s20
      %p24 = pneg %p18
      %p25 = scmp.eq.s32.totalorder %s9, 1
      %p26 = por %p24, %p25
      %p27 = scmp.ne.s32.totalorder %s19, %s22
      %p28 = scmp.eq.s32.totalorder %s9, 0
      %p29 = por %p27, %p28
      %p30 = scmp.ne.s32.totalorder %s19, %s22
      %p31 = scmp.eq.s32.totalorder %s14, 1
      %p32 = por %p30, %p31
      %p33 = scmp.ne.s32.totalorder %s22, %s23
      %p34 = scmp.eq.s32.totalorder %s14, 0
      %p35 = por %p33, %p34
      %p36 = scmp.ne.s32.totalorder %s22, %s23
      %p37 = scmp.eq.s32.totalorder %s15, 1
      %p38 = por %p36, %p37
      %p40 = scmp.ne.s32.totalorder %s23, %s39
      %p41 = scmp.eq.s32.totalorder %s15, 0
      %p42 = por %p40, %p41
      %s44 = sadd.s32 %s43, 1
      %p47 = scmp.eq.s32.totalorder %s9, 1
      %p48 = scmp.ne.s32.totalorder %s43, %s45
      %p49 = scmp.eq.s32.totalorder %s9, 0
      %p50 = por %p48, %p49
      %p51 = scmp.ne.s32.totalorder %s43, %s45
      %p52 = scmp.eq.s32.totalorder %s14, 1
      %p53 = por %p51, %p52
      %p54 = scmp.ne.s32.totalorder %s45, %s46
      %p55 = scmp.eq.s32.totalorder %s14, 0
      %p56 = por %p54, %p55
      %p57 = scmp.ne.s32.totalorder %s45, %s46
      %p58 = scmp.eq.s32.totalorder %s15, 1
      %p59 = por %p57, %p58
      %p61 = scmp.ne.s32.totalorder %s46, %s60
      %p62 = scmp.eq.s32.totalorder %s15, 0
      %p63 = por %p61, %p62
      %s65 = sadd.s32 %s64, 1
      %p68 = scmp.eq.s32.totalorder %s9, 1
      %p69 = scmp.ne.s32.totalorder %s64, %s66
      %p70 = scmp.eq.s32.totalorder %s9, 0
      %p71 = por %p69, %p70
      %p72 = scmp.ne.s32.totalorder %s64, %s66
      %p73 = scmp.eq.s32.totalorder %s14, 1
      %p74 = por %p72, %p73
      %p75 = scmp.ne.s32.totalorder %s66, %s67
      %p76 = scmp.eq.s32.totalorder %s14, 0
      %p77 = por %p75, %p76
      %p78 = scmp.ne.s32.totalorder %s66, %s67
      %p79 = scmp.eq.s32.totalorder %s15, 1
      %p80 = por %p78, %p79
      %p82 = scmp.ne.s32.totalorder %s67, %s81
      %p83 = scmp.eq.s32.totalorder %s15, 0
      %p84 = por %p82, %p83
      %s85 = ssub.s32 %s9, %s16
      %p86 = scmp.eq.s32.totalorder %s85, 0
      %s88 = sadd.s32 %s87, 1
      %s89 = scalar_select %p86, %s87, %s88
      %p92 = pneg %p86
      %p93 = scmp.eq.s32.totalorder %s9, 1
      %p94 = por %p92, %p93
      %p95 = scmp.ne.s32.totalorder %s87, %s90
      %p96 = scmp.eq.s32.totalorder %s9, 0
      %p97 = por %p95, %p96
      %p98 = scmp.ne.s32.totalorder %s87, %s90
      %p99 = scmp.eq.s32.totalorder %s14, 1
      %p100 = por %p98, %p99
      %p101 = scmp.ne.s32.totalorder %s90, %s91
      %p102 = scmp.eq.s32.totalorder %s14, 0
      %p103 = por %p101, %p102
      %p104 = scmp.ne.s32.totalorder %s90, %s91
      %p105 = scmp.eq.s32.totalorder %s15, 1
      %p106 = por %p104, %p105
      %p108 = scmp.ne.s32.totalorder %s91, %s107
      %p109 = scmp.eq.s32.totalorder %s15, 0
      %p110 = por %p108, %p109
      %p111 = scmp.le.s32.totalorder 1, %s9
      %p112 = scmp.lt.s32.totalorder %s9, 3
      %p113 = pnand %p111, %p112
      %p114 = pneg %p113
      // Predicated region
      $region9: #{simple_cnn_forward.2} parent=5 // pred_check
        _
      $region10: #{simple_cnn_forward.2} parent=5 // pred_check_branch
        %116 = sbr.rel (%p113) target = $region12
      $region11: #{simple_cnn_forward.2} parent=5 // pred_region
        %s117 = ssub.s32 %s9, 1
        // Predicated region
        $region13: #{simple_cnn_forward.2} parent=11 // pred_check
          %p118 = pneg %p56
        $region14: #{simple_cnn_forward.2} parent=11 // pred_check_branch
          %120 = sbr.rel (%p118) target = $region16
        $region15: #{simple_cnn_forward.2} parent=11 // pred_region
          _
        $region16: #{simple_cnn_forward.2} parent=11 // pred_fallthru
          _
        // Predicated region
        $region17: #{simple_cnn_forward.2} parent=11 // pred_check
          %p121 = pneg %p77
        $region18: #{simple_cnn_forward.2} parent=11 // pred_check_branch
          %123 = sbr.rel (%p121) target = $region20
        $region19: #{simple_cnn_forward.2} parent=11 // pred_region
          _
        $region20: #{simple_cnn_forward.2} parent=11 // pred_fallthru
          _
      $region12: #{simple_cnn_forward.2} parent=5 // pred_fallthru
        _
      %p124 = scmp.lt.s32.totalorder %s9, 2
      // Predicated region
      $region21: #{simple_cnn_forward.2} parent=5 // pred_check
        %p125 = pneg %p124
      $region22: #{simple_cnn_forward.2} parent=5 // pred_check_branch
        %127 = sbr.rel (%p125) target = $region24
      $region23: #{simple_cnn_forward.2} parent=5 // pred_region
        // Predicated region
        $region25: #{simple_cnn_forward.2} parent=23 // pred_check
          %p128 = pneg %p29
        $region26: #{simple_cnn_forward.2} parent=23 // pred_check_branch
          %130 = sbr.rel (%p128) target = $region28
        $region27: #{simple_cnn_forward.2} parent=23 // pred_region
          %s131 = sand.u32 %s19, 1
          %s132 = sand.u32 %s19, 1
          %s133 = smul.addr %s132, 512
          %s134 = scalar_lea.vmem [#allocation2], %s133
          %s135 = smul.u32 32, %s9
          %s136 = smul.addr %s135, 4
          %s137 = scalar_lea.vmem %s0, %s136
          // Predicated region
          $region29: #{simple_cnn_forward.2} parent=27 // pred_check
            _
          $region30: #{simple_cnn_forward.2} parent=27 // pred_check_branch
            %139 = sbr.rel (0) target = $region32
          $region31: #{simple_cnn_forward.2} parent=27 // pred_region
            // Predicated region
            $region33: #{simple_cnn_forward.2} parent=31 // pred_check
              _
            $region34: #{simple_cnn_forward.2} parent=31 // pred_check_branch
              %141 = sbr.rel target = $region36
            $region35: #{simple_cnn_forward.2} parent=31 // pred_region
              // Predicated region
              $region48: #{simple_cnn_forward.2} parent=35 // pred_check
                _
              $region49: #{simple_cnn_forward.2} parent=35 // pred_check_branch
                %410 = sbr.rel (0) target = $region51
              $region50: #{simple_cnn_forward.2} parent=35 // pred_region
                loop: start=0, step=1, limit=1
                $region52: #{simple_cnn_forward.2} parent=50 // loop_pre_header
                  _
                $region53: #{simple_cnn_forward.2} parent=50 // loop_header
                  %s412 = sphi 0, %s416
                  %p413 = scmp.ge.s32.totalorder %s412, 1
                  %s417 = sphi %s137, %s137
                  %s418 = sphi %s134, %s134
                $region54: #{simple_cnn_forward.2} parent=50 // loop_header_branch
                  %415 = sbr.rel (%p413) target = $region58
                $region55: #{simple_cnn_forward.2} parent=50 // loop_body
                  _
                $region56: #{simple_cnn_forward.2} parent=50 // loop_footer
                  %s416 = sadd.s32 1, %s412
                $region57: #{simple_cnn_forward.2} parent=50 // loop_footer_branch
                  %411 = sbr.rel target = $region53
                $region58: #{simple_cnn_forward.2} parent=50 // loop_exit
                  _
                loop: start=0, step=1, limit=1
                $region59: #{simple_cnn_forward.2} parent=50 // loop_pre_header
                  _
                $region60: #{simple_cnn_forward.2} parent=50 // loop_header
                  %s421 = sphi 0, %s425
                  %p422 = scmp.ge.s32.totalorder %s421, 1
                  %s426 = sphi %s137, %s137
                  %s427 = sphi %s134, %s134
                $region61: #{simple_cnn_forward.2} parent=50 // loop_header_branch
                  %424 = sbr.rel (%p422) target = $region65
                $region62: #{simple_cnn_forward.2} parent=50 // loop_body
                  %v428 = vld [vmem:[%s426] sm:$0xf]
                  %429 = vst [vmem:[%s427] sm:$0xf] %v428
                  %v430 = vld [vmem:[%s426 + $0x4] sm:$0xf]
                  %431 = vst [vmem:[%s427 + $0x4] sm:$0xf] %v430
                  %v432 = vld [vmem:[%s426 + $0x8] sm:$0xf]
                  %433 = vst [vmem:[%s427 + $0x8] sm:$0xf] %v432
                  %v434 = vld [vmem:[%s426 + $0xc] sm:$0xf]
                  %435 = vst [vmem:[%s427 + $0xc] sm:$0xf] %v434
                  %v436 = vld [vmem:[%s426 + $0x10] sm:$0xf]
                  %437 = vst [vmem:[%s427 + $0x10] sm:$0xf] %v436
                  %v438 = vld [vmem:[%s426 + $0x14] sm:$0xf]
                  %439 = vst [vmem:[%s427 + $0x14] sm:$0xf] %v438
                  %v440 = vld [vmem:[%s426 + $0x18] sm:$0xf]
                  %441 = vst [vmem:[%s427 + $0x18] sm:$0xf] %v440
                  %v442 = vld [vmem:[%s426 + $0x1c] sm:$0xf]
                  %443 = vst [vmem:[%s427 + $0x1c] sm:$0xf] %v442
                  %v444 = vld [vmem:[%s426 + $0x20] sm:$0xf]
                  %445 = vst [vmem:[%s427 + $0x20] sm:$0xf] %v444
                  %v446 = vld [vmem:[%s426 + $0x24] sm:$0xf]
                  %447 = vst [vmem:[%s427 + $0x24] sm:$0xf] %v446
                  %v448 = vld [vmem:[%s426 + $0x28] sm:$0xf]
                  %449 = vst [vmem:[%s427 + $0x28] sm:$0xf] %v448
                  %v450 = vld [vmem:[%s426 + $0x2c] sm:$0xf]
                  %451 = vst [vmem:[%s427 + $0x2c] sm:$0xf] %v450
                  %v452 = vld [vmem:[%s426 + $0x30] sm:$0xf]
                  %453 = vst [vmem:[%s427 + $0x30] sm:$0xf] %v452
                  %v454 = vld [vmem:[%s426 + $0x34] sm:$0xf]
                  %455 = vst [vmem:[%s427 + $0x34] sm:$0xf] %v454
                  %v456 = vld [vmem:[%s426 + $0x38] sm:$0xf]
                  %457 = vst [vmem:[%s427 + $0x38] sm:$0xf] %v456
                  %v458 = vld [vmem:[%s426 + $0x3c] sm:$0xf]
                  %459 = vst [vmem:[%s427 + $0x3c] sm:$0xf] %v458
                  %v460 = vld [vmem:[%s426 + $0x40] sm:$0xf]
                  %461 = vst [vmem:[%s427 + $0x40] sm:$0xf] %v460
                  %v462 = vld [vmem:[%s426 + $0x44] sm:$0xf]
                  %463 = vst [vmem:[%s427 + $0x44] sm:$0xf] %v462
                  %v464 = vld [vmem:[%s426 + $0x48] sm:$0xf]
                  %465 = vst [vmem:[%s427 + $0x48] sm:$0xf] %v464
                  %v466 = vld [vmem:[%s426 + $0x4c] sm:$0xf]
                  %467 = vst [vmem:[%s427 + $0x4c] sm:$0xf] %v466
                  %v468 = vld [vmem:[%s426 + $0x50] sm:$0xf]
                  %469 = vst [vmem:[%s427 + $0x50] sm:$0xf] %v468
                  %v470 = vld [vmem:[%s426 + $0x54] sm:$0xf]
                  %471 = vst [vmem:[%s427 + $0x54] sm:$0xf] %v470
                  %v472 = vld [vmem:[%s426 + $0x58] sm:$0xf]
                  %473 = vst [vmem:[%s427 + $0x58] sm:$0xf] %v472
                  %v474 = vld [vmem:[%s426 + $0x5c] sm:$0xf]
                  %475 = vst [vmem:[%s427 + $0x5c] sm:$0xf] %v474
                  %v476 = vld [vmem:[%s426 + $0x60] sm:$0xf]
                  %477 = vst [vmem:[%s427 + $0x60] sm:$0xf] %v476
                  %v478 = vld [vmem:[%s426 + $0x64] sm:$0xf]
                  %479 = vst [vmem:[%s427 + $0x64] sm:$0xf] %v478
                  %v480 = vld [vmem:[%s426 + $0x68] sm:$0xf]
                  %481 = vst [vmem:[%s427 + $0x68] sm:$0xf] %v480
                  %v482 = vld [vmem:[%s426 + $0x6c] sm:$0xf]
                  %483 = vst [vmem:[%s427 + $0x6c] sm:$0xf] %v482
                  %v484 = vld [vmem:[%s426 + $0x70] sm:$0xf]
                  %485 = vst [vmem:[%s427 + $0x70] sm:$0xf] %v484
                  %v486 = vld [vmem:[%s426 + $0x74] sm:$0xf]
                  %487 = vst [vmem:[%s427 + $0x74] sm:$0xf] %v486
                  %v488 = vld [vmem:[%s426 + $0x78] sm:$0xf]
                  %489 = vst [vmem:[%s427 + $0x78] sm:$0xf] %v488
                  %v490 = vld [vmem:[%s426 + $0x7c] sm:$0xf]
                  %491 = vst [vmem:[%s427 + $0x7c] sm:$0xf] %v490
                  %v492 = vld [vmem:[%s426 + $0x100] sm:$0xf]
                  %493 = vst [vmem:[%s427 + $0x80] sm:$0xf] %v492
                  %v494 = vld [vmem:[%s426 + $0x104] sm:$0xf]
                  %495 = vst [vmem:[%s427 + $0x84] sm:$0xf] %v494
                  %v496 = vld [vmem:[%s426 + $0x108] sm:$0xf]
                  %497 = vst [vmem:[%s427 + $0x88] sm:$0xf] %v496
                  %v498 = vld [vmem:[%s426 + $0x10c] sm:$0xf]
                  %499 = vst [vmem:[%s427 + $0x8c] sm:$0xf] %v498
                  %v500 = vld [vmem:[%s426 + $0x110] sm:$0xf]
                  %501 = vst [vmem:[%s427 + $0x90] sm:$0xf] %v500
                  %v502 = vld [vmem:[%s426 + $0x114] sm:$0xf]
                  %503 = vst [vmem:[%s427 + $0x94] sm:$0xf] %v502
                  %v504 = vld [vmem:[%s426 + $0x118] sm:$0xf]
                  %505 = vst [vmem:[%s427 + $0x98] sm:$0xf] %v504
                  %v506 = vld [vmem:[%s426 + $0x11c] sm:$0xf]
                  %507 = vst [vmem:[%s427 + $0x9c] sm:$0xf] %v506
                  %v508 = vld [vmem:[%s426 + $0x120] sm:$0xf]
                  %509 = vst [vmem:[%s427 + $0xa0] sm:$0xf] %v508
                  %v510 = vld [vmem:[%s426 + $0x124] sm:$0xf]
                  %511 = vst [vmem:[%s427 + $0xa4] sm:$0xf] %v510
                  %v512 = vld [vmem:[%s426 + $0x128] sm:$0xf]
                  %513 = vst [vmem:[%s427 + $0xa8] sm:$0xf] %v512
                  %v514 = vld [vmem:[%s426 + $0x12c] sm:$0xf]
                  %515 = vst [vmem:[%s427 + $0xac] sm:$0xf] %v514
                  %v516 = vld [vmem:[%s426 + $0x130] sm:$0xf]
                  %517 = vst [vmem:[%s427 + $0xb0] sm:$0xf] %v516
                  %v518 = vld [vmem:[%s426 + $0x134] sm:$0xf]
                  %519 = vst [vmem:[%s427 + $0xb4] sm:$0xf] %v518
                  %v520 = vld [vmem:[%s426 + $0x138] sm:$0xf]
                  %521 = vst [vmem:[%s427 + $0xb8] sm:$0xf] %v520
                  %v522 = vld [vmem:[%s426 + $0x13c] sm:$0xf]
                  %523 = vst [vmem:[%s427 + $0xbc] sm:$0xf] %v522
                  %v524 = vld [vmem:[%s426 + $0x140] sm:$0xf]
                  %525 = vst [vmem:[%s427 + $0xc0] sm:$0xf] %v524
                  %v526 = vld [vmem:[%s426 + $0x144] sm:$0xf]
                  %527 = vst [vmem:[%s427 + $0xc4] sm:$0xf] %v526
                  %v528 = vld [vmem:[%s426 + $0x148] sm:$0xf]
                  %529 = vst [vmem:[%s427 + $0xc8] sm:$0xf] %v528
                  %v530 = vld [vmem:[%s426 + $0x14c] sm:$0xf]
                  %531 = vst [vmem:[%s427 + $0xcc] sm:$0xf] %v530
                  %v532 = vld [vmem:[%s426 + $0x150] sm:$0xf]
                  %533 = vst [vmem:[%s427 + $0xd0] sm:$0xf] %v532
                  %v534 = vld [vmem:[%s426 + $0x154] sm:$0xf]
                  %535 = vst [vmem:[%s427 + $0xd4] sm:$0xf] %v534
                  %v536 = vld [vmem:[%s426 + $0x158] sm:$0xf]
                  %537 = vst [vmem:[%s427 + $0xd8] sm:$0xf] %v536
                  %v538 = vld [vmem:[%s426 + $0x15c] sm:$0xf]
                  %539 = vst [vmem:[%s427 + $0xdc] sm:$0xf] %v538
                  %v540 = vld [vmem:[%s426 + $0x160] sm:$0xf]
                  %541 = vst [vmem:[%s427 + $0xe0] sm:$0xf] %v540
                  %v542 = vld [vmem:[%s426 + $0x164] sm:$0xf]
                  %543 = vst [vmem:[%s427 + $0xe4] sm:$0xf] %v542
                  %v544 = vld [vmem:[%s426 + $0x168] sm:$0xf]
                  %545 = vst [vmem:[%s427 + $0xe8] sm:$0xf] %v544
                  %v546 = vld [vmem:[%s426 + $0x16c] sm:$0xf]
                  %547 = vst [vmem:[%s427 + $0xec] sm:$0xf] %v546
                  %v548 = vld [vmem:[%s426 + $0x170] sm:$0xf]
                  %549 = vst [vmem:[%s427 + $0xf0] sm:$0xf] %v548
                  %v550 = vld [vmem:[%s426 + $0x174] sm:$0xf]
                  %551 = vst [vmem:[%s427 + $0xf4] sm:$0xf] %v550
                  %v552 = vld [vmem:[%s426 + $0x178] sm:$0xf]
                  %553 = vst [vmem:[%s427 + $0xf8] sm:$0xf] %v552
                  %v554 = vld [vmem:[%s426 + $0x17c] sm:$0xf]
                  %555 = vst [vmem:[%s427 + $0xfc] sm:$0xf] %v554
                  %v556 = vld [vmem:[%s426 + $0x200] sm:$0xf]
                  %557 = vst [vmem:[%s427 + $0x100] sm:$0xf] %v556
                  %v558 = vld [vmem:[%s426 + $0x204] sm:$0xf]
                  %559 = vst [vmem:[%s427 + $0x104] sm:$0xf] %v558
                  %v560 = vld [vmem:[%s426 + $0x208] sm:$0xf]
                  %561 = vst [vmem:[%s427 + $0x108] sm:$0xf] %v560
                  %v562 = vld [vmem:[%s426 + $0x20c] sm:$0xf]
                  %563 = vst [vmem:[%s427 + $0x10c] sm:$0xf] %v562
                  %v564 = vld [vmem:[%s426 + $0x210] sm:$0xf]
                  %565 = vst [vmem:[%s427 + $0x110] sm:$0xf] %v564
                  %v566 = vld [vmem:[%s426 + $0x214] sm:$0xf]
                  %567 = vst [vmem:[%s427 + $0x114] sm:$0xf] %v566
                  %v568 = vld [vmem:[%s426 + $0x218] sm:$0xf]
                  %569 = vst [vmem:[%s427 + $0x118] sm:$0xf] %v568
                  %v570 = vld [vmem:[%s426 + $0x21c] sm:$0xf]
                  %571 = vst [vmem:[%s427 + $0x11c] sm:$0xf] %v570
                  %v572 = vld [vmem:[%s426 + $0x220] sm:$0xf]
                  %573 = vst [vmem:[%s427 + $0x120] sm:$0xf] %v572
                  %v574 = vld [vmem:[%s426 + $0x224] sm:$0xf]
                  %575 = vst [vmem:[%s427 + $0x124] sm:$0xf] %v574
                  %v576 = vld [vmem:[%s426 + $0x228] sm:$0xf]
                  %577 = vst [vmem:[%s427 + $0x128] sm:$0xf] %v576
                  %v578 = vld [vmem:[%s426 + $0x22c] sm:$0xf]
                  %579 = vst [vmem:[%s427 + $0x12c] sm:$0xf] %v578
                  %v580 = vld [vmem:[%s426 + $0x230] sm:$0xf]
                  %581 = vst [vmem:[%s427 + $0x130] sm:$0xf] %v580
                  %v582 = vld [vmem:[%s426 + $0x234] sm:$0xf]
                  %583 = vst [vmem:[%s427 + $0x134] sm:$0xf] %v582
                  %v584 = vld [vmem:[%s426 + $0x238] sm:$0xf]
                  %585 = vst [vmem:[%s427 + $0x138] sm:$0xf] %v584
                  %v586 = vld [vmem:[%s426 + $0x23c] sm:$0xf]
                  %587 = vst [vmem:[%s427 + $0x13c] sm:$0xf] %v586
                  %v588 = vld [vmem:[%s426 + $0x240] sm:$0xf]
                  %589 = vst [vmem:[%s427 + $0x140] sm:$0xf] %v588
                  %v590 = vld [vmem:[%s426 + $0x244] sm:$0xf]
                  %591 = vst [vmem:[%s427 + $0x144] sm:$0xf] %v590
                  %v592 = vld [vmem:[%s426 + $0x248] sm:$0xf]
                  %593 = vst [vmem:[%s427 + $0x148] sm:$0xf] %v592
                  %v594 = vld [vmem:[%s426 + $0x24c] sm:$0xf]
                  %595 = vst [vmem:[%s427 + $0x14c] sm:$0xf] %v594
                  %v596 = vld [vmem:[%s426 + $0x250] sm:$0xf]
                  %597 = vst [vmem:[%s427 + $0x150] sm:$0xf] %v596
                  %v598 = vld [vmem:[%s426 + $0x254] sm:$0xf]
                  %599 = vst [vmem:[%s427 + $0x154] sm:$0xf] %v598
                  %v600 = vld [vmem:[%s426 + $0x258] sm:$0xf]
                  %601 = vst [vmem:[%s427 + $0x158] sm:$0xf] %v600
                  %v602 = vld [vmem:[%s426 + $0x25c] sm:$0xf]
                  %603 = vst [vmem:[%s427 + $0x15c] sm:$0xf] %v602
                  %v604 = vld [vmem:[%s426 + $0x260] sm:$0xf]
                  %605 = vst [vmem:[%s427 + $0x160] sm:$0xf] %v604
                  %v606 = vld [vmem:[%s426 + $0x264] sm:$0xf]
                  %607 = vst [vmem:[%s427 + $0x164] sm:$0xf] %v606
                  %v608 = vld [vmem:[%s426 + $0x268] sm:$0xf]
                  %609 = vst [vmem:[%s427 + $0x168] sm:$0xf] %v608
                  %v610 = vld [vmem:[%s426 + $0x26c] sm:$0xf]
                  %611 = vst [vmem:[%s427 + $0x16c] sm:$0xf] %v610
                  %v612 = vld [vmem:[%s426 + $0x270] sm:$0xf]
                  %613 = vst [vmem:[%s427 + $0x170] sm:$0xf] %v612
                  %v614 = vld [vmem:[%s426 + $0x274] sm:$0xf]
                  %615 = vst [vmem:[%s427 + $0x174] sm:$0xf] %v614
                  %v616 = vld [vmem:[%s426 + $0x278] sm:$0xf]
                  %617 = vst [vmem:[%s427 + $0x178] sm:$0xf] %v616
                  %v618 = vld [vmem:[%s426 + $0x27c] sm:$0xf]
                  %619 = vst [vmem:[%s427 + $0x17c] sm:$0xf] %v618
                  %v620 = vld [vmem:[%s426 + $0x300] sm:$0xf]
                  %621 = vst [vmem:[%s427 + $0x180] sm:$0xf] %v620
                  %v622 = vld [vmem:[%s426 + $0x304] sm:$0xf]
                  %623 = vst [vmem:[%s427 + $0x184] sm:$0xf] %v622
                  %v624 = vld [vmem:[%s426 + $0x308] sm:$0xf]
                  %625 = vst [vmem:[%s427 + $0x188] sm:$0xf] %v624
                  %v626 = vld [vmem:[%s426 + $0x30c] sm:$0xf]
                  %627 = vst [vmem:[%s427 + $0x18c] sm:$0xf] %v626
                  %v628 = vld [vmem:[%s426 + $0x310] sm:$0xf]
                  %629 = vst [vmem:[%s427 + $0x190] sm:$0xf] %v628
                  %v630 = vld [vmem:[%s426 + $0x314] sm:$0xf]
                  %631 = vst [vmem:[%s427 + $0x194] sm:$0xf] %v630
                  %v632 = vld [vmem:[%s426 + $0x318] sm:$0xf]
                  %633 = vst [vmem:[%s427 + $0x198] sm:$0xf] %v632
                  %v634 = vld [vmem:[%s426 + $0x31c] sm:$0xf]
                  %635 = vst [vmem:[%s427 + $0x19c] sm:$0xf] %v634
                  %v636 = vld [vmem:[%s426 + $0x320] sm:$0xf]
                  %637 = vst [vmem:[%s427 + $0x1a0] sm:$0xf] %v636
                  %v638 = vld [vmem:[%s426 + $0x324] sm:$0xf]
                  %639 = vst [vmem:[%s427 + $0x1a4] sm:$0xf] %v638
                  %v640 = vld [vmem:[%s426 + $0x328] sm:$0xf]
                  %641 = vst [vmem:[%s427 + $0x1a8] sm:$0xf] %v640
                  %v642 = vld [vmem:[%s426 + $0x32c] sm:$0xf]
                  %643 = vst [vmem:[%s427 + $0x1ac] sm:$0xf] %v642
                  %v644 = vld [vmem:[%s426 + $0x330] sm:$0xf]
                  %645 = vst [vmem:[%s427 + $0x1b0] sm:$0xf] %v644
                  %v646 = vld [vmem:[%s426 + $0x334] sm:$0xf]
                  %647 = vst [vmem:[%s427 + $0x1b4] sm:$0xf] %v646
                  %v648 = vld [vmem:[%s426 + $0x338] sm:$0xf]
                  %649 = vst [vmem:[%s427 + $0x1b8] sm:$0xf] %v648
                  %v650 = vld [vmem:[%s426 + $0x33c] sm:$0xf]
                  %651 = vst [vmem:[%s427 + $0x1bc] sm:$0xf] %v650
                  %v652 = vld [vmem:[%s426 + $0x340] sm:$0xf]
                  %653 = vst [vmem:[%s427 + $0x1c0] sm:$0xf] %v652
                  %v654 = vld [vmem:[%s426 + $0x344] sm:$0xf]
                  %655 = vst [vmem:[%s427 + $0x1c4] sm:$0xf] %v654
                  %v656 = vld [vmem:[%s426 + $0x348] sm:$0xf]
                  %657 = vst [vmem:[%s427 + $0x1c8] sm:$0xf] %v656
                  %v658 = vld [vmem:[%s426 + $0x34c] sm:$0xf]
                  %659 = vst [vmem:[%s427 + $0x1cc] sm:$0xf] %v658
                  %v660 = vld [vmem:[%s426 + $0x350] sm:$0xf]
                  %661 = vst [vmem:[%s427 + $0x1d0] sm:$0xf] %v660
                  %v662 = vld [vmem:[%s426 + $0x354] sm:$0xf]
                  %663 = vst [vmem:[%s427 + $0x1d4] sm:$0xf] %v662
                  %v664 = vld [vmem:[%s426 + $0x358] sm:$0xf]
                  %665 = vst [vmem:[%s427 + $0x1d8] sm:$0xf] %v664
                  %v666 = vld [vmem:[%s426 + $0x35c] sm:$0xf]
                  %667 = vst [vmem:[%s427 + $0x1dc] sm:$0xf] %v666
                  %v668 = vld [vmem:[%s426 + $0x360] sm:$0xf]
                  %669 = vst [vmem:[%s427 + $0x1e0] sm:$0xf] %v668
                  %v670 = vld [vmem:[%s426 + $0x364] sm:$0xf]
                  %671 = vst [vmem:[%s427 + $0x1e4] sm:$0xf] %v670
                  %v672 = vld [vmem:[%s426 + $0x368] sm:$0xf]
                  %673 = vst [vmem:[%s427 + $0x1e8] sm:$0xf] %v672
                  %v674 = vld [vmem:[%s426 + $0x36c] sm:$0xf]
                  %675 = vst [vmem:[%s427 + $0x1ec] sm:$0xf] %v674
                  %v676 = vld [vmem:[%s426 + $0x370] sm:$0xf]
                  %677 = vst [vmem:[%s427 + $0x1f0] sm:$0xf] %v676
                  %v678 = vld [vmem:[%s426 + $0x374] sm:$0xf]
                  %679 = vst [vmem:[%s427 + $0x1f4] sm:$0xf] %v678
                  %v680 = vld [vmem:[%s426 + $0x378] sm:$0xf]
                  %681 = vst [vmem:[%s427 + $0x1f8] sm:$0xf] %v680
                  %v682 = vld [vmem:[%s426 + $0x37c] sm:$0xf]
                  %683 = vst [vmem:[%s427 + $0x1fc] sm:$0xf] %v682
                $region63: #{simple_cnn_forward.2} parent=50 // loop_footer
                  %s425 = sadd.s32 1, %s421
                $region64: #{simple_cnn_forward.2} parent=50 // loop_footer_branch
                  %420 = sbr.rel target = $region60
                $region65: #{simple_cnn_forward.2} parent=50 // loop_exit
                  _
              $region51: #{simple_cnn_forward.2} parent=35 // pred_fallthru
                _
            $region36: #{simple_cnn_forward.2} parent=31 // pred_fallthru
              _
            // Predicated region
            $region37: #{simple_cnn_forward.2} parent=31 // pred_check
              _
            $region38: #{simple_cnn_forward.2} parent=31 // pred_check_branch
              %143 = sbr.rel (0) target = $region40
            $region39: #{simple_cnn_forward.2} parent=31 // pred_region
              loop: start=0, step=1, limit=1
              $region41: #{simple_cnn_forward.2} parent=39 // loop_pre_header
                _
              $region42: #{simple_cnn_forward.2} parent=39 // loop_header
                %s146 = sphi 0, %s150
                %p147 = scmp.ge.s32.totalorder %s146, 1
                %s151 = sphi %s137, %s137
                %s152 = sphi %s134, %s134
              $region43: #{simple_cnn_forward.2} parent=39 // loop_header_branch
                %149 = sbr.rel (%p147) target = $region47
              $region44: #{simple_cnn_forward.2} parent=39 // loop_body
                %v153 = vld [vmem:[%s151] sm:$0xf]
                %154 = vst [vmem:[%s152] sm:$0xf] %v153
                %v155 = vld [vmem:[%s151 + $0x4] sm:$0xf]
                %156 = vst [vmem:[%s152 + $0x4] sm:$0xf] %v155
                %v157 = vld [vmem:[%s151 + $0x8] sm:$0xf]
                %158 = vst [vmem:[%s152 + $0x8] sm:$0xf] %v157
                %v159 = vld [vmem:[%s151 + $0xc] sm:$0xf]
                %160 = vst [vmem:[%s152 + $0xc] sm:$0xf] %v159
                %v161 = vld [vmem:[%s151 + $0x10] sm:$0xf]
                %162 = vst [vmem:[%s152 + $0x10] sm:$0xf] %v161
                %v163 = vld [vmem:[%s151 + $0x14] sm:$0xf]
                %164 = vst [vmem:[%s152 + $0x14] sm:$0xf] %v163
                %v165 = vld [vmem:[%s151 + $0x18] sm:$0xf]
                %166 = vst [vmem:[%s152 + $0x18] sm:$0xf] %v165
                %v167 = vld [vmem:[%s151 + $0x1c] sm:$0xf]
                %168 = vst [vmem:[%s152 + $0x1c] sm:$0xf] %v167
                %v169 = vld [vmem:[%s151 + $0x20] sm:$0xf]
                %170 = vst [vmem:[%s152 + $0x20] sm:$0xf] %v169
                %v171 = vld [vmem:[%s151 + $0x24] sm:$0xf]
                %172 = vst [vmem:[%s152 + $0x24] sm:$0xf] %v171
                %v173 = vld [vmem:[%s151 + $0x28] sm:$0xf]
                %174 = vst [vmem:[%s152 + $0x28] sm:$0xf] %v173
                %v175 = vld [vmem:[%s151 + $0x2c] sm:$0xf]
                %176 = vst [vmem:[%s152 + $0x2c] sm:$0xf] %v175
                %v177 = vld [vmem:[%s151 + $0x30] sm:$0xf]
                %178 = vst [vmem:[%s152 + $0x30] sm:$0xf] %v177
                %v179 = vld [vmem:[%s151 + $0x34] sm:$0xf]
                %180 = vst [vmem:[%s152 + $0x34] sm:$0xf] %v179
                %v181 = vld [vmem:[%s151 + $0x38] sm:$0xf]
                %182 = vst [vmem:[%s152 + $0x38] sm:$0xf] %v181
                %v183 = vld [vmem:[%s151 + $0x3c] sm:$0xf]
                %184 = vst [vmem:[%s152 + $0x3c] sm:$0xf] %v183
                %v185 = vld [vmem:[%s151 + $0x40] sm:$0xf]
                %186 = vst [vmem:[%s152 + $0x40] sm:$0xf] %v185
                %v187 = vld [vmem:[%s151 + $0x44] sm:$0xf]
                %188 = vst [vmem:[%s152 + $0x44] sm:$0xf] %v187
                %v189 = vld [vmem:[%s151 + $0x48] sm:$0xf]
                %190 = vst [vmem:[%s152 + $0x48] sm:$0xf] %v189
                %v191 = vld [vmem:[%s151 + $0x4c] sm:$0xf]
                %192 = vst [vmem:[%s152 + $0x4c] sm:$0xf] %v191
                %v193 = vld [vmem:[%s151 + $0x50] sm:$0xf]
                %194 = vst [vmem:[%s152 + $0x50] sm:$0xf] %v193
                %v195 = vld [vmem:[%s151 + $0x54] sm:$0xf]
                %196 = vst [vmem:[%s152 + $0x54] sm:$0xf] %v195
                %v197 = vld [vmem:[%s151 + $0x58] sm:$0xf]
                %198 = vst [vmem:[%s152 + $0x58] sm:$0xf] %v197
                %v199 = vld [vmem:[%s151 + $0x5c] sm:$0xf]
                %200 = vst [vmem:[%s152 + $0x5c] sm:$0xf] %v199
                %v201 = vld [vmem:[%s151 + $0x60] sm:$0xf]
                %202 = vst [vmem:[%s152 + $0x60] sm:$0xf] %v201
                %v203 = vld [vmem:[%s151 + $0x64] sm:$0xf]
                %204 = vst [vmem:[%s152 + $0x64] sm:$0xf] %v203
                %v205 = vld [vmem:[%s151 + $0x68] sm:$0xf]
                %206 = vst [vmem:[%s152 + $0x68] sm:$0xf] %v205
                %v207 = vld [vmem:[%s151 + $0x6c] sm:$0xf]
                %208 = vst [vmem:[%s152 + $0x6c] sm:$0xf] %v207
                %v209 = vld [vmem:[%s151 + $0x70] sm:$0xf]
                %210 = vst [vmem:[%s152 + $0x70] sm:$0xf] %v209
                %v211 = vld [vmem:[%s151 + $0x74] sm:$0xf]
                %212 = vst [vmem:[%s152 + $0x74] sm:$0xf] %v211
                %v213 = vld [vmem:[%s151 + $0x78] sm:$0xf]
                %214 = vst [vmem:[%s152 + $0x78] sm:$0xf] %v213
                %v215 = vld [vmem:[%s151 + $0x7c] sm:$0xf]
                %216 = vst [vmem:[%s152 + $0x7c] sm:$0xf] %v215
                %v217 = vld [vmem:[%s151 + $0x100] sm:$0xf]
                %218 = vst [vmem:[%s152 + $0x80] sm:$0xf] %v217
                %v219 = vld [vmem:[%s151 + $0x104] sm:$0xf]
                %220 = vst [vmem:[%s152 + $0x84] sm:$0xf] %v219
                %v221 = vld [vmem:[%s151 + $0x108] sm:$0xf]
                %222 = vst [vmem:[%s152 + $0x88] sm:$0xf] %v221
                %v223 = vld [vmem:[%s151 + $0x10c] sm:$0xf]
                %224 = vst [vmem:[%s152 + $0x8c] sm:$0xf] %v223
                %v225 = vld [vmem:[%s151 + $0x110] sm:$0xf]
                %226 = vst [vmem:[%s152 + $0x90] sm:$0xf] %v225
                %v227 = vld [vmem:[%s151 + $0x114] sm:$0xf]
                %228 = vst [vmem:[%s152 + $0x94] sm:$0xf] %v227
                %v229 = vld [vmem:[%s151 + $0x118] sm:$0xf]
                %230 = vst [vmem:[%s152 + $0x98] sm:$0xf] %v229
                %v231 = vld [vmem:[%s151 + $0x11c] sm:$0xf]
                %232 = vst [vmem:[%s152 + $0x9c] sm:$0xf] %v231
                %v233 = vld [vmem:[%s151 + $0x120] sm:$0xf]
                %234 = vst [vmem:[%s152 + $0xa0] sm:$0xf] %v233
                %v235 = vld [vmem:[%s151 + $0x124] sm:$0xf]
                %236 = vst [vmem:[%s152 + $0xa4] sm:$0xf] %v235
                %v237 = vld [vmem:[%s151 + $0x128] sm:$0xf]
                %238 = vst [vmem:[%s152 + $0xa8] sm:$0xf] %v237
                %v239 = vld [vmem:[%s151 + $0x12c] sm:$0xf]
                %240 = vst [vmem:[%s152 + $0xac] sm:$0xf] %v239
                %v241 = vld [vmem:[%s151 + $0x130] sm:$0xf]
                %242 = vst [vmem:[%s152 + $0xb0] sm:$0xf] %v241
                %v243 = vld [vmem:[%s151 + $0x134] sm:$0xf]
                %244 = vst [vmem:[%s152 + $0xb4] sm:$0xf] %v243
                %v245 = vld [vmem:[%s151 + $0x138] sm:$0xf]
                %246 = vst [vmem:[%s152 + $0xb8] sm:$0xf] %v245
                %v247 = vld [vmem:[%s151 + $0x13c] sm:$0xf]
                %248 = vst [vmem:[%s152 + $0xbc] sm:$0xf] %v247
                %v249 = vld [vmem:[%s151 + $0x140] sm:$0xf]
                %250 = vst [vmem:[%s152 + $0xc0] sm:$0xf] %v249
                %v251 = vld [vmem:[%s151 + $0x144] sm:$0xf]
                %252 = vst [vmem:[%s152 + $0xc4] sm:$0xf] %v251
                %v253 = vld [vmem:[%s151 + $0x148] sm:$0xf]
                %254 = vst [vmem:[%s152 + $0xc8] sm:$0xf] %v253
                %v255 = vld [vmem:[%s151 + $0x14c] sm:$0xf]
                %256 = vst [vmem:[%s152 + $0xcc] sm:$0xf] %v255
                %v257 = vld [vmem:[%s151 + $0x150] sm:$0xf]
                %258 = vst [vmem:[%s152 + $0xd0] sm:$0xf] %v257
                %v259 = vld [vmem:[%s151 + $0x154] sm:$0xf]
                %260 = vst [vmem:[%s152 + $0xd4] sm:$0xf] %v259
                %v261 = vld [vmem:[%s151 + $0x158] sm:$0xf]
                %262 = vst [vmem:[%s152 + $0xd8] sm:$0xf] %v261
                %v263 = vld [vmem:[%s151 + $0x15c] sm:$0xf]
                %264 = vst [vmem:[%s152 + $0xdc] sm:$0xf] %v263
                %v265 = vld [vmem:[%s151 + $0x160] sm:$0xf]
                %266 = vst [vmem:[%s152 + $0xe0] sm:$0xf] %v265
                %v267 = vld [vmem:[%s151 + $0x164] sm:$0xf]
                %268 = vst [vmem:[%s152 + $0xe4] sm:$0xf] %v267
                %v269 = vld [vmem:[%s151 + $0x168] sm:$0xf]
                %270 = vst [vmem:[%s152 + $0xe8] sm:$0xf] %v269
                %v271 = vld [vmem:[%s151 + $0x16c] sm:$0xf]
                %272 = vst [vmem:[%s152 + $0xec] sm:$0xf] %v271
                %v273 = vld [vmem:[%s151 + $0x170] sm:$0xf]
                %274 = vst [vmem:[%s152 + $0xf0] sm:$0xf] %v273
                %v275 = vld [vmem:[%s151 + $0x174] sm:$0xf]
                %276 = vst [vmem:[%s152 + $0xf4] sm:$0xf] %v275
                %v277 = vld [vmem:[%s151 + $0x178] sm:$0xf]
                %278 = vst [vmem:[%s152 + $0xf8] sm:$0xf] %v277
                %v279 = vld [vmem:[%s151 + $0x17c] sm:$0xf]
                %280 = vst [vmem:[%s152 + $0xfc] sm:$0xf] %v279
                %v281 = vld [vmem:[%s151 + $0x200] sm:$0xf]
                %282 = vst [vmem:[%s152 + $0x100] sm:$0xf] %v281
                %v283 = vld [vmem:[%s151 + $0x204] sm:$0xf]
                %284 = vst [vmem:[%s152 + $0x104] sm:$0xf] %v283
                %v285 = vld [vmem:[%s151 + $0x208] sm:$0xf]
                %286 = vst [vmem:[%s152 + $0x108] sm:$0xf] %v285
                %v287 = vld [vmem:[%s151 + $0x20c] sm:$0xf]
                %288 = vst [vmem:[%s152 + $0x10c] sm:$0xf] %v287
                %v289 = vld [vmem:[%s151 + $0x210] sm:$0xf]
                %290 = vst [vmem:[%s152 + $0x110] sm:$0xf] %v289
                %v291 = vld [vmem:[%s151 + $0x214] sm:$0xf]
                %292 = vst [vmem:[%s152 + $0x114] sm:$0xf] %v291
                %v293 = vld [vmem:[%s151 + $0x218] sm:$0xf]
                %294 = vst [vmem:[%s152 + $0x118] sm:$0xf] %v293
                %v295 = vld [vmem:[%s151 + $0x21c] sm:$0xf]
                %296 = vst [vmem:[%s152 + $0x11c] sm:$0xf] %v295
                %v297 = vld [vmem:[%s151 + $0x220] sm:$0xf]
                %298 = vst [vmem:[%s152 + $0x120] sm:$0xf] %v297
                %v299 = vld [vmem:[%s151 + $0x224] sm:$0xf]
                %300 = vst [vmem:[%s152 + $0x124] sm:$0xf] %v299
                %v301 = vld [vmem:[%s151 + $0x228] sm:$0xf]
                %302 = vst [vmem:[%s152 + $0x128] sm:$0xf] %v301
                %v303 = vld [vmem:[%s151 + $0x22c] sm:$0xf]
                %304 = vst [vmem:[%s152 + $0x12c] sm:$0xf] %v303
                %v305 = vld [vmem:[%s151 + $0x230] sm:$0xf]
                %306 = vst [vmem:[%s152 + $0x130] sm:$0xf] %v305
                %v307 = vld [vmem:[%s151 + $0x234] sm:$0xf]
                %308 = vst [vmem:[%s152 + $0x134] sm:$0xf] %v307
                %v309 = vld [vmem:[%s151 + $0x238] sm:$0xf]
                %310 = vst [vmem:[%s152 + $0x138] sm:$0xf] %v309
                %v311 = vld [vmem:[%s151 + $0x23c] sm:$0xf]
                %312 = vst [vmem:[%s152 + $0x13c] sm:$0xf] %v311
                %v313 = vld [vmem:[%s151 + $0x240] sm:$0xf]
                %314 = vst [vmem:[%s152 + $0x140] sm:$0xf] %v313
                %v315 = vld [vmem:[%s151 + $0x244] sm:$0xf]
                %316 = vst [vmem:[%s152 + $0x144] sm:$0xf] %v315
                %v317 = vld [vmem:[%s151 + $0x248] sm:$0xf]
                %318 = vst [vmem:[%s152 + $0x148] sm:$0xf] %v317
                %v319 = vld [vmem:[%s151 + $0x24c] sm:$0xf]
                %320 = vst [vmem:[%s152 + $0x14c] sm:$0xf] %v319
                %v321 = vld [vmem:[%s151 + $0x250] sm:$0xf]
                %322 = vst [vmem:[%s152 + $0x150] sm:$0xf] %v321
                %v323 = vld [vmem:[%s151 + $0x254] sm:$0xf]
                %324 = vst [vmem:[%s152 + $0x154] sm:$0xf] %v323
                %v325 = vld [vmem:[%s151 + $0x258] sm:$0xf]
                %326 = vst [vmem:[%s152 + $0x158] sm:$0xf] %v325
                %v327 = vld [vmem:[%s151 + $0x25c] sm:$0xf]
                %328 = vst [vmem:[%s152 + $0x15c] sm:$0xf] %v327
                %v329 = vld [vmem:[%s151 + $0x260] sm:$0xf]
                %330 = vst [vmem:[%s152 + $0x160] sm:$0xf] %v329
                %v331 = vld [vmem:[%s151 + $0x264] sm:$0xf]
                %332 = vst [vmem:[%s152 + $0x164] sm:$0xf] %v331
                %v333 = vld [vmem:[%s151 + $0x268] sm:$0xf]
                %334 = vst [vmem:[%s152 + $0x168] sm:$0xf] %v333
                %v335 = vld [vmem:[%s151 + $0x26c] sm:$0xf]
                %336 = vst [vmem:[%s152 + $0x16c] sm:$0xf] %v335
                %v337 = vld [vmem:[%s151 + $0x270] sm:$0xf]
                %338 = vst [vmem:[%s152 + $0x170] sm:$0xf] %v337
                %v339 = vld [vmem:[%s151 + $0x274] sm:$0xf]
                %340 = vst [vmem:[%s152 + $0x174] sm:$0xf] %v339
                %v341 = vld [vmem:[%s151 + $0x278] sm:$0xf]
                %342 = vst [vmem:[%s152 + $0x178] sm:$0xf] %v341
                %v343 = vld [vmem:[%s151 + $0x27c] sm:$0xf]
                %344 = vst [vmem:[%s152 + $0x17c] sm:$0xf] %v343
                %v345 = vld [vmem:[%s151 + $0x300] sm:$0xf]
                %346 = vst [vmem:[%s152 + $0x180] sm:$0xf] %v345
                %v347 = vld [vmem:[%s151 + $0x304] sm:$0xf]
                %348 = vst [vmem:[%s152 + $0x184] sm:$0xf] %v347
                %v349 = vld [vmem:[%s151 + $0x308] sm:$0xf]
                %350 = vst [vmem:[%s152 + $0x188] sm:$0xf] %v349
                %v351 = vld [vmem:[%s151 + $0x30c] sm:$0xf]
                %352 = vst [vmem:[%s152 + $0x18c] sm:$0xf] %v351
                %v353 = vld [vmem:[%s151 + $0x310] sm:$0xf]
                %354 = vst [vmem:[%s152 + $0x190] sm:$0xf] %v353
                %v355 = vld [vmem:[%s151 + $0x314] sm:$0xf]
                %356 = vst [vmem:[%s152 + $0x194] sm:$0xf] %v355
                %v357 = vld [vmem:[%s151 + $0x318] sm:$0xf]
                %358 = vst [vmem:[%s152 + $0x198] sm:$0xf] %v357
                %v359 = vld [vmem:[%s151 + $0x31c] sm:$0xf]
                %360 = vst [vmem:[%s152 + $0x19c] sm:$0xf] %v359
                %v361 = vld [vmem:[%s151 + $0x320] sm:$0xf]
                %362 = vst [vmem:[%s152 + $0x1a0] sm:$0xf] %v361
                %v363 = vld [vmem:[%s151 + $0x324] sm:$0xf]
                %364 = vst [vmem:[%s152 + $0x1a4] sm:$0xf] %v363
                %v365 = vld [vmem:[%s151 + $0x328] sm:$0xf]
                %366 = vst [vmem:[%s152 + $0x1a8] sm:$0xf] %v365
                %v367 = vld [vmem:[%s151 + $0x32c] sm:$0xf]
                %368 = vst [vmem:[%s152 + $0x1ac] sm:$0xf] %v367
                %v369 = vld [vmem:[%s151 + $0x330] sm:$0xf]
                %370 = vst [vmem:[%s152 + $0x1b0] sm:$0xf] %v369
                %v371 = vld [vmem:[%s151 + $0x334] sm:$0xf]
                %372 = vst [vmem:[%s152 + $0x1b4] sm:$0xf] %v371
                %v373 = vld [vmem:[%s151 + $0x338] sm:$0xf]
                %374 = vst [vmem:[%s152 + $0x1b8] sm:$0xf] %v373
                %v375 = vld [vmem:[%s151 + $0x33c] sm:$0xf]
                %376 = vst [vmem:[%s152 + $0x1bc] sm:$0xf] %v375
                %v377 = vld [vmem:[%s151 + $0x340] sm:$0xf]
                %378 = vst [vmem:[%s152 + $0x1c0] sm:$0xf] %v377
                %v379 = vld [vmem:[%s151 + $0x344] sm:$0xf]
                %380 = vst [vmem:[%s152 + $0x1c4] sm:$0xf] %v379
                %v381 = vld [vmem:[%s151 + $0x348] sm:$0xf]
                %382 = vst [vmem:[%s152 + $0x1c8] sm:$0xf] %v381
                %v383 = vld [vmem:[%s151 + $0x34c] sm:$0xf]
                %384 = vst [vmem:[%s152 + $0x1cc] sm:$0xf] %v383
                %v385 = vld [vmem:[%s151 + $0x350] sm:$0xf]
                %386 = vst [vmem:[%s152 + $0x1d0] sm:$0xf] %v385
                %v387 = vld [vmem:[%s151 + $0x354] sm:$0xf]
                %388 = vst [vmem:[%s152 + $0x1d4] sm:$0xf] %v387
                %v389 = vld [vmem:[%s151 + $0x358] sm:$0xf]
                %390 = vst [vmem:[%s152 + $0x1d8] sm:$0xf] %v389
                %v391 = vld [vmem:[%s151 + $0x35c] sm:$0xf]
                %392 = vst [vmem:[%s152 + $0x1dc] sm:$0xf] %v391
                %v393 = vld [vmem:[%s151 + $0x360] sm:$0xf]
                %394 = vst [vmem:[%s152 + $0x1e0] sm:$0xf] %v393
                %v395 = vld [vmem:[%s151 + $0x364] sm:$0xf]
                %396 = vst [vmem:[%s152 + $0x1e4] sm:$0xf] %v395
                %v397 = vld [vmem:[%s151 + $0x368] sm:$0xf]
                %398 = vst [vmem:[%s152 + $0x1e8] sm:$0xf] %v397
                %v399 = vld [vmem:[%s151 + $0x36c] sm:$0xf]
                %400 = vst [vmem:[%s152 + $0x1ec] sm:$0xf] %v399
                %v401 = vld [vmem:[%s151 + $0x370] sm:$0xf]
                %402 = vst [vmem:[%s152 + $0x1f0] sm:$0xf] %v401
                %v403 = vld [vmem:[%s151 + $0x374] sm:$0xf]
                %404 = vst [vmem:[%s152 + $0x1f4] sm:$0xf] %v403
                %v405 = vld [vmem:[%s151 + $0x378] sm:$0xf]
                %406 = vst [vmem:[%s152 + $0x1f8] sm:$0xf] %v405
                %v407 = vld [vmem:[%s151 + $0x37c] sm:$0xf]
                %408 = vst [vmem:[%s152 + $0x1fc] sm:$0xf] %v407
              $region45: #{simple_cnn_forward.2} parent=39 // loop_footer
                %s150 = sadd.s32 1, %s146
              $region46: #{simple_cnn_forward.2} parent=39 // loop_footer_branch
                %145 = sbr.rel target = $region42
              $region47: #{simple_cnn_forward.2} parent=39 // loop_exit
                _
            $region40: #{simple_cnn_forward.2} parent=31 // pred_fallthru
              _
          $region32: #{simple_cnn_forward.2} parent=27 // pred_fallthru
            _
          %684 = vnop
        $region28: #{simple_cnn_forward.2} parent=23 // pred_fallthru
          _
      $region24: #{simple_cnn_forward.2} parent=5 // pred_fallthru
        _
      %p685 = scmp.le.s32.totalorder 1, %s9
      %p686 = scmp.lt.s32.totalorder %s9, 3
      %p687 = pnand %p685, %p686
      %p688 = pneg %p687
      // Predicated region
      $region66: #{simple_cnn_forward.2} parent=5 // pred_check
        _
      $region67: #{simple_cnn_forward.2} parent=5 // pred_check_branch
        %690 = sbr.rel (%p687) target = $region69
      $region68: #{simple_cnn_forward.2} parent=5 // pred_region
        %s691 = ssub.s32 %s9, 1
        %s692 = sand.u32 %s22, 1
        %s693 = sand.u32 %s22, 1
        %s694 = smul.addr %s693, 512
        %s695 = scalar_lea.vmem [#allocation2], %s694
        // Predicated region
        $region70: #{simple_cnn_forward.2} parent=68 // pred_check
          %p696 = pneg %p35
        $region71: #{simple_cnn_forward.2} parent=68 // pred_check_branch
          %698 = sbr.rel (%p696) target = $region73
        $region72: #{simple_cnn_forward.2} parent=68 // pred_region
          _
        $region73: #{simple_cnn_forward.2} parent=68 // pred_fallthru
          _
        %s699 = sand.u32 %s22, 1
        %s700 = sand.u32 %s22, 1
        %s701 = smul.addr %s700, 512
        %s702 = scalar_lea.vmem [#allocation2], %s701
        %p703 = pneg %p35
        %p704 = pneg %p32
        %p705 = pneg %p56
        %p706 = pneg %p53
        %p707 = pneg %p77
        %p708 = pneg %p74
        %p709 = pneg %p103
        %p710 = pneg %p100
        %s711 = smul.u32 32, %s14
        %p712 = scmp.lt.s32.totalorder %s711, 63
        %s713 = scalar_select %p712, %s711, 63
        %s714 = smul.addr %s713, 4
        %s715 = scalar_lea.vmem %s3, %s714
        %s716 = smul.u32 32, %s14
        %s717 = smul.u32 32, %s14
        %p718 = scmp.lt.s32.totalorder %s717, 63
        %s719 = scalar_select %p718, %s717, 63
        %s720 = smul.addr %s719, 4
        %s721 = scalar_lea.vmem %s3, %s720
        %s722 = smul.u32 32, %s14
        %v724 = vld [vmem:[%s695] sm:$0xf]
        %v725 = vld [vmem:[%s695 + $0x4] sm:$0xf]
        %v726 = vld [vmem:[%s695 + $0x8] sm:$0xf]
        %v727 = vld [vmem:[%s695 + $0xc] sm:$0xf]
        %v728 = vld [vmem:[%s695 + $0x10] sm:$0xf]
        %v729 = vld [vmem:[%s695 + $0x14] sm:$0xf]
        %v730 = vld [vmem:[%s695 + $0x18] sm:$0xf]
        %v731 = vld [vmem:[%s695 + $0x1c] sm:$0xf]
        %v732 = vld [vmem:[%s695 + $0x20] sm:$0xf]
        %v733 = vld [vmem:[%s695 + $0x24] sm:$0xf]
        %v734 = vld [vmem:[%s695 + $0x28] sm:$0xf]
        %v735 = vld [vmem:[%s695 + $0x2c] sm:$0xf]
        %v736 = vld [vmem:[%s695 + $0x30] sm:$0xf]
        %v737 = vld [vmem:[%s695 + $0x34] sm:$0xf]
        %v738 = vld [vmem:[%s695 + $0x38] sm:$0xf]
        %v739 = vld [vmem:[%s695 + $0x3c] sm:$0xf]
        %v740 = vld [vmem:[%s695 + $0x40] sm:$0xf]
        %v741 = vld [vmem:[%s695 + $0x44] sm:$0xf]
        %v742 = vld [vmem:[%s695 + $0x48] sm:$0xf]
        %v743 = vld [vmem:[%s695 + $0x4c] sm:$0xf]
        %v744 = vld [vmem:[%s695 + $0x50] sm:$0xf]
        %v745 = vld [vmem:[%s695 + $0x54] sm:$0xf]
        %v746 = vld [vmem:[%s695 + $0x58] sm:$0xf]
        %v747 = vld [vmem:[%s695 + $0x5c] sm:$0xf]
        %v748 = vld [vmem:[%s695 + $0x60] sm:$0xf]
        %v749 = vld [vmem:[%s695 + $0x64] sm:$0xf]
        %v750 = vld [vmem:[%s695 + $0x68] sm:$0xf]
        %v751 = vld [vmem:[%s695 + $0x6c] sm:$0xf]
        %v752 = vld [vmem:[%s695 + $0x70] sm:$0xf]
        %v753 = vld [vmem:[%s695 + $0x74] sm:$0xf]
        %v754 = vld [vmem:[%s695 + $0x78] sm:$0xf]
        %v755 = vld [vmem:[%s695 + $0x7c] sm:$0xf]
        %v756 = vld [vmem:[%s1] sm:$0xf]
        %v757 = vld [vmem:[%s1 + $0x4] sm:$0xf]
        %v758 = vld [vmem:[%s1 + $0x8] sm:$0xf]
        %v759 = vld [vmem:[%s1 + $0xc] sm:$0xf]
        %v760 = vld [vmem:[%s1 + $0x10] sm:$0xf]
        %v761 = vld [vmem:[%s1 + $0x14] sm:$0xf]
        %v762 = vld [vmem:[%s1 + $0x18] sm:$0xf]
        %v763 = vld [vmem:[%s1 + $0x1c] sm:$0xf]
        %v764 = vld [vmem:[%s1 + $0x20] sm:$0xf]
        %v765 = vld [vmem:[%s1 + $0x24] sm:$0x3]
        %v798 = vunpack.c.l.b16 %v724
        %v799 = vunpack.c.l.b16 %v725
        %v800 = vunpack.c.l.b16 %v726
        %v801 = vunpack.c.l.b16 %v727
        %v802 = vunpack.c.l.b16 %v728
        %v803 = vunpack.c.l.b16 %v729
        %v804 = vunpack.c.l.b16 %v730
        %v805 = vunpack.c.l.b16 %v731
        %v806 = vunpack.c.l.b16 %v732
        %v807 = vunpack.c.l.b16 %v733
        %v808 = vunpack.c.l.b16 %v734
        %v809 = vunpack.c.l.b16 %v735
        %v810 = vunpack.c.l.b16 %v736
        %v811 = vunpack.c.l.b16 %v737
        %v812 = vunpack.c.l.b16 %v738
        %v813 = vunpack.c.l.b16 %v739
        %v814 = vunpack.c.l.b16 %v740
        %v815 = vunpack.c.l.b16 %v741
        %v816 = vunpack.c.l.b16 %v742
        %v817 = vunpack.c.l.b16 %v743
        %v818 = vunpack.c.l.b16 %v744
        %v819 = vunpack.c.l.b16 %v745
        %v820 = vunpack.c.l.b16 %v746
        %v821 = vunpack.c.l.b16 %v747
        %v822 = vunpack.c.l.b16 %v748
        %v823 = vunpack.c.l.b16 %v749
        %v824 = vunpack.c.l.b16 %v750
        %v825 = vunpack.c.l.b16 %v751
        %v826 = vunpack.c.l.b16 %v752
        %v827 = vunpack.c.l.b16 %v753
        %v828 = vunpack.c.l.b16 %v754
        %v829 = vunpack.c.l.b16 %v755
        %v830 = vpack.c.b16 %v799, %v798
        %v831 = vpack.c.b16 %v801, %v800
        %v832 = vpack.c.b16 %v803, %v802
        %v833 = vpack.c.b16 %v805, %v804
        %v834 = vpack.c.b16 %v807, %v806
        %v835 = vpack.c.b16 %v809, %v808
        %v836 = vpack.c.b16 %v811, %v810
        %v837 = vpack.c.b16 %v813, %v812
        %v838 = vpack.c.b16 %v815, %v814
        %v839 = vpack.c.b16 %v817, %v816
        %v840 = vpack.c.b16 %v819, %v818
        %v841 = vpack.c.b16 %v821, %v820
        %v842 = vpack.c.b16 %v823, %v822
        %v843 = vpack.c.b16 %v825, %v824
        %v844 = vpack.c.b16 %v827, %v826
        %v845 = vpack.c.b16 %v829, %v828
        %v856 = vunpack.c.l.b16 %v756
        %v857 = vunpack.c.l.b16 %v757
        %v858 = vunpack.c.l.b16 %v758
        %v859 = vunpack.c.l.b16 %v759
        %v860 = vunpack.c.l.b16 %v760
        %v861 = vunpack.c.l.b16 %v761
        %v862 = vunpack.c.l.b16 %v762
        %v863 = vunpack.c.l.b16 %v763
        %v864 = vunpack.c.l.b16 %v764
        %v865 = vunpack.c.l.b16 %v765
        %v866 = vpack.c.b16 %v857, %v856
        %v867 = vpack.c.b16 %v859, %v858
        %v868 = vpack.c.b16 %v861, %v860
        %v869 = vpack.c.b16 %v863, %v862
        %v870 = vpack.c.b16 %v865, %v864
        %vm875 = vcmask 613376
        %v877 = vsel %vm875, %v830, 0
        %v880 = vsel %vm875, %v831, 0
        %v883 = vsel %vm875, %v832, 0
        %v886 = vsel %vm875, %v833, 0
        %v889 = vsel %vm875, %v834, 0
        %v892 = vsel %vm875, %v835, 0
        %v895 = vsel %vm875, %v836, 0
        %v898 = vsel %vm875, %v837, 0
        %v901 = vsel %vm875, %v838, 0
        %v904 = vsel %vm875, %v839, 0
        %v907 = vsel %vm875, %v840, 0
        %v910 = vsel %vm875, %v841, 0
        %v913 = vsel %vm875, %v842, 0
        %v916 = vsel %vm875, %v843, 0
        %v919 = vsel %vm875, %v844, 0
        %v922 = vsel %vm875, %v845, 0
        %vm924 = vcmask 1044480
        %vm925 = vcmask 1045504
        %v926 = vsel %vm924, 4294967295, 65535
        %v927 = vsel %vm925, %v926, 0
        %v929 = vand.u32 %v870, %v927
        %931 = vmatprep.subr.bf16.mxu0 0
        %932 = vmatpush1.bf16.msra.mxu0 %v866
        %933 = vmatprep.subr.bf16.mxu0 0
        %934 = vmatpush1.bf16.msra.mxu0 %v867
        %935 = vmatprep.subr.bf16.mxu0 0
        %936 = vmatpush1.bf16.msra.mxu0 %v868
        %937 = vmatprep.subr.bf16.mxu0 0
        %938 = vmatpush1.bf16.msra.mxu0 %v869
        %939 = vmatprep.subr.bf16.mxu0 0
        %940 = vmatpush1.bf16.msra.mxu0 %v929
        %941 = vmatprep.subr.bf16.mxu0 0
        %942 = vmatpush1.bf16.msra.mxu0 0
        %943 = vmatprep.subr.bf16.mxu0 0
        %944 = vmatpush1.bf16.msra.mxu0 0
        %945 = vmatprep.subr.bf16.mxu0 0
        %946 = vmatpush1.bf16.msra.mxu0 0
        %947 = vmatprep.subr.bf16.mxu0 0
        %948 = vmatpush1.bf16.msra.mxu0 0
        %949 = vmatprep.subr.bf16.mxu0 0
        %950 = vmatpush1.bf16.msra.mxu0 0
        %951 = vmatprep.subr.bf16.mxu0 0
        %952 = vmatpush1.bf16.msra.mxu0 0
        %953 = vmatprep.subr.bf16.mxu0 0
        %954 = vmatpush1.bf16.msra.mxu0 0
        %955 = vmatprep.subr.bf16.mxu0 0
        %956 = vmatpush1.bf16.msra.mxu0 0
        %957 = vmatprep.subr.bf16.mxu0 0
        %958 = vmatpush1.bf16.msra.mxu0 0
        %959 = vmatprep.subr.bf16.mxu0 0
        %960 = vmatpush1.bf16.msra.mxu0 0
        %961 = vmatprep.subr.bf16.mxu0 0
        %962 = vmatpush1.bf16.msra.mxu0 0
        %963 = vmatprep.mubr.bf16.mxu0 0
        %964 = vmatmul.mubr.bf16.gmra.mrb[0].mxu0 %v877
        %v965 = vpop.f32.mrb[0].mxu0
        %v966 = vadd.f32 0.0, %v965
        %v967 = vpop.f32.mrb[0].mxu0
        %v968 = vpop.f32.mrb[0].mxu0
        %v969 = vadd.f32 0.0, %v968
        %v970 = vpop.f32.mrb[0].mxu0
        %971 = vmatprep.mubr.bf16.mxu0 0
        %972 = vmatmul.mubr.bf16.gmra.mrb[0].mxu0 %v880
        %v973 = vpop.f32.mrb[0].mxu0
        %v974 = vadd.f32 0.0, %v973
        %v975 = vpop.f32.mrb[0].mxu0
        %v976 = vpop.f32.mrb[0].mxu0
        %v977 = vadd.f32 0.0, %v976
        %v978 = vpop.f32.mrb[0].mxu0
        %979 = vmatprep.mubr.bf16.mxu0 0
        %980 = vmatmul.mubr.bf16.gmra.mrb[0].mxu0 %v883
        %v981 = vpop.f32.mrb[0].mxu0
        %v982 = vadd.f32 0.0, %v981
        %v983 = vpop.f32.mrb[0].mxu0
        %v984 = vpop.f32.mrb[0].mxu0
        %v985 = vadd.f32 0.0, %v984
        %v986 = vpop.f32.mrb[0].mxu0
        %987 = vmatprep.mubr.bf16.mxu0 0
        %988 = vmatmul.mubr.bf16.gmra.mrb[0].mxu0 %v886
        %v989 = vpop.f32.mrb[0].mxu0
        %v990 = vadd.f32 0.0, %v989
        %v991 = vpop.f32.mrb[0].mxu0
        %v992 = vpop.f32.mrb[0].mxu0
        %v993 = vadd.f32 0.0, %v992
        %v994 = vpop.f32.mrb[0].mxu0
        %995 = vmatprep.mubr.bf16.mxu0 0
        %996 = vmatmul.mubr.bf16.gmra.mrb[0].mxu0 %v889
        %v997 = vpop.f32.mrb[0].mxu0
        %v998 = vadd.f32 0.0, %v997
        %v999 = vpop.f32.mrb[0].mxu0
        %v1000 = vpop.f32.mrb[0].mxu0
        %v1001 = vadd.f32 0.0, %v1000
        %v1002 = vpop.f32.mrb[0].mxu0
        %1003 = vmatprep.mubr.bf16.mxu0 0
        %1004 = vmatmul.mubr.bf16.gmra.mrb[0].mxu0 %v892
        %v1005 = vpop.f32.mrb[0].mxu0
        %v1006 = vadd.f32 0.0, %v1005
        %v1007 = vpop.f32.mrb[0].mxu0
        %v1008 = vpop.f32.mrb[0].mxu0
        %v1009 = vadd.f32 0.0, %v1008
        %v1010 = vpop.f32.mrb[0].mxu0
        %1011 = vmatprep.mubr.bf16.mxu0 0
        %1012 = vmatmul.mubr.bf16.gmra.mrb[0].mxu0 %v895
        %v1013 = vpop.f32.mrb[0].mxu0
        %v1014 = vadd.f32 0.0, %v1013
        %v1015 = vpop.f32.mrb[0].mxu0
        %v1016 = vpop.f32.mrb[0].mxu0
        %v1017 = vadd.f32 0.0, %v1016
        %v1018 = vpop.f32.mrb[0].mxu0
        %1019 = vmatprep.mubr.bf16.mxu0 0
        %1020 = vmatmul.mubr.bf16.gmra.mrb[0].mxu0 %v898
        %v1021 = vpop.f32.mrb[0].mxu0
        %v1022 = vadd.f32 0.0, %v1021
        %v1023 = vpop.f32.mrb[0].mxu0
        %v1024 = vpop.f32.mrb[0].mxu0
        %v1025 = vadd.f32 0.0, %v1024
        %v1026 = vpop.f32.mrb[0].mxu0
        %1027 = vmatprep.mubr.bf16.mxu0 0
        %1028 = vmatmul.mubr.bf16.gmra.mrb[0].mxu0 %v901
        %v1029 = vpop.f32.mrb[0].mxu0
        %v1030 = vadd.f32 0.0, %v1029
        %v1031 = vpop.f32.mrb[0].mxu0
        %v1032 = vpop.f32.mrb[0].mxu0
        %v1033 = vadd.f32 0.0, %v1032
        %v1034 = vpop.f32.mrb[0].mxu0
        %1035 = vmatprep.mubr.bf16.mxu0 0
        %1036 = vmatmul.mubr.bf16.gmra.mrb[0].mxu0 %v904
        %v1037 = vpop.f32.mrb[0].mxu0
        %v1038 = vadd.f32 0.0, %v1037
        %v1039 = vpop.f32.mrb[0].mxu0
        %v1040 = vpop.f32.mrb[0].mxu0
        %v1041 = vadd.f32 0.0, %v1040
        %v1042 = vpop.f32.mrb[0].mxu0
        %1043 = vmatprep.mubr.bf16.mxu0 0
        %1044 = vmatmul.mubr.bf16.gmra.mrb[0].mxu0 %v907
        %v1045 = vpop.f32.mrb[0].mxu0
        %v1046 = vadd.f32 0.0, %v1045
        %v1047 = vpop.f32.mrb[0].mxu0
        %v1048 = vpop.f32.mrb[0].mxu0
        %v1049 = vadd.f32 0.0, %v1048
        %v1050 = vpop.f32.mrb[0].mxu0
        %1051 = vmatprep.mubr.bf16.mxu0 0
        %1052 = vmatmul.mubr.bf16.gmra.mrb[0].mxu0 %v910
        %v1053 = vpop.f32.mrb[0].mxu0
        %v1054 = vadd.f32 0.0, %v1053
        %v1055 = vpop.f32.mrb[0].mxu0
        %v1056 = vpop.f32.mrb[0].mxu0
        %v1057 = vadd.f32 0.0, %v1056
        %v1058 = vpop.f32.mrb[0].mxu0
        %1059 = vmatprep.mubr.bf16.mxu0 0
        %1060 = vmatmul.mubr.bf16.gmra.mrb[0].mxu0 %v913
        %v1061 = vpop.f32.mrb[0].mxu0
        %v1062 = vadd.f32 0.0, %v1061
        %v1063 = vpop.f32.mrb[0].mxu0
        %v1064 = vpop.f32.mrb[0].mxu0
        %v1065 = vadd.f32 0.0, %v1064
        %v1066 = vpop.f32.mrb[0].mxu0
        %1067 = vmatprep.mubr.bf16.mxu0 0
        %1068 = vmatmul.mubr.bf16.gmra.mrb[0].mxu0 %v916
        %v1069 = vpop.f32.mrb[0].mxu0
        %v1070 = vadd.f32 0.0, %v1069
        %v1071 = vpop.f32.mrb[0].mxu0
        %v1072 = vpop.f32.mrb[0].mxu0
        %v1073 = vadd.f32 0.0, %v1072
        %v1074 = vpop.f32.mrb[0].mxu0
        %1075 = vmatprep.mubr.bf16.mxu0 0
        %1076 = vmatmul.mubr.bf16.gmra.mrb[0].mxu0 %v919
        %v1077 = vpop.f32.mrb[0].mxu0
        %v1078 = vadd.f32 0.0, %v1077
        %v1079 = vpop.f32.mrb[0].mxu0
        %v1080 = vpop.f32.mrb[0].mxu0
        %v1081 = vadd.f32 0.0, %v1080
        %v1082 = vpop.f32.mrb[0].mxu0
        %1083 = vmatprep.mubr.bf16.mxu0 0
        %1084 = vmatmul.mubr.bf16.gmra.mrb[0].mxu0 %v922
        %v1085 = vpop.f32.mrb[0].mxu0
        %v1086 = vadd.f32 0.0, %v1085
        %v1087 = vpop.f32.mrb[0].mxu0
        %v1088 = vpop.f32.mrb[0].mxu0
        %v1089 = vadd.f32 0.0, %v1088
        %v1090 = vpop.f32.mrb[0].mxu0
        %1091 = vdwg.mxu0
        %s1092 = scalar_lea.vmem %s695, 128 [#allocation2]
        %v1093 = vld [vmem:[%s1092] sm:$0xf]
        %v1094 = vld [vmem:[%s1092 + $0x4] sm:$0xf]
        %v1095 = vld [vmem:[%s1092 + $0x8] sm:$0xf]
        %v1096 = vld [vmem:[%s1092 + $0xc] sm:$0xf]
        %v1097 = vld [vmem:[%s1092 + $0x10] sm:$0xf]
        %v1098 = vld [vmem:[%s1092 + $0x14] sm:$0xf]
        %v1099 = vld [vmem:[%s1092 + $0x18] sm:$0xf]
        %v1100 = vld [vmem:[%s1092 + $0x1c] sm:$0xf]
        %v1101 = vld [vmem:[%s1092 + $0x20] sm:$0xf]
        %v1102 = vld [vmem:[%s1092 + $0x24] sm:$0xf]
        %v1103 = vld [vmem:[%s1092 + $0x28] sm:$0xf]
        %v1104 = vld [vmem:[%s1092 + $0x2c] sm:$0xf]
        %v1105 = vld [vmem:[%s1092 + $0x30] sm:$0xf]
        %v1106 = vld [vmem:[%s1092 + $0x34] sm:$0xf]
        %v1107 = vld [vmem:[%s1092 + $0x38] sm:$0xf]
        %v1108 = vld [vmem:[%s1092 + $0x3c] sm:$0xf]
        %v1109 = vld [vmem:[%s1092 + $0x40] sm:$0xf]
        %v1110 = vld [vmem:[%s1092 + $0x44] sm:$0xf]
        %v1111 = vld [vmem:[%s1092 + $0x48] sm:$0xf]
        %v1112 = vld [vmem:[%s1092 + $0x4c] sm:$0xf]
        %v1113 = vld [vmem:[%s1092 + $0x50] sm:$0xf]
        %v1114 = vld [vmem:[%s1092 + $0x54] sm:$0xf]
        %v1115 = vld [vmem:[%s1092 + $0x58] sm:$0xf]
        %v1116 = vld [vmem:[%s1092 + $0x5c] sm:$0xf]
        %v1117 = vld [vmem:[%s1092 + $0x60] sm:$0xf]
        %v1118 = vld [vmem:[%s1092 + $0x64] sm:$0xf]
        %v1119 = vld [vmem:[%s1092 + $0x68] sm:$0xf]
        %v1120 = vld [vmem:[%s1092 + $0x6c] sm:$0xf]
        %v1121 = vld [vmem:[%s1092 + $0x70] sm:$0xf]
        %v1122 = vld [vmem:[%s1092 + $0x74] sm:$0xf]
        %v1123 = vld [vmem:[%s1092 + $0x78] sm:$0xf]
        %v1124 = vld [vmem:[%s1092 + $0x7c] sm:$0xf]
        %v1157 = vunpack.c.l.b16 %v1093
        %v1158 = vunpack.c.l.b16 %v1094
        %v1159 = vunpack.c.l.b16 %v1095
        %v1160 = vunpack.c.l.b16 %v1096
        %v1161 = vunpack.c.l.b16 %v1097
        %v1162 = vunpack.c.l.b16 %v1098
        %v1163 = vunpack.c.l.b16 %v1099
        %v1164 = vunpack.c.l.b16 %v1100
        %v1165 = vunpack.c.l.b16 %v1101
        %v1166 = vunpack.c.l.b16 %v1102
        %v1167 = vunpack.c.l.b16 %v1103
        %v1168 = vunpack.c.l.b16 %v1104
        %v1169 = vunpack.c.l.b16 %v1105
        %v1170 = vunpack.c.l.b16 %v1106
        %v1171 = vunpack.c.l.b16 %v1107
        %v1172 = vunpack.c.l.b16 %v1108
        %v1173 = vunpack.c.l.b16 %v1109
        %v1174 = vunpack.c.l.b16 %v1110
        %v1175 = vunpack.c.l.b16 %v1111
        %v1176 = vunpack.c.l.b16 %v1112
        %v1177 = vunpack.c.l.b16 %v1113
        %v1178 = vunpack.c.l.b16 %v1114
        %v1179 = vunpack.c.l.b16 %v1115
        %v1180 = vunpack.c.l.b16 %v1116
        %v1181 = vunpack.c.l.b16 %v1117
        %v1182 = vunpack.c.l.b16 %v1118
        %v1183 = vunpack.c.l.b16 %v1119
        %v1184 = vunpack.c.l.b16 %v1120
        %v1185 = vunpack.c.l.b16 %v1121
        %v1186 = vunpack.c.l.b16 %v1122
        %v1187 = vunpack.c.l.b16 %v1123
        %v1188 = vunpack.c.l.b16 %v1124
        %v1189 = vpack.c.b16 %v1158, %v1157
        %v1190 = vpack.c.b16 %v1160, %v1159
        %v1191 = vpack.c.b16 %v1162, %v1161
        %v1192 = vpack.c.b16 %v1164, %v1163
        %v1193 = vpack.c.b16 %v1166, %v1165
        %v1194 = vpack.c.b16 %v1168, %v1167
        %v1195 = vpack.c.b16 %v1170, %v1169
        %v1196 = vpack.c.b16 %v1172, %v1171
        %v1197 = vpack.c.b16 %v1174, %v1173
        %v1198 = vpack.c.b16 %v1176, %v1175
        %v1199 = vpack.c.b16 %v1178, %v1177
        %v1200 = vpack.c.b16 %v1180, %v1179
        %v1201 = vpack.c.b16 %v1182, %v1181
        %v1202 = vpack.c.b16 %v1184, %v1183
        %v1203 = vpack.c.b16 %v1186, %v1185
        %v1204 = vpack.c.b16 %v1188, %v1187
        %v1206 = vsel %vm875, %v1189, 0
        %v1209 = vsel %vm875, %v1190, 0
        %v1212 = vsel %vm875, %v1191, 0
        %v1215 = vsel %vm875, %v1192, 0
        %v1218 = vsel %vm875, %v1193, 0
        %v1221 = vsel %vm875, %v1194, 0
        %v1224 = vsel %vm875, %v1195, 0
        %v1227 = vsel %vm875, %v1196, 0
        %v1230 = vsel %vm875, %v1197, 0
        %v1233 = vsel %vm875, %v1198, 0
        %v1236 = vsel %vm875, %v1199, 0
        %v1239 = vsel %vm875, %v1200, 0
        %v1242 = vsel %vm875, %v1201, 0
        %v1245 = vsel %vm875, %v1202, 0
        %v1248 = vsel %vm875, %v1203, 0
        %v1251 = vsel %vm875, %v1204, 0
        %1253 = vmatprep.subr.bf16.mxu0 0
        %1254 = vmatpush1.bf16.msra.mxu0 %v866
        %1255 = vmatprep.subr.bf16.mxu0 0
        %1256 = vmatpush1.bf16.msra.mxu0 %v867
        %1257 = vmatprep.subr.bf16.mxu0 0
        %1258 = vmatpush1.bf16.msra.mxu0 %v868
        %1259 = vmatprep.subr.bf16.mxu0 0
        %1260 = vmatpush1.bf16.msra.mxu0 %v869
        %1261 = vmatprep.subr.bf16.mxu0 0
        %1262 = vmatpush1.bf16.msra.mxu0 %v929
        %1263 = vmatprep.subr.bf16.mxu0 0
        %1264 = vmatpush1.bf16.msra.mxu0 0
        %1265 = vmatprep.subr.bf16.mxu0 0
        %1266 = vmatpush1.bf16.msra.mxu0 0
        %1267 = vmatprep.subr.bf16.mxu0 0
        %1268 = vmatpush1.bf16.msra.mxu0 0
        %1269 = vmatprep.subr.bf16.mxu0 0
        %1270 = vmatpush1.bf16.msra.mxu0 0
        %1271 = vmatprep.subr.bf16.mxu0 0
        %1272 = vmatpush1.bf16.msra.mxu0 0
        %1273 = vmatprep.subr.bf16.mxu0 0
        %1274 = vmatpush1.bf16.msra.mxu0 0
        %1275 = vmatprep.subr.bf16.mxu0 0
        %1276 = vmatpush1.bf16.msra.mxu0 0
        %1277 = vmatprep.subr.bf16.mxu0 0
        %1278 = vmatpush1.bf16.msra.mxu0 0
        %1279 = vmatprep.subr.bf16.mxu0 0
        %1280 = vmatpush1.bf16.msra.mxu0 0
        %1281 = vmatprep.subr.bf16.mxu0 0
        %1282 = vmatpush1.bf16.msra.mxu0 0
        %1283 = vmatprep.subr.bf16.mxu0 0
        %1284 = vmatpush1.bf16.msra.mxu0 0
        %1285 = vmatprep.mubr.bf16.mxu0 0
        %1286 = vmatmul.mubr.bf16.gmra.mrb[0].mxu0 %v1206
        %v1287 = vpop.f32.mrb[0].mxu0
        %v1288 = vadd.f32 0.0, %v1287
        %v1289 = vpop.f32.mrb[0].mxu0
        %v1290 = vpop.f32.mrb[0].mxu0
        %v1291 = vadd.f32 0.0, %v1290
        %v1292 = vpop.f32.mrb[0].mxu0
        %1293 = vmatprep.mubr.bf16.mxu0 0
        %1294 = vmatmul.mubr.bf16.gmra.mrb[0].mxu0 %v1209
        %v1295 = vpop.f32.mrb[0].mxu0
        %v1296 = vadd.f32 0.0, %v1295
        %v1297 = vpop.f32.mrb[0].mxu0
        %v1298 = vpop.f32.mrb[0].mxu0
        %v1299 = vadd.f32 0.0, %v1298
        %v1300 = vpop.f32.mrb[0].mxu0
        %1301 = vmatprep.mubr.bf16.mxu0 0
        %1302 = vmatmul.mubr.bf16.gmra.mrb[0].mxu0 %v1212
        %v1303 = vpop.f32.mrb[0].mxu0
        %v1304 = vadd.f32 0.0, %v1303
        %v1305 = vpop.f32.mrb[0].mxu0
        %v1306 = vpop.f32.mrb[0].mxu0
        %v1307 = vadd.f32 0.0, %v1306
        %v1308 = vpop.f32.mrb[0].mxu0
        %1309 = vmatprep.mubr.bf16.mxu0 0
        %1310 = vmatmul.mubr.bf16.gmra.mrb[0].mxu0 %v1215
        %v1311 = vpop.f32.mrb[0].mxu0
        %v1312 = vadd.f32 0.0, %v1311
        %v1313 = vpop.f32.mrb[0].mxu0
        %v1314 = vpop.f32.mrb[0].mxu0
        %v1315 = vadd.f32 0.0, %v1314
        %v1316 = vpop.f32.mrb[0].mxu0
        %1317 = vmatprep.mubr.bf16.mxu0 0
        %1318 = vmatmul.mubr.bf16.gmra.mrb[0].mxu0 %v1218
        %v1319 = vpop.f32.mrb[0].mxu0
        %v1320 = vadd.f32 0.0, %v1319
        %v1321 = vpop.f32.mrb[0].mxu0
        %v1322 = vpop.f32.mrb[0].mxu0
        %v1323 = vadd.f32 0.0, %v1322
        %v1324 = vpop.f32.mrb[0].mxu0
        %1325 = vmatprep.mubr.bf16.mxu0 0
        %1326 = vmatmul.mubr.bf16.gmra.mrb[0].mxu0 %v1221
        %v1327 = vpop.f32.mrb[0].mxu0
        %v1328 = vadd.f32 0.0, %v1327
        %v1329 = vpop.f32.mrb[0].mxu0
        %v1330 = vpop.f32.mrb[0].mxu0
        %v1331 = vadd.f32 0.0, %v1330
        %v1332 = vpop.f32.mrb[0].mxu0
        %1333 = vmatprep.mubr.bf16.mxu0 0
        %1334 = vmatmul.mubr.bf16.gmra.mrb[0].mxu0 %v1224
        %v1335 = vpop.f32.mrb[0].mxu0
        %v1336 = vadd.f32 0.0, %v1335
        %v1337 = vpop.f32.mrb[0].mxu0
        %v1338 = vpop.f32.mrb[0].mxu0
        %v1339 = vadd.f32 0.0, %v1338
        %v1340 = vpop.f32.mrb[0].mxu0
        %1341 = vmatprep.mubr.bf16.mxu0 0
        %1342 = vmatmul.mubr.bf16.gmra.mrb[0].mxu0 %v1227
        %v1343 = vpop.f32.mrb[0].mxu0
        %v1344 = vadd.f32 0.0, %v1343
        %v1345 = vpop.f32.mrb[0].mxu0
        %v1346 = vpop.f32.mrb[0].mxu0
        %v1347 = vadd.f32 0.0, %v1346
        %v1348 = vpop.f32.mrb[0].mxu0
        %1349 = vmatprep.mubr.bf16.mxu0 0
        %1350 = vmatmul.mubr.bf16.gmra.mrb[0].mxu0 %v1230
        %v1351 = vpop.f32.mrb[0].mxu0
        %v1352 = vadd.f32 0.0, %v1351
        %v1353 = vpop.f32.mrb[0].mxu0
        %v1354 = vpop.f32.mrb[0].mxu0
        %v1355 = vadd.f32 0.0, %v1354
        %v1356 = vpop.f32.mrb[0].mxu0
        %1357 = vmatprep.mubr.bf16.mxu0 0
        %1358 = vmatmul.mubr.bf16.gmra.mrb[0].mxu0 %v1233
        %v1359 = vpop.f32.mrb[0].mxu0
        %v1360 = vadd.f32 0.0, %v1359
        %v1361 = vpop.f32.mrb[0].mxu0
        %v1362 = vpop.f32.mrb[0].mxu0
        %v1363 = vadd.f32 0.0, %v1362
        %v1364 = vpop.f32.mrb[0].mxu0
        %1365 = vmatprep.mubr.bf16.mxu0 0
        %1366 = vmatmul.mubr.bf16.gmra.mrb[0].mxu0 %v1236
        %v1367 = vpop.f32.mrb[0].mxu0
        %v1368 = vadd.f32 0.0, %v1367
        %v1369 = vpop.f32.mrb[0].mxu0
        %v1370 = vpop.f32.mrb[0].mxu0
        %v1371 = vadd.f32 0.0, %v1370
        %v1372 = vpop.f32.mrb[0].mxu0
        %1373 = vmatprep.mubr.bf16.mxu0 0
        %1374 = vmatmul.mubr.bf16.gmra.mrb[0].mxu0 %v1239
        %v1375 = vpop.f32.mrb[0].mxu0
        %v1376 = vadd.f32 0.0, %v1375
        %v1377 = vpop.f32.mrb[0].mxu0
        %v1378 = vpop.f32.mrb[0].mxu0
        %v1379 = vadd.f32 0.0, %v1378
        %v1380 = vpop.f32.mrb[0].mxu0
        %1381 = vmatprep.mubr.bf16.mxu0 0
        %1382 = vmatmul.mubr.bf16.gmra.mrb[0].mxu0 %v1242
        %v1383 = vpop.f32.mrb[0].mxu0
        %v1384 = vadd.f32 0.0, %v1383
        %v1385 = vpop.f32.mrb[0].mxu0
        %v1386 = vpop.f32.mrb[0].mxu0
        %v1387 = vadd.f32 0.0, %v1386
        %v1388 = vpop.f32.mrb[0].mxu0
        %1389 = vmatprep.mubr.bf16.mxu0 0
        %1390 = vmatmul.mubr.bf16.gmra.mrb[0].mxu0 %v1245
        %v1391 = vpop.f32.mrb[0].mxu0
        %v1392 = vadd.f32 0.0, %v1391
        %v1393 = vpop.f32.mrb[0].mxu0
        %v1394 = vpop.f32.mrb[0].mxu0
        %v1395 = vadd.f32 0.0, %v1394
        %v1396 = vpop.f32.mrb[0].mxu0
        %1397 = vmatprep.mubr.bf16.mxu0 0
        %1398 = vmatmul.mubr.bf16.gmra.mrb[0].mxu0 %v1248
        %v1399 = vpop.f32.mrb[0].mxu0
        %v1400 = vadd.f32 0.0, %v1399
        %v1401 = vpop.f32.mrb[0].mxu0
        %v1402 = vpop.f32.mrb[0].mxu0
        %v1403 = vadd.f32 0.0, %v1402
        %v1404 = vpop.f32.mrb[0].mxu0
        %1405 = vmatprep.mubr.bf16.mxu0 0
        %1406 = vmatmul.mubr.bf16.gmra.mrb[0].mxu0 %v1251
        %v1407 = vpop.f32.mrb[0].mxu0
        %v1408 = vadd.f32 0.0, %v1407
        %v1409 = vpop.f32.mrb[0].mxu0
        %v1410 = vpop.f32.mrb[0].mxu0
        %v1411 = vadd.f32 0.0, %v1410
        %v1412 = vpop.f32.mrb[0].mxu0
        %1413 = vdwg.mxu0
        %v1414 = vmax.f32 %v966, %v1288
        %v1415 = vmax.f32 %v969, %v1291
        %v1416 = vmax.f32 %v974, %v1296
        %v1417 = vmax.f32 %v977, %v1299
        %v1418 = vmax.f32 %v982, %v1304
        %v1419 = vmax.f32 %v985, %v1307
        %v1420 = vmax.f32 %v990, %v1312
        %v1421 = vmax.f32 %v993, %v1315
        %v1422 = vmax.f32 %v998, %v1320
        %v1423 = vmax.f32 %v1001, %v1323
        %v1424 = vmax.f32 %v1006, %v1328
        %v1425 = vmax.f32 %v1009, %v1331
        %v1426 = vmax.f32 %v1014, %v1336
        %v1427 = vmax.f32 %v1017, %v1339
        %v1428 = vmax.f32 %v1022, %v1344
        %v1429 = vmax.f32 %v1025, %v1347
        %v1430 = vmax.f32 %v1030, %v1352
        %v1431 = vmax.f32 %v1033, %v1355
        %v1432 = vmax.f32 %v1038, %v1360
        %v1433 = vmax.f32 %v1041, %v1363
        %v1434 = vmax.f32 %v1046, %v1368
        %v1435 = vmax.f32 %v1049, %v1371
        %v1436 = vmax.f32 %v1054, %v1376
        %v1437 = vmax.f32 %v1057, %v1379
        %v1438 = vmax.f32 %v1062, %v1384
        %v1439 = vmax.f32 %v1065, %v1387
        %v1440 = vmax.f32 %v1070, %v1392
        %v1441 = vmax.f32 %v1073, %v1395
        %v1442 = vmax.f32 %v1078, %v1400
        %v1443 = vmax.f32 %v1081, %v1403
        %v1444 = vmax.f32 %v1086, %v1408
        %v1445 = vmax.f32 %v1089, %v1411
        %s1446 = scalar_lea.vmem %s695, 256 [#allocation2]
        %v1447 = vld [vmem:[%s1446] sm:$0xf]
        %v1448 = vld [vmem:[%s1446 + $0x4] sm:$0xf]
        %v1449 = vld [vmem:[%s1446 + $0x8] sm:$0xf]
        %v1450 = vld [vmem:[%s1446 + $0xc] sm:$0xf]
        %v1451 = vld [vmem:[%s1446 + $0x10] sm:$0xf]
        %v1452 = vld [vmem:[%s1446 + $0x14] sm:$0xf]
        %v1453 = vld [vmem:[%s1446 + $0x18] sm:$0xf]
        %v1454 = vld [vmem:[%s1446 + $0x1c] sm:$0xf]
        %v1455 = vld [vmem:[%s1446 + $0x20] sm:$0xf]
        %v1456 = vld [vmem:[%s1446 + $0x24] sm:$0xf]
        %v1457 = vld [vmem:[%s1446 + $0x28] sm:$0xf]
        %v1458 = vld [vmem:[%s1446 + $0x2c] sm:$0xf]
        %v1459 = vld [vmem:[%s1446 + $0x30] sm:$0xf]
        %v1460 = vld [vmem:[%s1446 + $0x34] sm:$0xf]
        %v1461 = vld [vmem:[%s1446 + $0x38] sm:$0xf]
        %v1462 = vld [vmem:[%s1446 + $0x3c] sm:$0xf]
        %v1463 = vld [vmem:[%s1446 + $0x40] sm:$0xf]
        %v1464 = vld [vmem:[%s1446 + $0x44] sm:$0xf]
        %v1465 = vld [vmem:[%s1446 + $0x48] sm:$0xf]
        %v1466 = vld [vmem:[%s1446 + $0x4c] sm:$0xf]
        %v1467 = vld [vmem:[%s1446 + $0x50] sm:$0xf]
        %v1468 = vld [vmem:[%s1446 + $0x54] sm:$0xf]
        %v1469 = vld [vmem:[%s1446 + $0x58] sm:$0xf]
        %v1470 = vld [vmem:[%s1446 + $0x5c] sm:$0xf]
        %v1471 = vld [vmem:[%s1446 + $0x60] sm:$0xf]
        %v1472 = vld [vmem:[%s1446 + $0x64] sm:$0xf]
        %v1473 = vld [vmem:[%s1446 + $0x68] sm:$0xf]
        %v1474 = vld [vmem:[%s1446 + $0x6c] sm:$0xf]
        %v1475 = vld [vmem:[%s1446 + $0x70] sm:$0xf]
        %v1476 = vld [vmem:[%s1446 + $0x74] sm:$0xf]
        %v1477 = vld [vmem:[%s1446 + $0x78] sm:$0xf]
        %v1478 = vld [vmem:[%s1446 + $0x7c] sm:$0xf]
        %v1511 = vunpack.c.l.b16 %v1447
        %v1512 = vunpack.c.l.b16 %v1448
        %v1513 = vunpack.c.l.b16 %v1449
        %v1514 = vunpack.c.l.b16 %v1450
        %v1515 = vunpack.c.l.b16 %v1451
        %v1516 = vunpack.c.l.b16 %v1452
        %v1517 = vunpack.c.l.b16 %v1453
        %v1518 = vunpack.c.l.b16 %v1454
        %v1519 = vunpack.c.l.b16 %v1455
        %v1520 = vunpack.c.l.b16 %v1456
        %v1521 = vunpack.c.l.b16 %v1457
        %v1522 = vunpack.c.l.b16 %v1458
        %v1523 = vunpack.c.l.b16 %v1459
        %v1524 = vunpack.c.l.b16 %v1460
        %v1525 = vunpack.c.l.b16 %v1461
        %v1526 = vunpack.c.l.b16 %v1462
        %v1527 = vunpack.c.l.b16 %v1463
        %v1528 = vunpack.c.l.b16 %v1464
        %v1529 = vunpack.c.l.b16 %v1465
        %v1530 = vunpack.c.l.b16 %v1466
        %v1531 = vunpack.c.l.b16 %v1467
        %v1532 = vunpack.c.l.b16 %v1468
        %v1533 = vunpack.c.l.b16 %v1469
        %v1534 = vunpack.c.l.b16 %v1470
        %v1535 = vunpack.c.l.b16 %v1471
        %v1536 = vunpack.c.l.b16 %v1472
        %v1537 = vunpack.c.l.b16 %v1473
        %v1538 = vunpack.c.l.b16 %v1474
        %v1539 = vunpack.c.l.b16 %v1475
        %v1540 = vunpack.c.l.b16 %v1476
        %v1541 = vunpack.c.l.b16 %v1477
        %v1542 = vunpack.c.l.b16 %v1478
        %v1543 = vpack.c.b16 %v1512, %v1511
        %v1544 = vpack.c.b16 %v1514, %v1513
        %v1545 = vpack.c.b16 %v1516, %v1515
        %v1546 = vpack.c.b16 %v1518, %v1517
        %v1547 = vpack.c.b16 %v1520, %v1519
        %v1548 = vpack.c.b16 %v1522, %v1521
        %v1549 = vpack.c.b16 %v1524, %v1523
        %v1550 = vpack.c.b16 %v1526, %v1525
        %v1551 = vpack.c.b16 %v1528, %v1527
        %v1552 = vpack.c.b16 %v1530, %v1529
        %v1553 = vpack.c.b16 %v1532, %v1531
        %v1554 = vpack.c.b16 %v1534, %v1533
        %v1555 = vpack.c.b16 %v1536, %v1535
        %v1556 = vpack.c.b16 %v1538, %v1537
        %v1557 = vpack.c.b16 %v1540, %v1539
        %v1558 = vpack.c.b16 %v1542, %v1541
        %v1560 = vsel %vm875, %v1543, 0
        %v1563 = vsel %vm875, %v1544, 0
        %v1566 = vsel %vm875, %v1545, 0
        %v1569 = vsel %vm875, %v1546, 0
        %v1572 = vsel %vm875, %v1547, 0
        %v1575 = vsel %vm875, %v1548, 0
        %v1578 = vsel %vm875, %v1549, 0
        %v1581 = vsel %vm875, %v1550, 0
        %v1584 = vsel %vm875, %v1551, 0
        %v1587 = vsel %vm875, %v1552, 0
        %v1590 = vsel %vm875, %v1553, 0
        %v1593 = vsel %vm875, %v1554, 0
        %v1596 = vsel %vm875, %v1555, 0
        %v1599 = vsel %vm875, %v1556, 0
        %v1602 = vsel %vm875, %v1557, 0
        %v1605 = vsel %vm875, %v1558, 0
        %1607 = vmatprep.subr.bf16.mxu0 0
        %1608 = vmatpush1.bf16.msra.mxu0 %v866
        %1609 = vmatprep.subr.bf16.mxu0 0
        %1610 = vmatpush1.bf16.msra.mxu0 %v867
        %1611 = vmatprep.subr.bf16.mxu0 0
        %1612 = vmatpush1.bf16.msra.mxu0 %v868
        %1613 = vmatprep.subr.bf16.mxu0 0
        %1614 = vmatpush1.bf16.msra.mxu0 %v869
        %1615 = vmatprep.subr.bf16.mxu0 0
        %1616 = vmatpush1.bf16.msra.mxu0 %v929
        %1617 = vmatprep.subr.bf16.mxu0 0
        %1618 = vmatpush1.bf16.msra.mxu0 0
        %1619 = vmatprep.subr.bf16.mxu0 0
        %1620 = vmatpush1.bf16.msra.mxu0 0
        %1621 = vmatprep.subr.bf16.mxu0 0
        %1622 = vmatpush1.bf16.msra.mxu0 0
        %1623 = vmatprep.subr.bf16.mxu0 0
        %1624 = vmatpush1.bf16.msra.mxu0 0
        %1625 = vmatprep.subr.bf16.mxu0 0
        %1626 = vmatpush1.bf16.msra.mxu0 0
        %1627 = vmatprep.subr.bf16.mxu0 0
        %1628 = vmatpush1.bf16.msra.mxu0 0
        %1629 = vmatprep.subr.bf16.mxu0 0
        %1630 = vmatpush1.bf16.msra.mxu0 0
        %1631 = vmatprep.subr.bf16.mxu0 0
        %1632 = vmatpush1.bf16.msra.mxu0 0
        %1633 = vmatprep.subr.bf16.mxu0 0
        %1634 = vmatpush1.bf16.msra.mxu0 0
        %1635 = vmatprep.subr.bf16.mxu0 0
        %1636 = vmatpush1.bf16.msra.mxu0 0
        %1637 = vmatprep.subr.bf16.mxu0 0
        %1638 = vmatpush1.bf16.msra.mxu0 0
        %1639 = vmatprep.mubr.bf16.mxu0 0
        %1640 = vmatmul.mubr.bf16.gmra.mrb[0].mxu0 %v1560
        %v1641 = vpop.f32.mrb[0].mxu0
        %v1642 = vadd.f32 0.0, %v1641
        %v1643 = vpop.f32.mrb[0].mxu0
        %v1644 = vpop.f32.mrb[0].mxu0
        %v1645 = vadd.f32 0.0, %v1644
        %v1646 = vpop.f32.mrb[0].mxu0
        %1647 = vmatprep.mubr.bf16.mxu0 0
        %1648 = vmatmul.mubr.bf16.gmra.mrb[0].mxu0 %v1563
        %v1649 = vpop.f32.mrb[0].mxu0
        %v1650 = vadd.f32 0.0, %v1649
        %v1651 = vpop.f32.mrb[0].mxu0
        %v1652 = vpop.f32.mrb[0].mxu0
        %v1653 = vadd.f32 0.0, %v1652
        %v1654 = vpop.f32.mrb[0].mxu0
        %1655 = vmatprep.mubr.bf16.mxu0 0
        %1656 = vmatmul.mubr.bf16.gmra.mrb[0].mxu0 %v1566
        %v1657 = vpop.f32.mrb[0].mxu0
        %v1658 = vadd.f32 0.0, %v1657
        %v1659 = vpop.f32.mrb[0].mxu0
        %v1660 = vpop.f32.mrb[0].mxu0
        %v1661 = vadd.f32 0.0, %v1660
        %v1662 = vpop.f32.mrb[0].mxu0
        %1663 = vmatprep.mubr.bf16.mxu0 0
        %1664 = vmatmul.mubr.bf16.gmra.mrb[0].mxu0 %v1569
        %v1665 = vpop.f32.mrb[0].mxu0
        %v1666 = vadd.f32 0.0, %v1665
        %v1667 = vpop.f32.mrb[0].mxu0
        %v1668 = vpop.f32.mrb[0].mxu0
        %v1669 = vadd.f32 0.0, %v1668
        %v1670 = vpop.f32.mrb[0].mxu0
        %1671 = vmatprep.mubr.bf16.mxu0 0
        %1672 = vmatmul.mubr.bf16.gmra.mrb[0].mxu0 %v1572
        %v1673 = vpop.f32.mrb[0].mxu0
        %v1674 = vadd.f32 0.0, %v1673
        %v1675 = vpop.f32.mrb[0].mxu0
        %v1676 = vpop.f32.mrb[0].mxu0
        %v1677 = vadd.f32 0.0, %v1676
        %v1678 = vpop.f32.mrb[0].mxu0
        %1679 = vmatprep.mubr.bf16.mxu0 0
        %1680 = vmatmul.mubr.bf16.gmra.mrb[0].mxu0 %v1575
        %v1681 = vpop.f32.mrb[0].mxu0
        %v1682 = vadd.f32 0.0, %v1681
        %v1683 = vpop.f32.mrb[0].mxu0
        %v1684 = vpop.f32.mrb[0].mxu0
        %v1685 = vadd.f32 0.0, %v1684
        %v1686 = vpop.f32.mrb[0].mxu0
        %1687 = vmatprep.mubr.bf16.mxu0 0
        %1688 = vmatmul.mubr.bf16.gmra.mrb[0].mxu0 %v1578
        %v1689 = vpop.f32.mrb[0].mxu0
        %v1690 = vadd.f32 0.0, %v1689
        %v1691 = vpop.f32.mrb[0].mxu0
        %v1692 = vpop.f32.mrb[0].mxu0
        %v1693 = vadd.f32 0.0, %v1692
        %v1694 = vpop.f32.mrb[0].mxu0
        %1695 = vmatprep.mubr.bf16.mxu0 0
        %1696 = vmatmul.mubr.bf16.gmra.mrb[0].mxu0 %v1581
        %v1697 = vpop.f32.mrb[0].mxu0
        %v1698 = vadd.f32 0.0, %v1697
        %v1699 = vpop.f32.mrb[0].mxu0
        %v1700 = vpop.f32.mrb[0].mxu0
        %v1701 = vadd.f32 0.0, %v1700
        %v1702 = vpop.f32.mrb[0].mxu0
        %1703 = vmatprep.mubr.bf16.mxu0 0
        %1704 = vmatmul.mubr.bf16.gmra.mrb[0].mxu0 %v1584
        %v1705 = vpop.f32.mrb[0].mxu0
        %v1706 = vadd.f32 0.0, %v1705
        %v1707 = vpop.f32.mrb[0].mxu0
        %v1708 = vpop.f32.mrb[0].mxu0
        %v1709 = vadd.f32 0.0, %v1708
        %v1710 = vpop.f32.mrb[0].mxu0
        %1711 = vmatprep.mubr.bf16.mxu0 0
        %1712 = vmatmul.mubr.bf16.gmra.mrb[0].mxu0 %v1587
        %v1713 = vpop.f32.mrb[0].mxu0
        %v1714 = vadd.f32 0.0, %v1713
        %v1715 = vpop.f32.mrb[0].mxu0
        %v1716 = vpop.f32.mrb[0].mxu0
        %v1717 = vadd.f32 0.0, %v1716
        %v1718 = vpop.f32.mrb[0].mxu0
        %1719 = vmatprep.mubr.bf16.mxu0 0
        %1720 = vmatmul.mubr.bf16.gmra.mrb[0].mxu0 %v1590
        %v1721 = vpop.f32.mrb[0].mxu0
        %v1722 = vadd.f32 0.0, %v1721
        %v1723 = vpop.f32.mrb[0].mxu0
        %v1724 = vpop.f32.mrb[0].mxu0
        %v1725 = vadd.f32 0.0, %v1724
        %v1726 = vpop.f32.mrb[0].mxu0
        %1727 = vmatprep.mubr.bf16.mxu0 0
        %1728 = vmatmul.mubr.bf16.gmra.mrb[0].mxu0 %v1593
        %v1729 = vpop.f32.mrb[0].mxu0
        %v1730 = vadd.f32 0.0, %v1729
        %v1731 = vpop.f32.mrb[0].mxu0
        %v1732 = vpop.f32.mrb[0].mxu0
        %v1733 = vadd.f32 0.0, %v1732
        %v1734 = vpop.f32.mrb[0].mxu0
        %1735 = vmatprep.mubr.bf16.mxu0 0
        %1736 = vmatmul.mubr.bf16.gmra.mrb[0].mxu0 %v1596
        %v1737 = vpop.f32.mrb[0].mxu0
        %v1738 = vadd.f32 0.0, %v1737
        %v1739 = vpop.f32.mrb[0].mxu0
        %v1740 = vpop.f32.mrb[0].mxu0
        %v1741 = vadd.f32 0.0, %v1740
        %v1742 = vpop.f32.mrb[0].mxu0
        %1743 = vmatprep.mubr.bf16.mxu0 0
        %1744 = vmatmul.mubr.bf16.gmra.mrb[0].mxu0 %v1599
        %v1745 = vpop.f32.mrb[0].mxu0
        %v1746 = vadd.f32 0.0, %v1745
        %v1747 = vpop.f32.mrb[0].mxu0
        %v1748 = vpop.f32.mrb[0].mxu0
        %v1749 = vadd.f32 0.0, %v1748
        %v1750 = vpop.f32.mrb[0].mxu0
        %1751 = vmatprep.mubr.bf16.mxu0 0
        %1752 = vmatmul.mubr.bf16.gmra.mrb[0].mxu0 %v1602
        %v1753 = vpop.f32.mrb[0].mxu0
        %v1754 = vadd.f32 0.0, %v1753
        %v1755 = vpop.f32.mrb[0].mxu0
        %v1756 = vpop.f32.mrb[0].mxu0
        %v1757 = vadd.f32 0.0, %v1756
        %v1758 = vpop.f32.mrb[0].mxu0
        %1759 = vmatprep.mubr.bf16.mxu0 0
        %1760 = vmatmul.mubr.bf16.gmra.mrb[0].mxu0 %v1605
        %v1761 = vpop.f32.mrb[0].mxu0
        %v1762 = vadd.f32 0.0, %v1761
        %v1763 = vpop.f32.mrb[0].mxu0
        %v1764 = vpop.f32.mrb[0].mxu0
        %v1765 = vadd.f32 0.0, %v1764
        %v1766 = vpop.f32.mrb[0].mxu0
        %1767 = vdwg.mxu0
        %v1768 = vmax.f32 %v1414, %v1642
        %v1769 = vmax.f32 %v1415, %v1645
        %v1770 = vmax.f32 %v1416, %v1650
        %v1771 = vmax.f32 %v1417, %v1653
        %v1772 = vmax.f32 %v1418, %v1658
        %v1773 = vmax.f32 %v1419, %v1661
        %v1774 = vmax.f32 %v1420, %v1666
        %v1775 = vmax.f32 %v1421, %v1669
        %v1776 = vmax.f32 %v1422, %v1674
        %v1777 = vmax.f32 %v1423, %v1677
        %v1778 = vmax.f32 %v1424, %v1682
        %v1779 = vmax.f32 %v1425, %v1685
        %v1780 = vmax.f32 %v1426, %v1690
        %v1781 = vmax.f32 %v1427, %v1693
        %v1782 = vmax.f32 %v1428, %v1698
        %v1783 = vmax.f32 %v1429, %v1701
        %v1784 = vmax.f32 %v1430, %v1706
        %v1785 = vmax.f32 %v1431, %v1709
        %v1786 = vmax.f32 %v1432, %v1714
        %v1787 = vmax.f32 %v1433, %v1717
        %v1788 = vmax.f32 %v1434, %v1722
        %v1789 = vmax.f32 %v1435, %v1725
        %v1790 = vmax.f32 %v1436, %v1730
        %v1791 = vmax.f32 %v1437, %v1733
        %v1792 = vmax.f32 %v1438, %v1738
        %v1793 = vmax.f32 %v1439, %v1741
        %v1794 = vmax.f32 %v1440, %v1746
        %v1795 = vmax.f32 %v1441, %v1749
        %v1796 = vmax.f32 %v1442, %v1754
        %v1797 = vmax.f32 %v1443, %v1757
        %v1798 = vmax.f32 %v1444, %v1762
        %v1799 = vmax.f32 %v1445, %v1765
        %s1800 = scalar_lea.vmem %s695, 384 [#allocation2]
        %v1801 = vld [vmem:[%s1800] sm:$0xf]
        %v1802 = vld [vmem:[%s1800 + $0x4] sm:$0xf]
        %v1803 = vld [vmem:[%s1800 + $0x8] sm:$0xf]
        %v1804 = vld [vmem:[%s1800 + $0xc] sm:$0xf]
        %v1805 = vld [vmem:[%s1800 + $0x10] sm:$0xf]
        %v1806 = vld [vmem:[%s1800 + $0x14] sm:$0xf]
        %v1807 = vld [vmem:[%s1800 + $0x18] sm:$0xf]
        %v1808 = vld [vmem:[%s1800 + $0x1c] sm:$0xf]
        %v1809 = vld [vmem:[%s1800 + $0x20] sm:$0xf]
        %v1810 = vld [vmem:[%s1800 + $0x24] sm:$0xf]
        %v1811 = vld [vmem:[%s1800 + $0x28] sm:$0xf]
        %v1812 = vld [vmem:[%s1800 + $0x2c] sm:$0xf]
        %v1813 = vld [vmem:[%s1800 + $0x30] sm:$0xf]
        %v1814 = vld [vmem:[%s1800 + $0x34] sm:$0xf]
        %v1815 = vld [vmem:[%s1800 + $0x38] sm:$0xf]
        %v1816 = vld [vmem:[%s1800 + $0x3c] sm:$0xf]
        %v1817 = vld [vmem:[%s1800 + $0x40] sm:$0xf]
        %v1818 = vld [vmem:[%s1800 + $0x44] sm:$0xf]
        %v1819 = vld [vmem:[%s1800 + $0x48] sm:$0xf]
        %v1820 = vld [vmem:[%s1800 + $0x4c] sm:$0xf]
        %v1821 = vld [vmem:[%s1800 + $0x50] sm:$0xf]
        %v1822 = vld [vmem:[%s1800 + $0x54] sm:$0xf]
        %v1823 = vld [vmem:[%s1800 + $0x58] sm:$0xf]
        %v1824 = vld [vmem:[%s1800 + $0x5c] sm:$0xf]
        %v1825 = vld [vmem:[%s1800 + $0x60] sm:$0xf]
        %v1826 = vld [vmem:[%s1800 + $0x64] sm:$0xf]
        %v1827 = vld [vmem:[%s1800 + $0x68] sm:$0xf]
        %v1828 = vld [vmem:[%s1800 + $0x6c] sm:$0xf]
        %v1829 = vld [vmem:[%s1800 + $0x70] sm:$0xf]
        %v1830 = vld [vmem:[%s1800 + $0x74] sm:$0xf]
        %v1831 = vld [vmem:[%s1800 + $0x78] sm:$0xf]
        %v1832 = vld [vmem:[%s1800 + $0x7c] sm:$0xf]
        %v1865 = vunpack.c.l.b16 %v1801
        %v1866 = vunpack.c.l.b16 %v1802
        %v1867 = vunpack.c.l.b16 %v1803
        %v1868 = vunpack.c.l.b16 %v1804
        %v1869 = vunpack.c.l.b16 %v1805
        %v1870 = vunpack.c.l.b16 %v1806
        %v1871 = vunpack.c.l.b16 %v1807
        %v1872 = vunpack.c.l.b16 %v1808
        %v1873 = vunpack.c.l.b16 %v1809
        %v1874 = vunpack.c.l.b16 %v1810
        %v1875 = vunpack.c.l.b16 %v1811
        %v1876 = vunpack.c.l.b16 %v1812
        %v1877 = vunpack.c.l.b16 %v1813
        %v1878 = vunpack.c.l.b16 %v1814
        %v1879 = vunpack.c.l.b16 %v1815
        %v1880 = vunpack.c.l.b16 %v1816
        %v1881 = vunpack.c.l.b16 %v1817
        %v1882 = vunpack.c.l.b16 %v1818
        %v1883 = vunpack.c.l.b16 %v1819
        %v1884 = vunpack.c.l.b16 %v1820
        %v1885 = vunpack.c.l.b16 %v1821
        %v1886 = vunpack.c.l.b16 %v1822
        %v1887 = vunpack.c.l.b16 %v1823
        %v1888 = vunpack.c.l.b16 %v1824
        %v1889 = vunpack.c.l.b16 %v1825
        %v1890 = vunpack.c.l.b16 %v1826
        %v1891 = vunpack.c.l.b16 %v1827
        %v1892 = vunpack.c.l.b16 %v1828
        %v1893 = vunpack.c.l.b16 %v1829
        %v1894 = vunpack.c.l.b16 %v1830
        %v1895 = vunpack.c.l.b16 %v1831
        %v1896 = vunpack.c.l.b16 %v1832
        %v1897 = vpack.c.b16 %v1866, %v1865
        %v1898 = vpack.c.b16 %v1868, %v1867
        %v1899 = vpack.c.b16 %v1870, %v1869
        %v1900 = vpack.c.b16 %v1872, %v1871
        %v1901 = vpack.c.b16 %v1874, %v1873
        %v1902 = vpack.c.b16 %v1876, %v1875
        %v1903 = vpack.c.b16 %v1878, %v1877
        %v1904 = vpack.c.b16 %v1880, %v1879
        %v1905 = vpack.c.b16 %v1882, %v1881
        %v1906 = vpack.c.b16 %v1884, %v1883
        %v1907 = vpack.c.b16 %v1886, %v1885
        %v1908 = vpack.c.b16 %v1888, %v1887
        %v1909 = vpack.c.b16 %v1890, %v1889
        %v1910 = vpack.c.b16 %v1892, %v1891
        %v1911 = vpack.c.b16 %v1894, %v1893
        %v1912 = vpack.c.b16 %v1896, %v1895
        %v1914 = vsel %vm875, %v1897, 0
        %v1917 = vsel %vm875, %v1898, 0
        %v1920 = vsel %vm875, %v1899, 0
        %v1923 = vsel %vm875, %v1900, 0
        %v1926 = vsel %vm875, %v1901, 0
        %v1929 = vsel %vm875, %v1902, 0
        %v1932 = vsel %vm875, %v1903, 0
        %v1935 = vsel %vm875, %v1904, 0
        %v1938 = vsel %vm875, %v1905, 0
        %v1941 = vsel %vm875, %v1906, 0
        %v1944 = vsel %vm875, %v1907, 0
        %v1947 = vsel %vm875, %v1908, 0
        %v1950 = vsel %vm875, %v1909, 0
        %v1953 = vsel %vm875, %v1910, 0
        %v1956 = vsel %vm875, %v1911, 0
        %v1959 = vsel %vm875, %v1912, 0
        %1961 = vmatprep.subr.bf16.mxu0 0
        %1962 = vmatpush1.bf16.msra.mxu0 %v866
        %1963 = vmatprep.subr.bf16.mxu0 0
        %1964 = vmatpush1.bf16.msra.mxu0 %v867
        %1965 = vmatprep.subr.bf16.mxu0 0
        %1966 = vmatpush1.bf16.msra.mxu0 %v868
        %1967 = vmatprep.subr.bf16.mxu0 0
        %1968 = vmatpush1.bf16.msra.mxu0 %v869
        %1969 = vmatprep.subr.bf16.mxu0 0
        %1970 = vmatpush1.bf16.msra.mxu0 %v929
        %1971 = vmatprep.subr.bf16.mxu0 0
        %1972 = vmatpush1.bf16.msra.mxu0 0
        %1973 = vmatprep.subr.bf16.mxu0 0
        %1974 = vmatpush1.bf16.msra.mxu0 0
        %1975 = vmatprep.subr.bf16.mxu0 0
        %1976 = vmatpush1.bf16.msra.mxu0 0
        %1977 = vmatprep.subr.bf16.mxu0 0
        %1978 = vmatpush1.bf16.msra.mxu0 0
        %1979 = vmatprep.subr.bf16.mxu0 0
        %1980 = vmatpush1.bf16.msra.mxu0 0
        %1981 = vmatprep.subr.bf16.mxu0 0
        %1982 = vmatpush1.bf16.msra.mxu0 0
        %1983 = vmatprep.subr.bf16.mxu0 0
        %1984 = vmatpush1.bf16.msra.mxu0 0
        %1985 = vmatprep.subr.bf16.mxu0 0
        %1986 = vmatpush1.bf16.msra.mxu0 0
        %1987 = vmatprep.subr.bf16.mxu0 0
        %1988 = vmatpush1.bf16.msra.mxu0 0
        %1989 = vmatprep.subr.bf16.mxu0 0
        %1990 = vmatpush1.bf16.msra.mxu0 0
        %1991 = vmatprep.subr.bf16.mxu0 0
        %1992 = vmatpush1.bf16.msra.mxu0 0
        %1993 = vmatprep.mubr.bf16.mxu0 0
        %1994 = vmatmul.mubr.bf16.gmra.mrb[0].mxu0 %v1914
        %v1995 = vpop.f32.mrb[0].mxu0
        %v1996 = vadd.f32 0.0, %v1995
        %v1997 = vpop.f32.mrb[0].mxu0
        %v1998 = vpop.f32.mrb[0].mxu0
        %v1999 = vadd.f32 0.0, %v1998
        %v2000 = vpop.f32.mrb[0].mxu0
        %2001 = vmatprep.mubr.bf16.mxu0 0
        %2002 = vmatmul.mubr.bf16.gmra.mrb[0].mxu0 %v1917
        %v2003 = vpop.f32.mrb[0].mxu0
        %v2004 = vadd.f32 0.0, %v2003
        %v2005 = vpop.f32.mrb[0].mxu0
        %v2006 = vpop.f32.mrb[0].mxu0
        %v2007 = vadd.f32 0.0, %v2006
        %v2008 = vpop.f32.mrb[0].mxu0
        %2009 = vmatprep.mubr.bf16.mxu0 0
        %2010 = vmatmul.mubr.bf16.gmra.mrb[0].mxu0 %v1920
        %v2011 = vpop.f32.mrb[0].mxu0
        %v2012 = vadd.f32 0.0, %v2011
        %v2013 = vpop.f32.mrb[0].mxu0
        %v2014 = vpop.f32.mrb[0].mxu0
        %v2015 = vadd.f32 0.0, %v2014
        %v2016 = vpop.f32.mrb[0].mxu0
        %2017 = vmatprep.mubr.bf16.mxu0 0
        %2018 = vmatmul.mubr.bf16.gmra.mrb[0].mxu0 %v1923
        %v2019 = vpop.f32.mrb[0].mxu0
        %v2020 = vadd.f32 0.0, %v2019
        %v2021 = vpop.f32.mrb[0].mxu0
        %v2022 = vpop.f32.mrb[0].mxu0
        %v2023 = vadd.f32 0.0, %v2022
        %v2024 = vpop.f32.mrb[0].mxu0
        %2025 = vmatprep.mubr.bf16.mxu0 0
        %2026 = vmatmul.mubr.bf16.gmra.mrb[0].mxu0 %v1926
        %v2027 = vpop.f32.mrb[0].mxu0
        %v2028 = vadd.f32 0.0, %v2027
        %v2029 = vpop.f32.mrb[0].mxu0
        %v2030 = vpop.f32.mrb[0].mxu0
        %v2031 = vadd.f32 0.0, %v2030
        %v2032 = vpop.f32.mrb[0].mxu0
        %2033 = vmatprep.mubr.bf16.mxu0 0
        %2034 = vmatmul.mubr.bf16.gmra.mrb[0].mxu0 %v1929
        %v2035 = vpop.f32.mrb[0].mxu0
        %v2036 = vadd.f32 0.0, %v2035
        %v2037 = vpop.f32.mrb[0].mxu0
        %v2038 = vpop.f32.mrb[0].mxu0
        %v2039 = vadd.f32 0.0, %v2038
        %v2040 = vpop.f32.mrb[0].mxu0
        %2041 = vmatprep.mubr.bf16.mxu0 0
        %2042 = vmatmul.mubr.bf16.gmra.mrb[0].mxu0 %v1932
        %v2043 = vpop.f32.mrb[0].mxu0
        %v2044 = vadd.f32 0.0, %v2043
        %v2045 = vpop.f32.mrb[0].mxu0
        %v2046 = vpop.f32.mrb[0].mxu0
        %v2047 = vadd.f32 0.0, %v2046
        %v2048 = vpop.f32.mrb[0].mxu0
        %2049 = vmatprep.mubr.bf16.mxu0 0
        %2050 = vmatmul.mubr.bf16.gmra.mrb[0].mxu0 %v1935
        %v2051 = vpop.f32.mrb[0].mxu0
        %v2052 = vadd.f32 0.0, %v2051
        %v2053 = vpop.f32.mrb[0].mxu0
        %v2054 = vpop.f32.mrb[0].mxu0
        %v2055 = vadd.f32 0.0, %v2054
        %v2056 = vpop.f32.mrb[0].mxu0
        %2057 = vmatprep.mubr.bf16.mxu0 0
        %2058 = vmatmul.mubr.bf16.gmra.mrb[0].mxu0 %v1938
        %v2059 = vpop.f32.mrb[0].mxu0
        %v2060 = vadd.f32 0.0, %v2059
        %v2061 = vpop.f32.mrb[0].mxu0
        %v2062 = vpop.f32.mrb[0].mxu0
        %v2063 = vadd.f32 0.0, %v2062
        %v2064 = vpop.f32.mrb[0].mxu0
        %2065 = vmatprep.mubr.bf16.mxu0 0
        %2066 = vmatmul.mubr.bf16.gmra.mrb[0].mxu0 %v1941
        %v2067 = vpop.f32.mrb[0].mxu0
        %v2068 = vadd.f32 0.0, %v2067
        %v2069 = vpop.f32.mrb[0].mxu0
        %v2070 = vpop.f32.mrb[0].mxu0
        %v2071 = vadd.f32 0.0, %v2070
        %v2072 = vpop.f32.mrb[0].mxu0
        %2073 = vmatprep.mubr.bf16.mxu0 0
        %2074 = vmatmul.mubr.bf16.gmra.mrb[0].mxu0 %v1944
        %v2075 = vpop.f32.mrb[0].mxu0
        %v2076 = vadd.f32 0.0, %v2075
        %v2077 = vpop.f32.mrb[0].mxu0
        %v2078 = vpop.f32.mrb[0].mxu0
        %v2079 = vadd.f32 0.0, %v2078
        %v2080 = vpop.f32.mrb[0].mxu0
        %2081 = vmatprep.mubr.bf16.mxu0 0
        %2082 = vmatmul.mubr.bf16.gmra.mrb[0].mxu0 %v1947
        %v2083 = vpop.f32.mrb[0].mxu0
        %v2084 = vadd.f32 0.0, %v2083
        %v2085 = vpop.f32.mrb[0].mxu0
        %v2086 = vpop.f32.mrb[0].mxu0
        %v2087 = vadd.f32 0.0, %v2086
        %v2088 = vpop.f32.mrb[0].mxu0
        %2089 = vmatprep.mubr.bf16.mxu0 0
        %2090 = vmatmul.mubr.bf16.gmra.mrb[0].mxu0 %v1950
        %v2091 = vpop.f32.mrb[0].mxu0
        %v2092 = vadd.f32 0.0, %v2091
        %v2093 = vpop.f32.mrb[0].mxu0
        %v2094 = vpop.f32.mrb[0].mxu0
        %v2095 = vadd.f32 0.0, %v2094
        %v2096 = vpop.f32.mrb[0].mxu0
        %2097 = vmatprep.mubr.bf16.mxu0 0
        %2098 = vmatmul.mubr.bf16.gmra.mrb[0].mxu0 %v1953
        %v2099 = vpop.f32.mrb[0].mxu0
        %v2100 = vadd.f32 0.0, %v2099
        %v2101 = vpop.f32.mrb[0].mxu0
        %v2102 = vpop.f32.mrb[0].mxu0
        %v2103 = vadd.f32 0.0, %v2102
        %v2104 = vpop.f32.mrb[0].mxu0
        %2105 = vmatprep.mubr.bf16.mxu0 0
        %2106 = vmatmul.mubr.bf16.gmra.mrb[0].mxu0 %v1956
        %v2107 = vpop.f32.mrb[0].mxu0
        %v2108 = vadd.f32 0.0, %v2107
        %v2109 = vpop.f32.mrb[0].mxu0
        %v2110 = vpop.f32.mrb[0].mxu0
        %v2111 = vadd.f32 0.0, %v2110
        %v2112 = vpop.f32.mrb[0].mxu0
        %2113 = vmatprep.mubr.bf16.mxu0 0
        %2114 = vmatmul.mubr.bf16.gmra.mrb[0].mxu0 %v1959
        %v2115 = vpop.f32.mrb[0].mxu0
        %v2116 = vadd.f32 0.0, %v2115
        %v2117 = vpop.f32.mrb[0].mxu0
        %v2118 = vpop.f32.mrb[0].mxu0
        %v2119 = vadd.f32 0.0, %v2118
        %v2120 = vpop.f32.mrb[0].mxu0
        %2121 = vdwg.mxu0
        %v2122 = vmax.f32 %v1768, %v1996
        %v2123 = vmax.f32 %v1769, %v1999
        %v2124 = vmax.f32 %v1770, %v2004
        %v2125 = vmax.f32 %v1771, %v2007
        %v2126 = vmax.f32 %v1772, %v2012
        %v2127 = vmax.f32 %v1773, %v2015
        %v2128 = vmax.f32 %v1774, %v2020
        %v2129 = vmax.f32 %v1775, %v2023
        %v2130 = vmax.f32 %v1776, %v2028
        %v2131 = vmax.f32 %v1777, %v2031
        %v2132 = vmax.f32 %v1778, %v2036
        %v2133 = vmax.f32 %v1779, %v2039
        %v2134 = vmax.f32 %v1780, %v2044
        %v2135 = vmax.f32 %v1781, %v2047
        %v2136 = vmax.f32 %v1782, %v2052
        %v2137 = vmax.f32 %v1783, %v2055
        %v2138 = vmax.f32 %v1784, %v2060
        %v2139 = vmax.f32 %v1785, %v2063
        %v2140 = vmax.f32 %v1786, %v2068
        %v2141 = vmax.f32 %v1787, %v2071
        %v2142 = vmax.f32 %v1788, %v2076
        %v2143 = vmax.f32 %v1789, %v2079
        %v2144 = vmax.f32 %v1790, %v2084
        %v2145 = vmax.f32 %v1791, %v2087
        %v2146 = vmax.f32 %v1792, %v2092
        %v2147 = vmax.f32 %v1793, %v2095
        %v2148 = vmax.f32 %v1794, %v2100
        %v2149 = vmax.f32 %v1795, %v2103
        %v2150 = vmax.f32 %v1796, %v2108
        %v2151 = vmax.f32 %v1797, %v2111
        %v2152 = vmax.f32 %v1798, %v2116
        %v2153 = vmax.f32 %v1799, %v2119
        %v2154 = vld [vmem:[%s2] sm:$0x1]
        %v2156 = vlaneseq
        %v2157 = vshrl.u32 %v2156, 7
        %v2158 = vsub.s32 0, %v2157
        %v2159 = vrot.slane %v2154, %v2158
        %v2161 = vadd.f32 %v2122, %v2159
        %v2162 = vadd.f32 %v2123, %v2159
        %v2163 = vadd.f32 %v2124, %v2159
        %v2164 = vadd.f32 %v2125, %v2159
        %v2165 = vadd.f32 %v2126, %v2159
        %v2166 = vadd.f32 %v2127, %v2159
        %v2167 = vadd.f32 %v2128, %v2159
        %v2168 = vadd.f32 %v2129, %v2159
        %v2169 = vadd.f32 %v2130, %v2159
        %v2170 = vadd.f32 %v2131, %v2159
        %v2171 = vadd.f32 %v2132, %v2159
        %v2172 = vadd.f32 %v2133, %v2159
        %v2173 = vadd.f32 %v2134, %v2159
        %v2174 = vadd.f32 %v2135, %v2159
        %v2175 = vadd.f32 %v2136, %v2159
        %v2176 = vadd.f32 %v2137, %v2159
        %v2177 = vadd.f32 %v2138, %v2159
        %v2178 = vadd.f32 %v2139, %v2159
        %v2179 = vadd.f32 %v2140, %v2159
        %v2180 = vadd.f32 %v2141, %v2159
        %v2181 = vadd.f32 %v2142, %v2159
        %v2182 = vadd.f32 %v2143, %v2159
        %v2183 = vadd.f32 %v2144, %v2159
        %v2184 = vadd.f32 %v2145, %v2159
        %v2185 = vadd.f32 %v2146, %v2159
        %v2186 = vadd.f32 %v2147, %v2159
        %v2187 = vadd.f32 %v2148, %v2159
        %v2188 = vadd.f32 %v2149, %v2159
        %v2189 = vadd.f32 %v2150, %v2159
        %v2190 = vadd.f32 %v2151, %v2159
        %v2191 = vadd.f32 %v2152, %v2159
        %v2192 = vadd.f32 %v2153, %v2159
        %v2193 = vmax.f32 %v2161, 0.0
        %v2194 = vmax.f32 %v2162, 0.0
        %v2195 = vmax.f32 %v2163, 0.0
        %v2196 = vmax.f32 %v2164, 0.0
        %v2197 = vmax.f32 %v2165, 0.0
        %v2198 = vmax.f32 %v2166, 0.0
        %v2199 = vmax.f32 %v2167, 0.0
        %v2200 = vmax.f32 %v2168, 0.0
        %v2201 = vmax.f32 %v2169, 0.0
        %v2202 = vmax.f32 %v2170, 0.0
        %v2203 = vmax.f32 %v2171, 0.0
        %v2204 = vmax.f32 %v2172, 0.0
        %v2205 = vmax.f32 %v2173, 0.0
        %v2206 = vmax.f32 %v2174, 0.0
        %v2207 = vmax.f32 %v2175, 0.0
        %v2208 = vmax.f32 %v2176, 0.0
        %v2209 = vmax.f32 %v2177, 0.0
        %v2210 = vmax.f32 %v2178, 0.0
        %v2211 = vmax.f32 %v2179, 0.0
        %v2212 = vmax.f32 %v2180, 0.0
        %v2213 = vmax.f32 %v2181, 0.0
        %v2214 = vmax.f32 %v2182, 0.0
        %v2215 = vmax.f32 %v2183, 0.0
        %v2216 = vmax.f32 %v2184, 0.0
        %v2217 = vmax.f32 %v2185, 0.0
        %v2218 = vmax.f32 %v2186, 0.0
        %v2219 = vmax.f32 %v2187, 0.0
        %v2220 = vmax.f32 %v2188, 0.0
        %v2221 = vmax.f32 %v2189, 0.0
        %v2222 = vmax.f32 %v2190, 0.0
        %v2223 = vmax.f32 %v2191, 0.0
        %v2224 = vmax.f32 %v2192, 0.0
        %v2225 = vpack.c.bf16 %v2194, %v2193
        %v2226 = vpack.c.bf16 %v2196, %v2195
        %v2227 = vpack.c.bf16 %v2198, %v2197
        %v2228 = vpack.c.bf16 %v2200, %v2199
        %v2229 = vpack.c.bf16 %v2202, %v2201
        %v2230 = vpack.c.bf16 %v2204, %v2203
        %v2231 = vpack.c.bf16 %v2206, %v2205
        %v2232 = vpack.c.bf16 %v2208, %v2207
        %v2233 = vpack.c.bf16 %v2210, %v2209
        %v2234 = vpack.c.bf16 %v2212, %v2211
        %v2235 = vpack.c.bf16 %v2214, %v2213
        %v2236 = vpack.c.bf16 %v2216, %v2215
        %v2237 = vpack.c.bf16 %v2218, %v2217
        %v2238 = vpack.c.bf16 %v2220, %v2219
        %v2239 = vpack.c.bf16 %v2222, %v2221
        %v2240 = vpack.c.bf16 %v2224, %v2223
        %v2257 = vunpack.c.l.b16 %v2225
        %v2258 = vunpack.c.h.b16 %v2225
        %v2259 = vunpack.c.l.b16 %v2226
        %v2260 = vunpack.c.h.b16 %v2226
        %v2261 = vunpack.c.l.b16 %v2227
        %v2262 = vunpack.c.h.b16 %v2227
        %v2263 = vunpack.c.l.b16 %v2228
        %v2264 = vunpack.c.h.b16 %v2228
        %v2265 = vunpack.c.l.b16 %v2229
        %v2266 = vunpack.c.h.b16 %v2229
        %v2267 = vunpack.c.l.b16 %v2230
        %v2268 = vunpack.c.h.b16 %v2230
        %v2269 = vunpack.c.l.b16 %v2231
        %v2270 = vunpack.c.h.b16 %v2231
        %v2271 = vunpack.c.l.b16 %v2232
        %v2272 = vunpack.c.h.b16 %v2232
        %v2273 = vunpack.c.l.b16 %v2233
        %v2274 = vunpack.c.h.b16 %v2233
        %v2275 = vunpack.c.l.b16 %v2234
        %v2276 = vunpack.c.h.b16 %v2234
        %v2277 = vunpack.c.l.b16 %v2235
        %v2278 = vunpack.c.h.b16 %v2235
        %v2279 = vunpack.c.l.b16 %v2236
        %v2280 = vunpack.c.h.b16 %v2236
        %v2281 = vunpack.c.l.b16 %v2237
        %v2282 = vunpack.c.h.b16 %v2237
        %v2283 = vunpack.c.l.b16 %v2238
        %v2284 = vunpack.c.h.b16 %v2238
        %v2285 = vunpack.c.l.b16 %v2239
        %v2286 = vunpack.c.h.b16 %v2239
        %v2287 = vunpack.c.l.b16 %v2240
        %v2288 = vunpack.c.h.b16 %v2240
        %v2289 = vpack.c.b16 %v2257, %v2257
        %v2290 = vpack.c.b16 %v2258, %v2258
        %v2291 = vpack.c.b16 %v2259, %v2259
        %v2292 = vpack.c.b16 %v2260, %v2260
        %v2293 = vpack.c.b16 %v2261, %v2261
        %v2294 = vpack.c.b16 %v2262, %v2262
        %v2295 = vpack.c.b16 %v2263, %v2263
        %v2296 = vpack.c.b16 %v2264, %v2264
        %v2297 = vpack.c.b16 %v2265, %v2265
        %v2298 = vpack.c.b16 %v2266, %v2266
        %v2299 = vpack.c.b16 %v2267, %v2267
        %v2300 = vpack.c.b16 %v2268, %v2268
        %v2301 = vpack.c.b16 %v2269, %v2269
        %v2302 = vpack.c.b16 %v2270, %v2270
        %v2303 = vpack.c.b16 %v2271, %v2271
        %v2304 = vpack.c.b16 %v2272, %v2272
        %v2305 = vpack.c.b16 %v2273, %v2273
        %v2306 = vpack.c.b16 %v2274, %v2274
        %v2307 = vpack.c.b16 %v2275, %v2275
        %v2308 = vpack.c.b16 %v2276, %v2276
        %v2309 = vpack.c.b16 %v2277, %v2277
        %v2310 = vpack.c.b16 %v2278, %v2278
        %v2311 = vpack.c.b16 %v2279, %v2279
        %v2312 = vpack.c.b16 %v2280, %v2280
        %v2313 = vpack.c.b16 %v2281, %v2281
        %v2314 = vpack.c.b16 %v2282, %v2282
        %v2315 = vpack.c.b16 %v2283, %v2283
        %v2316 = vpack.c.b16 %v2284, %v2284
        %v2317 = vpack.c.b16 %v2285, %v2285
        %v2318 = vpack.c.b16 %v2286, %v2286
        %v2319 = vpack.c.b16 %v2287, %v2287
        %v2320 = vpack.c.b16 %v2288, %v2288
        %2353 = vst [vmem:[%s721] sm:$0xf] %v2289
        %2354 = vst [vmem:[%s721 + $0x4] sm:$0xf] %v2290
        %2355 = vst [vmem:[%s721 + $0x8] sm:$0xf] %v2291
        %2356 = vst [vmem:[%s721 + $0xc] sm:$0xf] %v2292
        %2357 = vst [vmem:[%s721 + $0x10] sm:$0xf] %v2293
        %2358 = vst [vmem:[%s721 + $0x14] sm:$0xf] %v2294
        %2359 = vst [vmem:[%s721 + $0x18] sm:$0xf] %v2295
        %2360 = vst [vmem:[%s721 + $0x1c] sm:$0xf] %v2296
        %2361 = vst [vmem:[%s721 + $0x20] sm:$0xf] %v2297
        %2362 = vst [vmem:[%s721 + $0x24] sm:$0xf] %v2298
        %2363 = vst [vmem:[%s721 + $0x28] sm:$0xf] %v2299
        %2364 = vst [vmem:[%s721 + $0x2c] sm:$0xf] %v2300
        %2365 = vst [vmem:[%s721 + $0x30] sm:$0xf] %v2301
        %2366 = vst [vmem:[%s721 + $0x34] sm:$0xf] %v2302
        %2367 = vst [vmem:[%s721 + $0x38] sm:$0xf] %v2303
        %2368 = vst [vmem:[%s721 + $0x3c] sm:$0xf] %v2304
        %2369 = vst [vmem:[%s721 + $0x40] sm:$0xf] %v2305
        %2370 = vst [vmem:[%s721 + $0x44] sm:$0xf] %v2306
        %2371 = vst [vmem:[%s721 + $0x48] sm:$0xf] %v2307
        %2372 = vst [vmem:[%s721 + $0x4c] sm:$0xf] %v2308
        %2373 = vst [vmem:[%s721 + $0x50] sm:$0xf] %v2309
        %2374 = vst [vmem:[%s721 + $0x54] sm:$0xf] %v2310
        %2375 = vst [vmem:[%s721 + $0x58] sm:$0xf] %v2311
        %2376 = vst [vmem:[%s721 + $0x5c] sm:$0xf] %v2312
        %2377 = vst [vmem:[%s721 + $0x60] sm:$0xf] %v2313
        %2378 = vst [vmem:[%s721 + $0x64] sm:$0xf] %v2314
        %2379 = vst [vmem:[%s721 + $0x68] sm:$0xf] %v2315
        %2380 = vst [vmem:[%s721 + $0x6c] sm:$0xf] %v2316
        %2381 = vst [vmem:[%s721 + $0x70] sm:$0xf] %v2317
        %2382 = vst [vmem:[%s721 + $0x74] sm:$0xf] %v2318
        %2383 = vst [vmem:[%s721 + $0x78] sm:$0xf] %v2319
        %2384 = vst [vmem:[%s721 + $0x7c] sm:$0xf] %v2320
        %s2385 = smul.u32 32, %s14
        %p2386 = scmp.lt.s32.totalorder %s2385, 63
        %s2387 = scalar_select %p2386, %s2385, 63
        %s2388 = smul.addr %s2387, 4
        %s2389 = scalar_lea.vmem %s3, %s2388
        // Predicated region
        $region74: #{simple_cnn_forward.2} parent=68 // pred_check
          %p2390 = pneg %p100
        $region75: #{simple_cnn_forward.2} parent=68 // pred_check_branch
          %2392 = sbr.rel (%p2390) target = $region77
        $region76: #{simple_cnn_forward.2} parent=68 // pred_region
          %s2393 = smul.u32 32, %s14
        $region77: #{simple_cnn_forward.2} parent=68 // pred_fallthru
          _
      $region69: #{simple_cnn_forward.2} parent=5 // pred_fallthru
        _
      %p2394 = scmp.le.s32.totalorder 2, %s9
      // Predicated region
      $region78: #{simple_cnn_forward.2} parent=5 // pred_check
        %p2395 = pneg %p2394
      $region79: #{simple_cnn_forward.2} parent=5 // pred_check_branch
        %2397 = sbr.rel (%p2395) target = $region81
      $region80: #{simple_cnn_forward.2} parent=5 // pred_region
        %s2398 = ssub.s32 %s9, 2
        // Predicated region
        $region82: #{simple_cnn_forward.2} parent=80 // pred_check
          %p2399 = pneg %p106
        $region83: #{simple_cnn_forward.2} parent=80 // pred_check_branch
          %2401 = sbr.rel (%p2399) target = $region85
        $region84: #{simple_cnn_forward.2} parent=80 // pred_region
          %s2402 = smul.u32 32, %s15
          %p2403 = scmp.lt.s32.totalorder %s2402, 63
          %s2404 = scalar_select %p2403, %s2402, 63
          %s2405 = smul.addr %s2404, 4
          %s2406 = scalar_lea.vmem %s3, %s2405
        $region85: #{simple_cnn_forward.2} parent=80 // pred_fallthru
          _
      $region81: #{simple_cnn_forward.2} parent=5 // pred_fallthru
        _
    $region6: #{simple_cnn_forward.2} parent=1 // loop_footer
      %s13 = sadd.s32 1, %s9
    $region7: #{simple_cnn_forward.2} parent=1 // loop_footer_branch
      %8 = sbr.rel target = $region3
    $region8: #{simple_cnn_forward.2} parent=1 // loop_exit
      _

// kernel: simple_cnn_forward.3
$region0: #{simple_cnn_forward.3}
  #allocation0 [shape = 'u32[]', space=smem, size = 0x4, offset = 0x4, fixed_abs, tag = 'smem constant byte address 0x4 - core index']
  #allocation1 [shape = 'u32[144,128]{1,0:T(1,128)}', space=vmem, size = 0x12000, scoped, tag = 'internal scratch']
  %s0 = inlined_call_operand.vmem [shape: bf16[4,72,108], index: 0, kind: input, shape index: {}]
  %s1 = inlined_call_operand.vmem [shape: bf16[108,128], index: 1, kind: input, shape index: {}]
  %s2 = inlined_call_operand.vmem [shape: f32[1,128], index: 2, kind: input, shape index: {}]
  %s3 = inlined_call_operand.vmem [shape: bf16[4608,128], index: 3, kind: input, shape index: {}]
  %s4 = inlined_call_operand.vmem [shape: f32[1,128], index: 4, kind: input, shape index: {}]
  %s5 = inlined_call_operand.vmem [shape: bf16[128,128], index: 5, kind: input, shape index: {}]
  %s6 = inlined_call_operand.vmem [shape: f32[1,128], index: 6, kind: input, shape index: {}]
  %s7 = inlined_call_operand.vmem [shape: bf16[128,128], index: 7, kind: input, shape index: {}]
  %s8 = inlined_call_operand.vmem [shape: f32[1,128], index: 8, kind: input, shape index: {}]
  %s9 = inlined_call_operand.hbm [shape: f32[2,128], index: 9, kind: output, shape index: {}]
  %s10 = sld [smem:[#allocation0]]
  $region46: #{simple_cnn_forward.3} parent=0
    _
  %s12 = ssub.s32 1, %s10
  %s13 = scalar_select 0, %s12, %s10
  $region1: #{simple_cnn_forward.3} parent=0
    #allocation2 [shape = 'u8[1024]{0}', space=vmem, size = 0x400, scoped, tag = 'output window, operand 0, single buffered']
    #allocation3 [shape = 's32[1]{0}', space=sflag, size = 0x4, scoped, tag = 'scoped memory for simple_cnn_forward.3']
    %14 = vsyncpa [#allocation3], 0
    // Predicated region
    $region2: #{simple_cnn_forward.3} parent=1 // pred_check
      _
    $region3: #{simple_cnn_forward.3} parent=1 // pred_check_branch
      %16 = sbr.rel (0) target = $region5
    $region4: #{simple_cnn_forward.3} parent=1 // pred_region
      _
    $region5: #{simple_cnn_forward.3} parent=1 // pred_fallthru
      _
    // Predicated region
    $region6: #{simple_cnn_forward.3} parent=1 // pred_check
      _
    $region7: #{simple_cnn_forward.3} parent=1 // pred_check_branch
      %18 = sbr.rel (0) target = $region9
    $region8: #{simple_cnn_forward.3} parent=1 // pred_region
      _
    $region9: #{simple_cnn_forward.3} parent=1 // pred_fallthru
      _
    // Predicated region
    $region10: #{simple_cnn_forward.3} parent=1 // pred_check
      _
    $region11: #{simple_cnn_forward.3} parent=1 // pred_check_branch
      %20 = sbr.rel (0) target = $region13
    $region12: #{simple_cnn_forward.3} parent=1 // pred_region
      _
    $region13: #{simple_cnn_forward.3} parent=1 // pred_fallthru
      _
    // Predicated region
    $region14: #{simple_cnn_forward.3} parent=1 // pred_check
      _
    $region15: #{simple_cnn_forward.3} parent=1 // pred_check_branch
      %22 = sbr.rel (0) target = $region17
    $region16: #{simple_cnn_forward.3} parent=1 // pred_region
      _
    $region17: #{simple_cnn_forward.3} parent=1 // pred_fallthru
      _
    // Predicated region
    $region18: #{simple_cnn_forward.3} parent=1 // pred_check
      _
    $region19: #{simple_cnn_forward.3} parent=1 // pred_check_branch
      %24 = sbr.rel (0) target = $region21
    $region20: #{simple_cnn_forward.3} parent=1 // pred_region
      _
    $region21: #{simple_cnn_forward.3} parent=1 // pred_fallthru
      _
    // Predicated region
    $region22: #{simple_cnn_forward.3} parent=1 // pred_check
      _
    $region23: #{simple_cnn_forward.3} parent=1 // pred_check_branch
      %26 = sbr.rel (0) target = $region25
    $region24: #{simple_cnn_forward.3} parent=1 // pred_region
      _
    $region25: #{simple_cnn_forward.3} parent=1 // pred_fallthru
      _
    // Predicated region
    $region26: #{simple_cnn_forward.3} parent=1 // pred_check
      _
    $region27: #{simple_cnn_forward.3} parent=1 // pred_check_branch
      %28 = sbr.rel (0) target = $region29
    $region28: #{simple_cnn_forward.3} parent=1 // pred_region
      _
    $region29: #{simple_cnn_forward.3} parent=1 // pred_fallthru
      _
    // Predicated region
    $region30: #{simple_cnn_forward.3} parent=1 // pred_check
      _
    $region31: #{simple_cnn_forward.3} parent=1 // pred_check_branch
      %30 = sbr.rel (0) target = $region33
    $region32: #{simple_cnn_forward.3} parent=1 // pred_region
      _
    $region33: #{simple_cnn_forward.3} parent=1 // pred_fallthru
      _
    // Predicated region
    $region34: #{simple_cnn_forward.3} parent=1 // pred_check
      _
    $region35: #{simple_cnn_forward.3} parent=1 // pred_check_branch
      %32 = sbr.rel (0) target = $region37
    $region36: #{simple_cnn_forward.3} parent=1 // pred_region
      _
    $region37: #{simple_cnn_forward.3} parent=1 // pred_fallthru
      _
    %v34 = vld [vmem:[%s0] sm:$0xf]
    %v35 = vld [vmem:[%s0 + $0x4] sm:$0xf]
    %v36 = vld [vmem:[%s0 + $0x8] sm:$0xf]
    %v37 = vld [vmem:[%s0 + $0xc] sm:$0xf]
    %v38 = vld [vmem:[%s0 + $0x10] sm:$0xf]
    %v39 = vld [vmem:[%s0 + $0x14] sm:$0xf]
    %v40 = vld [vmem:[%s0 + $0x18] sm:$0xf]
    %v41 = vld [vmem:[%s0 + $0x1c] sm:$0xf]
    %v42 = vld [vmem:[%s0 + $0x20] sm:$0xf]
    %v43 = vld [vmem:[%s1] sm:$0xf]
    %v44 = vld [vmem:[%s1 + $0x4] sm:$0xf]
    %v45 = vld [vmem:[%s1 + $0x8] sm:$0xf]
    %v46 = vld [vmem:[%s1 + $0xc] sm:$0xf]
    %v47 = vld [vmem:[%s1 + $0x10] sm:$0xf]
    %v48 = vld [vmem:[%s1 + $0x14] sm:$0xf]
    %v49 = vld [vmem:[%s1 + $0x18] sm:$0xf]
    %v50 = vld [vmem:[%s1 + $0x1c] sm:$0xf]
    %v51 = vld [vmem:[%s1 + $0x20] sm:$0xf]
    %v52 = vld [vmem:[%s1 + $0x24] sm:$0xf]
    %v53 = vld [vmem:[%s1 + $0x28] sm:$0xf]
    %v54 = vld [vmem:[%s1 + $0x2c] sm:$0xf]
    %v55 = vld [vmem:[%s1 + $0x30] sm:$0xf]
    %v56 = vld [vmem:[%s1 + $0x34] sm:$0x3]
    %v66 = vunpack.c.l.b16 %v34
    %v67 = vunpack.c.l.b16 %v35
    %v68 = vunpack.c.l.b16 %v36
    %v69 = vunpack.c.l.b16 %v37
    %v70 = vunpack.c.l.b16 %v38
    %v71 = vunpack.c.l.b16 %v39
    %v72 = vunpack.c.l.b16 %v40
    %v73 = vunpack.c.l.b16 %v41
    %v74 = vunpack.c.l.b16 %v42
    %v75 = vpack.c.b16 %v67, %v66
    %v76 = vpack.c.b16 %v69, %v68
    %v77 = vpack.c.b16 %v71, %v70
    %v78 = vpack.c.b16 %v73, %v72
    %v79 = vpack.c.b16 %v74, %v74
    %v94 = vunpack.c.l.b16 %v43
    %v95 = vunpack.c.l.b16 %v44
    %v96 = vunpack.c.l.b16 %v45
    %v97 = vunpack.c.l.b16 %v46
    %v98 = vunpack.c.l.b16 %v47
    %v99 = vunpack.c.l.b16 %v48
    %v100 = vunpack.c.l.b16 %v49
    %v101 = vunpack.c.l.b16 %v50
    %v102 = vunpack.c.l.b16 %v51
    %v103 = vunpack.c.l.b16 %v52
    %v104 = vunpack.c.l.b16 %v53
    %v105 = vunpack.c.l.b16 %v54
    %v106 = vunpack.c.l.b16 %v55
    %v107 = vunpack.c.l.b16 %v56
    %v108 = vpack.c.b16 %v95, %v94
    %v109 = vpack.c.b16 %v97, %v96
    %v110 = vpack.c.b16 %v99, %v98
    %v111 = vpack.c.b16 %v101, %v100
    %v112 = vpack.c.b16 %v103, %v102
    %v113 = vpack.c.b16 %v105, %v104
    %v114 = vpack.c.b16 %v107, %v106
    %vm121 = vcmask 883712
    %v123 = vsel %vm121, %v75, 0
    %v126 = vsel %vm121, %v76, 0
    %v129 = vsel %vm121, %v77, 0
    %v132 = vsel %vm121, %v78, 0
    %v135 = vsel %vm121, %v79, 0
    %vm137 = vcmask 1045504
    %v139 = vsel %vm137, %v114, 0
    %141 = vmatprep.subr.bf16.mxu0 0
    %142 = vmatpush1.bf16.msra.mxu0 %v108
    %143 = vmatprep.subr.bf16.mxu0 0
    %144 = vmatpush1.bf16.msra.mxu0 %v109
    %145 = vmatprep.subr.bf16.mxu0 0
    %146 = vmatpush1.bf16.msra.mxu0 %v110
    %147 = vmatprep.subr.bf16.mxu0 0
    %148 = vmatpush1.bf16.msra.mxu0 %v111
    %149 = vmatprep.subr.bf16.mxu0 0
    %150 = vmatpush1.bf16.msra.mxu0 %v112
    %151 = vmatprep.subr.bf16.mxu0 0
    %152 = vmatpush1.bf16.msra.mxu0 %v113
    %153 = vmatprep.subr.bf16.mxu0 0
    %154 = vmatpush1.bf16.msra.mxu0 %v139
    %155 = vmatprep.subr.bf16.mxu0 0
    %156 = vmatpush1.bf16.msra.mxu0 0
    %157 = vmatprep.subr.bf16.mxu0 0
    %158 = vmatpush1.bf16.msra.mxu0 0
    %159 = vmatprep.subr.bf16.mxu0 0
    %160 = vmatpush1.bf16.msra.mxu0 0
    %161 = vmatprep.subr.bf16.mxu0 0
    %162 = vmatpush1.bf16.msra.mxu0 0
    %163 = vmatprep.subr.bf16.mxu0 0
    %164 = vmatpush1.bf16.msra.mxu0 0
    %165 = vmatprep.subr.bf16.mxu0 0
    %166 = vmatpush1.bf16.msra.mxu0 0
    %167 = vmatprep.subr.bf16.mxu0 0
    %168 = vmatpush1.bf16.msra.mxu0 0
    %169 = vmatprep.subr.bf16.mxu0 0
    %170 = vmatpush1.bf16.msra.mxu0 0
    %171 = vmatprep.subr.bf16.mxu0 0
    %172 = vmatpush1.bf16.msra.mxu0 0
    %173 = vmatprep.mubr.bf16.mxu0 0
    %174 = vmatmul.mubr.bf16.gmra.mrb[0].mxu0 %v123
    %v175 = vpop.f32.mrb[0].mxu0
    %v176 = vadd.f32 0.0, %v175
    %v177 = vpop.f32.mrb[0].mxu0
    %v178 = vpop.f32.mrb[0].mxu0
    %v179 = vadd.f32 0.0, %v178
    %v180 = vpop.f32.mrb[0].mxu0
    %181 = vmatprep.mubr.bf16.mxu0 0
    %182 = vmatmul.mubr.bf16.gmra.mrb[0].mxu0 %v126
    %v183 = vpop.f32.mrb[0].mxu0
    %v184 = vadd.f32 0.0, %v183
    %v185 = vpop.f32.mrb[0].mxu0
    %v186 = vpop.f32.mrb[0].mxu0
    %v187 = vadd.f32 0.0, %v186
    %v188 = vpop.f32.mrb[0].mxu0
    %189 = vmatprep.mubr.bf16.mxu0 0
    %190 = vmatmul.mubr.bf16.gmra.mrb[0].mxu0 %v129
    %v191 = vpop.f32.mrb[0].mxu0
    %v192 = vadd.f32 0.0, %v191
    %v193 = vpop.f32.mrb[0].mxu0
    %v194 = vpop.f32.mrb[0].mxu0
    %v195 = vadd.f32 0.0, %v194
    %v196 = vpop.f32.mrb[0].mxu0
    %197 = vmatprep.mubr.bf16.mxu0 0
    %198 = vmatmul.mubr.bf16.gmra.mrb[0].mxu0 %v132
    %v199 = vpop.f32.mrb[0].mxu0
    %v200 = vadd.f32 0.0, %v199
    %v201 = vpop.f32.mrb[0].mxu0
    %v202 = vpop.f32.mrb[0].mxu0
    %v203 = vadd.f32 0.0, %v202
    %v204 = vpop.f32.mrb[0].mxu0
    %205 = vmatprep.mubr.bf16.mxu0 0
    %206 = vmatmul.mubr.bf16.gmra.mrb[0].mxu0 %v135
    %v207 = vpop.f32.mrb[0].mxu0
    %v208 = vadd.f32 0.0, %v207
    %v209 = vpop.f32.mrb[0].mxu0
    %v210 = vpop.f32.mrb[0].mxu0
    %v211 = vpop.f32.mrb[0].mxu0
    %212 = vdwg.mxu0
    %s213 = scalar_lea.vmem %s0, 36
    %v214 = vld [vmem:[%s213] sm:$0xf]
    %v215 = vld [vmem:[%s213 + $0x4] sm:$0xf]
    %v216 = vld [vmem:[%s213 + $0x8] sm:$0xf]
    %v217 = vld [vmem:[%s213 + $0xc] sm:$0xf]
    %v218 = vld [vmem:[%s213 + $0x10] sm:$0xf]
    %v219 = vld [vmem:[%s213 + $0x14] sm:$0xf]
    %v220 = vld [vmem:[%s213 + $0x18] sm:$0xf]
    %v221 = vld [vmem:[%s213 + $0x1c] sm:$0xf]
    %v222 = vld [vmem:[%s213 + $0x20] sm:$0xf]
    %v232 = vunpack.c.l.b16 %v214
    %v233 = vunpack.c.l.b16 %v215
    %v234 = vunpack.c.l.b16 %v216
    %v235 = vunpack.c.l.b16 %v217
    %v236 = vunpack.c.l.b16 %v218
    %v237 = vunpack.c.l.b16 %v219
    %v238 = vunpack.c.l.b16 %v220
    %v239 = vunpack.c.l.b16 %v221
    %v240 = vunpack.c.l.b16 %v222
    %v241 = vpack.c.b16 %v233, %v232
    %v242 = vpack.c.b16 %v235, %v234
    %v243 = vpack.c.b16 %v237, %v236
    %v244 = vpack.c.b16 %v239, %v238
    %v245 = vpack.c.b16 %v240, %v240
    %v247 = vsel %vm121, %v241, 0
    %v250 = vsel %vm121, %v242, 0
    %v253 = vsel %vm121, %v243, 0
    %v256 = vsel %vm121, %v244, 0
    %v259 = vsel %vm121, %v245, 0
    %261 = vmatprep.subr.bf16.mxu0 0
    %262 = vmatpush1.bf16.msra.mxu0 %v108
    %263 = vmatprep.subr.bf16.mxu0 0
    %264 = vmatpush1.bf16.msra.mxu0 %v109
    %265 = vmatprep.subr.bf16.mxu0 0
    %266 = vmatpush1.bf16.msra.mxu0 %v110
    %267 = vmatprep.subr.bf16.mxu0 0
    %268 = vmatpush1.bf16.msra.mxu0 %v111
    %269 = vmatprep.subr.bf16.mxu0 0
    %270 = vmatpush1.bf16.msra.mxu0 %v112
    %271 = vmatprep.subr.bf16.mxu0 0
    %272 = vmatpush1.bf16.msra.mxu0 %v113
    %273 = vmatprep.subr.bf16.mxu0 0
    %274 = vmatpush1.bf16.msra.mxu0 %v139
    %275 = vmatprep.subr.bf16.mxu0 0
    %276 = vmatpush1.bf16.msra.mxu0 0
    %277 = vmatprep.subr.bf16.mxu0 0
    %278 = vmatpush1.bf16.msra.mxu0 0
    %279 = vmatprep.subr.bf16.mxu0 0
    %280 = vmatpush1.bf16.msra.mxu0 0
    %281 = vmatprep.subr.bf16.mxu0 0
    %282 = vmatpush1.bf16.msra.mxu0 0
    %283 = vmatprep.subr.bf16.mxu0 0
    %284 = vmatpush1.bf16.msra.mxu0 0
    %285 = vmatprep.subr.bf16.mxu0 0
    %286 = vmatpush1.bf16.msra.mxu0 0
    %287 = vmatprep.subr.bf16.mxu0 0
    %288 = vmatpush1.bf16.msra.mxu0 0
    %289 = vmatprep.subr.bf16.mxu0 0
    %290 = vmatpush1.bf16.msra.mxu0 0
    %291 = vmatprep.subr.bf16.mxu0 0
    %292 = vmatpush1.bf16.msra.mxu0 0
    %293 = vmatprep.mubr.bf16.mxu0 0
    %294 = vmatmul.mubr.bf16.gmra.mrb[0].mxu0 %v247
    %v295 = vpop.f32.mrb[0].mxu0
    %v296 = vadd.f32 0.0, %v295
    %v297 = vpop.f32.mrb[0].mxu0
    %v298 = vpop.f32.mrb[0].mxu0
    %v299 = vadd.f32 0.0, %v298
    %v300 = vpop.f32.mrb[0].mxu0
    %301 = vmatprep.mubr.bf16.mxu0 0
    %302 = vmatmul.mubr.bf16.gmra.mrb[0].mxu0 %v250
    %v303 = vpop.f32.mrb[0].mxu0
    %v304 = vadd.f32 0.0, %v303
    %v305 = vpop.f32.mrb[0].mxu0
    %v306 = vpop.f32.mrb[0].mxu0
    %v307 = vadd.f32 0.0, %v306
    %v308 = vpop.f32.mrb[0].mxu0
    %309 = vmatprep.mubr.bf16.mxu0 0
    %310 = vmatmul.mubr.bf16.gmra.mrb[0].mxu0 %v253
    %v311 = vpop.f32.mrb[0].mxu0
    %v312 = vadd.f32 0.0, %v311
    %v313 = vpop.f32.mrb[0].mxu0
    %v314 = vpop.f32.mrb[0].mxu0
    %v315 = vadd.f32 0.0, %v314
    %v316 = vpop.f32.mrb[0].mxu0
    %317 = vmatprep.mubr.bf16.mxu0 0
    %318 = vmatmul.mubr.bf16.gmra.mrb[0].mxu0 %v256
    %v319 = vpop.f32.mrb[0].mxu0
    %v320 = vadd.f32 0.0, %v319
    %v321 = vpop.f32.mrb[0].mxu0
    %v322 = vpop.f32.mrb[0].mxu0
    %v323 = vadd.f32 0.0, %v322
    %v324 = vpop.f32.mrb[0].mxu0
    %325 = vmatprep.mubr.bf16.mxu0 0
    %326 = vmatmul.mubr.bf16.gmra.mrb[0].mxu0 %v259
    %v327 = vpop.f32.mrb[0].mxu0
    %v328 = vadd.f32 0.0, %v327
    %v329 = vpop.f32.mrb[0].mxu0
    %v330 = vpop.f32.mrb[0].mxu0
    %v331 = vpop.f32.mrb[0].mxu0
    %332 = vdwg.mxu0
    %v333 = vmax.f32 %v176, %v296
    %v334 = vmax.f32 %v179, %v299
    %v335 = vmax.f32 %v184, %v304
    %v336 = vmax.f32 %v187, %v307
    %v337 = vmax.f32 %v192, %v312
    %v338 = vmax.f32 %v195, %v315
    %v339 = vmax.f32 %v200, %v320
    %v340 = vmax.f32 %v203, %v323
    %v341 = vmax.f32 %v208, %v328
    %s342 = scalar_lea.vmem %s0, 72
    %v343 = vld [vmem:[%s342] sm:$0xf]
    %v344 = vld [vmem:[%s342 + $0x4] sm:$0xf]
    %v345 = vld [vmem:[%s342 + $0x8] sm:$0xf]
    %v346 = vld [vmem:[%s342 + $0xc] sm:$0xf]
    %v347 = vld [vmem:[%s342 + $0x10] sm:$0xf]
    %v348 = vld [vmem:[%s342 + $0x14] sm:$0xf]
    %v349 = vld [vmem:[%s342 + $0x18] sm:$0xf]
    %v350 = vld [vmem:[%s342 + $0x1c] sm:$0xf]
    %v351 = vld [vmem:[%s342 + $0x20] sm:$0xf]
    %v361 = vunpack.c.l.b16 %v343
    %v362 = vunpack.c.l.b16 %v344
    %v363 = vunpack.c.l.b16 %v345
    %v364 = vunpack.c.l.b16 %v346
    %v365 = vunpack.c.l.b16 %v347
    %v366 = vunpack.c.l.b16 %v348
    %v367 = vunpack.c.l.b16 %v349
    %v368 = vunpack.c.l.b16 %v350
    %v369 = vunpack.c.l.b16 %v351
    %v370 = vpack.c.b16 %v362, %v361
    %v371 = vpack.c.b16 %v364, %v363
    %v372 = vpack.c.b16 %v366, %v365
    %v373 = vpack.c.b16 %v368, %v367
    %v374 = vpack.c.b16 %v369, %v369
    %v376 = vsel %vm121, %v370, 0
    %v379 = vsel %vm121, %v371, 0
    %v382 = vsel %vm121, %v372, 0
    %v385 = vsel %vm121, %v373, 0
    %v388 = vsel %vm121, %v374, 0
    %390 = vmatprep.subr.bf16.mxu0 0
    %391 = vmatpush1.bf16.msra.mxu0 %v108
    %392 = vmatprep.subr.bf16.mxu0 0
    %393 = vmatpush1.bf16.msra.mxu0 %v109
    %394 = vmatprep.subr.bf16.mxu0 0
    %395 = vmatpush1.bf16.msra.mxu0 %v110
    %396 = vmatprep.subr.bf16.mxu0 0
    %397 = vmatpush1.bf16.msra.mxu0 %v111
    %398 = vmatprep.subr.bf16.mxu0 0
    %399 = vmatpush1.bf16.msra.mxu0 %v112
    %400 = vmatprep.subr.bf16.mxu0 0
    %401 = vmatpush1.bf16.msra.mxu0 %v113
    %402 = vmatprep.subr.bf16.mxu0 0
    %403 = vmatpush1.bf16.msra.mxu0 %v139
    %404 = vmatprep.subr.bf16.mxu0 0
    %405 = vmatpush1.bf16.msra.mxu0 0
    %406 = vmatprep.subr.bf16.mxu0 0
    %407 = vmatpush1.bf16.msra.mxu0 0
    %408 = vmatprep.subr.bf16.mxu0 0
    %409 = vmatpush1.bf16.msra.mxu0 0
    %410 = vmatprep.subr.bf16.mxu0 0
    %411 = vmatpush1.bf16.msra.mxu0 0
    %412 = vmatprep.subr.bf16.mxu0 0
    %413 = vmatpush1.bf16.msra.mxu0 0
    %414 = vmatprep.subr.bf16.mxu0 0
    %415 = vmatpush1.bf16.msra.mxu0 0
    %416 = vmatprep.subr.bf16.mxu0 0
    %417 = vmatpush1.bf16.msra.mxu0 0
    %418 = vmatprep.subr.bf16.mxu0 0
    %419 = vmatpush1.bf16.msra.mxu0 0
    %420 = vmatprep.subr.bf16.mxu0 0
    %421 = vmatpush1.bf16.msra.mxu0 0
    %422 = vmatprep.mubr.bf16.mxu0 0
    %423 = vmatmul.mubr.bf16.gmra.mrb[0].mxu0 %v376
    %v424 = vpop.f32.mrb[0].mxu0
    %v425 = vadd.f32 0.0, %v424
    %v426 = vpop.f32.mrb[0].mxu0
    %v427 = vpop.f32.mrb[0].mxu0
    %v428 = vadd.f32 0.0, %v427
    %v429 = vpop.f32.mrb[0].mxu0
    %430 = vmatprep.mubr.bf16.mxu0 0
    %431 = vmatmul.mubr.bf16.gmra.mrb[0].mxu0 %v379
    %v432 = vpop.f32.mrb[0].mxu0
    %v433 = vadd.f32 0.0, %v432
    %v434 = vpop.f32.mrb[0].mxu0
    %v435 = vpop.f32.mrb[0].mxu0
    %v436 = vadd.f32 0.0, %v435
    %v437 = vpop.f32.mrb[0].mxu0
    %438 = vmatprep.mubr.bf16.mxu0 0
    %439 = vmatmul.mubr.bf16.gmra.mrb[0].mxu0 %v382
    %v440 = vpop.f32.mrb[0].mxu0
    %v441 = vadd.f32 0.0, %v440
    %v442 = vpop.f32.mrb[0].mxu0
    %v443 = vpop.f32.mrb[0].mxu0
    %v444 = vadd.f32 0.0, %v443
    %v445 = vpop.f32.mrb[0].mxu0
    %446 = vmatprep.mubr.bf16.mxu0 0
    %447 = vmatmul.mubr.bf16.gmra.mrb[0].mxu0 %v385
    %v448 = vpop.f32.mrb[0].mxu0
    %v449 = vadd.f32 0.0, %v448
    %v450 = vpop.f32.mrb[0].mxu0
    %v451 = vpop.f32.mrb[0].mxu0
    %v452 = vadd.f32 0.0, %v451
    %v453 = vpop.f32.mrb[0].mxu0
    %454 = vmatprep.mubr.bf16.mxu0 0
    %455 = vmatmul.mubr.bf16.gmra.mrb[0].mxu0 %v388
    %v456 = vpop.f32.mrb[0].mxu0
    %v457 = vadd.f32 0.0, %v456
    %v458 = vpop.f32.mrb[0].mxu0
    %v459 = vpop.f32.mrb[0].mxu0
    %v460 = vpop.f32.mrb[0].mxu0
    %461 = vdwg.mxu0
    %v462 = vmax.f32 %v333, %v425
    %v463 = vmax.f32 %v334, %v428
    %v464 = vmax.f32 %v335, %v433
    %v465 = vmax.f32 %v336, %v436
    %v466 = vmax.f32 %v337, %v441
    %v467 = vmax.f32 %v338, %v444
    %v468 = vmax.f32 %v339, %v449
    %v469 = vmax.f32 %v340, %v452
    %v470 = vmax.f32 %v341, %v457
    %s471 = scalar_lea.vmem %s0, 108
    %v472 = vld [vmem:[%s471] sm:$0xf]
    %v473 = vld [vmem:[%s471 + $0x4] sm:$0xf]
    %v474 = vld [vmem:[%s471 + $0x8] sm:$0xf]
    %v475 = vld [vmem:[%s471 + $0xc] sm:$0xf]
    %v476 = vld [vmem:[%s471 + $0x10] sm:$0xf]
    %v477 = vld [vmem:[%s471 + $0x14] sm:$0xf]
    %v478 = vld [vmem:[%s471 + $0x18] sm:$0xf]
    %v479 = vld [vmem:[%s471 + $0x1c] sm:$0xf]
    %v480 = vld [vmem:[%s471 + $0x20] sm:$0xf]
    %v490 = vunpack.c.l.b16 %v472
    %v491 = vunpack.c.l.b16 %v473
    %v492 = vunpack.c.l.b16 %v474
    %v493 = vunpack.c.l.b16 %v475
    %v494 = vunpack.c.l.b16 %v476
    %v495 = vunpack.c.l.b16 %v477
    %v496 = vunpack.c.l.b16 %v478
    %v497 = vunpack.c.l.b16 %v479
    %v498 = vunpack.c.l.b16 %v480
    %v499 = vpack.c.b16 %v491, %v490
    %v500 = vpack.c.b16 %v493, %v492
    %v501 = vpack.c.b16 %v495, %v494
    %v502 = vpack.c.b16 %v497, %v496
    %v503 = vpack.c.b16 %v498, %v498
    %v505 = vsel %vm121, %v499, 0
    %v508 = vsel %vm121, %v500, 0
    %v511 = vsel %vm121, %v501, 0
    %v514 = vsel %vm121, %v502, 0
    %v517 = vsel %vm121, %v503, 0
    %519 = vmatprep.subr.bf16.mxu0 0
    %520 = vmatpush1.bf16.msra.mxu0 %v108
    %521 = vmatprep.subr.bf16.mxu0 0
    %522 = vmatpush1.bf16.msra.mxu0 %v109
    %523 = vmatprep.subr.bf16.mxu0 0
    %524 = vmatpush1.bf16.msra.mxu0 %v110
    %525 = vmatprep.subr.bf16.mxu0 0
    %526 = vmatpush1.bf16.msra.mxu0 %v111
    %527 = vmatprep.subr.bf16.mxu0 0
    %528 = vmatpush1.bf16.msra.mxu0 %v112
    %529 = vmatprep.subr.bf16.mxu0 0
    %530 = vmatpush1.bf16.msra.mxu0 %v113
    %531 = vmatprep.subr.bf16.mxu0 0
    %532 = vmatpush1.bf16.msra.mxu0 %v139
    %533 = vmatprep.subr.bf16.mxu0 0
    %534 = vmatpush1.bf16.msra.mxu0 0
    %535 = vmatprep.subr.bf16.mxu0 0
    %536 = vmatpush1.bf16.msra.mxu0 0
    %537 = vmatprep.subr.bf16.mxu0 0
    %538 = vmatpush1.bf16.msra.mxu0 0
    %539 = vmatprep.subr.bf16.mxu0 0
    %540 = vmatpush1.bf16.msra.mxu0 0
    %541 = vmatprep.subr.bf16.mxu0 0
    %542 = vmatpush1.bf16.msra.mxu0 0
    %543 = vmatprep.subr.bf16.mxu0 0
    %544 = vmatpush1.bf16.msra.mxu0 0
    %545 = vmatprep.subr.bf16.mxu0 0
    %546 = vmatpush1.bf16.msra.mxu0 0
    %547 = vmatprep.subr.bf16.mxu0 0
    %548 = vmatpush1.bf16.msra.mxu0 0
    %549 = vmatprep.subr.bf16.mxu0 0
    %550 = vmatpush1.bf16.msra.mxu0 0
    %551 = vmatprep.mubr.bf16.mxu0 0
    %552 = vmatmul.mubr.bf16.gmra.mrb[0].mxu0 %v505
    %v553 = vpop.f32.mrb[0].mxu0
    %v554 = vadd.f32 0.0, %v553
    %v555 = vpop.f32.mrb[0].mxu0
    %v556 = vpop.f32.mrb[0].mxu0
    %v557 = vadd.f32 0.0, %v556
    %v558 = vpop.f32.mrb[0].mxu0
    %559 = vmatprep.mubr.bf16.mxu0 0
    %560 = vmatmul.mubr.bf16.gmra.mrb[0].mxu0 %v508
    %v561 = vpop.f32.mrb[0].mxu0
    %v562 = vadd.f32 0.0, %v561
    %v563 = vpop.f32.mrb[0].mxu0
    %v564 = vpop.f32.mrb[0].mxu0
    %v565 = vadd.f32 0.0, %v564
    %v566 = vpop.f32.mrb[0].mxu0
    %567 = vmatprep.mubr.bf16.mxu0 0
    %568 = vmatmul.mubr.bf16.gmra.mrb[0].mxu0 %v511
    %v569 = vpop.f32.mrb[0].mxu0
    %v570 = vadd.f32 0.0, %v569
    %v571 = vpop.f32.mrb[0].mxu0
    %v572 = vpop.f32.mrb[0].mxu0
    %v573 = vadd.f32 0.0, %v572
    %v574 = vpop.f32.mrb[0].mxu0
    %575 = vmatprep.mubr.bf16.mxu0 0
    %576 = vmatmul.mubr.bf16.gmra.mrb[0].mxu0 %v514
    %v577 = vpop.f32.mrb[0].mxu0
    %v578 = vadd.f32 0.0, %v577
    %v579 = vpop.f32.mrb[0].mxu0
    %v580 = vpop.f32.mrb[0].mxu0
    %v581 = vadd.f32 0.0, %v580
    %v582 = vpop.f32.mrb[0].mxu0
    %583 = vmatprep.mubr.bf16.mxu0 0
    %584 = vmatmul.mubr.bf16.gmra.mrb[0].mxu0 %v517
    %v585 = vpop.f32.mrb[0].mxu0
    %v586 = vadd.f32 0.0, %v585
    %v587 = vpop.f32.mrb[0].mxu0
    %v588 = vpop.f32.mrb[0].mxu0
    %v589 = vpop.f32.mrb[0].mxu0
    %590 = vdwg.mxu0
    %v591 = vmax.f32 %v462, %v554
    %v592 = vmax.f32 %v463, %v557
    %v593 = vmax.f32 %v464, %v562
    %v594 = vmax.f32 %v465, %v565
    %v595 = vmax.f32 %v466, %v570
    %v596 = vmax.f32 %v467, %v573
    %v597 = vmax.f32 %v468, %v578
    %v598 = vmax.f32 %v469, %v581
    %v599 = vmax.f32 %v470, %v586
    %v600 = vld [vmem:[%s2] sm:$0x1]
    %v602 = vlaneseq
    %v603 = vshrl.u32 %v602, 7
    %v604 = vsub.s32 0, %v603
    %v605 = vrot.slane %v600, %v604
    %v607 = vadd.f32 %v591, %v605
    %v608 = vadd.f32 %v592, %v605
    %v609 = vadd.f32 %v593, %v605
    %v610 = vadd.f32 %v594, %v605
    %v611 = vadd.f32 %v595, %v605
    %v612 = vadd.f32 %v596, %v605
    %v613 = vadd.f32 %v597, %v605
    %v614 = vadd.f32 %v598, %v605
    %v615 = vadd.f32 %v599, %v605
    %v616 = vmax.f32 %v607, 0.0
    %v617 = vmax.f32 %v608, 0.0
    %v618 = vmax.f32 %v609, 0.0
    %v619 = vmax.f32 %v610, 0.0
    %v620 = vmax.f32 %v611, 0.0
    %v621 = vmax.f32 %v612, 0.0
    %v622 = vmax.f32 %v613, 0.0
    %v623 = vmax.f32 %v614, 0.0
    %v624 = vmax.f32 %v615, 0.0
    %v625 = vpack.c.bf16 %v617, %v616
    %v626 = vpack.c.bf16 %v619, %v618
    %v627 = vpack.c.bf16 %v621, %v620
    %v628 = vpack.c.bf16 %v623, %v622
    %v629 = vpack.c.bf16 %v624, %v624
    %v630 = vld [vmem:[%s3] sm:$0xf]
    %v631 = vld [vmem:[%s3 + $0x4] sm:$0xf]
    %v632 = vld [vmem:[%s3 + $0x8] sm:$0xf]
    %v633 = vld [vmem:[%s3 + $0xc] sm:$0xf]
    %v634 = vld [vmem:[%s3 + $0x10] sm:$0xf]
    %v635 = vld [vmem:[%s3 + $0x14] sm:$0xf]
    %v636 = vld [vmem:[%s3 + $0x18] sm:$0xf]
    %v637 = vld [vmem:[%s3 + $0x1c] sm:$0xf]
    %v638 = vld [vmem:[%s3 + $0x20] sm:$0xf]
    %v639 = vld [vmem:[%s3 + $0x24] sm:$0xf]
    %v640 = vld [vmem:[%s3 + $0x28] sm:$0xf]
    %v641 = vld [vmem:[%s3 + $0x2c] sm:$0xf]
    %v642 = vld [vmem:[%s3 + $0x30] sm:$0xf]
    %v643 = vld [vmem:[%s3 + $0x34] sm:$0xf]
    %v644 = vld [vmem:[%s3 + $0x38] sm:$0xf]
    %v645 = vld [vmem:[%s3 + $0x3c] sm:$0xf]
    %v646 = vld [vmem:[%s3 + $0x40] sm:$0xf]
    %v647 = vld [vmem:[%s3 + $0x44] sm:$0xf]
    %v648 = vld [vmem:[%s3 + $0x48] sm:$0xf]
    %v649 = vld [vmem:[%s3 + $0x4c] sm:$0xf]
    %v650 = vld [vmem:[%s3 + $0x50] sm:$0xf]
    %v651 = vld [vmem:[%s3 + $0x54] sm:$0xf]
    %v652 = vld [vmem:[%s3 + $0x58] sm:$0xf]
    %v653 = vld [vmem:[%s3 + $0x5c] sm:$0xf]
    %v654 = vld [vmem:[%s3 + $0x60] sm:$0xf]
    %v655 = vld [vmem:[%s3 + $0x64] sm:$0xf]
    %v656 = vld [vmem:[%s3 + $0x68] sm:$0xf]
    %v657 = vld [vmem:[%s3 + $0x6c] sm:$0xf]
    %v658 = vld [vmem:[%s3 + $0x70] sm:$0xf]
    %v659 = vld [vmem:[%s3 + $0x74] sm:$0xf]
    %v660 = vld [vmem:[%s3 + $0x78] sm:$0xf]
    %v661 = vld [vmem:[%s3 + $0x7c] sm:$0xf]
    %v663 = vrot.slane %v625, 1
    %v681 = vunpack.c.l.b16 %v646
    %v682 = vunpack.c.l.b16 %v647
    %v683 = vunpack.c.l.b16 %v648
    %v684 = vunpack.c.l.b16 %v649
    %v685 = vunpack.c.l.b16 %v650
    %v686 = vunpack.c.l.b16 %v651
    %v687 = vunpack.c.l.b16 %v652
    %v688 = vunpack.c.l.b16 %v653
    %v689 = vunpack.c.l.b16 %v654
    %v690 = vunpack.c.l.b16 %v655
    %v691 = vunpack.c.l.b16 %v656
    %v692 = vunpack.c.l.b16 %v657
    %v693 = vunpack.c.l.b16 %v658
    %v694 = vunpack.c.l.b16 %v659
    %v695 = vunpack.c.l.b16 %v660
    %v696 = vunpack.c.l.b16 %v661
    %v697 = vpack.c.b16 %v682, %v681
    %v698 = vpack.c.b16 %v684, %v683
    %v699 = vpack.c.b16 %v686, %v685
    %v700 = vpack.c.b16 %v688, %v687
    %v701 = vpack.c.b16 %v690, %v689
    %v702 = vpack.c.b16 %v692, %v691
    %v703 = vpack.c.b16 %v694, %v693
    %v704 = vpack.c.b16 %v696, %v695
    %713 = vmatprep.subr.bf16.mxu0 0
    %714 = vmatpush1.bf16.msra.mxu0 %v697
    %715 = vmatprep.subr.bf16.mxu0 0
    %716 = vmatpush1.bf16.msra.mxu0 %v698
    %717 = vmatprep.subr.bf16.mxu0 0
    %718 = vmatpush1.bf16.msra.mxu0 %v699
    %719 = vmatprep.subr.bf16.mxu0 0
    %720 = vmatpush1.bf16.msra.mxu0 %v700
    %721 = vmatprep.subr.bf16.mxu0 0
    %722 = vmatpush1.bf16.msra.mxu0 %v701
    %723 = vmatprep.subr.bf16.mxu0 0
    %724 = vmatpush1.bf16.msra.mxu0 %v702
    %725 = vmatprep.subr.bf16.mxu0 0
    %726 = vmatpush1.bf16.msra.mxu0 %v703
    %727 = vmatprep.subr.bf16.mxu0 0
    %728 = vmatpush1.bf16.msra.mxu0 %v704
    %729 = vmatprep.subr.bf16.mxu0 0
    %730 = vmatpush1.bf16.msra.mxu0 0
    %731 = vmatprep.subr.bf16.mxu0 0
    %732 = vmatpush1.bf16.msra.mxu0 0
    %733 = vmatprep.subr.bf16.mxu0 0
    %734 = vmatpush1.bf16.msra.mxu0 0
    %735 = vmatprep.subr.bf16.mxu0 0
    %736 = vmatpush1.bf16.msra.mxu0 0
    %737 = vmatprep.subr.bf16.mxu0 0
    %738 = vmatpush1.bf16.msra.mxu0 0
    %739 = vmatprep.subr.bf16.mxu0 0
    %740 = vmatpush1.bf16.msra.mxu0 0
    %741 = vmatprep.subr.bf16.mxu0 0
    %742 = vmatpush1.bf16.msra.mxu0 0
    %743 = vmatprep.subr.bf16.mxu0 0
    %744 = vmatpush1.bf16.msra.mxu0 0
    %745 = vmatprep.mubr.bf16.mxu0 0
    %746 = vmatmul.mubr.bf16.gmra.mrb[0].mxu0 %v663
    %v747 = vpop.f32.mrb[0].mxu0
    %v748 = vadd.f32 0.0, %v747
    %v749 = vpop.f32.mrb[0].mxu0
    %v750 = vpop.f32.mrb[0].mxu0
    %v751 = vpop.f32.mrb[0].mxu0
    %752 = vdwg.mxu0
    %v769 = vunpack.c.l.b16 %v630
    %v770 = vunpack.c.l.b16 %v631
    %v771 = vunpack.c.l.b16 %v632
    %v772 = vunpack.c.l.b16 %v633
    %v773 = vunpack.c.l.b16 %v634
    %v774 = vunpack.c.l.b16 %v635
    %v775 = vunpack.c.l.b16 %v636
    %v776 = vunpack.c.l.b16 %v637
    %v777 = vunpack.c.l.b16 %v638
    %v778 = vunpack.c.l.b16 %v639
    %v779 = vunpack.c.l.b16 %v640
    %v780 = vunpack.c.l.b16 %v641
    %v781 = vunpack.c.l.b16 %v642
    %v782 = vunpack.c.l.b16 %v643
    %v783 = vunpack.c.l.b16 %v644
    %v784 = vunpack.c.l.b16 %v645
    %v785 = vpack.c.b16 %v770, %v769
    %v786 = vpack.c.b16 %v772, %v771
    %v787 = vpack.c.b16 %v774, %v773
    %v788 = vpack.c.b16 %v776, %v775
    %v789 = vpack.c.b16 %v778, %v777
    %v790 = vpack.c.b16 %v780, %v779
    %v791 = vpack.c.b16 %v782, %v781
    %v792 = vpack.c.b16 %v784, %v783
    %801 = vmatprep.subr.bf16.mxu0 0
    %802 = vmatpush1.bf16.msra.mxu0 %v785
    %803 = vmatprep.subr.bf16.mxu0 0
    %804 = vmatpush1.bf16.msra.mxu0 %v786
    %805 = vmatprep.subr.bf16.mxu0 0
    %806 = vmatpush1.bf16.msra.mxu0 %v787
    %807 = vmatprep.subr.bf16.mxu0 0
    %808 = vmatpush1.bf16.msra.mxu0 %v788
    %809 = vmatprep.subr.bf16.mxu0 0
    %810 = vmatpush1.bf16.msra.mxu0 %v789
    %811 = vmatprep.subr.bf16.mxu0 0
    %812 = vmatpush1.bf16.msra.mxu0 %v790
    %813 = vmatprep.subr.bf16.mxu0 0
    %814 = vmatpush1.bf16.msra.mxu0 %v791
    %815 = vmatprep.subr.bf16.mxu0 0
    %816 = vmatpush1.bf16.msra.mxu0 %v792
    %817 = vmatprep.subr.bf16.mxu0 0
    %818 = vmatpush1.bf16.msra.mxu0 0
    %819 = vmatprep.subr.bf16.mxu0 0
    %820 = vmatpush1.bf16.msra.mxu0 0
    %821 = vmatprep.subr.bf16.mxu0 0
    %822 = vmatpush1.bf16.msra.mxu0 0
    %823 = vmatprep.subr.bf16.mxu0 0
    %824 = vmatpush1.bf16.msra.mxu0 0
    %825 = vmatprep.subr.bf16.mxu0 0
    %826 = vmatpush1.bf16.msra.mxu0 0
    %827 = vmatprep.subr.bf16.mxu0 0
    %828 = vmatpush1.bf16.msra.mxu0 0
    %829 = vmatprep.subr.bf16.mxu0 0
    %830 = vmatpush1.bf16.msra.mxu0 0
    %831 = vmatprep.subr.bf16.mxu0 0
    %832 = vmatpush1.bf16.msra.mxu0 0
    %833 = vmatprep.mubr.bf16.mxu0 0
    %834 = vmatmul.mubr.bf16.gmra.mrb[0].mxu0 %v625
    %v835 = vpop.f32.mrb[0].mxu0
    %v836 = vadd.f32 %v748, %v835
    %v837 = vpop.f32.mrb[0].mxu0
    %v838 = vpop.f32.mrb[0].mxu0
    %v839 = vpop.f32.mrb[0].mxu0
    %840 = vdwg.mxu0
    %v841 = vld [vmem:[%s3 + $0x80] sm:$0xf]
    %v842 = vld [vmem:[%s3 + $0x84] sm:$0xf]
    %v843 = vld [vmem:[%s3 + $0x88] sm:$0xf]
    %v844 = vld [vmem:[%s3 + $0x8c] sm:$0xf]
    %v845 = vld [vmem:[%s3 + $0x90] sm:$0xf]
    %v846 = vld [vmem:[%s3 + $0x94] sm:$0xf]
    %v847 = vld [vmem:[%s3 + $0x98] sm:$0xf]
    %v848 = vld [vmem:[%s3 + $0x9c] sm:$0xf]
    %v849 = vld [vmem:[%s3 + $0xa0] sm:$0xf]
    %v850 = vld [vmem:[%s3 + $0xa4] sm:$0xf]
    %v851 = vld [vmem:[%s3 + $0xa8] sm:$0xf]
    %v852 = vld [vmem:[%s3 + $0xac] sm:$0xf]
    %v853 = vld [vmem:[%s3 + $0xb0] sm:$0xf]
    %v854 = vld [vmem:[%s3 + $0xb4] sm:$0xf]
    %v855 = vld [vmem:[%s3 + $0xb8] sm:$0xf]
    %v856 = vld [vmem:[%s3 + $0xbc] sm:$0xf]
    %v857 = vrot.slane %v625, 2
    %v875 = vunpack.c.l.b16 %v841
    %v876 = vunpack.c.l.b16 %v842
    %v877 = vunpack.c.l.b16 %v843
    %v878 = vunpack.c.l.b16 %v844
    %v879 = vunpack.c.l.b16 %v845
    %v880 = vunpack.c.l.b16 %v846
    %v881 = vunpack.c.l.b16 %v847
    %v882 = vunpack.c.l.b16 %v848
    %v883 = vunpack.c.l.b16 %v849
    %v884 = vunpack.c.l.b16 %v850
    %v885 = vunpack.c.l.b16 %v851
    %v886 = vunpack.c.l.b16 %v852
    %v887 = vunpack.c.l.b16 %v853
    %v888 = vunpack.c.l.b16 %v854
    %v889 = vunpack.c.l.b16 %v855
    %v890 = vunpack.c.l.b16 %v856
    %v891 = vpack.c.b16 %v876, %v875
    %v892 = vpack.c.b16 %v878, %v877
    %v893 = vpack.c.b16 %v880, %v879
    %v894 = vpack.c.b16 %v882, %v881
    %v895 = vpack.c.b16 %v884, %v883
    %v896 = vpack.c.b16 %v886, %v885
    %v897 = vpack.c.b16 %v888, %v887
    %v898 = vpack.c.b16 %v890, %v889
    %907 = vmatprep.subr.bf16.mxu0 0
    %908 = vmatpush1.bf16.msra.mxu0 %v891
    %909 = vmatprep.subr.bf16.mxu0 0
    %910 = vmatpush1.bf16.msra.mxu0 %v892
    %911 = vmatprep.subr.bf16.mxu0 0
    %912 = vmatpush1.bf16.msra.mxu0 %v893
    %913 = vmatprep.subr.bf16.mxu0 0
    %914 = vmatpush1.bf16.msra.mxu0 %v894
    %915 = vmatprep.subr.bf16.mxu0 0
    %916 = vmatpush1.bf16.msra.mxu0 %v895
    %917 = vmatprep.subr.bf16.mxu0 0
    %918 = vmatpush1.bf16.msra.mxu0 %v896
    %919 = vmatprep.subr.bf16.mxu0 0
    %920 = vmatpush1.bf16.msra.mxu0 %v897
    %921 = vmatprep.subr.bf16.mxu0 0
    %922 = vmatpush1.bf16.msra.mxu0 %v898
    %923 = vmatprep.subr.bf16.mxu0 0
    %924 = vmatpush1.bf16.msra.mxu0 0
    %925 = vmatprep.subr.bf16.mxu0 0
    %926 = vmatpush1.bf16.msra.mxu0 0
    %927 = vmatprep.subr.bf16.mxu0 0
    %928 = vmatpush1.bf16.msra.mxu0 0
    %929 = vmatprep.subr.bf16.mxu0 0
    %930 = vmatpush1.bf16.msra.mxu0 0
    %931 = vmatprep.subr.bf16.mxu0 0
    %932 = vmatpush1.bf16.msra.mxu0 0
    %933 = vmatprep.subr.bf16.mxu0 0
    %934 = vmatpush1.bf16.msra.mxu0 0
    %935 = vmatprep.subr.bf16.mxu0 0
    %936 = vmatpush1.bf16.msra.mxu0 0
    %937 = vmatprep.subr.bf16.mxu0 0
    %938 = vmatpush1.bf16.msra.mxu0 0
    %939 = vmatprep.mubr.bf16.mxu0 0
    %940 = vmatmul.mubr.bf16.gmra.mrb[0].mxu0 %v857
    %v941 = vpop.f32.mrb[0].mxu0
    %v942 = vadd.f32 0.0, %v941
    %v943 = vpop.f32.mrb[0].mxu0
    %v944 = vpop.f32.mrb[0].mxu0
    %v945 = vpop.f32.mrb[0].mxu0
    %946 = vdwg.mxu0
    %v947 = vadd.f32 %v836, %v942
    %v948 = vld [vmem:[%s3 + $0xc0] sm:$0xf]
    %v949 = vld [vmem:[%s3 + $0xc4] sm:$0xf]
    %v950 = vld [vmem:[%s3 + $0xc8] sm:$0xf]
    %v951 = vld [vmem:[%s3 + $0xcc] sm:$0xf]
    %v952 = vld [vmem:[%s3 + $0xd0] sm:$0xf]
    %v953 = vld [vmem:[%s3 + $0xd4] sm:$0xf]
    %v954 = vld [vmem:[%s3 + $0xd8] sm:$0xf]
    %v955 = vld [vmem:[%s3 + $0xdc] sm:$0xf]
    %v956 = vld [vmem:[%s3 + $0xe0] sm:$0xf]
    %v957 = vld [vmem:[%s3 + $0xe4] sm:$0xf]
    %v958 = vld [vmem:[%s3 + $0xe8] sm:$0xf]
    %v959 = vld [vmem:[%s3 + $0xec] sm:$0xf]
    %v960 = vld [vmem:[%s3 + $0xf0] sm:$0xf]
    %v961 = vld [vmem:[%s3 + $0xf4] sm:$0xf]
    %v962 = vld [vmem:[%s3 + $0xf8] sm:$0xf]
    %v963 = vld [vmem:[%s3 + $0xfc] sm:$0xf]
    %v964 = vrot.slane %v625, 3
    %v982 = vunpack.c.l.b16 %v948
    %v983 = vunpack.c.l.b16 %v949
    %v984 = vunpack.c.l.b16 %v950
    %v985 = vunpack.c.l.b16 %v951
    %v986 = vunpack.c.l.b16 %v952
    %v987 = vunpack.c.l.b16 %v953
    %v988 = vunpack.c.l.b16 %v954
    %v989 = vunpack.c.l.b16 %v955
    %v990 = vunpack.c.l.b16 %v956
    %v991 = vunpack.c.l.b16 %v957
    %v992 = vunpack.c.l.b16 %v958
    %v993 = vunpack.c.l.b16 %v959
    %v994 = vunpack.c.l.b16 %v960
    %v995 = vunpack.c.l.b16 %v961
    %v996 = vunpack.c.l.b16 %v962
    %v997 = vunpack.c.l.b16 %v963
    %v998 = vpack.c.b16 %v983, %v982
    %v999 = vpack.c.b16 %v985, %v984
    %v1000 = vpack.c.b16 %v987, %v986
    %v1001 = vpack.c.b16 %v989, %v988
    %v1002 = vpack.c.b16 %v991, %v990
    %v1003 = vpack.c.b16 %v993, %v992
    %v1004 = vpack.c.b16 %v995, %v994
    %v1005 = vpack.c.b16 %v997, %v996
    %1014 = vmatprep.subr.bf16.mxu0 0
    %1015 = vmatpush1.bf16.msra.mxu0 %v998
    %1016 = vmatprep.subr.bf16.mxu0 0
    %1017 = vmatpush1.bf16.msra.mxu0 %v999
    %1018 = vmatprep.subr.bf16.mxu0 0
    %1019 = vmatpush1.bf16.msra.mxu0 %v1000
    %1020 = vmatprep.subr.bf16.mxu0 0
    %1021 = vmatpush1.bf16.msra.mxu0 %v1001
    %1022 = vmatprep.subr.bf16.mxu0 0
    %1023 = vmatpush1.bf16.msra.mxu0 %v1002
    %1024 = vmatprep.subr.bf16.mxu0 0
    %1025 = vmatpush1.bf16.msra.mxu0 %v1003
    %1026 = vmatprep.subr.bf16.mxu0 0
    %1027 = vmatpush1.bf16.msra.mxu0 %v1004
    %1028 = vmatprep.subr.bf16.mxu0 0
    %1029 = vmatpush1.bf16.msra.mxu0 %v1005
    %1030 = vmatprep.subr.bf16.mxu0 0
    %1031 = vmatpush1.bf16.msra.mxu0 0
    %1032 = vmatprep.subr.bf16.mxu0 0
    %1033 = vmatpush1.bf16.msra.mxu0 0
    %1034 = vmatprep.subr.bf16.mxu0 0
    %1035 = vmatpush1.bf16.msra.mxu0 0
    %1036 = vmatprep.subr.bf16.mxu0 0
    %1037 = vmatpush1.bf16.msra.mxu0 0
    %1038 = vmatprep.subr.bf16.mxu0 0
    %1039 = vmatpush1.bf16.msra.mxu0 0
    %1040 = vmatprep.subr.bf16.mxu0 0
    %1041 = vmatpush1.bf16.msra.mxu0 0
    %1042 = vmatprep.subr.bf16.mxu0 0
    %1043 = vmatpush1.bf16.msra.mxu0 0
    %1044 = vmatprep.subr.bf16.mxu0 0
    %1045 = vmatpush1.bf16.msra.mxu0 0
    %1046 = vmatprep.mubr.bf16.mxu0 0
    %1047 = vmatmul.mubr.bf16.gmra.mrb[0].mxu0 %v964
    %v1048 = vpop.f32.mrb[0].mxu0
    %v1049 = vadd.f32 0.0, %v1048
    %v1050 = vpop.f32.mrb[0].mxu0
    %v1051 = vpop.f32.mrb[0].mxu0
    %v1052 = vpop.f32.mrb[0].mxu0
    %1053 = vdwg.mxu0
    %v1054 = vadd.f32 %v947, %v1049
    %v1055 = vld [vmem:[%s3 + $0x100] sm:$0xf]
    %v1056 = vld [vmem:[%s3 + $0x104] sm:$0xf]
    %v1057 = vld [vmem:[%s3 + $0x108] sm:$0xf]
    %v1058 = vld [vmem:[%s3 + $0x10c] sm:$0xf]
    %v1059 = vld [vmem:[%s3 + $0x110] sm:$0xf]
    %v1060 = vld [vmem:[%s3 + $0x114] sm:$0xf]
    %v1061 = vld [vmem:[%s3 + $0x118] sm:$0xf]
    %v1062 = vld [vmem:[%s3 + $0x11c] sm:$0xf]
    %v1063 = vld [vmem:[%s3 + $0x120] sm:$0xf]
    %v1064 = vld [vmem:[%s3 + $0x124] sm:$0xf]
    %v1065 = vld [vmem:[%s3 + $0x128] sm:$0xf]
    %v1066 = vld [vmem:[%s3 + $0x12c] sm:$0xf]
    %v1067 = vld [vmem:[%s3 + $0x130] sm:$0xf]
    %v1068 = vld [vmem:[%s3 + $0x134] sm:$0xf]
    %v1069 = vld [vmem:[%s3 + $0x138] sm:$0xf]
    %v1070 = vld [vmem:[%s3 + $0x13c] sm:$0xf]
    %v1071 = vrot.slane %v625, 4
    %v1089 = vunpack.c.l.b16 %v1055
    %v1090 = vunpack.c.l.b16 %v1056
    %v1091 = vunpack.c.l.b16 %v1057
    %v1092 = vunpack.c.l.b16 %v1058
    %v1093 = vunpack.c.l.b16 %v1059
    %v1094 = vunpack.c.l.b16 %v1060
    %v1095 = vunpack.c.l.b16 %v1061
    %v1096 = vunpack.c.l.b16 %v1062
    %v1097 = vunpack.c.l.b16 %v1063
    %v1098 = vunpack.c.l.b16 %v1064
    %v1099 = vunpack.c.l.b16 %v1065
    %v1100 = vunpack.c.l.b16 %v1066
    %v1101 = vunpack.c.l.b16 %v1067
    %v1102 = vunpack.c.l.b16 %v1068
    %v1103 = vunpack.c.l.b16 %v1069
    %v1104 = vunpack.c.l.b16 %v1070
    %v1105 = vpack.c.b16 %v1090, %v1089
    %v1106 = vpack.c.b16 %v1092, %v1091
    %v1107 = vpack.c.b16 %v1094, %v1093
    %v1108 = vpack.c.b16 %v1096, %v1095
    %v1109 = vpack.c.b16 %v1098, %v1097
    %v1110 = vpack.c.b16 %v1100, %v1099
    %v1111 = vpack.c.b16 %v1102, %v1101
    %v1112 = vpack.c.b16 %v1104, %v1103
    %1121 = vmatprep.subr.bf16.mxu0 0
    %1122 = vmatpush1.bf16.msra.mxu0 %v1105
    %1123 = vmatprep.subr.bf16.mxu0 0
    %1124 = vmatpush1.bf16.msra.mxu0 %v1106
    %1125 = vmatprep.subr.bf16.mxu0 0
    %1126 = vmatpush1.bf16.msra.mxu0 %v1107
    %1127 = vmatprep.subr.bf16.mxu0 0
    %1128 = vmatpush1.bf16.msra.mxu0 %v1108
    %1129 = vmatprep.subr.bf16.mxu0 0
    %1130 = vmatpush1.bf16.msra.mxu0 %v1109
    %1131 = vmatprep.subr.bf16.mxu0 0
    %1132 = vmatpush1.bf16.msra.mxu0 %v1110
    %1133 = vmatprep.subr.bf16.mxu0 0
    %1134 = vmatpush1.bf16.msra.mxu0 %v1111
    %1135 = vmatprep.subr.bf16.mxu0 0
    %1136 = vmatpush1.bf16.msra.mxu0 %v1112
    %1137 = vmatprep.subr.bf16.mxu0 0
    %1138 = vmatpush1.bf16.msra.mxu0 0
    %1139 = vmatprep.subr.bf16.mxu0 0
    %1140 = vmatpush1.bf16.msra.mxu0 0
    %1141 = vmatprep.subr.bf16.mxu0 0
    %1142 = vmatpush1.bf16.msra.mxu0 0
    %1143 = vmatprep.subr.bf16.mxu0 0
    %1144 = vmatpush1.bf16.msra.mxu0 0
    %1145 = vmatprep.subr.bf16.mxu0 0
    %1146 = vmatpush1.bf16.msra.mxu0 0
    %1147 = vmatprep.subr.bf16.mxu0 0
    %1148 = vmatpush1.bf16.msra.mxu0 0
    %1149 = vmatprep.subr.bf16.mxu0 0
    %1150 = vmatpush1.bf16.msra.mxu0 0
    %1151 = vmatprep.subr.bf16.mxu0 0
    %1152 = vmatpush1.bf16.msra.mxu0 0
    %1153 = vmatprep.mubr.bf16.mxu0 0
    %1154 = vmatmul.mubr.bf16.gmra.mrb[0].mxu0 %v1071
    %v1155 = vpop.f32.mrb[0].mxu0
    %v1156 = vadd.f32 0.0, %v1155
    %v1157 = vpop.f32.mrb[0].mxu0
    %v1158 = vpop.f32.mrb[0].mxu0
    %v1159 = vpop.f32.mrb[0].mxu0
    %1160 = vdwg.mxu0
    %v1161 = vadd.f32 %v1054, %v1156
    %v1162 = vld [vmem:[%s3 + $0x140] sm:$0xf]
    %v1163 = vld [vmem:[%s3 + $0x144] sm:$0xf]
    %v1164 = vld [vmem:[%s3 + $0x148] sm:$0xf]
    %v1165 = vld [vmem:[%s3 + $0x14c] sm:$0xf]
    %v1166 = vld [vmem:[%s3 + $0x150] sm:$0xf]
    %v1167 = vld [vmem:[%s3 + $0x154] sm:$0xf]
    %v1168 = vld [vmem:[%s3 + $0x158] sm:$0xf]
    %v1169 = vld [vmem:[%s3 + $0x15c] sm:$0xf]
    %v1170 = vld [vmem:[%s3 + $0x160] sm:$0xf]
    %v1171 = vld [vmem:[%s3 + $0x164] sm:$0xf]
    %v1172 = vld [vmem:[%s3 + $0x168] sm:$0xf]
    %v1173 = vld [vmem:[%s3 + $0x16c] sm:$0xf]
    %v1174 = vld [vmem:[%s3 + $0x170] sm:$0xf]
    %v1175 = vld [vmem:[%s3 + $0x174] sm:$0xf]
    %v1176 = vld [vmem:[%s3 + $0x178] sm:$0xf]
    %v1177 = vld [vmem:[%s3 + $0x17c] sm:$0xf]
    %v1178 = vrot.slane %v625, 5
    %v1196 = vunpack.c.l.b16 %v1162
    %v1197 = vunpack.c.l.b16 %v1163
    %v1198 = vunpack.c.l.b16 %v1164
    %v1199 = vunpack.c.l.b16 %v1165
    %v1200 = vunpack.c.l.b16 %v1166
    %v1201 = vunpack.c.l.b16 %v1167
    %v1202 = vunpack.c.l.b16 %v1168
    %v1203 = vunpack.c.l.b16 %v1169
    %v1204 = vunpack.c.l.b16 %v1170
    %v1205 = vunpack.c.l.b16 %v1171
    %v1206 = vunpack.c.l.b16 %v1172
    %v1207 = vunpack.c.l.b16 %v1173
    %v1208 = vunpack.c.l.b16 %v1174
    %v1209 = vunpack.c.l.b16 %v1175
    %v1210 = vunpack.c.l.b16 %v1176
    %v1211 = vunpack.c.l.b16 %v1177
    %v1212 = vpack.c.b16 %v1197, %v1196
    %v1213 = vpack.c.b16 %v1199, %v1198
    %v1214 = vpack.c.b16 %v1201, %v1200
    %v1215 = vpack.c.b16 %v1203, %v1202
    %v1216 = vpack.c.b16 %v1205, %v1204
    %v1217 = vpack.c.b16 %v1207, %v1206
    %v1218 = vpack.c.b16 %v1209, %v1208
    %v1219 = vpack.c.b16 %v1211, %v1210
    %1228 = vmatprep.subr.bf16.mxu0 0
    %1229 = vmatpush1.bf16.msra.mxu0 %v1212
    %1230 = vmatprep.subr.bf16.mxu0 0
    %1231 = vmatpush1.bf16.msra.mxu0 %v1213
    %1232 = vmatprep.subr.bf16.mxu0 0
    %1233 = vmatpush1.bf16.msra.mxu0 %v1214
    %1234 = vmatprep.subr.bf16.mxu0 0
    %1235 = vmatpush1.bf16.msra.mxu0 %v1215
    %1236 = vmatprep.subr.bf16.mxu0 0
    %1237 = vmatpush1.bf16.msra.mxu0 %v1216
    %1238 = vmatprep.subr.bf16.mxu0 0
    %1239 = vmatpush1.bf16.msra.mxu0 %v1217
    %1240 = vmatprep.subr.bf16.mxu0 0
    %1241 = vmatpush1.bf16.msra.mxu0 %v1218
    %1242 = vmatprep.subr.bf16.mxu0 0
    %1243 = vmatpush1.bf16.msra.mxu0 %v1219
    %1244 = vmatprep.subr.bf16.mxu0 0
    %1245 = vmatpush1.bf16.msra.mxu0 0
    %1246 = vmatprep.subr.bf16.mxu0 0
    %1247 = vmatpush1.bf16.msra.mxu0 0
    %1248 = vmatprep.subr.bf16.mxu0 0
    %1249 = vmatpush1.bf16.msra.mxu0 0
    %1250 = vmatprep.subr.bf16.mxu0 0
    %1251 = vmatpush1.bf16.msra.mxu0 0
    %1252 = vmatprep.subr.bf16.mxu0 0
    %1253 = vmatpush1.bf16.msra.mxu0 0
    %1254 = vmatprep.subr.bf16.mxu0 0
    %1255 = vmatpush1.bf16.msra.mxu0 0
    %1256 = vmatprep.subr.bf16.mxu0 0
    %1257 = vmatpush1.bf16.msra.mxu0 0
    %1258 = vmatprep.subr.bf16.mxu0 0
    %1259 = vmatpush1.bf16.msra.mxu0 0
    %1260 = vmatprep.mubr.bf16.mxu0 0
    %1261 = vmatmul.mubr.bf16.gmra.mrb[0].mxu0 %v1178
    %v1262 = vpop.f32.mrb[0].mxu0
    %v1263 = vadd.f32 0.0, %v1262
    %v1264 = vpop.f32.mrb[0].mxu0
    %v1265 = vpop.f32.mrb[0].mxu0
    %v1266 = vpop.f32.mrb[0].mxu0
    %1267 = vdwg.mxu0
    %v1268 = vadd.f32 %v1161, %v1263
    %v1269 = vld [vmem:[%s3 + $0x180] sm:$0xf]
    %v1270 = vld [vmem:[%s3 + $0x184] sm:$0xf]
    %v1271 = vld [vmem:[%s3 + $0x188] sm:$0xf]
    %v1272 = vld [vmem:[%s3 + $0x18c] sm:$0xf]
    %v1273 = vld [vmem:[%s3 + $0x190] sm:$0xf]
    %v1274 = vld [vmem:[%s3 + $0x194] sm:$0xf]
    %v1275 = vld [vmem:[%s3 + $0x198] sm:$0xf]
    %v1276 = vld [vmem:[%s3 + $0x19c] sm:$0xf]
    %v1277 = vld [vmem:[%s3 + $0x1a0] sm:$0xf]
    %v1278 = vld [vmem:[%s3 + $0x1a4] sm:$0xf]
    %v1279 = vld [vmem:[%s3 + $0x1a8] sm:$0xf]
    %v1280 = vld [vmem:[%s3 + $0x1ac] sm:$0xf]
    %v1281 = vld [vmem:[%s3 + $0x1b0] sm:$0xf]
    %v1282 = vld [vmem:[%s3 + $0x1b4] sm:$0xf]
    %v1283 = vld [vmem:[%s3 + $0x1b8] sm:$0xf]
    %v1284 = vld [vmem:[%s3 + $0x1bc] sm:$0xf]
    %v1285 = vrot.slane %v625, 6
    %v1303 = vunpack.c.l.b16 %v1269
    %v1304 = vunpack.c.l.b16 %v1270
    %v1305 = vunpack.c.l.b16 %v1271
    %v1306 = vunpack.c.l.b16 %v1272
    %v1307 = vunpack.c.l.b16 %v1273
    %v1308 = vunpack.c.l.b16 %v1274
    %v1309 = vunpack.c.l.b16 %v1275
    %v1310 = vunpack.c.l.b16 %v1276
    %v1311 = vunpack.c.l.b16 %v1277
    %v1312 = vunpack.c.l.b16 %v1278
    %v1313 = vunpack.c.l.b16 %v1279
    %v1314 = vunpack.c.l.b16 %v1280
    %v1315 = vunpack.c.l.b16 %v1281
    %v1316 = vunpack.c.l.b16 %v1282
    %v1317 = vunpack.c.l.b16 %v1283
    %v1318 = vunpack.c.l.b16 %v1284
    %v1319 = vpack.c.b16 %v1304, %v1303
    %v1320 = vpack.c.b16 %v1306, %v1305
    %v1321 = vpack.c.b16 %v1308, %v1307
    %v1322 = vpack.c.b16 %v1310, %v1309
    %v1323 = vpack.c.b16 %v1312, %v1311
    %v1324 = vpack.c.b16 %v1314, %v1313
    %v1325 = vpack.c.b16 %v1316, %v1315
    %v1326 = vpack.c.b16 %v1318, %v1317
    %1335 = vmatprep.subr.bf16.mxu0 0
    %1336 = vmatpush1.bf16.msra.mxu0 %v1319
    %1337 = vmatprep.subr.bf16.mxu0 0
    %1338 = vmatpush1.bf16.msra.mxu0 %v1320
    %1339 = vmatprep.subr.bf16.mxu0 0
    %1340 = vmatpush1.bf16.msra.mxu0 %v1321
    %1341 = vmatprep.subr.bf16.mxu0 0
    %1342 = vmatpush1.bf16.msra.mxu0 %v1322
    %1343 = vmatprep.subr.bf16.mxu0 0
    %1344 = vmatpush1.bf16.msra.mxu0 %v1323
    %1345 = vmatprep.subr.bf16.mxu0 0
    %1346 = vmatpush1.bf16.msra.mxu0 %v1324
    %1347 = vmatprep.subr.bf16.mxu0 0
    %1348 = vmatpush1.bf16.msra.mxu0 %v1325
    %1349 = vmatprep.subr.bf16.mxu0 0
    %1350 = vmatpush1.bf16.msra.mxu0 %v1326
    %1351 = vmatprep.subr.bf16.mxu0 0
    %1352 = vmatpush1.bf16.msra.mxu0 0
    %1353 = vmatprep.subr.bf16.mxu0 0
    %1354 = vmatpush1.bf16.msra.mxu0 0
    %1355 = vmatprep.subr.bf16.mxu0 0
    %1356 = vmatpush1.bf16.msra.mxu0 0
    %1357 = vmatprep.subr.bf16.mxu0 0
    %1358 = vmatpush1.bf16.msra.mxu0 0
    %1359 = vmatprep.subr.bf16.mxu0 0
    %1360 = vmatpush1.bf16.msra.mxu0 0
    %1361 = vmatprep.subr.bf16.mxu0 0
    %1362 = vmatpush1.bf16.msra.mxu0 0
    %1363 = vmatprep.subr.bf16.mxu0 0
    %1364 = vmatpush1.bf16.msra.mxu0 0
    %1365 = vmatprep.subr.bf16.mxu0 0
    %1366 = vmatpush1.bf16.msra.mxu0 0
    %1367 = vmatprep.mubr.bf16.mxu0 0
    %1368 = vmatmul.mubr.bf16.gmra.mrb[0].mxu0 %v1285
    %v1369 = vpop.f32.mrb[0].mxu0
    %v1370 = vadd.f32 0.0, %v1369
    %v1371 = vpop.f32.mrb[0].mxu0
    %v1372 = vpop.f32.mrb[0].mxu0
    %v1373 = vpop.f32.mrb[0].mxu0
    %1374 = vdwg.mxu0
    %v1375 = vadd.f32 %v1268, %v1370
    %v1376 = vld [vmem:[%s3 + $0x1c0] sm:$0xf]
    %v1377 = vld [vmem:[%s3 + $0x1c4] sm:$0xf]
    %v1378 = vld [vmem:[%s3 + $0x1c8] sm:$0xf]
    %v1379 = vld [vmem:[%s3 + $0x1cc] sm:$0xf]
    %v1380 = vld [vmem:[%s3 + $0x1d0] sm:$0xf]
    %v1381 = vld [vmem:[%s3 + $0x1d4] sm:$0xf]
    %v1382 = vld [vmem:[%s3 + $0x1d8] sm:$0xf]
    %v1383 = vld [vmem:[%s3 + $0x1dc] sm:$0xf]
    %v1384 = vld [vmem:[%s3 + $0x1e0] sm:$0xf]
    %v1385 = vld [vmem:[%s3 + $0x1e4] sm:$0xf]
    %v1386 = vld [vmem:[%s3 + $0x1e8] sm:$0xf]
    %v1387 = vld [vmem:[%s3 + $0x1ec] sm:$0xf]
    %v1388 = vld [vmem:[%s3 + $0x1f0] sm:$0xf]
    %v1389 = vld [vmem:[%s3 + $0x1f4] sm:$0xf]
    %v1390 = vld [vmem:[%s3 + $0x1f8] sm:$0xf]
    %v1391 = vld [vmem:[%s3 + $0x1fc] sm:$0xf]
    %v1392 = vrot.slane %v625, 7
    %v1410 = vunpack.c.l.b16 %v1376
    %v1411 = vunpack.c.l.b16 %v1377
    %v1412 = vunpack.c.l.b16 %v1378
    %v1413 = vunpack.c.l.b16 %v1379
    %v1414 = vunpack.c.l.b16 %v1380
    %v1415 = vunpack.c.l.b16 %v1381
    %v1416 = vunpack.c.l.b16 %v1382
    %v1417 = vunpack.c.l.b16 %v1383
    %v1418 = vunpack.c.l.b16 %v1384
    %v1419 = vunpack.c.l.b16 %v1385
    %v1420 = vunpack.c.l.b16 %v1386
    %v1421 = vunpack.c.l.b16 %v1387
    %v1422 = vunpack.c.l.b16 %v1388
    %v1423 = vunpack.c.l.b16 %v1389
    %v1424 = vunpack.c.l.b16 %v1390
    %v1425 = vunpack.c.l.b16 %v1391
    %v1426 = vpack.c.b16 %v1411, %v1410
    %v1427 = vpack.c.b16 %v1413, %v1412
    %v1428 = vpack.c.b16 %v1415, %v1414
    %v1429 = vpack.c.b16 %v1417, %v1416
    %v1430 = vpack.c.b16 %v1419, %v1418
    %v1431 = vpack.c.b16 %v1421, %v1420
    %v1432 = vpack.c.b16 %v1423, %v1422
    %v1433 = vpack.c.b16 %v1425, %v1424
    %1442 = vmatprep.subr.bf16.mxu0 0
    %1443 = vmatpush1.bf16.msra.mxu0 %v1426
    %1444 = vmatprep.subr.bf16.mxu0 0
    %1445 = vmatpush1.bf16.msra.mxu0 %v1427
    %1446 = vmatprep.subr.bf16.mxu0 0
    %1447 = vmatpush1.bf16.msra.mxu0 %v1428
    %1448 = vmatprep.subr.bf16.mxu0 0
    %1449 = vmatpush1.bf16.msra.mxu0 %v1429
    %1450 = vmatprep.subr.bf16.mxu0 0
    %1451 = vmatpush1.bf16.msra.mxu0 %v1430
    %1452 = vmatprep.subr.bf16.mxu0 0
    %1453 = vmatpush1.bf16.msra.mxu0 %v1431
    %1454 = vmatprep.subr.bf16.mxu0 0
    %1455 = vmatpush1.bf16.msra.mxu0 %v1432
    %1456 = vmatprep.subr.bf16.mxu0 0
    %1457 = vmatpush1.bf16.msra.mxu0 %v1433
    %1458 = vmatprep.subr.bf16.mxu0 0
    %1459 = vmatpush1.bf16.msra.mxu0 0
    %1460 = vmatprep.subr.bf16.mxu0 0
    %1461 = vmatpush1.bf16.msra.mxu0 0
    %1462 = vmatprep.subr.bf16.mxu0 0
    %1463 = vmatpush1.bf16.msra.mxu0 0
    %1464 = vmatprep.subr.bf16.mxu0 0
    %1465 = vmatpush1.bf16.msra.mxu0 0
    %1466 = vmatprep.subr.bf16.mxu0 0
    %1467 = vmatpush1.bf16.msra.mxu0 0
    %1468 = vmatprep.subr.bf16.mxu0 0
    %1469 = vmatpush1.bf16.msra.mxu0 0
    %1470 = vmatprep.subr.bf16.mxu0 0
    %1471 = vmatpush1.bf16.msra.mxu0 0
    %1472 = vmatprep.subr.bf16.mxu0 0
    %1473 = vmatpush1.bf16.msra.mxu0 0
    %1474 = vmatprep.mubr.bf16.mxu0 0
    %1475 = vmatmul.mubr.bf16.gmra.mrb[0].mxu0 %v1392
    %v1476 = vpop.f32.mrb[0].mxu0
    %v1477 = vadd.f32 0.0, %v1476
    %v1478 = vpop.f32.mrb[0].mxu0
    %v1479 = vpop.f32.mrb[0].mxu0
    %v1480 = vpop.f32.mrb[0].mxu0
    %1481 = vdwg.mxu0
    %v1482 = vadd.f32 %v1375, %v1477
    %v1483 = vld [vmem:[%s3 + $0x200] sm:$0xf]
    %v1484 = vld [vmem:[%s3 + $0x204] sm:$0xf]
    %v1485 = vld [vmem:[%s3 + $0x208] sm:$0xf]
    %v1486 = vld [vmem:[%s3 + $0x20c] sm:$0xf]
    %v1487 = vld [vmem:[%s3 + $0x210] sm:$0xf]
    %v1488 = vld [vmem:[%s3 + $0x214] sm:$0xf]
    %v1489 = vld [vmem:[%s3 + $0x218] sm:$0xf]
    %v1490 = vld [vmem:[%s3 + $0x21c] sm:$0xf]
    %v1491 = vld [vmem:[%s3 + $0x220] sm:$0xf]
    %v1492 = vld [vmem:[%s3 + $0x224] sm:$0xf]
    %v1493 = vld [vmem:[%s3 + $0x228] sm:$0xf]
    %v1494 = vld [vmem:[%s3 + $0x22c] sm:$0xf]
    %v1495 = vld [vmem:[%s3 + $0x230] sm:$0xf]
    %v1496 = vld [vmem:[%s3 + $0x234] sm:$0xf]
    %v1497 = vld [vmem:[%s3 + $0x238] sm:$0xf]
    %v1498 = vld [vmem:[%s3 + $0x23c] sm:$0xf]
    %v1515 = vunpack.c.l.b16 %v1483
    %v1516 = vunpack.c.l.b16 %v1484
    %v1517 = vunpack.c.l.b16 %v1485
    %v1518 = vunpack.c.l.b16 %v1486
    %v1519 = vunpack.c.l.b16 %v1487
    %v1520 = vunpack.c.l.b16 %v1488
    %v1521 = vunpack.c.l.b16 %v1489
    %v1522 = vunpack.c.l.b16 %v1490
    %v1523 = vunpack.c.l.b16 %v1491
    %v1524 = vunpack.c.l.b16 %v1492
    %v1525 = vunpack.c.l.b16 %v1493
    %v1526 = vunpack.c.l.b16 %v1494
    %v1527 = vunpack.c.l.b16 %v1495
    %v1528 = vunpack.c.l.b16 %v1496
    %v1529 = vunpack.c.l.b16 %v1497
    %v1530 = vunpack.c.l.b16 %v1498
    %v1531 = vpack.c.b16 %v1516, %v1515
    %v1532 = vpack.c.b16 %v1518, %v1517
    %v1533 = vpack.c.b16 %v1520, %v1519
    %v1534 = vpack.c.b16 %v1522, %v1521
    %v1535 = vpack.c.b16 %v1524, %v1523
    %v1536 = vpack.c.b16 %v1526, %v1525
    %v1537 = vpack.c.b16 %v1528, %v1527
    %v1538 = vpack.c.b16 %v1530, %v1529
    %1547 = vmatprep.subr.bf16.mxu0 0
    %1548 = vmatpush1.bf16.msra.mxu0 %v1531
    %1549 = vmatprep.subr.bf16.mxu0 0
    %1550 = vmatpush1.bf16.msra.mxu0 %v1532
    %1551 = vmatprep.subr.bf16.mxu0 0
    %1552 = vmatpush1.bf16.msra.mxu0 %v1533
    %1553 = vmatprep.subr.bf16.mxu0 0
    %1554 = vmatpush1.bf16.msra.mxu0 %v1534
    %1555 = vmatprep.subr.bf16.mxu0 0
    %1556 = vmatpush1.bf16.msra.mxu0 %v1535
    %1557 = vmatprep.subr.bf16.mxu0 0
    %1558 = vmatpush1.bf16.msra.mxu0 %v1536
    %1559 = vmatprep.subr.bf16.mxu0 0
    %1560 = vmatpush1.bf16.msra.mxu0 %v1537
    %1561 = vmatprep.subr.bf16.mxu0 0
    %1562 = vmatpush1.bf16.msra.mxu0 %v1538
    %1563 = vmatprep.subr.bf16.mxu0 0
    %1564 = vmatpush1.bf16.msra.mxu0 0
    %1565 = vmatprep.subr.bf16.mxu0 0
    %1566 = vmatpush1.bf16.msra.mxu0 0
    %1567 = vmatprep.subr.bf16.mxu0 0
    %1568 = vmatpush1.bf16.msra.mxu0 0
    %1569 = vmatprep.subr.bf16.mxu0 0
    %1570 = vmatpush1.bf16.msra.mxu0 0
    %1571 = vmatprep.subr.bf16.mxu0 0
    %1572 = vmatpush1.bf16.msra.mxu0 0
    %1573 = vmatprep.subr.bf16.mxu0 0
    %1574 = vmatpush1.bf16.msra.mxu0 0
    %1575 = vmatprep.subr.bf16.mxu0 0
    %1576 = vmatpush1.bf16.msra.mxu0 0
    %1577 = vmatprep.subr.bf16.mxu0 0
    %1578 = vmatpush1.bf16.msra.mxu0 0
    %1579 = vmatprep.mubr.bf16.mxu0 0
    %1580 = vmatmul.mubr.bf16.gmra.mrb[0].mxu0 %v626
    %v1581 = vpop.f32.mrb[0].mxu0
    %v1582 = vadd.f32 0.0, %v1581
    %v1583 = vpop.f32.mrb[0].mxu0
    %v1584 = vpop.f32.mrb[0].mxu0
    %v1585 = vpop.f32.mrb[0].mxu0
    %1586 = vdwg.mxu0
    %v1587 = vadd.f32 %v1482, %v1582
    %v1588 = vld [vmem:[%s3 + $0x240] sm:$0xf]
    %v1589 = vld [vmem:[%s3 + $0x244] sm:$0xf]
    %v1590 = vld [vmem:[%s3 + $0x248] sm:$0xf]
    %v1591 = vld [vmem:[%s3 + $0x24c] sm:$0xf]
    %v1592 = vld [vmem:[%s3 + $0x250] sm:$0xf]
    %v1593 = vld [vmem:[%s3 + $0x254] sm:$0xf]
    %v1594 = vld [vmem:[%s3 + $0x258] sm:$0xf]
    %v1595 = vld [vmem:[%s3 + $0x25c] sm:$0xf]
    %v1596 = vld [vmem:[%s3 + $0x260] sm:$0xf]
    %v1597 = vld [vmem:[%s3 + $0x264] sm:$0xf]
    %v1598 = vld [vmem:[%s3 + $0x268] sm:$0xf]
    %v1599 = vld [vmem:[%s3 + $0x26c] sm:$0xf]
    %v1600 = vld [vmem:[%s3 + $0x270] sm:$0xf]
    %v1601 = vld [vmem:[%s3 + $0x274] sm:$0xf]
    %v1602 = vld [vmem:[%s3 + $0x278] sm:$0xf]
    %v1603 = vld [vmem:[%s3 + $0x27c] sm:$0xf]
    %v1605 = vrot.slane %v626, 1
    %v1623 = vunpack.c.l.b16 %v1588
    %v1624 = vunpack.c.l.b16 %v1589
    %v1625 = vunpack.c.l.b16 %v1590
    %v1626 = vunpack.c.l.b16 %v1591
    %v1627 = vunpack.c.l.b16 %v1592
    %v1628 = vunpack.c.l.b16 %v1593
    %v1629 = vunpack.c.l.b16 %v1594
    %v1630 = vunpack.c.l.b16 %v1595
    %v1631 = vunpack.c.l.b16 %v1596
    %v1632 = vunpack.c.l.b16 %v1597
    %v1633 = vunpack.c.l.b16 %v1598
    %v1634 = vunpack.c.l.b16 %v1599
    %v1635 = vunpack.c.l.b16 %v1600
    %v1636 = vunpack.c.l.b16 %v1601
    %v1637 = vunpack.c.l.b16 %v1602
    %v1638 = vunpack.c.l.b16 %v1603
    %v1639 = vpack.c.b16 %v1624, %v1623
    %v1640 = vpack.c.b16 %v1626, %v1625
    %v1641 = vpack.c.b16 %v1628, %v1627
    %v1642 = vpack.c.b16 %v1630, %v1629
    %v1643 = vpack.c.b16 %v1632, %v1631
    %v1644 = vpack.c.b16 %v1634, %v1633
    %v1645 = vpack.c.b16 %v1636, %v1635
    %v1646 = vpack.c.b16 %v1638, %v1637
    %1655 = vmatprep.subr.bf16.mxu0 0
    %1656 = vmatpush1.bf16.msra.mxu0 %v1639
    %1657 = vmatprep.subr.bf16.mxu0 0
    %1658 = vmatpush1.bf16.msra.mxu0 %v1640
    %1659 = vmatprep.subr.bf16.mxu0 0
    %1660 = vmatpush1.bf16.msra.mxu0 %v1641
    %1661 = vmatprep.subr.bf16.mxu0 0
    %1662 = vmatpush1.bf16.msra.mxu0 %v1642
    %1663 = vmatprep.subr.bf16.mxu0 0
    %1664 = vmatpush1.bf16.msra.mxu0 %v1643
    %1665 = vmatprep.subr.bf16.mxu0 0
    %1666 = vmatpush1.bf16.msra.mxu0 %v1644
    %1667 = vmatprep.subr.bf16.mxu0 0
    %1668 = vmatpush1.bf16.msra.mxu0 %v1645
    %1669 = vmatprep.subr.bf16.mxu0 0
    %1670 = vmatpush1.bf16.msra.mxu0 %v1646
    %1671 = vmatprep.subr.bf16.mxu0 0
    %1672 = vmatpush1.bf16.msra.mxu0 0
    %1673 = vmatprep.subr.bf16.mxu0 0
    %1674 = vmatpush1.bf16.msra.mxu0 0
    %1675 = vmatprep.subr.bf16.mxu0 0
    %1676 = vmatpush1.bf16.msra.mxu0 0
    %1677 = vmatprep.subr.bf16.mxu0 0
    %1678 = vmatpush1.bf16.msra.mxu0 0
    %1679 = vmatprep.subr.bf16.mxu0 0
    %1680 = vmatpush1.bf16.msra.mxu0 0
    %1681 = vmatprep.subr.bf16.mxu0 0
    %1682 = vmatpush1.bf16.msra.mxu0 0
    %1683 = vmatprep.subr.bf16.mxu0 0
    %1684 = vmatpush1.bf16.msra.mxu0 0
    %1685 = vmatprep.subr.bf16.mxu0 0
    %1686 = vmatpush1.bf16.msra.mxu0 0
    %1687 = vmatprep.mubr.bf16.mxu0 0
    %1688 = vmatmul.mubr.bf16.gmra.mrb[0].mxu0 %v1605
    %v1689 = vpop.f32.mrb[0].mxu0
    %v1690 = vadd.f32 0.0, %v1689
    %v1691 = vpop.f32.mrb[0].mxu0
    %v1692 = vpop.f32.mrb[0].mxu0
    %v1693 = vpop.f32.mrb[0].mxu0
    %1694 = vdwg.mxu0
    %v1695 = vadd.f32 %v1587, %v1690
    %v1696 = vld [vmem:[%s3 + $0x280] sm:$0xf]
    %v1697 = vld [vmem:[%s3 + $0x284] sm:$0xf]
    %v1698 = vld [vmem:[%s3 + $0x288] sm:$0xf]
    %v1699 = vld [vmem:[%s3 + $0x28c] sm:$0xf]
    %v1700 = vld [vmem:[%s3 + $0x290] sm:$0xf]
    %v1701 = vld [vmem:[%s3 + $0x294] sm:$0xf]
    %v1702 = vld [vmem:[%s3 + $0x298] sm:$0xf]
    %v1703 = vld [vmem:[%s3 + $0x29c] sm:$0xf]
    %v1704 = vld [vmem:[%s3 + $0x2a0] sm:$0xf]
    %v1705 = vld [vmem:[%s3 + $0x2a4] sm:$0xf]
    %v1706 = vld [vmem:[%s3 + $0x2a8] sm:$0xf]
    %v1707 = vld [vmem:[%s3 + $0x2ac] sm:$0xf]
    %v1708 = vld [vmem:[%s3 + $0x2b0] sm:$0xf]
    %v1709 = vld [vmem:[%s3 + $0x2b4] sm:$0xf]
    %v1710 = vld [vmem:[%s3 + $0x2b8] sm:$0xf]
    %v1711 = vld [vmem:[%s3 + $0x2bc] sm:$0xf]
    %v1712 = vrot.slane %v626, 2
    %v1730 = vunpack.c.l.b16 %v1696
    %v1731 = vunpack.c.l.b16 %v1697
    %v1732 = vunpack.c.l.b16 %v1698
    %v1733 = vunpack.c.l.b16 %v1699
    %v1734 = vunpack.c.l.b16 %v1700
    %v1735 = vunpack.c.l.b16 %v1701
    %v1736 = vunpack.c.l.b16 %v1702
    %v1737 = vunpack.c.l.b16 %v1703
    %v1738 = vunpack.c.l.b16 %v1704
    %v1739 = vunpack.c.l.b16 %v1705
    %v1740 = vunpack.c.l.b16 %v1706
    %v1741 = vunpack.c.l.b16 %v1707
    %v1742 = vunpack.c.l.b16 %v1708
    %v1743 = vunpack.c.l.b16 %v1709
    %v1744 = vunpack.c.l.b16 %v1710
    %v1745 = vunpack.c.l.b16 %v1711
    %v1746 = vpack.c.b16 %v1731, %v1730
    %v1747 = vpack.c.b16 %v1733, %v1732
    %v1748 = vpack.c.b16 %v1735, %v1734
    %v1749 = vpack.c.b16 %v1737, %v1736
    %v1750 = vpack.c.b16 %v1739, %v1738
    %v1751 = vpack.c.b16 %v1741, %v1740
    %v1752 = vpack.c.b16 %v1743, %v1742
    %v1753 = vpack.c.b16 %v1745, %v1744
    %1762 = vmatprep.subr.bf16.mxu0 0
    %1763 = vmatpush1.bf16.msra.mxu0 %v1746
    %1764 = vmatprep.subr.bf16.mxu0 0
    %1765 = vmatpush1.bf16.msra.mxu0 %v1747
    %1766 = vmatprep.subr.bf16.mxu0 0
    %1767 = vmatpush1.bf16.msra.mxu0 %v1748
    %1768 = vmatprep.subr.bf16.mxu0 0
    %1769 = vmatpush1.bf16.msra.mxu0 %v1749
    %1770 = vmatprep.subr.bf16.mxu0 0
    %1771 = vmatpush1.bf16.msra.mxu0 %v1750
    %1772 = vmatprep.subr.bf16.mxu0 0
    %1773 = vmatpush1.bf16.msra.mxu0 %v1751
    %1774 = vmatprep.subr.bf16.mxu0 0
    %1775 = vmatpush1.bf16.msra.mxu0 %v1752
    %1776 = vmatprep.subr.bf16.mxu0 0
    %1777 = vmatpush1.bf16.msra.mxu0 %v1753
    %1778 = vmatprep.subr.bf16.mxu0 0
    %1779 = vmatpush1.bf16.msra.mxu0 0
    %1780 = vmatprep.subr.bf16.mxu0 0
    %1781 = vmatpush1.bf16.msra.mxu0 0
    %1782 = vmatprep.subr.bf16.mxu0 0
    %1783 = vmatpush1.bf16.msra.mxu0 0
    %1784 = vmatprep.subr.bf16.mxu0 0
    %1785 = vmatpush1.bf16.msra.mxu0 0
    %1786 = vmatprep.subr.bf16.mxu0 0
    %1787 = vmatpush1.bf16.msra.mxu0 0
    %1788 = vmatprep.subr.bf16.mxu0 0
    %1789 = vmatpush1.bf16.msra.mxu0 0
    %1790 = vmatprep.subr.bf16.mxu0 0
    %1791 = vmatpush1.bf16.msra.mxu0 0
    %1792 = vmatprep.subr.bf16.mxu0 0
    %1793 = vmatpush1.bf16.msra.mxu0 0
    %1794 = vmatprep.mubr.bf16.mxu0 0
    %1795 = vmatmul.mubr.bf16.gmra.mrb[0].mxu0 %v1712
    %v1796 = vpop.f32.mrb[0].mxu0
    %v1797 = vadd.f32 0.0, %v1796
    %v1798 = vpop.f32.mrb[0].mxu0
    %v1799 = vpop.f32.mrb[0].mxu0
    %v1800 = vpop.f32.mrb[0].mxu0
    %1801 = vdwg.mxu0
    %v1802 = vadd.f32 %v1695, %v1797
    %v1803 = vld [vmem:[%s3 + $0x2c0] sm:$0xf]
    %v1804 = vld [vmem:[%s3 + $0x2c4] sm:$0xf]
    %v1805 = vld [vmem:[%s3 + $0x2c8] sm:$0xf]
    %v1806 = vld [vmem:[%s3 + $0x2cc] sm:$0xf]
    %v1807 = vld [vmem:[%s3 + $0x2d0] sm:$0xf]
    %v1808 = vld [vmem:[%s3 + $0x2d4] sm:$0xf]
    %v1809 = vld [vmem:[%s3 + $0x2d8] sm:$0xf]
    %v1810 = vld [vmem:[%s3 + $0x2dc] sm:$0xf]
    %v1811 = vld [vmem:[%s3 + $0x2e0] sm:$0xf]
    %v1812 = vld [vmem:[%s3 + $0x2e4] sm:$0xf]
    %v1813 = vld [vmem:[%s3 + $0x2e8] sm:$0xf]
    %v1814 = vld [vmem:[%s3 + $0x2ec] sm:$0xf]
    %v1815 = vld [vmem:[%s3 + $0x2f0] sm:$0xf]
    %v1816 = vld [vmem:[%s3 + $0x2f4] sm:$0xf]
    %v1817 = vld [vmem:[%s3 + $0x2f8] sm:$0xf]
    %v1818 = vld [vmem:[%s3 + $0x2fc] sm:$0xf]
    %v1819 = vrot.slane %v626, 3
    %v1837 = vunpack.c.l.b16 %v1803
    %v1838 = vunpack.c.l.b16 %v1804
    %v1839 = vunpack.c.l.b16 %v1805
    %v1840 = vunpack.c.l.b16 %v1806
    %v1841 = vunpack.c.l.b16 %v1807
    %v1842 = vunpack.c.l.b16 %v1808
    %v1843 = vunpack.c.l.b16 %v1809
    %v1844 = vunpack.c.l.b16 %v1810
    %v1845 = vunpack.c.l.b16 %v1811
    %v1846 = vunpack.c.l.b16 %v1812
    %v1847 = vunpack.c.l.b16 %v1813
    %v1848 = vunpack.c.l.b16 %v1814
    %v1849 = vunpack.c.l.b16 %v1815
    %v1850 = vunpack.c.l.b16 %v1816
    %v1851 = vunpack.c.l.b16 %v1817
    %v1852 = vunpack.c.l.b16 %v1818
    %v1853 = vpack.c.b16 %v1838, %v1837
    %v1854 = vpack.c.b16 %v1840, %v1839
    %v1855 = vpack.c.b16 %v1842, %v1841
    %v1856 = vpack.c.b16 %v1844, %v1843
    %v1857 = vpack.c.b16 %v1846, %v1845
    %v1858 = vpack.c.b16 %v1848, %v1847
    %v1859 = vpack.c.b16 %v1850, %v1849
    %v1860 = vpack.c.b16 %v1852, %v1851
    %1869 = vmatprep.subr.bf16.mxu0 0
    %1870 = vmatpush1.bf16.msra.mxu0 %v1853
    %1871 = vmatprep.subr.bf16.mxu0 0
    %1872 = vmatpush1.bf16.msra.mxu0 %v1854
    %1873 = vmatprep.subr.bf16.mxu0 0
    %1874 = vmatpush1.bf16.msra.mxu0 %v1855
    %1875 = vmatprep.subr.bf16.mxu0 0
    %1876 = vmatpush1.bf16.msra.mxu0 %v1856
    %1877 = vmatprep.subr.bf16.mxu0 0
    %1878 = vmatpush1.bf16.msra.mxu0 %v1857
    %1879 = vmatprep.subr.bf16.mxu0 0
    %1880 = vmatpush1.bf16.msra.mxu0 %v1858
    %1881 = vmatprep.subr.bf16.mxu0 0
    %1882 = vmatpush1.bf16.msra.mxu0 %v1859
    %1883 = vmatprep.subr.bf16.mxu0 0
    %1884 = vmatpush1.bf16.msra.mxu0 %v1860
    %1885 = vmatprep.subr.bf16.mxu0 0
    %1886 = vmatpush1.bf16.msra.mxu0 0
    %1887 = vmatprep.subr.bf16.mxu0 0
    %1888 = vmatpush1.bf16.msra.mxu0 0
    %1889 = vmatprep.subr.bf16.mxu0 0
    %1890 = vmatpush1.bf16.msra.mxu0 0
    %1891 = vmatprep.subr.bf16.mxu0 0
    %1892 = vmatpush1.bf16.msra.mxu0 0
    %1893 = vmatprep.subr.bf16.mxu0 0
    %1894 = vmatpush1.bf16.msra.mxu0 0
    %1895 = vmatprep.subr.bf16.mxu0 0
    %1896 = vmatpush1.bf16.msra.mxu0 0
    %1897 = vmatprep.subr.bf16.mxu0 0
    %1898 = vmatpush1.bf16.msra.mxu0 0
    %1899 = vmatprep.subr.bf16.mxu0 0
    %1900 = vmatpush1.bf16.msra.mxu0 0
    %1901 = vmatprep.mubr.bf16.mxu0 0
    %1902 = vmatmul.mubr.bf16.gmra.mrb[0].mxu0 %v1819
    %v1903 = vpop.f32.mrb[0].mxu0
    %v1904 = vadd.f32 0.0, %v1903
    %v1905 = vpop.f32.mrb[0].mxu0
    %v1906 = vpop.f32.mrb[0].mxu0
    %v1907 = vpop.f32.mrb[0].mxu0
    %1908 = vdwg.mxu0
    %v1909 = vadd.f32 %v1802, %v1904
    %v1910 = vld [vmem:[%s3 + $0x300] sm:$0xf]
    %v1911 = vld [vmem:[%s3 + $0x304] sm:$0xf]
    %v1912 = vld [vmem:[%s3 + $0x308] sm:$0xf]
    %v1913 = vld [vmem:[%s3 + $0x30c] sm:$0xf]
    %v1914 = vld [vmem:[%s3 + $0x310] sm:$0xf]
    %v1915 = vld [vmem:[%s3 + $0x314] sm:$0xf]
    %v1916 = vld [vmem:[%s3 + $0x318] sm:$0xf]
    %v1917 = vld [vmem:[%s3 + $0x31c] sm:$0xf]
    %v1918 = vld [vmem:[%s3 + $0x320] sm:$0xf]
    %v1919 = vld [vmem:[%s3 + $0x324] sm:$0xf]
    %v1920 = vld [vmem:[%s3 + $0x328] sm:$0xf]
    %v1921 = vld [vmem:[%s3 + $0x32c] sm:$0xf]
    %v1922 = vld [vmem:[%s3 + $0x330] sm:$0xf]
    %v1923 = vld [vmem:[%s3 + $0x334] sm:$0xf]
    %v1924 = vld [vmem:[%s3 + $0x338] sm:$0xf]
    %v1925 = vld [vmem:[%s3 + $0x33c] sm:$0xf]
    %v1926 = vrot.slane %v626, 4
    %v1944 = vunpack.c.l.b16 %v1910
    %v1945 = vunpack.c.l.b16 %v1911
    %v1946 = vunpack.c.l.b16 %v1912
    %v1947 = vunpack.c.l.b16 %v1913
    %v1948 = vunpack.c.l.b16 %v1914
    %v1949 = vunpack.c.l.b16 %v1915
    %v1950 = vunpack.c.l.b16 %v1916
    %v1951 = vunpack.c.l.b16 %v1917
    %v1952 = vunpack.c.l.b16 %v1918
    %v1953 = vunpack.c.l.b16 %v1919
    %v1954 = vunpack.c.l.b16 %v1920
    %v1955 = vunpack.c.l.b16 %v1921
    %v1956 = vunpack.c.l.b16 %v1922
    %v1957 = vunpack.c.l.b16 %v1923
    %v1958 = vunpack.c.l.b16 %v1924
    %v1959 = vunpack.c.l.b16 %v1925
    %v1960 = vpack.c.b16 %v1945, %v1944
    %v1961 = vpack.c.b16 %v1947, %v1946
    %v1962 = vpack.c.b16 %v1949, %v1948
    %v1963 = vpack.c.b16 %v1951, %v1950
    %v1964 = vpack.c.b16 %v1953, %v1952
    %v1965 = vpack.c.b16 %v1955, %v1954
    %v1966 = vpack.c.b16 %v1957, %v1956
    %v1967 = vpack.c.b16 %v1959, %v1958
    %1976 = vmatprep.subr.bf16.mxu0 0
    %1977 = vmatpush1.bf16.msra.mxu0 %v1960
    %1978 = vmatprep.subr.bf16.mxu0 0
    %1979 = vmatpush1.bf16.msra.mxu0 %v1961
    %1980 = vmatprep.subr.bf16.mxu0 0
    %1981 = vmatpush1.bf16.msra.mxu0 %v1962
    %1982 = vmatprep.subr.bf16.mxu0 0
    %1983 = vmatpush1.bf16.msra.mxu0 %v1963
    %1984 = vmatprep.subr.bf16.mxu0 0
    %1985 = vmatpush1.bf16.msra.mxu0 %v1964
    %1986 = vmatprep.subr.bf16.mxu0 0
    %1987 = vmatpush1.bf16.msra.mxu0 %v1965
    %1988 = vmatprep.subr.bf16.mxu0 0
    %1989 = vmatpush1.bf16.msra.mxu0 %v1966
    %1990 = vmatprep.subr.bf16.mxu0 0
    %1991 = vmatpush1.bf16.msra.mxu0 %v1967
    %1992 = vmatprep.subr.bf16.mxu0 0
    %1993 = vmatpush1.bf16.msra.mxu0 0
    %1994 = vmatprep.subr.bf16.mxu0 0
    %1995 = vmatpush1.bf16.msra.mxu0 0
    %1996 = vmatprep.subr.bf16.mxu0 0
    %1997 = vmatpush1.bf16.msra.mxu0 0
    %1998 = vmatprep.subr.bf16.mxu0 0
    %1999 = vmatpush1.bf16.msra.mxu0 0
    %2000 = vmatprep.subr.bf16.mxu0 0
    %2001 = vmatpush1.bf16.msra.mxu0 0
    %2002 = vmatprep.subr.bf16.mxu0 0
    %2003 = vmatpush1.bf16.msra.mxu0 0
    %2004 = vmatprep.subr.bf16.mxu0 0
    %2005 = vmatpush1.bf16.msra.mxu0 0
    %2006 = vmatprep.subr.bf16.mxu0 0
    %2007 = vmatpush1.bf16.msra.mxu0 0
    %2008 = vmatprep.mubr.bf16.mxu0 0
    %2009 = vmatmul.mubr.bf16.gmra.mrb[0].mxu0 %v1926
    %v2010 = vpop.f32.mrb[0].mxu0
    %v2011 = vadd.f32 0.0, %v2010
    %v2012 = vpop.f32.mrb[0].mxu0
    %v2013 = vpop.f32.mrb[0].mxu0
    %v2014 = vpop.f32.mrb[0].mxu0
    %2015 = vdwg.mxu0
    %v2016 = vadd.f32 %v1909, %v2011
    %v2017 = vld [vmem:[%s3 + $0x340] sm:$0xf]
    %v2018 = vld [vmem:[%s3 + $0x344] sm:$0xf]
    %v2019 = vld [vmem:[%s3 + $0x348] sm:$0xf]
    %v2020 = vld [vmem:[%s3 + $0x34c] sm:$0xf]
    %v2021 = vld [vmem:[%s3 + $0x350] sm:$0xf]
    %v2022 = vld [vmem:[%s3 + $0x354] sm:$0xf]
    %v2023 = vld [vmem:[%s3 + $0x358] sm:$0xf]
    %v2024 = vld [vmem:[%s3 + $0x35c] sm:$0xf]
    %v2025 = vld [vmem:[%s3 + $0x360] sm:$0xf]
    %v2026 = vld [vmem:[%s3 + $0x364] sm:$0xf]
    %v2027 = vld [vmem:[%s3 + $0x368] sm:$0xf]
    %v2028 = vld [vmem:[%s3 + $0x36c] sm:$0xf]
    %v2029 = vld [vmem:[%s3 + $0x370] sm:$0xf]
    %v2030 = vld [vmem:[%s3 + $0x374] sm:$0xf]
    %v2031 = vld [vmem:[%s3 + $0x378] sm:$0xf]
    %v2032 = vld [vmem:[%s3 + $0x37c] sm:$0xf]
    %v2033 = vrot.slane %v626, 5
    %v2051 = vunpack.c.l.b16 %v2017
    %v2052 = vunpack.c.l.b16 %v2018
    %v2053 = vunpack.c.l.b16 %v2019
    %v2054 = vunpack.c.l.b16 %v2020
    %v2055 = vunpack.c.l.b16 %v2021
    %v2056 = vunpack.c.l.b16 %v2022
    %v2057 = vunpack.c.l.b16 %v2023
    %v2058 = vunpack.c.l.b16 %v2024
    %v2059 = vunpack.c.l.b16 %v2025
    %v2060 = vunpack.c.l.b16 %v2026
    %v2061 = vunpack.c.l.b16 %v2027
    %v2062 = vunpack.c.l.b16 %v2028
    %v2063 = vunpack.c.l.b16 %v2029
    %v2064 = vunpack.c.l.b16 %v2030
    %v2065 = vunpack.c.l.b16 %v2031
    %v2066 = vunpack.c.l.b16 %v2032
    %v2067 = vpack.c.b16 %v2052, %v2051
    %v2068 = vpack.c.b16 %v2054, %v2053
    %v2069 = vpack.c.b16 %v2056, %v2055
    %v2070 = vpack.c.b16 %v2058, %v2057
    %v2071 = vpack.c.b16 %v2060, %v2059
    %v2072 = vpack.c.b16 %v2062, %v2061
    %v2073 = vpack.c.b16 %v2064, %v2063
    %v2074 = vpack.c.b16 %v2066, %v2065
    %2083 = vmatprep.subr.bf16.mxu0 0
    %2084 = vmatpush1.bf16.msra.mxu0 %v2067
    %2085 = vmatprep.subr.bf16.mxu0 0
    %2086 = vmatpush1.bf16.msra.mxu0 %v2068
    %2087 = vmatprep.subr.bf16.mxu0 0
    %2088 = vmatpush1.bf16.msra.mxu0 %v2069
    %2089 = vmatprep.subr.bf16.mxu0 0
    %2090 = vmatpush1.bf16.msra.mxu0 %v2070
    %2091 = vmatprep.subr.bf16.mxu0 0
    %2092 = vmatpush1.bf16.msra.mxu0 %v2071
    %2093 = vmatprep.subr.bf16.mxu0 0
    %2094 = vmatpush1.bf16.msra.mxu0 %v2072
    %2095 = vmatprep.subr.bf16.mxu0 0
    %2096 = vmatpush1.bf16.msra.mxu0 %v2073
    %2097 = vmatprep.subr.bf16.mxu0 0
    %2098 = vmatpush1.bf16.msra.mxu0 %v2074
    %2099 = vmatprep.subr.bf16.mxu0 0
    %2100 = vmatpush1.bf16.msra.mxu0 0
    %2101 = vmatprep.subr.bf16.mxu0 0
    %2102 = vmatpush1.bf16.msra.mxu0 0
    %2103 = vmatprep.subr.bf16.mxu0 0
    %2104 = vmatpush1.bf16.msra.mxu0 0
    %2105 = vmatprep.subr.bf16.mxu0 0
    %2106 = vmatpush1.bf16.msra.mxu0 0
    %2107 = vmatprep.subr.bf16.mxu0 0
    %2108 = vmatpush1.bf16.msra.mxu0 0
    %2109 = vmatprep.subr.bf16.mxu0 0
    %2110 = vmatpush1.bf16.msra.mxu0 0
    %2111 = vmatprep.subr.bf16.mxu0 0
    %2112 = vmatpush1.bf16.msra.mxu0 0
    %2113 = vmatprep.subr.bf16.mxu0 0
    %2114 = vmatpush1.bf16.msra.mxu0 0
    %2115 = vmatprep.mubr.bf16.mxu0 0
    %2116 = vmatmul.mubr.bf16.gmra.mrb[0].mxu0 %v2033
    %v2117 = vpop.f32.mrb[0].mxu0
    %v2118 = vadd.f32 0.0, %v2117
    %v2119 = vpop.f32.mrb[0].mxu0
    %v2120 = vpop.f32.mrb[0].mxu0
    %v2121 = vpop.f32.mrb[0].mxu0
    %2122 = vdwg.mxu0
    %v2123 = vadd.f32 %v2016, %v2118
    %v2124 = vld [vmem:[%s3 + $0x380] sm:$0xf]
    %v2125 = vld [vmem:[%s3 + $0x384] sm:$0xf]
    %v2126 = vld [vmem:[%s3 + $0x388] sm:$0xf]
    %v2127 = vld [vmem:[%s3 + $0x38c] sm:$0xf]
    %v2128 = vld [vmem:[%s3 + $0x390] sm:$0xf]
    %v2129 = vld [vmem:[%s3 + $0x394] sm:$0xf]
    %v2130 = vld [vmem:[%s3 + $0x398] sm:$0xf]
    %v2131 = vld [vmem:[%s3 + $0x39c] sm:$0xf]
    %v2132 = vld [vmem:[%s3 + $0x3a0] sm:$0xf]
    %v2133 = vld [vmem:[%s3 + $0x3a4] sm:$0xf]
    %v2134 = vld [vmem:[%s3 + $0x3a8] sm:$0xf]
    %v2135 = vld [vmem:[%s3 + $0x3ac] sm:$0xf]
    %v2136 = vld [vmem:[%s3 + $0x3b0] sm:$0xf]
    %v2137 = vld [vmem:[%s3 + $0x3b4] sm:$0xf]
    %v2138 = vld [vmem:[%s3 + $0x3b8] sm:$0xf]
    %v2139 = vld [vmem:[%s3 + $0x3bc] sm:$0xf]
    %v2140 = vrot.slane %v626, 6
    %v2158 = vunpack.c.l.b16 %v2124
    %v2159 = vunpack.c.l.b16 %v2125
    %v2160 = vunpack.c.l.b16 %v2126
    %v2161 = vunpack.c.l.b16 %v2127
    %v2162 = vunpack.c.l.b16 %v2128
    %v2163 = vunpack.c.l.b16 %v2129
    %v2164 = vunpack.c.l.b16 %v2130
    %v2165 = vunpack.c.l.b16 %v2131
    %v2166 = vunpack.c.l.b16 %v2132
    %v2167 = vunpack.c.l.b16 %v2133
    %v2168 = vunpack.c.l.b16 %v2134
    %v2169 = vunpack.c.l.b16 %v2135
    %v2170 = vunpack.c.l.b16 %v2136
    %v2171 = vunpack.c.l.b16 %v2137
    %v2172 = vunpack.c.l.b16 %v2138
    %v2173 = vunpack.c.l.b16 %v2139
    %v2174 = vpack.c.b16 %v2159, %v2158
    %v2175 = vpack.c.b16 %v2161, %v2160
    %v2176 = vpack.c.b16 %v2163, %v2162
    %v2177 = vpack.c.b16 %v2165, %v2164
    %v2178 = vpack.c.b16 %v2167, %v2166
    %v2179 = vpack.c.b16 %v2169, %v2168
    %v2180 = vpack.c.b16 %v2171, %v2170
    %v2181 = vpack.c.b16 %v2173, %v2172
    %2190 = vmatprep.subr.bf16.mxu0 0
    %2191 = vmatpush1.bf16.msra.mxu0 %v2174
    %2192 = vmatprep.subr.bf16.mxu0 0
    %2193 = vmatpush1.bf16.msra.mxu0 %v2175
    %2194 = vmatprep.subr.bf16.mxu0 0
    %2195 = vmatpush1.bf16.msra.mxu0 %v2176
    %2196 = vmatprep.subr.bf16.mxu0 0
    %2197 = vmatpush1.bf16.msra.mxu0 %v2177
    %2198 = vmatprep.subr.bf16.mxu0 0
    %2199 = vmatpush1.bf16.msra.mxu0 %v2178
    %2200 = vmatprep.subr.bf16.mxu0 0
    %2201 = vmatpush1.bf16.msra.mxu0 %v2179
    %2202 = vmatprep.subr.bf16.mxu0 0
    %2203 = vmatpush1.bf16.msra.mxu0 %v2180
    %2204 = vmatprep.subr.bf16.mxu0 0
    %2205 = vmatpush1.bf16.msra.mxu0 %v2181
    %2206 = vmatprep.subr.bf16.mxu0 0
    %2207 = vmatpush1.bf16.msra.mxu0 0
    %2208 = vmatprep.subr.bf16.mxu0 0
    %2209 = vmatpush1.bf16.msra.mxu0 0
    %2210 = vmatprep.subr.bf16.mxu0 0
    %2211 = vmatpush1.bf16.msra.mxu0 0
    %2212 = vmatprep.subr.bf16.mxu0 0
    %2213 = vmatpush1.bf16.msra.mxu0 0
    %2214 = vmatprep.subr.bf16.mxu0 0
    %2215 = vmatpush1.bf16.msra.mxu0 0
    %2216 = vmatprep.subr.bf16.mxu0 0
    %2217 = vmatpush1.bf16.msra.mxu0 0
    %2218 = vmatprep.subr.bf16.mxu0 0
    %2219 = vmatpush1.bf16.msra.mxu0 0
    %2220 = vmatprep.subr.bf16.mxu0 0
    %2221 = vmatpush1.bf16.msra.mxu0 0
    %2222 = vmatprep.mubr.bf16.mxu0 0
    %2223 = vmatmul.mubr.bf16.gmra.mrb[0].mxu0 %v2140
    %v2224 = vpop.f32.mrb[0].mxu0
    %v2225 = vadd.f32 0.0, %v2224
    %v2226 = vpop.f32.mrb[0].mxu0
    %v2227 = vpop.f32.mrb[0].mxu0
    %v2228 = vpop.f32.mrb[0].mxu0
    %2229 = vdwg.mxu0
    %v2230 = vadd.f32 %v2123, %v2225
    %v2231 = vld [vmem:[%s3 + $0x3c0] sm:$0xf]
    %v2232 = vld [vmem:[%s3 + $0x3c4] sm:$0xf]
    %v2233 = vld [vmem:[%s3 + $0x3c8] sm:$0xf]
    %v2234 = vld [vmem:[%s3 + $0x3cc] sm:$0xf]
    %v2235 = vld [vmem:[%s3 + $0x3d0] sm:$0xf]
    %v2236 = vld [vmem:[%s3 + $0x3d4] sm:$0xf]
    %v2237 = vld [vmem:[%s3 + $0x3d8] sm:$0xf]
    %v2238 = vld [vmem:[%s3 + $0x3dc] sm:$0xf]
    %v2239 = vld [vmem:[%s3 + $0x3e0] sm:$0xf]
    %v2240 = vld [vmem:[%s3 + $0x3e4] sm:$0xf]
    %v2241 = vld [vmem:[%s3 + $0x3e8] sm:$0xf]
    %v2242 = vld [vmem:[%s3 + $0x3ec] sm:$0xf]
    %v2243 = vld [vmem:[%s3 + $0x3f0] sm:$0xf]
    %v2244 = vld [vmem:[%s3 + $0x3f4] sm:$0xf]
    %v2245 = vld [vmem:[%s3 + $0x3f8] sm:$0xf]
    %v2246 = vld [vmem:[%s3 + $0x3fc] sm:$0xf]
    %v2247 = vrot.slane %v626, 7
    %v2265 = vunpack.c.l.b16 %v2231
    %v2266 = vunpack.c.l.b16 %v2232
    %v2267 = vunpack.c.l.b16 %v2233
    %v2268 = vunpack.c.l.b16 %v2234
    %v2269 = vunpack.c.l.b16 %v2235
    %v2270 = vunpack.c.l.b16 %v2236
    %v2271 = vunpack.c.l.b16 %v2237
    %v2272 = vunpack.c.l.b16 %v2238
    %v2273 = vunpack.c.l.b16 %v2239
    %v2274 = vunpack.c.l.b16 %v2240
    %v2275 = vunpack.c.l.b16 %v2241
    %v2276 = vunpack.c.l.b16 %v2242
    %v2277 = vunpack.c.l.b16 %v2243
    %v2278 = vunpack.c.l.b16 %v2244
    %v2279 = vunpack.c.l.b16 %v2245
    %v2280 = vunpack.c.l.b16 %v2246
    %v2281 = vpack.c.b16 %v2266, %v2265
    %v2282 = vpack.c.b16 %v2268, %v2267
    %v2283 = vpack.c.b16 %v2270, %v2269
    %v2284 = vpack.c.b16 %v2272, %v2271
    %v2285 = vpack.c.b16 %v2274, %v2273
    %v2286 = vpack.c.b16 %v2276, %v2275
    %v2287 = vpack.c.b16 %v2278, %v2277
    %v2288 = vpack.c.b16 %v2280, %v2279
    %2297 = vmatprep.subr.bf16.mxu0 0
    %2298 = vmatpush1.bf16.msra.mxu0 %v2281
    %2299 = vmatprep.subr.bf16.mxu0 0
    %2300 = vmatpush1.bf16.msra.mxu0 %v2282
    %2301 = vmatprep.subr.bf16.mxu0 0
    %2302 = vmatpush1.bf16.msra.mxu0 %v2283
    %2303 = vmatprep.subr.bf16.mxu0 0
    %2304 = vmatpush1.bf16.msra.mxu0 %v2284
    %2305 = vmatprep.subr.bf16.mxu0 0
    %2306 = vmatpush1.bf16.msra.mxu0 %v2285
    %2307 = vmatprep.subr.bf16.mxu0 0
    %2308 = vmatpush1.bf16.msra.mxu0 %v2286
    %2309 = vmatprep.subr.bf16.mxu0 0
    %2310 = vmatpush1.bf16.msra.mxu0 %v2287
    %2311 = vmatprep.subr.bf16.mxu0 0
    %2312 = vmatpush1.bf16.msra.mxu0 %v2288
    %2313 = vmatprep.subr.bf16.mxu0 0
    %2314 = vmatpush1.bf16.msra.mxu0 0
    %2315 = vmatprep.subr.bf16.mxu0 0
    %2316 = vmatpush1.bf16.msra.mxu0 0
    %2317 = vmatprep.subr.bf16.mxu0 0
    %2318 = vmatpush1.bf16.msra.mxu0 0
    %2319 = vmatprep.subr.bf16.mxu0 0
    %2320 = vmatpush1.bf16.msra.mxu0 0
    %2321 = vmatprep.subr.bf16.mxu0 0
    %2322 = vmatpush1.bf16.msra.mxu0 0
    %2323 = vmatprep.subr.bf16.mxu0 0
    %2324 = vmatpush1.bf16.msra.mxu0 0
    %2325 = vmatprep.subr.bf16.mxu0 0
    %2326 = vmatpush1.bf16.msra.mxu0 0
    %2327 = vmatprep.subr.bf16.mxu0 0
    %2328 = vmatpush1.bf16.msra.mxu0 0
    %2329 = vmatprep.mubr.bf16.mxu0 0
    %2330 = vmatmul.mubr.bf16.gmra.mrb[0].mxu0 %v2247
    %v2331 = vpop.f32.mrb[0].mxu0
    %v2332 = vadd.f32 0.0, %v2331
    %v2333 = vpop.f32.mrb[0].mxu0
    %v2334 = vpop.f32.mrb[0].mxu0
    %v2335 = vpop.f32.mrb[0].mxu0
    %2336 = vdwg.mxu0
    %v2337 = vadd.f32 %v2230, %v2332
    %v2338 = vld [vmem:[%s3 + $0x400] sm:$0xf]
    %v2339 = vld [vmem:[%s3 + $0x404] sm:$0xf]
    %v2340 = vld [vmem:[%s3 + $0x408] sm:$0xf]
    %v2341 = vld [vmem:[%s3 + $0x40c] sm:$0xf]
    %v2342 = vld [vmem:[%s3 + $0x410] sm:$0xf]
    %v2343 = vld [vmem:[%s3 + $0x414] sm:$0xf]
    %v2344 = vld [vmem:[%s3 + $0x418] sm:$0xf]
    %v2345 = vld [vmem:[%s3 + $0x41c] sm:$0xf]
    %v2346 = vld [vmem:[%s3 + $0x420] sm:$0xf]
    %v2347 = vld [vmem:[%s3 + $0x424] sm:$0xf]
    %v2348 = vld [vmem:[%s3 + $0x428] sm:$0xf]
    %v2349 = vld [vmem:[%s3 + $0x42c] sm:$0xf]
    %v2350 = vld [vmem:[%s3 + $0x430] sm:$0xf]
    %v2351 = vld [vmem:[%s3 + $0x434] sm:$0xf]
    %v2352 = vld [vmem:[%s3 + $0x438] sm:$0xf]
    %v2353 = vld [vmem:[%s3 + $0x43c] sm:$0xf]
    %v2370 = vunpack.c.l.b16 %v2338
    %v2371 = vunpack.c.l.b16 %v2339
    %v2372 = vunpack.c.l.b16 %v2340
    %v2373 = vunpack.c.l.b16 %v2341
    %v2374 = vunpack.c.l.b16 %v2342
    %v2375 = vunpack.c.l.b16 %v2343
    %v2376 = vunpack.c.l.b16 %v2344
    %v2377 = vunpack.c.l.b16 %v2345
    %v2378 = vunpack.c.l.b16 %v2346
    %v2379 = vunpack.c.l.b16 %v2347
    %v2380 = vunpack.c.l.b16 %v2348
    %v2381 = vunpack.c.l.b16 %v2349
    %v2382 = vunpack.c.l.b16 %v2350
    %v2383 = vunpack.c.l.b16 %v2351
    %v2384 = vunpack.c.l.b16 %v2352
    %v2385 = vunpack.c.l.b16 %v2353
    %v2386 = vpack.c.b16 %v2371, %v2370
    %v2387 = vpack.c.b16 %v2373, %v2372
    %v2388 = vpack.c.b16 %v2375, %v2374
    %v2389 = vpack.c.b16 %v2377, %v2376
    %v2390 = vpack.c.b16 %v2379, %v2378
    %v2391 = vpack.c.b16 %v2381, %v2380
    %v2392 = vpack.c.b16 %v2383, %v2382
    %v2393 = vpack.c.b16 %v2385, %v2384
    %2402 = vmatprep.subr.bf16.mxu0 0
    %2403 = vmatpush1.bf16.msra.mxu0 %v2386
    %2404 = vmatprep.subr.bf16.mxu0 0
    %2405 = vmatpush1.bf16.msra.mxu0 %v2387
    %2406 = vmatprep.subr.bf16.mxu0 0
    %2407 = vmatpush1.bf16.msra.mxu0 %v2388
    %2408 = vmatprep.subr.bf16.mxu0 0
    %2409 = vmatpush1.bf16.msra.mxu0 %v2389
    %2410 = vmatprep.subr.bf16.mxu0 0
    %2411 = vmatpush1.bf16.msra.mxu0 %v2390
    %2412 = vmatprep.subr.bf16.mxu0 0
    %2413 = vmatpush1.bf16.msra.mxu0 %v2391
    %2414 = vmatprep.subr.bf16.mxu0 0
    %2415 = vmatpush1.bf16.msra.mxu0 %v2392
    %2416 = vmatprep.subr.bf16.mxu0 0
    %2417 = vmatpush1.bf16.msra.mxu0 %v2393
    %2418 = vmatprep.subr.bf16.mxu0 0
    %2419 = vmatpush1.bf16.msra.mxu0 0
    %2420 = vmatprep.subr.bf16.mxu0 0
    %2421 = vmatpush1.bf16.msra.mxu0 0
    %2422 = vmatprep.subr.bf16.mxu0 0
    %2423 = vmatpush1.bf16.msra.mxu0 0
    %2424 = vmatprep.subr.bf16.mxu0 0
    %2425 = vmatpush1.bf16.msra.mxu0 0
    %2426 = vmatprep.subr.bf16.mxu0 0
    %2427 = vmatpush1.bf16.msra.mxu0 0
    %2428 = vmatprep.subr.bf16.mxu0 0
    %2429 = vmatpush1.bf16.msra.mxu0 0
    %2430 = vmatprep.subr.bf16.mxu0 0
    %2431 = vmatpush1.bf16.msra.mxu0 0
    %2432 = vmatprep.subr.bf16.mxu0 0
    %2433 = vmatpush1.bf16.msra.mxu0 0
    %2434 = vmatprep.mubr.bf16.mxu0 0
    %2435 = vmatmul.mubr.bf16.gmra.mrb[0].mxu0 %v627
    %v2436 = vpop.f32.mrb[0].mxu0
    %v2437 = vadd.f32 0.0, %v2436
    %v2438 = vpop.f32.mrb[0].mxu0
    %v2439 = vpop.f32.mrb[0].mxu0
    %v2440 = vpop.f32.mrb[0].mxu0
    %2441 = vdwg.mxu0
    %v2442 = vadd.f32 %v2337, %v2437
    %v2443 = vld [vmem:[%s3 + $0x440] sm:$0xf]
    %v2444 = vld [vmem:[%s3 + $0x444] sm:$0xf]
    %v2445 = vld [vmem:[%s3 + $0x448] sm:$0xf]
    %v2446 = vld [vmem:[%s3 + $0x44c] sm:$0xf]
    %v2447 = vld [vmem:[%s3 + $0x450] sm:$0xf]
    %v2448 = vld [vmem:[%s3 + $0x454] sm:$0xf]
    %v2449 = vld [vmem:[%s3 + $0x458] sm:$0xf]
    %v2450 = vld [vmem:[%s3 + $0x45c] sm:$0xf]
    %v2451 = vld [vmem:[%s3 + $0x460] sm:$0xf]
    %v2452 = vld [vmem:[%s3 + $0x464] sm:$0xf]
    %v2453 = vld [vmem:[%s3 + $0x468] sm:$0xf]
    %v2454 = vld [vmem:[%s3 + $0x46c] sm:$0xf]
    %v2455 = vld [vmem:[%s3 + $0x470] sm:$0xf]
    %v2456 = vld [vmem:[%s3 + $0x474] sm:$0xf]
    %v2457 = vld [vmem:[%s3 + $0x478] sm:$0xf]
    %v2458 = vld [vmem:[%s3 + $0x47c] sm:$0xf]
    %v2460 = vrot.slane %v627, 1
    %v2478 = vunpack.c.l.b16 %v2443
    %v2479 = vunpack.c.l.b16 %v2444
    %v2480 = vunpack.c.l.b16 %v2445
    %v2481 = vunpack.c.l.b16 %v2446
    %v2482 = vunpack.c.l.b16 %v2447
    %v2483 = vunpack.c.l.b16 %v2448
    %v2484 = vunpack.c.l.b16 %v2449
    %v2485 = vunpack.c.l.b16 %v2450
    %v2486 = vunpack.c.l.b16 %v2451
    %v2487 = vunpack.c.l.b16 %v2452
    %v2488 = vunpack.c.l.b16 %v2453
    %v2489 = vunpack.c.l.b16 %v2454
    %v2490 = vunpack.c.l.b16 %v2455
    %v2491 = vunpack.c.l.b16 %v2456
    %v2492 = vunpack.c.l.b16 %v2457
    %v2493 = vunpack.c.l.b16 %v2458
    %v2494 = vpack.c.b16 %v2479, %v2478
    %v2495 = vpack.c.b16 %v2481, %v2480
    %v2496 = vpack.c.b16 %v2483, %v2482
    %v2497 = vpack.c.b16 %v2485, %v2484
    %v2498 = vpack.c.b16 %v2487, %v2486
    %v2499 = vpack.c.b16 %v2489, %v2488
    %v2500 = vpack.c.b16 %v2491, %v2490
    %v2501 = vpack.c.b16 %v2493, %v2492
    %2510 = vmatprep.subr.bf16.mxu0 0
    %2511 = vmatpush1.bf16.msra.mxu0 %v2494
    %2512 = vmatprep.subr.bf16.mxu0 0
    %2513 = vmatpush1.bf16.msra.mxu0 %v2495
    %2514 = vmatprep.subr.bf16.mxu0 0
    %2515 = vmatpush1.bf16.msra.mxu0 %v2496
    %2516 = vmatprep.subr.bf16.mxu0 0
    %2517 = vmatpush1.bf16.msra.mxu0 %v2497
    %2518 = vmatprep.subr.bf16.mxu0 0
    %2519 = vmatpush1.bf16.msra.mxu0 %v2498
    %2520 = vmatprep.subr.bf16.mxu0 0
    %2521 = vmatpush1.bf16.msra.mxu0 %v2499
    %2522 = vmatprep.subr.bf16.mxu0 0
    %2523 = vmatpush1.bf16.msra.mxu0 %v2500
    %2524 = vmatprep.subr.bf16.mxu0 0
    %2525 = vmatpush1.bf16.msra.mxu0 %v2501
    %2526 = vmatprep.subr.bf16.mxu0 0
    %2527 = vmatpush1.bf16.msra.mxu0 0
    %2528 = vmatprep.subr.bf16.mxu0 0
    %2529 = vmatpush1.bf16.msra.mxu0 0
    %2530 = vmatprep.subr.bf16.mxu0 0
    %2531 = vmatpush1.bf16.msra.mxu0 0
    %2532 = vmatprep.subr.bf16.mxu0 0
    %2533 = vmatpush1.bf16.msra.mxu0 0
    %2534 = vmatprep.subr.bf16.mxu0 0
    %2535 = vmatpush1.bf16.msra.mxu0 0
    %2536 = vmatprep.subr.bf16.mxu0 0
    %2537 = vmatpush1.bf16.msra.mxu0 0
    %2538 = vmatprep.subr.bf16.mxu0 0
    %2539 = vmatpush1.bf16.msra.mxu0 0
    %2540 = vmatprep.subr.bf16.mxu0 0
    %2541 = vmatpush1.bf16.msra.mxu0 0
    %2542 = vmatprep.mubr.bf16.mxu0 0
    %2543 = vmatmul.mubr.bf16.gmra.mrb[0].mxu0 %v2460
    %v2544 = vpop.f32.mrb[0].mxu0
    %v2545 = vadd.f32 0.0, %v2544
    %v2546 = vpop.f32.mrb[0].mxu0
    %v2547 = vpop.f32.mrb[0].mxu0
    %v2548 = vpop.f32.mrb[0].mxu0
    %2549 = vdwg.mxu0
    %v2550 = vadd.f32 %v2442, %v2545
    %v2551 = vld [vmem:[%s3 + $0x480] sm:$0xf]
    %v2552 = vld [vmem:[%s3 + $0x484] sm:$0xf]
    %v2553 = vld [vmem:[%s3 + $0x488] sm:$0xf]
    %v2554 = vld [vmem:[%s3 + $0x48c] sm:$0xf]
    %v2555 = vld [vmem:[%s3 + $0x490] sm:$0xf]
    %v2556 = vld [vmem:[%s3 + $0x494] sm:$0xf]
    %v2557 = vld [vmem:[%s3 + $0x498] sm:$0xf]
    %v2558 = vld [vmem:[%s3 + $0x49c] sm:$0xf]
    %v2559 = vld [vmem:[%s3 + $0x4a0] sm:$0xf]
    %v2560 = vld [vmem:[%s3 + $0x4a4] sm:$0xf]
    %v2561 = vld [vmem:[%s3 + $0x4a8] sm:$0xf]
    %v2562 = vld [vmem:[%s3 + $0x4ac] sm:$0xf]
    %v2563 = vld [vmem:[%s3 + $0x4b0] sm:$0xf]
    %v2564 = vld [vmem:[%s3 + $0x4b4] sm:$0xf]
    %v2565 = vld [vmem:[%s3 + $0x4b8] sm:$0xf]
    %v2566 = vld [vmem:[%s3 + $0x4bc] sm:$0xf]
    %v2567 = vrot.slane %v627, 2
    %v2585 = vunpack.c.l.b16 %v2551
    %v2586 = vunpack.c.l.b16 %v2552
    %v2587 = vunpack.c.l.b16 %v2553
    %v2588 = vunpack.c.l.b16 %v2554
    %v2589 = vunpack.c.l.b16 %v2555
    %v2590 = vunpack.c.l.b16 %v2556
    %v2591 = vunpack.c.l.b16 %v2557
    %v2592 = vunpack.c.l.b16 %v2558
    %v2593 = vunpack.c.l.b16 %v2559
    %v2594 = vunpack.c.l.b16 %v2560
    %v2595 = vunpack.c.l.b16 %v2561
    %v2596 = vunpack.c.l.b16 %v2562
    %v2597 = vunpack.c.l.b16 %v2563
    %v2598 = vunpack.c.l.b16 %v2564
    %v2599 = vunpack.c.l.b16 %v2565
    %v2600 = vunpack.c.l.b16 %v2566
    %v2601 = vpack.c.b16 %v2586, %v2585
    %v2602 = vpack.c.b16 %v2588, %v2587
    %v2603 = vpack.c.b16 %v2590, %v2589
    %v2604 = vpack.c.b16 %v2592, %v2591
    %v2605 = vpack.c.b16 %v2594, %v2593
    %v2606 = vpack.c.b16 %v2596, %v2595
    %v2607 = vpack.c.b16 %v2598, %v2597
    %v2608 = vpack.c.b16 %v2600, %v2599
    %2617 = vmatprep.subr.bf16.mxu0 0
    %2618 = vmatpush1.bf16.msra.mxu0 %v2601
    %2619 = vmatprep.subr.bf16.mxu0 0
    %2620 = vmatpush1.bf16.msra.mxu0 %v2602
    %2621 = vmatprep.subr.bf16.mxu0 0
    %2622 = vmatpush1.bf16.msra.mxu0 %v2603
    %2623 = vmatprep.subr.bf16.mxu0 0
    %2624 = vmatpush1.bf16.msra.mxu0 %v2604
    %2625 = vmatprep.subr.bf16.mxu0 0
    %2626 = vmatpush1.bf16.msra.mxu0 %v2605
    %2627 = vmatprep.subr.bf16.mxu0 0
    %2628 = vmatpush1.bf16.msra.mxu0 %v2606
    %2629 = vmatprep.subr.bf16.mxu0 0
    %2630 = vmatpush1.bf16.msra.mxu0 %v2607
    %2631 = vmatprep.subr.bf16.mxu0 0
    %2632 = vmatpush1.bf16.msra.mxu0 %v2608
    %2633 = vmatprep.subr.bf16.mxu0 0
    %2634 = vmatpush1.bf16.msra.mxu0 0
    %2635 = vmatprep.subr.bf16.mxu0 0
    %2636 = vmatpush1.bf16.msra.mxu0 0
    %2637 = vmatprep.subr.bf16.mxu0 0
    %2638 = vmatpush1.bf16.msra.mxu0 0
    %2639 = vmatprep.subr.bf16.mxu0 0
    %2640 = vmatpush1.bf16.msra.mxu0 0
    %2641 = vmatprep.subr.bf16.mxu0 0
    %2642 = vmatpush1.bf16.msra.mxu0 0
    %2643 = vmatprep.subr.bf16.mxu0 0
    %2644 = vmatpush1.bf16.msra.mxu0 0
    %2645 = vmatprep.subr.bf16.mxu0 0
    %2646 = vmatpush1.bf16.msra.mxu0 0
    %2647 = vmatprep.subr.bf16.mxu0 0
    %2648 = vmatpush1.bf16.msra.mxu0 0
    %2649 = vmatprep.mubr.bf16.mxu0 0
    %2650 = vmatmul.mubr.bf16.gmra.mrb[0].mxu0 %v2567
    %v2651 = vpop.f32.mrb[0].mxu0
    %v2652 = vadd.f32 0.0, %v2651
    %v2653 = vpop.f32.mrb[0].mxu0
    %v2654 = vpop.f32.mrb[0].mxu0
    %v2655 = vpop.f32.mrb[0].mxu0
    %2656 = vdwg.mxu0
    %v2657 = vadd.f32 %v2550, %v2652
    %v2658 = vld [vmem:[%s3 + $0x4c0] sm:$0xf]
    %v2659 = vld [vmem:[%s3 + $0x4c4] sm:$0xf]
    %v2660 = vld [vmem:[%s3 + $0x4c8] sm:$0xf]
    %v2661 = vld [vmem:[%s3 + $0x4cc] sm:$0xf]
    %v2662 = vld [vmem:[%s3 + $0x4d0] sm:$0xf]
    %v2663 = vld [vmem:[%s3 + $0x4d4] sm:$0xf]
    %v2664 = vld [vmem:[%s3 + $0x4d8] sm:$0xf]
    %v2665 = vld [vmem:[%s3 + $0x4dc] sm:$0xf]
    %v2666 = vld [vmem:[%s3 + $0x4e0] sm:$0xf]
    %v2667 = vld [vmem:[%s3 + $0x4e4] sm:$0xf]
    %v2668 = vld [vmem:[%s3 + $0x4e8] sm:$0xf]
    %v2669 = vld [vmem:[%s3 + $0x4ec] sm:$0xf]
    %v2670 = vld [vmem:[%s3 + $0x4f0] sm:$0xf]
    %v2671 = vld [vmem:[%s3 + $0x4f4] sm:$0xf]
    %v2672 = vld [vmem:[%s3 + $0x4f8] sm:$0xf]
    %v2673 = vld [vmem:[%s3 + $0x4fc] sm:$0xf]
    %v2674 = vrot.slane %v627, 3
    %v2692 = vunpack.c.l.b16 %v2658
    %v2693 = vunpack.c.l.b16 %v2659
    %v2694 = vunpack.c.l.b16 %v2660
    %v2695 = vunpack.c.l.b16 %v2661
    %v2696 = vunpack.c.l.b16 %v2662
    %v2697 = vunpack.c.l.b16 %v2663
    %v2698 = vunpack.c.l.b16 %v2664
    %v2699 = vunpack.c.l.b16 %v2665
    %v2700 = vunpack.c.l.b16 %v2666
    %v2701 = vunpack.c.l.b16 %v2667
    %v2702 = vunpack.c.l.b16 %v2668
    %v2703 = vunpack.c.l.b16 %v2669
    %v2704 = vunpack.c.l.b16 %v2670
    %v2705 = vunpack.c.l.b16 %v2671
    %v2706 = vunpack.c.l.b16 %v2672
    %v2707 = vunpack.c.l.b16 %v2673
    %v2708 = vpack.c.b16 %v2693, %v2692
    %v2709 = vpack.c.b16 %v2695, %v2694
    %v2710 = vpack.c.b16 %v2697, %v2696
    %v2711 = vpack.c.b16 %v2699, %v2698
    %v2712 = vpack.c.b16 %v2701, %v2700
    %v2713 = vpack.c.b16 %v2703, %v2702
    %v2714 = vpack.c.b16 %v2705, %v2704
    %v2715 = vpack.c.b16 %v2707, %v2706
    %2724 = vmatprep.subr.bf16.mxu0 0
    %2725 = vmatpush1.bf16.msra.mxu0 %v2708
    %2726 = vmatprep.subr.bf16.mxu0 0
    %2727 = vmatpush1.bf16.msra.mxu0 %v2709
    %2728 = vmatprep.subr.bf16.mxu0 0
    %2729 = vmatpush1.bf16.msra.mxu0 %v2710
    %2730 = vmatprep.subr.bf16.mxu0 0
    %2731 = vmatpush1.bf16.msra.mxu0 %v2711
    %2732 = vmatprep.subr.bf16.mxu0 0
    %2733 = vmatpush1.bf16.msra.mxu0 %v2712
    %2734 = vmatprep.subr.bf16.mxu0 0
    %2735 = vmatpush1.bf16.msra.mxu0 %v2713
    %2736 = vmatprep.subr.bf16.mxu0 0
    %2737 = vmatpush1.bf16.msra.mxu0 %v2714
    %2738 = vmatprep.subr.bf16.mxu0 0
    %2739 = vmatpush1.bf16.msra.mxu0 %v2715
    %2740 = vmatprep.subr.bf16.mxu0 0
    %2741 = vmatpush1.bf16.msra.mxu0 0
    %2742 = vmatprep.subr.bf16.mxu0 0
    %2743 = vmatpush1.bf16.msra.mxu0 0
    %2744 = vmatprep.subr.bf16.mxu0 0
    %2745 = vmatpush1.bf16.msra.mxu0 0
    %2746 = vmatprep.subr.bf16.mxu0 0
    %2747 = vmatpush1.bf16.msra.mxu0 0
    %2748 = vmatprep.subr.bf16.mxu0 0
    %2749 = vmatpush1.bf16.msra.mxu0 0
    %2750 = vmatprep.subr.bf16.mxu0 0
    %2751 = vmatpush1.bf16.msra.mxu0 0
    %2752 = vmatprep.subr.bf16.mxu0 0
    %2753 = vmatpush1.bf16.msra.mxu0 0
    %2754 = vmatprep.subr.bf16.mxu0 0
    %2755 = vmatpush1.bf16.msra.mxu0 0
    %2756 = vmatprep.mubr.bf16.mxu0 0
    %2757 = vmatmul.mubr.bf16.gmra.mrb[0].mxu0 %v2674
    %v2758 = vpop.f32.mrb[0].mxu0
    %v2759 = vadd.f32 0.0, %v2758
    %v2760 = vpop.f32.mrb[0].mxu0
    %v2761 = vpop.f32.mrb[0].mxu0
    %v2762 = vpop.f32.mrb[0].mxu0
    %2763 = vdwg.mxu0
    %v2764 = vadd.f32 %v2657, %v2759
    %v2765 = vld [vmem:[%s3 + $0x500] sm:$0xf]
    %v2766 = vld [vmem:[%s3 + $0x504] sm:$0xf]
    %v2767 = vld [vmem:[%s3 + $0x508] sm:$0xf]
    %v2768 = vld [vmem:[%s3 + $0x50c] sm:$0xf]
    %v2769 = vld [vmem:[%s3 + $0x510] sm:$0xf]
    %v2770 = vld [vmem:[%s3 + $0x514] sm:$0xf]
    %v2771 = vld [vmem:[%s3 + $0x518] sm:$0xf]
    %v2772 = vld [vmem:[%s3 + $0x51c] sm:$0xf]
    %v2773 = vld [vmem:[%s3 + $0x520] sm:$0xf]
    %v2774 = vld [vmem:[%s3 + $0x524] sm:$0xf]
    %v2775 = vld [vmem:[%s3 + $0x528] sm:$0xf]
    %v2776 = vld [vmem:[%s3 + $0x52c] sm:$0xf]
    %v2777 = vld [vmem:[%s3 + $0x530] sm:$0xf]
    %v2778 = vld [vmem:[%s3 + $0x534] sm:$0xf]
    %v2779 = vld [vmem:[%s3 + $0x538] sm:$0xf]
    %v2780 = vld [vmem:[%s3 + $0x53c] sm:$0xf]
    %v2781 = vrot.slane %v627, 4
    %v2799 = vunpack.c.l.b16 %v2765
    %v2800 = vunpack.c.l.b16 %v2766
    %v2801 = vunpack.c.l.b16 %v2767
    %v2802 = vunpack.c.l.b16 %v2768
    %v2803 = vunpack.c.l.b16 %v2769
    %v2804 = vunpack.c.l.b16 %v2770
    %v2805 = vunpack.c.l.b16 %v2771
    %v2806 = vunpack.c.l.b16 %v2772
    %v2807 = vunpack.c.l.b16 %v2773
    %v2808 = vunpack.c.l.b16 %v2774
    %v2809 = vunpack.c.l.b16 %v2775
    %v2810 = vunpack.c.l.b16 %v2776
    %v2811 = vunpack.c.l.b16 %v2777
    %v2812 = vunpack.c.l.b16 %v2778
    %v2813 = vunpack.c.l.b16 %v2779
    %v2814 = vunpack.c.l.b16 %v2780
    %v2815 = vpack.c.b16 %v2800, %v2799
    %v2816 = vpack.c.b16 %v2802, %v2801
    %v2817 = vpack.c.b16 %v2804, %v2803
    %v2818 = vpack.c.b16 %v2806, %v2805
    %v2819 = vpack.c.b16 %v2808, %v2807
    %v2820 = vpack.c.b16 %v2810, %v2809
    %v2821 = vpack.c.b16 %v2812, %v2811
    %v2822 = vpack.c.b16 %v2814, %v2813
    %2831 = vmatprep.subr.bf16.mxu0 0
    %2832 = vmatpush1.bf16.msra.mxu0 %v2815
    %2833 = vmatprep.subr.bf16.mxu0 0
    %2834 = vmatpush1.bf16.msra.mxu0 %v2816
    %2835 = vmatprep.subr.bf16.mxu0 0
    %2836 = vmatpush1.bf16.msra.mxu0 %v2817
    %2837 = vmatprep.subr.bf16.mxu0 0
    %2838 = vmatpush1.bf16.msra.mxu0 %v2818
    %2839 = vmatprep.subr.bf16.mxu0 0
    %2840 = vmatpush1.bf16.msra.mxu0 %v2819
    %2841 = vmatprep.subr.bf16.mxu0 0
    %2842 = vmatpush1.bf16.msra.mxu0 %v2820
    %2843 = vmatprep.subr.bf16.mxu0 0
    %2844 = vmatpush1.bf16.msra.mxu0 %v2821
    %2845 = vmatprep.subr.bf16.mxu0 0
    %2846 = vmatpush1.bf16.msra.mxu0 %v2822
    %2847 = vmatprep.subr.bf16.mxu0 0
    %2848 = vmatpush1.bf16.msra.mxu0 0
    %2849 = vmatprep.subr.bf16.mxu0 0
    %2850 = vmatpush1.bf16.msra.mxu0 0
    %2851 = vmatprep.subr.bf16.mxu0 0
    %2852 = vmatpush1.bf16.msra.mxu0 0
    %2853 = vmatprep.subr.bf16.mxu0 0
    %2854 = vmatpush1.bf16.msra.mxu0 0
    %2855 = vmatprep.subr.bf16.mxu0 0
    %2856 = vmatpush1.bf16.msra.mxu0 0
    %2857 = vmatprep.subr.bf16.mxu0 0
    %2858 = vmatpush1.bf16.msra.mxu0 0
    %2859 = vmatprep.subr.bf16.mxu0 0
    %2860 = vmatpush1.bf16.msra.mxu0 0
    %2861 = vmatprep.subr.bf16.mxu0 0
    %2862 = vmatpush1.bf16.msra.mxu0 0
    %2863 = vmatprep.mubr.bf16.mxu0 0
    %2864 = vmatmul.mubr.bf16.gmra.mrb[0].mxu0 %v2781
    %v2865 = vpop.f32.mrb[0].mxu0
    %v2866 = vadd.f32 0.0, %v2865
    %v2867 = vpop.f32.mrb[0].mxu0
    %v2868 = vpop.f32.mrb[0].mxu0
    %v2869 = vpop.f32.mrb[0].mxu0
    %2870 = vdwg.mxu0
    %v2871 = vadd.f32 %v2764, %v2866
    %v2872 = vld [vmem:[%s3 + $0x540] sm:$0xf]
    %v2873 = vld [vmem:[%s3 + $0x544] sm:$0xf]
    %v2874 = vld [vmem:[%s3 + $0x548] sm:$0xf]
    %v2875 = vld [vmem:[%s3 + $0x54c] sm:$0xf]
    %v2876 = vld [vmem:[%s3 + $0x550] sm:$0xf]
    %v2877 = vld [vmem:[%s3 + $0x554] sm:$0xf]
    %v2878 = vld [vmem:[%s3 + $0x558] sm:$0xf]
    %v2879 = vld [vmem:[%s3 + $0x55c] sm:$0xf]
    %v2880 = vld [vmem:[%s3 + $0x560] sm:$0xf]
    %v2881 = vld [vmem:[%s3 + $0x564] sm:$0xf]
    %v2882 = vld [vmem:[%s3 + $0x568] sm:$0xf]
    %v2883 = vld [vmem:[%s3 + $0x56c] sm:$0xf]
    %v2884 = vld [vmem:[%s3 + $0x570] sm:$0xf]
    %v2885 = vld [vmem:[%s3 + $0x574] sm:$0xf]
    %v2886 = vld [vmem:[%s3 + $0x578] sm:$0xf]
    %v2887 = vld [vmem:[%s3 + $0x57c] sm:$0xf]
    %v2888 = vrot.slane %v627, 5
    %v2906 = vunpack.c.l.b16 %v2872
    %v2907 = vunpack.c.l.b16 %v2873
    %v2908 = vunpack.c.l.b16 %v2874
    %v2909 = vunpack.c.l.b16 %v2875
    %v2910 = vunpack.c.l.b16 %v2876
    %v2911 = vunpack.c.l.b16 %v2877
    %v2912 = vunpack.c.l.b16 %v2878
    %v2913 = vunpack.c.l.b16 %v2879
    %v2914 = vunpack.c.l.b16 %v2880
    %v2915 = vunpack.c.l.b16 %v2881
    %v2916 = vunpack.c.l.b16 %v2882
    %v2917 = vunpack.c.l.b16 %v2883
    %v2918 = vunpack.c.l.b16 %v2884
    %v2919 = vunpack.c.l.b16 %v2885
    %v2920 = vunpack.c.l.b16 %v2886
    %v2921 = vunpack.c.l.b16 %v2887
    %v2922 = vpack.c.b16 %v2907, %v2906
    %v2923 = vpack.c.b16 %v2909, %v2908
    %v2924 = vpack.c.b16 %v2911, %v2910
    %v2925 = vpack.c.b16 %v2913, %v2912
    %v2926 = vpack.c.b16 %v2915, %v2914
    %v2927 = vpack.c.b16 %v2917, %v2916
    %v2928 = vpack.c.b16 %v2919, %v2918
    %v2929 = vpack.c.b16 %v2921, %v2920
    %2938 = vmatprep.subr.bf16.mxu0 0
    %2939 = vmatpush1.bf16.msra.mxu0 %v2922
    %2940 = vmatprep.subr.bf16.mxu0 0
    %2941 = vmatpush1.bf16.msra.mxu0 %v2923
    %2942 = vmatprep.subr.bf16.mxu0 0
    %2943 = vmatpush1.bf16.msra.mxu0 %v2924
    %2944 = vmatprep.subr.bf16.mxu0 0
    %2945 = vmatpush1.bf16.msra.mxu0 %v2925
    %2946 = vmatprep.subr.bf16.mxu0 0
    %2947 = vmatpush1.bf16.msra.mxu0 %v2926
    %2948 = vmatprep.subr.bf16.mxu0 0
    %2949 = vmatpush1.bf16.msra.mxu0 %v2927
    %2950 = vmatprep.subr.bf16.mxu0 0
    %2951 = vmatpush1.bf16.msra.mxu0 %v2928
    %2952 = vmatprep.subr.bf16.mxu0 0
    %2953 = vmatpush1.bf16.msra.mxu0 %v2929
    %2954 = vmatprep.subr.bf16.mxu0 0
    %2955 = vmatpush1.bf16.msra.mxu0 0
    %2956 = vmatprep.subr.bf16.mxu0 0
    %2957 = vmatpush1.bf16.msra.mxu0 0
    %2958 = vmatprep.subr.bf16.mxu0 0
    %2959 = vmatpush1.bf16.msra.mxu0 0
    %2960 = vmatprep.subr.bf16.mxu0 0
    %2961 = vmatpush1.bf16.msra.mxu0 0
    %2962 = vmatprep.subr.bf16.mxu0 0
    %2963 = vmatpush1.bf16.msra.mxu0 0
    %2964 = vmatprep.subr.bf16.mxu0 0
    %2965 = vmatpush1.bf16.msra.mxu0 0
    %2966 = vmatprep.subr.bf16.mxu0 0
    %2967 = vmatpush1.bf16.msra.mxu0 0
    %2968 = vmatprep.subr.bf16.mxu0 0
    %2969 = vmatpush1.bf16.msra.mxu0 0
    %2970 = vmatprep.mubr.bf16.mxu0 0
    %2971 = vmatmul.mubr.bf16.gmra.mrb[0].mxu0 %v2888
    %v2972 = vpop.f32.mrb[0].mxu0
    %v2973 = vadd.f32 0.0, %v2972
    %v2974 = vpop.f32.mrb[0].mxu0
    %v2975 = vpop.f32.mrb[0].mxu0
    %v2976 = vpop.f32.mrb[0].mxu0
    %2977 = vdwg.mxu0
    %v2978 = vadd.f32 %v2871, %v2973
    %v2979 = vld [vmem:[%s3 + $0x580] sm:$0xf]
    %v2980 = vld [vmem:[%s3 + $0x584] sm:$0xf]
    %v2981 = vld [vmem:[%s3 + $0x588] sm:$0xf]
    %v2982 = vld [vmem:[%s3 + $0x58c] sm:$0xf]
    %v2983 = vld [vmem:[%s3 + $0x590] sm:$0xf]
    %v2984 = vld [vmem:[%s3 + $0x594] sm:$0xf]
    %v2985 = vld [vmem:[%s3 + $0x598] sm:$0xf]
    %v2986 = vld [vmem:[%s3 + $0x59c] sm:$0xf]
    %v2987 = vld [vmem:[%s3 + $0x5a0] sm:$0xf]
    %v2988 = vld [vmem:[%s3 + $0x5a4] sm:$0xf]
    %v2989 = vld [vmem:[%s3 + $0x5a8] sm:$0xf]
    %v2990 = vld [vmem:[%s3 + $0x5ac] sm:$0xf]
    %v2991 = vld [vmem:[%s3 + $0x5b0] sm:$0xf]
    %v2992 = vld [vmem:[%s3 + $0x5b4] sm:$0xf]
    %v2993 = vld [vmem:[%s3 + $0x5b8] sm:$0xf]
    %v2994 = vld [vmem:[%s3 + $0x5bc] sm:$0xf]
    %v2995 = vrot.slane %v627, 6
    %v3013 = vunpack.c.l.b16 %v2979
    %v3014 = vunpack.c.l.b16 %v2980
    %v3015 = vunpack.c.l.b16 %v2981
    %v3016 = vunpack.c.l.b16 %v2982
    %v3017 = vunpack.c.l.b16 %v2983
    %v3018 = vunpack.c.l.b16 %v2984
    %v3019 = vunpack.c.l.b16 %v2985
    %v3020 = vunpack.c.l.b16 %v2986
    %v3021 = vunpack.c.l.b16 %v2987
    %v3022 = vunpack.c.l.b16 %v2988
    %v3023 = vunpack.c.l.b16 %v2989
    %v3024 = vunpack.c.l.b16 %v2990
    %v3025 = vunpack.c.l.b16 %v2991
    %v3026 = vunpack.c.l.b16 %v2992
    %v3027 = vunpack.c.l.b16 %v2993
    %v3028 = vunpack.c.l.b16 %v2994
    %v3029 = vpack.c.b16 %v3014, %v3013
    %v3030 = vpack.c.b16 %v3016, %v3015
    %v3031 = vpack.c.b16 %v3018, %v3017
    %v3032 = vpack.c.b16 %v3020, %v3019
    %v3033 = vpack.c.b16 %v3022, %v3021
    %v3034 = vpack.c.b16 %v3024, %v3023
    %v3035 = vpack.c.b16 %v3026, %v3025
    %v3036 = vpack.c.b16 %v3028, %v3027
    %3045 = vmatprep.subr.bf16.mxu0 0
    %3046 = vmatpush1.bf16.msra.mxu0 %v3029
    %3047 = vmatprep.subr.bf16.mxu0 0
    %3048 = vmatpush1.bf16.msra.mxu0 %v3030
    %3049 = vmatprep.subr.bf16.mxu0 0
    %3050 = vmatpush1.bf16.msra.mxu0 %v3031
    %3051 = vmatprep.subr.bf16.mxu0 0
    %3052 = vmatpush1.bf16.msra.mxu0 %v3032
    %3053 = vmatprep.subr.bf16.mxu0 0
    %3054 = vmatpush1.bf16.msra.mxu0 %v3033
    %3055 = vmatprep.subr.bf16.mxu0 0
    %3056 = vmatpush1.bf16.msra.mxu0 %v3034
    %3057 = vmatprep.subr.bf16.mxu0 0
    %3058 = vmatpush1.bf16.msra.mxu0 %v3035
    %3059 = vmatprep.subr.bf16.mxu0 0
    %3060 = vmatpush1.bf16.msra.mxu0 %v3036
    %3061 = vmatprep.subr.bf16.mxu0 0
    %3062 = vmatpush1.bf16.msra.mxu0 0
    %3063 = vmatprep.subr.bf16.mxu0 0
    %3064 = vmatpush1.bf16.msra.mxu0 0
    %3065 = vmatprep.subr.bf16.mxu0 0
    %3066 = vmatpush1.bf16.msra.mxu0 0
    %3067 = vmatprep.subr.bf16.mxu0 0
    %3068 = vmatpush1.bf16.msra.mxu0 0
    %3069 = vmatprep.subr.bf16.mxu0 0
    %3070 = vmatpush1.bf16.msra.mxu0 0
    %3071 = vmatprep.subr.bf16.mxu0 0
    %3072 = vmatpush1.bf16.msra.mxu0 0
    %3073 = vmatprep.subr.bf16.mxu0 0
    %3074 = vmatpush1.bf16.msra.mxu0 0
    %3075 = vmatprep.subr.bf16.mxu0 0
    %3076 = vmatpush1.bf16.msra.mxu0 0
    %3077 = vmatprep.mubr.bf16.mxu0 0
    %3078 = vmatmul.mubr.bf16.gmra.mrb[0].mxu0 %v2995
    %v3079 = vpop.f32.mrb[0].mxu0
    %v3080 = vadd.f32 0.0, %v3079
    %v3081 = vpop.f32.mrb[0].mxu0
    %v3082 = vpop.f32.mrb[0].mxu0
    %v3083 = vpop.f32.mrb[0].mxu0
    %3084 = vdwg.mxu0
    %v3085 = vadd.f32 %v2978, %v3080
    %v3086 = vld [vmem:[%s3 + $0x5c0] sm:$0xf]
    %v3087 = vld [vmem:[%s3 + $0x5c4] sm:$0xf]
    %v3088 = vld [vmem:[%s3 + $0x5c8] sm:$0xf]
    %v3089 = vld [vmem:[%s3 + $0x5cc] sm:$0xf]
    %v3090 = vld [vmem:[%s3 + $0x5d0] sm:$0xf]
    %v3091 = vld [vmem:[%s3 + $0x5d4] sm:$0xf]
    %v3092 = vld [vmem:[%s3 + $0x5d8] sm:$0xf]
    %v3093 = vld [vmem:[%s3 + $0x5dc] sm:$0xf]
    %v3094 = vld [vmem:[%s3 + $0x5e0] sm:$0xf]
    %v3095 = vld [vmem:[%s3 + $0x5e4] sm:$0xf]
    %v3096 = vld [vmem:[%s3 + $0x5e8] sm:$0xf]
    %v3097 = vld [vmem:[%s3 + $0x5ec] sm:$0xf]
    %v3098 = vld [vmem:[%s3 + $0x5f0] sm:$0xf]
    %v3099 = vld [vmem:[%s3 + $0x5f4] sm:$0xf]
    %v3100 = vld [vmem:[%s3 + $0x5f8] sm:$0xf]
    %v3101 = vld [vmem:[%s3 + $0x5fc] sm:$0xf]
    %v3102 = vrot.slane %v627, 7
    %v3120 = vunpack.c.l.b16 %v3086
    %v3121 = vunpack.c.l.b16 %v3087
    %v3122 = vunpack.c.l.b16 %v3088
    %v3123 = vunpack.c.l.b16 %v3089
    %v3124 = vunpack.c.l.b16 %v3090
    %v3125 = vunpack.c.l.b16 %v3091
    %v3126 = vunpack.c.l.b16 %v3092
    %v3127 = vunpack.c.l.b16 %v3093
    %v3128 = vunpack.c.l.b16 %v3094
    %v3129 = vunpack.c.l.b16 %v3095
    %v3130 = vunpack.c.l.b16 %v3096
    %v3131 = vunpack.c.l.b16 %v3097
    %v3132 = vunpack.c.l.b16 %v3098
    %v3133 = vunpack.c.l.b16 %v3099
    %v3134 = vunpack.c.l.b16 %v3100
    %v3135 = vunpack.c.l.b16 %v3101
    %v3136 = vpack.c.b16 %v3121, %v3120
    %v3137 = vpack.c.b16 %v3123, %v3122
    %v3138 = vpack.c.b16 %v3125, %v3124
    %v3139 = vpack.c.b16 %v3127, %v3126
    %v3140 = vpack.c.b16 %v3129, %v3128
    %v3141 = vpack.c.b16 %v3131, %v3130
    %v3142 = vpack.c.b16 %v3133, %v3132
    %v3143 = vpack.c.b16 %v3135, %v3134
    %3152 = vmatprep.subr.bf16.mxu0 0
    %3153 = vmatpush1.bf16.msra.mxu0 %v3136
    %3154 = vmatprep.subr.bf16.mxu0 0
    %3155 = vmatpush1.bf16.msra.mxu0 %v3137
    %3156 = vmatprep.subr.bf16.mxu0 0
    %3157 = vmatpush1.bf16.msra.mxu0 %v3138
    %3158 = vmatprep.subr.bf16.mxu0 0
    %3159 = vmatpush1.bf16.msra.mxu0 %v3139
    %3160 = vmatprep.subr.bf16.mxu0 0
    %3161 = vmatpush1.bf16.msra.mxu0 %v3140
    %3162 = vmatprep.subr.bf16.mxu0 0
    %3163 = vmatpush1.bf16.msra.mxu0 %v3141
    %3164 = vmatprep.subr.bf16.mxu0 0
    %3165 = vmatpush1.bf16.msra.mxu0 %v3142
    %3166 = vmatprep.subr.bf16.mxu0 0
    %3167 = vmatpush1.bf16.msra.mxu0 %v3143
    %3168 = vmatprep.subr.bf16.mxu0 0
    %3169 = vmatpush1.bf16.msra.mxu0 0
    %3170 = vmatprep.subr.bf16.mxu0 0
    %3171 = vmatpush1.bf16.msra.mxu0 0
    %3172 = vmatprep.subr.bf16.mxu0 0
    %3173 = vmatpush1.bf16.msra.mxu0 0
    %3174 = vmatprep.subr.bf16.mxu0 0
    %3175 = vmatpush1.bf16.msra.mxu0 0
    %3176 = vmatprep.subr.bf16.mxu0 0
    %3177 = vmatpush1.bf16.msra.mxu0 0
    %3178 = vmatprep.subr.bf16.mxu0 0
    %3179 = vmatpush1.bf16.msra.mxu0 0
    %3180 = vmatprep.subr.bf16.mxu0 0
    %3181 = vmatpush1.bf16.msra.mxu0 0
    %3182 = vmatprep.subr.bf16.mxu0 0
    %3183 = vmatpush1.bf16.msra.mxu0 0
    %3184 = vmatprep.mubr.bf16.mxu0 0
    %3185 = vmatmul.mubr.bf16.gmra.mrb[0].mxu0 %v3102
    %v3186 = vpop.f32.mrb[0].mxu0
    %v3187 = vadd.f32 0.0, %v3186
    %v3188 = vpop.f32.mrb[0].mxu0
    %v3189 = vpop.f32.mrb[0].mxu0
    %v3190 = vpop.f32.mrb[0].mxu0
    %3191 = vdwg.mxu0
    %v3192 = vadd.f32 %v3085, %v3187
    %v3193 = vld [vmem:[%s3 + $0x600] sm:$0xf]
    %v3194 = vld [vmem:[%s3 + $0x604] sm:$0xf]
    %v3195 = vld [vmem:[%s3 + $0x608] sm:$0xf]
    %v3196 = vld [vmem:[%s3 + $0x60c] sm:$0xf]
    %v3197 = vld [vmem:[%s3 + $0x610] sm:$0xf]
    %v3198 = vld [vmem:[%s3 + $0x614] sm:$0xf]
    %v3199 = vld [vmem:[%s3 + $0x618] sm:$0xf]
    %v3200 = vld [vmem:[%s3 + $0x61c] sm:$0xf]
    %v3201 = vld [vmem:[%s3 + $0x620] sm:$0xf]
    %v3202 = vld [vmem:[%s3 + $0x624] sm:$0xf]
    %v3203 = vld [vmem:[%s3 + $0x628] sm:$0xf]
    %v3204 = vld [vmem:[%s3 + $0x62c] sm:$0xf]
    %v3205 = vld [vmem:[%s3 + $0x630] sm:$0xf]
    %v3206 = vld [vmem:[%s3 + $0x634] sm:$0xf]
    %v3207 = vld [vmem:[%s3 + $0x638] sm:$0xf]
    %v3208 = vld [vmem:[%s3 + $0x63c] sm:$0xf]
    %v3225 = vunpack.c.l.b16 %v3193
    %v3226 = vunpack.c.l.b16 %v3194
    %v3227 = vunpack.c.l.b16 %v3195
    %v3228 = vunpack.c.l.b16 %v3196
    %v3229 = vunpack.c.l.b16 %v3197
    %v3230 = vunpack.c.l.b16 %v3198
    %v3231 = vunpack.c.l.b16 %v3199
    %v3232 = vunpack.c.l.b16 %v3200
    %v3233 = vunpack.c.l.b16 %v3201
    %v3234 = vunpack.c.l.b16 %v3202
    %v3235 = vunpack.c.l.b16 %v3203
    %v3236 = vunpack.c.l.b16 %v3204
    %v3237 = vunpack.c.l.b16 %v3205
    %v3238 = vunpack.c.l.b16 %v3206
    %v3239 = vunpack.c.l.b16 %v3207
    %v3240 = vunpack.c.l.b16 %v3208
    %v3241 = vpack.c.b16 %v3226, %v3225
    %v3242 = vpack.c.b16 %v3228, %v3227
    %v3243 = vpack.c.b16 %v3230, %v3229
    %v3244 = vpack.c.b16 %v3232, %v3231
    %v3245 = vpack.c.b16 %v3234, %v3233
    %v3246 = vpack.c.b16 %v3236, %v3235
    %v3247 = vpack.c.b16 %v3238, %v3237
    %v3248 = vpack.c.b16 %v3240, %v3239
    %3257 = vmatprep.subr.bf16.mxu0 0
    %3258 = vmatpush1.bf16.msra.mxu0 %v3241
    %3259 = vmatprep.subr.bf16.mxu0 0
    %3260 = vmatpush1.bf16.msra.mxu0 %v3242
    %3261 = vmatprep.subr.bf16.mxu0 0
    %3262 = vmatpush1.bf16.msra.mxu0 %v3243
    %3263 = vmatprep.subr.bf16.mxu0 0
    %3264 = vmatpush1.bf16.msra.mxu0 %v3244
    %3265 = vmatprep.subr.bf16.mxu0 0
    %3266 = vmatpush1.bf16.msra.mxu0 %v3245
    %3267 = vmatprep.subr.bf16.mxu0 0
    %3268 = vmatpush1.bf16.msra.mxu0 %v3246
    %3269 = vmatprep.subr.bf16.mxu0 0
    %3270 = vmatpush1.bf16.msra.mxu0 %v3247
    %3271 = vmatprep.subr.bf16.mxu0 0
    %3272 = vmatpush1.bf16.msra.mxu0 %v3248
    %3273 = vmatprep.subr.bf16.mxu0 0
    %3274 = vmatpush1.bf16.msra.mxu0 0
    %3275 = vmatprep.subr.bf16.mxu0 0
    %3276 = vmatpush1.bf16.msra.mxu0 0
    %3277 = vmatprep.subr.bf16.mxu0 0
    %3278 = vmatpush1.bf16.msra.mxu0 0
    %3279 = vmatprep.subr.bf16.mxu0 0
    %3280 = vmatpush1.bf16.msra.mxu0 0
    %3281 = vmatprep.subr.bf16.mxu0 0
    %3282 = vmatpush1.bf16.msra.mxu0 0
    %3283 = vmatprep.subr.bf16.mxu0 0
    %3284 = vmatpush1.bf16.msra.mxu0 0
    %3285 = vmatprep.subr.bf16.mxu0 0
    %3286 = vmatpush1.bf16.msra.mxu0 0
    %3287 = vmatprep.subr.bf16.mxu0 0
    %3288 = vmatpush1.bf16.msra.mxu0 0
    %3289 = vmatprep.mubr.bf16.mxu0 0
    %3290 = vmatmul.mubr.bf16.gmra.mrb[0].mxu0 %v628
    %v3291 = vpop.f32.mrb[0].mxu0
    %v3292 = vadd.f32 0.0, %v3291
    %v3293 = vpop.f32.mrb[0].mxu0
    %v3294 = vpop.f32.mrb[0].mxu0
    %v3295 = vpop.f32.mrb[0].mxu0
    %3296 = vdwg.mxu0
    %v3297 = vadd.f32 %v3192, %v3292
    %v3298 = vld [vmem:[%s3 + $0x640] sm:$0xf]
    %v3299 = vld [vmem:[%s3 + $0x644] sm:$0xf]
    %v3300 = vld [vmem:[%s3 + $0x648] sm:$0xf]
    %v3301 = vld [vmem:[%s3 + $0x64c] sm:$0xf]
    %v3302 = vld [vmem:[%s3 + $0x650] sm:$0xf]
    %v3303 = vld [vmem:[%s3 + $0x654] sm:$0xf]
    %v3304 = vld [vmem:[%s3 + $0x658] sm:$0xf]
    %v3305 = vld [vmem:[%s3 + $0x65c] sm:$0xf]
    %v3306 = vld [vmem:[%s3 + $0x660] sm:$0xf]
    %v3307 = vld [vmem:[%s3 + $0x664] sm:$0xf]
    %v3308 = vld [vmem:[%s3 + $0x668] sm:$0xf]
    %v3309 = vld [vmem:[%s3 + $0x66c] sm:$0xf]
    %v3310 = vld [vmem:[%s3 + $0x670] sm:$0xf]
    %v3311 = vld [vmem:[%s3 + $0x674] sm:$0xf]
    %v3312 = vld [vmem:[%s3 + $0x678] sm:$0xf]
    %v3313 = vld [vmem:[%s3 + $0x67c] sm:$0xf]
    %v3315 = vrot.slane %v628, 1
    %v3333 = vunpack.c.l.b16 %v3298
    %v3334 = vunpack.c.l.b16 %v3299
    %v3335 = vunpack.c.l.b16 %v3300
    %v3336 = vunpack.c.l.b16 %v3301
    %v3337 = vunpack.c.l.b16 %v3302
    %v3338 = vunpack.c.l.b16 %v3303
    %v3339 = vunpack.c.l.b16 %v3304
    %v3340 = vunpack.c.l.b16 %v3305
    %v3341 = vunpack.c.l.b16 %v3306
    %v3342 = vunpack.c.l.b16 %v3307
    %v3343 = vunpack.c.l.b16 %v3308
    %v3344 = vunpack.c.l.b16 %v3309
    %v3345 = vunpack.c.l.b16 %v3310
    %v3346 = vunpack.c.l.b16 %v3311
    %v3347 = vunpack.c.l.b16 %v3312
    %v3348 = vunpack.c.l.b16 %v3313
    %v3349 = vpack.c.b16 %v3334, %v3333
    %v3350 = vpack.c.b16 %v3336, %v3335
    %v3351 = vpack.c.b16 %v3338, %v3337
    %v3352 = vpack.c.b16 %v3340, %v3339
    %v3353 = vpack.c.b16 %v3342, %v3341
    %v3354 = vpack.c.b16 %v3344, %v3343
    %v3355 = vpack.c.b16 %v3346, %v3345
    %v3356 = vpack.c.b16 %v3348, %v3347
    %3365 = vmatprep.subr.bf16.mxu0 0
    %3366 = vmatpush1.bf16.msra.mxu0 %v3349
    %3367 = vmatprep.subr.bf16.mxu0 0
    %3368 = vmatpush1.bf16.msra.mxu0 %v3350
    %3369 = vmatprep.subr.bf16.mxu0 0
    %3370 = vmatpush1.bf16.msra.mxu0 %v3351
    %3371 = vmatprep.subr.bf16.mxu0 0
    %3372 = vmatpush1.bf16.msra.mxu0 %v3352
    %3373 = vmatprep.subr.bf16.mxu0 0
    %3374 = vmatpush1.bf16.msra.mxu0 %v3353
    %3375 = vmatprep.subr.bf16.mxu0 0
    %3376 = vmatpush1.bf16.msra.mxu0 %v3354
    %3377 = vmatprep.subr.bf16.mxu0 0
    %3378 = vmatpush1.bf16.msra.mxu0 %v3355
    %3379 = vmatprep.subr.bf16.mxu0 0
    %3380 = vmatpush1.bf16.msra.mxu0 %v3356
    %3381 = vmatprep.subr.bf16.mxu0 0
    %3382 = vmatpush1.bf16.msra.mxu0 0
    %3383 = vmatprep.subr.bf16.mxu0 0
    %3384 = vmatpush1.bf16.msra.mxu0 0
    %3385 = vmatprep.subr.bf16.mxu0 0
    %3386 = vmatpush1.bf16.msra.mxu0 0
    %3387 = vmatprep.subr.bf16.mxu0 0
    %3388 = vmatpush1.bf16.msra.mxu0 0
    %3389 = vmatprep.subr.bf16.mxu0 0
    %3390 = vmatpush1.bf16.msra.mxu0 0
    %3391 = vmatprep.subr.bf16.mxu0 0
    %3392 = vmatpush1.bf16.msra.mxu0 0
    %3393 = vmatprep.subr.bf16.mxu0 0
    %3394 = vmatpush1.bf16.msra.mxu0 0
    %3395 = vmatprep.subr.bf16.mxu0 0
    %3396 = vmatpush1.bf16.msra.mxu0 0
    %3397 = vmatprep.mubr.bf16.mxu0 0
    %3398 = vmatmul.mubr.bf16.gmra.mrb[0].mxu0 %v3315
    %v3399 = vpop.f32.mrb[0].mxu0
    %v3400 = vadd.f32 0.0, %v3399
    %v3401 = vpop.f32.mrb[0].mxu0
    %v3402 = vpop.f32.mrb[0].mxu0
    %v3403 = vpop.f32.mrb[0].mxu0
    %3404 = vdwg.mxu0
    %v3405 = vadd.f32 %v3297, %v3400
    %v3406 = vld [vmem:[%s3 + $0x680] sm:$0xf]
    %v3407 = vld [vmem:[%s3 + $0x684] sm:$0xf]
    %v3408 = vld [vmem:[%s3 + $0x688] sm:$0xf]
    %v3409 = vld [vmem:[%s3 + $0x68c] sm:$0xf]
    %v3410 = vld [vmem:[%s3 + $0x690] sm:$0xf]
    %v3411 = vld [vmem:[%s3 + $0x694] sm:$0xf]
    %v3412 = vld [vmem:[%s3 + $0x698] sm:$0xf]
    %v3413 = vld [vmem:[%s3 + $0x69c] sm:$0xf]
    %v3414 = vld [vmem:[%s3 + $0x6a0] sm:$0xf]
    %v3415 = vld [vmem:[%s3 + $0x6a4] sm:$0xf]
    %v3416 = vld [vmem:[%s3 + $0x6a8] sm:$0xf]
    %v3417 = vld [vmem:[%s3 + $0x6ac] sm:$0xf]
    %v3418 = vld [vmem:[%s3 + $0x6b0] sm:$0xf]
    %v3419 = vld [vmem:[%s3 + $0x6b4] sm:$0xf]
    %v3420 = vld [vmem:[%s3 + $0x6b8] sm:$0xf]
    %v3421 = vld [vmem:[%s3 + $0x6bc] sm:$0xf]
    %v3422 = vrot.slane %v628, 2
    %v3440 = vunpack.c.l.b16 %v3406
    %v3441 = vunpack.c.l.b16 %v3407
    %v3442 = vunpack.c.l.b16 %v3408
    %v3443 = vunpack.c.l.b16 %v3409
    %v3444 = vunpack.c.l.b16 %v3410
    %v3445 = vunpack.c.l.b16 %v3411
    %v3446 = vunpack.c.l.b16 %v3412
    %v3447 = vunpack.c.l.b16 %v3413
    %v3448 = vunpack.c.l.b16 %v3414
    %v3449 = vunpack.c.l.b16 %v3415
    %v3450 = vunpack.c.l.b16 %v3416
    %v3451 = vunpack.c.l.b16 %v3417
    %v3452 = vunpack.c.l.b16 %v3418
    %v3453 = vunpack.c.l.b16 %v3419
    %v3454 = vunpack.c.l.b16 %v3420
    %v3455 = vunpack.c.l.b16 %v3421
    %v3456 = vpack.c.b16 %v3441, %v3440
    %v3457 = vpack.c.b16 %v3443, %v3442
    %v3458 = vpack.c.b16 %v3445, %v3444
    %v3459 = vpack.c.b16 %v3447, %v3446
    %v3460 = vpack.c.b16 %v3449, %v3448
    %v3461 = vpack.c.b16 %v3451, %v3450
    %v3462 = vpack.c.b16 %v3453, %v3452
    %v3463 = vpack.c.b16 %v3455, %v3454
    %3472 = vmatprep.subr.bf16.mxu0 0
    %3473 = vmatpush1.bf16.msra.mxu0 %v3456
    %3474 = vmatprep.subr.bf16.mxu0 0
    %3475 = vmatpush1.bf16.msra.mxu0 %v3457
    %3476 = vmatprep.subr.bf16.mxu0 0
    %3477 = vmatpush1.bf16.msra.mxu0 %v3458
    %3478 = vmatprep.subr.bf16.mxu0 0
    %3479 = vmatpush1.bf16.msra.mxu0 %v3459
    %3480 = vmatprep.subr.bf16.mxu0 0
    %3481 = vmatpush1.bf16.msra.mxu0 %v3460
    %3482 = vmatprep.subr.bf16.mxu0 0
    %3483 = vmatpush1.bf16.msra.mxu0 %v3461
    %3484 = vmatprep.subr.bf16.mxu0 0
    %3485 = vmatpush1.bf16.msra.mxu0 %v3462
    %3486 = vmatprep.subr.bf16.mxu0 0
    %3487 = vmatpush1.bf16.msra.mxu0 %v3463
    %3488 = vmatprep.subr.bf16.mxu0 0
    %3489 = vmatpush1.bf16.msra.mxu0 0
    %3490 = vmatprep.subr.bf16.mxu0 0
    %3491 = vmatpush1.bf16.msra.mxu0 0
    %3492 = vmatprep.subr.bf16.mxu0 0
    %3493 = vmatpush1.bf16.msra.mxu0 0
    %3494 = vmatprep.subr.bf16.mxu0 0
    %3495 = vmatpush1.bf16.msra.mxu0 0
    %3496 = vmatprep.subr.bf16.mxu0 0
    %3497 = vmatpush1.bf16.msra.mxu0 0
    %3498 = vmatprep.subr.bf16.mxu0 0
    %3499 = vmatpush1.bf16.msra.mxu0 0
    %3500 = vmatprep.subr.bf16.mxu0 0
    %3501 = vmatpush1.bf16.msra.mxu0 0
    %3502 = vmatprep.subr.bf16.mxu0 0
    %3503 = vmatpush1.bf16.msra.mxu0 0
    %3504 = vmatprep.mubr.bf16.mxu0 0
    %3505 = vmatmul.mubr.bf16.gmra.mrb[0].mxu0 %v3422
    %v3506 = vpop.f32.mrb[0].mxu0
    %v3507 = vadd.f32 0.0, %v3506
    %v3508 = vpop.f32.mrb[0].mxu0
    %v3509 = vpop.f32.mrb[0].mxu0
    %v3510 = vpop.f32.mrb[0].mxu0
    %3511 = vdwg.mxu0
    %v3512 = vadd.f32 %v3405, %v3507
    %v3513 = vld [vmem:[%s3 + $0x6c0] sm:$0xf]
    %v3514 = vld [vmem:[%s3 + $0x6c4] sm:$0xf]
    %v3515 = vld [vmem:[%s3 + $0x6c8] sm:$0xf]
    %v3516 = vld [vmem:[%s3 + $0x6cc] sm:$0xf]
    %v3517 = vld [vmem:[%s3 + $0x6d0] sm:$0xf]
    %v3518 = vld [vmem:[%s3 + $0x6d4] sm:$0xf]
    %v3519 = vld [vmem:[%s3 + $0x6d8] sm:$0xf]
    %v3520 = vld [vmem:[%s3 + $0x6dc] sm:$0xf]
    %v3521 = vld [vmem:[%s3 + $0x6e0] sm:$0xf]
    %v3522 = vld [vmem:[%s3 + $0x6e4] sm:$0xf]
    %v3523 = vld [vmem:[%s3 + $0x6e8] sm:$0xf]
    %v3524 = vld [vmem:[%s3 + $0x6ec] sm:$0xf]
    %v3525 = vld [vmem:[%s3 + $0x6f0] sm:$0xf]
    %v3526 = vld [vmem:[%s3 + $0x6f4] sm:$0xf]
    %v3527 = vld [vmem:[%s3 + $0x6f8] sm:$0xf]
    %v3528 = vld [vmem:[%s3 + $0x6fc] sm:$0xf]
    %v3529 = vrot.slane %v628, 3
    %v3547 = vunpack.c.l.b16 %v3513
    %v3548 = vunpack.c.l.b16 %v3514
    %v3549 = vunpack.c.l.b16 %v3515
    %v3550 = vunpack.c.l.b16 %v3516
    %v3551 = vunpack.c.l.b16 %v3517
    %v3552 = vunpack.c.l.b16 %v3518
    %v3553 = vunpack.c.l.b16 %v3519
    %v3554 = vunpack.c.l.b16 %v3520
    %v3555 = vunpack.c.l.b16 %v3521
    %v3556 = vunpack.c.l.b16 %v3522
    %v3557 = vunpack.c.l.b16 %v3523
    %v3558 = vunpack.c.l.b16 %v3524
    %v3559 = vunpack.c.l.b16 %v3525
    %v3560 = vunpack.c.l.b16 %v3526
    %v3561 = vunpack.c.l.b16 %v3527
    %v3562 = vunpack.c.l.b16 %v3528
    %v3563 = vpack.c.b16 %v3548, %v3547
    %v3564 = vpack.c.b16 %v3550, %v3549
    %v3565 = vpack.c.b16 %v3552, %v3551
    %v3566 = vpack.c.b16 %v3554, %v3553
    %v3567 = vpack.c.b16 %v3556, %v3555
    %v3568 = vpack.c.b16 %v3558, %v3557
    %v3569 = vpack.c.b16 %v3560, %v3559
    %v3570 = vpack.c.b16 %v3562, %v3561
    %3579 = vmatprep.subr.bf16.mxu0 0
    %3580 = vmatpush1.bf16.msra.mxu0 %v3563
    %3581 = vmatprep.subr.bf16.mxu0 0
    %3582 = vmatpush1.bf16.msra.mxu0 %v3564
    %3583 = vmatprep.subr.bf16.mxu0 0
    %3584 = vmatpush1.bf16.msra.mxu0 %v3565
    %3585 = vmatprep.subr.bf16.mxu0 0
    %3586 = vmatpush1.bf16.msra.mxu0 %v3566
    %3587 = vmatprep.subr.bf16.mxu0 0
    %3588 = vmatpush1.bf16.msra.mxu0 %v3567
    %3589 = vmatprep.subr.bf16.mxu0 0
    %3590 = vmatpush1.bf16.msra.mxu0 %v3568
    %3591 = vmatprep.subr.bf16.mxu0 0
    %3592 = vmatpush1.bf16.msra.mxu0 %v3569
    %3593 = vmatprep.subr.bf16.mxu0 0
    %3594 = vmatpush1.bf16.msra.mxu0 %v3570
    %3595 = vmatprep.subr.bf16.mxu0 0
    %3596 = vmatpush1.bf16.msra.mxu0 0
    %3597 = vmatprep.subr.bf16.mxu0 0
    %3598 = vmatpush1.bf16.msra.mxu0 0
    %3599 = vmatprep.subr.bf16.mxu0 0
    %3600 = vmatpush1.bf16.msra.mxu0 0
    %3601 = vmatprep.subr.bf16.mxu0 0
    %3602 = vmatpush1.bf16.msra.mxu0 0
    %3603 = vmatprep.subr.bf16.mxu0 0
    %3604 = vmatpush1.bf16.msra.mxu0 0
    %3605 = vmatprep.subr.bf16.mxu0 0
    %3606 = vmatpush1.bf16.msra.mxu0 0
    %3607 = vmatprep.subr.bf16.mxu0 0
    %3608 = vmatpush1.bf16.msra.mxu0 0
    %3609 = vmatprep.subr.bf16.mxu0 0
    %3610 = vmatpush1.bf16.msra.mxu0 0
    %3611 = vmatprep.mubr.bf16.mxu0 0
    %3612 = vmatmul.mubr.bf16.gmra.mrb[0].mxu0 %v3529
    %v3613 = vpop.f32.mrb[0].mxu0
    %v3614 = vadd.f32 0.0, %v3613
    %v3615 = vpop.f32.mrb[0].mxu0
    %v3616 = vpop.f32.mrb[0].mxu0
    %v3617 = vpop.f32.mrb[0].mxu0
    %3618 = vdwg.mxu0
    %v3619 = vadd.f32 %v3512, %v3614
    %v3620 = vld [vmem:[%s3 + $0x700] sm:$0xf]
    %v3621 = vld [vmem:[%s3 + $0x704] sm:$0xf]
    %v3622 = vld [vmem:[%s3 + $0x708] sm:$0xf]
    %v3623 = vld [vmem:[%s3 + $0x70c] sm:$0xf]
    %v3624 = vld [vmem:[%s3 + $0x710] sm:$0xf]
    %v3625 = vld [vmem:[%s3 + $0x714] sm:$0xf]
    %v3626 = vld [vmem:[%s3 + $0x718] sm:$0xf]
    %v3627 = vld [vmem:[%s3 + $0x71c] sm:$0xf]
    %v3628 = vld [vmem:[%s3 + $0x720] sm:$0xf]
    %v3629 = vld [vmem:[%s3 + $0x724] sm:$0xf]
    %v3630 = vld [vmem:[%s3 + $0x728] sm:$0xf]
    %v3631 = vld [vmem:[%s3 + $0x72c] sm:$0xf]
    %v3632 = vld [vmem:[%s3 + $0x730] sm:$0xf]
    %v3633 = vld [vmem:[%s3 + $0x734] sm:$0xf]
    %v3634 = vld [vmem:[%s3 + $0x738] sm:$0xf]
    %v3635 = vld [vmem:[%s3 + $0x73c] sm:$0xf]
    %v3636 = vrot.slane %v628, 4
    %v3654 = vunpack.c.l.b16 %v3620
    %v3655 = vunpack.c.l.b16 %v3621
    %v3656 = vunpack.c.l.b16 %v3622
    %v3657 = vunpack.c.l.b16 %v3623
    %v3658 = vunpack.c.l.b16 %v3624
    %v3659 = vunpack.c.l.b16 %v3625
    %v3660 = vunpack.c.l.b16 %v3626
    %v3661 = vunpack.c.l.b16 %v3627
    %v3662 = vunpack.c.l.b16 %v3628
    %v3663 = vunpack.c.l.b16 %v3629
    %v3664 = vunpack.c.l.b16 %v3630
    %v3665 = vunpack.c.l.b16 %v3631
    %v3666 = vunpack.c.l.b16 %v3632
    %v3667 = vunpack.c.l.b16 %v3633
    %v3668 = vunpack.c.l.b16 %v3634
    %v3669 = vunpack.c.l.b16 %v3635
    %v3670 = vpack.c.b16 %v3655, %v3654
    %v3671 = vpack.c.b16 %v3657, %v3656
    %v3672 = vpack.c.b16 %v3659, %v3658
    %v3673 = vpack.c.b16 %v3661, %v3660
    %v3674 = vpack.c.b16 %v3663, %v3662
    %v3675 = vpack.c.b16 %v3665, %v3664
    %v3676 = vpack.c.b16 %v3667, %v3666
    %v3677 = vpack.c.b16 %v3669, %v3668
    %3686 = vmatprep.subr.bf16.mxu0 0
    %3687 = vmatpush1.bf16.msra.mxu0 %v3670
    %3688 = vmatprep.subr.bf16.mxu0 0
    %3689 = vmatpush1.bf16.msra.mxu0 %v3671
    %3690 = vmatprep.subr.bf16.mxu0 0
    %3691 = vmatpush1.bf16.msra.mxu0 %v3672
    %3692 = vmatprep.subr.bf16.mxu0 0
    %3693 = vmatpush1.bf16.msra.mxu0 %v3673
    %3694 = vmatprep.subr.bf16.mxu0 0
    %3695 = vmatpush1.bf16.msra.mxu0 %v3674
    %3696 = vmatprep.subr.bf16.mxu0 0
    %3697 = vmatpush1.bf16.msra.mxu0 %v3675
    %3698 = vmatprep.subr.bf16.mxu0 0
    %3699 = vmatpush1.bf16.msra.mxu0 %v3676
    %3700 = vmatprep.subr.bf16.mxu0 0
    %3701 = vmatpush1.bf16.msra.mxu0 %v3677
    %3702 = vmatprep.subr.bf16.mxu0 0
    %3703 = vmatpush1.bf16.msra.mxu0 0
    %3704 = vmatprep.subr.bf16.mxu0 0
    %3705 = vmatpush1.bf16.msra.mxu0 0
    %3706 = vmatprep.subr.bf16.mxu0 0
    %3707 = vmatpush1.bf16.msra.mxu0 0
    %3708 = vmatprep.subr.bf16.mxu0 0
    %3709 = vmatpush1.bf16.msra.mxu0 0
    %3710 = vmatprep.subr.bf16.mxu0 0
    %3711 = vmatpush1.bf16.msra.mxu0 0
    %3712 = vmatprep.subr.bf16.mxu0 0
    %3713 = vmatpush1.bf16.msra.mxu0 0
    %3714 = vmatprep.subr.bf16.mxu0 0
    %3715 = vmatpush1.bf16.msra.mxu0 0
    %3716 = vmatprep.subr.bf16.mxu0 0
    %3717 = vmatpush1.bf16.msra.mxu0 0
    %3718 = vmatprep.mubr.bf16.mxu0 0
    %3719 = vmatmul.mubr.bf16.gmra.mrb[0].mxu0 %v3636
    %v3720 = vpop.f32.mrb[0].mxu0
    %v3721 = vadd.f32 0.0, %v3720
    %v3722 = vpop.f32.mrb[0].mxu0
    %v3723 = vpop.f32.mrb[0].mxu0
    %v3724 = vpop.f32.mrb[0].mxu0
    %3725 = vdwg.mxu0
    %v3726 = vadd.f32 %v3619, %v3721
    %v3727 = vld [vmem:[%s3 + $0x740] sm:$0xf]
    %v3728 = vld [vmem:[%s3 + $0x744] sm:$0xf]
    %v3729 = vld [vmem:[%s3 + $0x748] sm:$0xf]
    %v3730 = vld [vmem:[%s3 + $0x74c] sm:$0xf]
    %v3731 = vld [vmem:[%s3 + $0x750] sm:$0xf]
    %v3732 = vld [vmem:[%s3 + $0x754] sm:$0xf]
    %v3733 = vld [vmem:[%s3 + $0x758] sm:$0xf]
    %v3734 = vld [vmem:[%s3 + $0x75c] sm:$0xf]
    %v3735 = vld [vmem:[%s3 + $0x760] sm:$0xf]
    %v3736 = vld [vmem:[%s3 + $0x764] sm:$0xf]
    %v3737 = vld [vmem:[%s3 + $0x768] sm:$0xf]
    %v3738 = vld [vmem:[%s3 + $0x76c] sm:$0xf]
    %v3739 = vld [vmem:[%s3 + $0x770] sm:$0xf]
    %v3740 = vld [vmem:[%s3 + $0x774] sm:$0xf]
    %v3741 = vld [vmem:[%s3 + $0x778] sm:$0xf]
    %v3742 = vld [vmem:[%s3 + $0x77c] sm:$0xf]
    %v3743 = vrot.slane %v628, 5
    %v3761 = vunpack.c.l.b16 %v3727
    %v3762 = vunpack.c.l.b16 %v3728
    %v3763 = vunpack.c.l.b16 %v3729
    %v3764 = vunpack.c.l.b16 %v3730
    %v3765 = vunpack.c.l.b16 %v3731
    %v3766 = vunpack.c.l.b16 %v3732
    %v3767 = vunpack.c.l.b16 %v3733
    %v3768 = vunpack.c.l.b16 %v3734
    %v3769 = vunpack.c.l.b16 %v3735
    %v3770 = vunpack.c.l.b16 %v3736
    %v3771 = vunpack.c.l.b16 %v3737
    %v3772 = vunpack.c.l.b16 %v3738
    %v3773 = vunpack.c.l.b16 %v3739
    %v3774 = vunpack.c.l.b16 %v3740
    %v3775 = vunpack.c.l.b16 %v3741
    %v3776 = vunpack.c.l.b16 %v3742
    %v3777 = vpack.c.b16 %v3762, %v3761
    %v3778 = vpack.c.b16 %v3764, %v3763
    %v3779 = vpack.c.b16 %v3766, %v3765
    %v3780 = vpack.c.b16 %v3768, %v3767
    %v3781 = vpack.c.b16 %v3770, %v3769
    %v3782 = vpack.c.b16 %v3772, %v3771
    %v3783 = vpack.c.b16 %v3774, %v3773
    %v3784 = vpack.c.b16 %v3776, %v3775
    %3793 = vmatprep.subr.bf16.mxu0 0
    %3794 = vmatpush1.bf16.msra.mxu0 %v3777
    %3795 = vmatprep.subr.bf16.mxu0 0
    %3796 = vmatpush1.bf16.msra.mxu0 %v3778
    %3797 = vmatprep.subr.bf16.mxu0 0
    %3798 = vmatpush1.bf16.msra.mxu0 %v3779
    %3799 = vmatprep.subr.bf16.mxu0 0
    %3800 = vmatpush1.bf16.msra.mxu0 %v3780
    %3801 = vmatprep.subr.bf16.mxu0 0
    %3802 = vmatpush1.bf16.msra.mxu0 %v3781
    %3803 = vmatprep.subr.bf16.mxu0 0
    %3804 = vmatpush1.bf16.msra.mxu0 %v3782
    %3805 = vmatprep.subr.bf16.mxu0 0
    %3806 = vmatpush1.bf16.msra.mxu0 %v3783
    %3807 = vmatprep.subr.bf16.mxu0 0
    %3808 = vmatpush1.bf16.msra.mxu0 %v3784
    %3809 = vmatprep.subr.bf16.mxu0 0
    %3810 = vmatpush1.bf16.msra.mxu0 0
    %3811 = vmatprep.subr.bf16.mxu0 0
    %3812 = vmatpush1.bf16.msra.mxu0 0
    %3813 = vmatprep.subr.bf16.mxu0 0
    %3814 = vmatpush1.bf16.msra.mxu0 0
    %3815 = vmatprep.subr.bf16.mxu0 0
    %3816 = vmatpush1.bf16.msra.mxu0 0
    %3817 = vmatprep.subr.bf16.mxu0 0
    %3818 = vmatpush1.bf16.msra.mxu0 0
    %3819 = vmatprep.subr.bf16.mxu0 0
    %3820 = vmatpush1.bf16.msra.mxu0 0
    %3821 = vmatprep.subr.bf16.mxu0 0
    %3822 = vmatpush1.bf16.msra.mxu0 0
    %3823 = vmatprep.subr.bf16.mxu0 0
    %3824 = vmatpush1.bf16.msra.mxu0 0
    %3825 = vmatprep.mubr.bf16.mxu0 0
    %3826 = vmatmul.mubr.bf16.gmra.mrb[0].mxu0 %v3743
    %v3827 = vpop.f32.mrb[0].mxu0
    %v3828 = vadd.f32 0.0, %v3827
    %v3829 = vpop.f32.mrb[0].mxu0
    %v3830 = vpop.f32.mrb[0].mxu0
    %v3831 = vpop.f32.mrb[0].mxu0
    %3832 = vdwg.mxu0
    %v3833 = vadd.f32 %v3726, %v3828
    %v3834 = vld [vmem:[%s3 + $0x780] sm:$0xf]
    %v3835 = vld [vmem:[%s3 + $0x784] sm:$0xf]
    %v3836 = vld [vmem:[%s3 + $0x788] sm:$0xf]
    %v3837 = vld [vmem:[%s3 + $0x78c] sm:$0xf]
    %v3838 = vld [vmem:[%s3 + $0x790] sm:$0xf]
    %v3839 = vld [vmem:[%s3 + $0x794] sm:$0xf]
    %v3840 = vld [vmem:[%s3 + $0x798] sm:$0xf]
    %v3841 = vld [vmem:[%s3 + $0x79c] sm:$0xf]
    %v3842 = vld [vmem:[%s3 + $0x7a0] sm:$0xf]
    %v3843 = vld [vmem:[%s3 + $0x7a4] sm:$0xf]
    %v3844 = vld [vmem:[%s3 + $0x7a8] sm:$0xf]
    %v3845 = vld [vmem:[%s3 + $0x7ac] sm:$0xf]
    %v3846 = vld [vmem:[%s3 + $0x7b0] sm:$0xf]
    %v3847 = vld [vmem:[%s3 + $0x7b4] sm:$0xf]
    %v3848 = vld [vmem:[%s3 + $0x7b8] sm:$0xf]
    %v3849 = vld [vmem:[%s3 + $0x7bc] sm:$0xf]
    %v3850 = vrot.slane %v628, 6
    %v3868 = vunpack.c.l.b16 %v3834
    %v3869 = vunpack.c.l.b16 %v3835
    %v3870 = vunpack.c.l.b16 %v3836
    %v3871 = vunpack.c.l.b16 %v3837
    %v3872 = vunpack.c.l.b16 %v3838
    %v3873 = vunpack.c.l.b16 %v3839
    %v3874 = vunpack.c.l.b16 %v3840
    %v3875 = vunpack.c.l.b16 %v3841
    %v3876 = vunpack.c.l.b16 %v3842
    %v3877 = vunpack.c.l.b16 %v3843
    %v3878 = vunpack.c.l.b16 %v3844
    %v3879 = vunpack.c.l.b16 %v3845
    %v3880 = vunpack.c.l.b16 %v3846
    %v3881 = vunpack.c.l.b16 %v3847
    %v3882 = vunpack.c.l.b16 %v3848
    %v3883 = vunpack.c.l.b16 %v3849
    %v3884 = vpack.c.b16 %v3869, %v3868
    %v3885 = vpack.c.b16 %v3871, %v3870
    %v3886 = vpack.c.b16 %v3873, %v3872
    %v3887 = vpack.c.b16 %v3875, %v3874
    %v3888 = vpack.c.b16 %v3877, %v3876
    %v3889 = vpack.c.b16 %v3879, %v3878
    %v3890 = vpack.c.b16 %v3881, %v3880
    %v3891 = vpack.c.b16 %v3883, %v3882
    %3900 = vmatprep.subr.bf16.mxu0 0
    %3901 = vmatpush1.bf16.msra.mxu0 %v3884
    %3902 = vmatprep.subr.bf16.mxu0 0
    %3903 = vmatpush1.bf16.msra.mxu0 %v3885
    %3904 = vmatprep.subr.bf16.mxu0 0
    %3905 = vmatpush1.bf16.msra.mxu0 %v3886
    %3906 = vmatprep.subr.bf16.mxu0 0
    %3907 = vmatpush1.bf16.msra.mxu0 %v3887
    %3908 = vmatprep.subr.bf16.mxu0 0
    %3909 = vmatpush1.bf16.msra.mxu0 %v3888
    %3910 = vmatprep.subr.bf16.mxu0 0
    %3911 = vmatpush1.bf16.msra.mxu0 %v3889
    %3912 = vmatprep.subr.bf16.mxu0 0
    %3913 = vmatpush1.bf16.msra.mxu0 %v3890
    %3914 = vmatprep.subr.bf16.mxu0 0
    %3915 = vmatpush1.bf16.msra.mxu0 %v3891
    %3916 = vmatprep.subr.bf16.mxu0 0
    %3917 = vmatpush1.bf16.msra.mxu0 0
    %3918 = vmatprep.subr.bf16.mxu0 0
    %3919 = vmatpush1.bf16.msra.mxu0 0
    %3920 = vmatprep.subr.bf16.mxu0 0
    %3921 = vmatpush1.bf16.msra.mxu0 0
    %3922 = vmatprep.subr.bf16.mxu0 0
    %3923 = vmatpush1.bf16.msra.mxu0 0
    %3924 = vmatprep.subr.bf16.mxu0 0
    %3925 = vmatpush1.bf16.msra.mxu0 0
    %3926 = vmatprep.subr.bf16.mxu0 0
    %3927 = vmatpush1.bf16.msra.mxu0 0
    %3928 = vmatprep.subr.bf16.mxu0 0
    %3929 = vmatpush1.bf16.msra.mxu0 0
    %3930 = vmatprep.subr.bf16.mxu0 0
    %3931 = vmatpush1.bf16.msra.mxu0 0
    %3932 = vmatprep.mubr.bf16.mxu0 0
    %3933 = vmatmul.mubr.bf16.gmra.mrb[0].mxu0 %v3850
    %v3934 = vpop.f32.mrb[0].mxu0
    %v3935 = vadd.f32 0.0, %v3934
    %v3936 = vpop.f32.mrb[0].mxu0
    %v3937 = vpop.f32.mrb[0].mxu0
    %v3938 = vpop.f32.mrb[0].mxu0
    %3939 = vdwg.mxu0
    %v3940 = vadd.f32 %v3833, %v3935
    %v3941 = vld [vmem:[%s3 + $0x7c0] sm:$0xf]
    %v3942 = vld [vmem:[%s3 + $0x7c4] sm:$0xf]
    %v3943 = vld [vmem:[%s3 + $0x7c8] sm:$0xf]
    %v3944 = vld [vmem:[%s3 + $0x7cc] sm:$0xf]
    %v3945 = vld [vmem:[%s3 + $0x7d0] sm:$0xf]
    %v3946 = vld [vmem:[%s3 + $0x7d4] sm:$0xf]
    %v3947 = vld [vmem:[%s3 + $0x7d8] sm:$0xf]
    %v3948 = vld [vmem:[%s3 + $0x7dc] sm:$0xf]
    %v3949 = vld [vmem:[%s3 + $0x7e0] sm:$0xf]
    %v3950 = vld [vmem:[%s3 + $0x7e4] sm:$0xf]
    %v3951 = vld [vmem:[%s3 + $0x7e8] sm:$0xf]
    %v3952 = vld [vmem:[%s3 + $0x7ec] sm:$0xf]
    %v3953 = vld [vmem:[%s3 + $0x7f0] sm:$0xf]
    %v3954 = vld [vmem:[%s3 + $0x7f4] sm:$0xf]
    %v3955 = vld [vmem:[%s3 + $0x7f8] sm:$0xf]
    %v3956 = vld [vmem:[%s3 + $0x7fc] sm:$0xf]
    %v3957 = vrot.slane %v628, 7
    %v3975 = vunpack.c.l.b16 %v3941
    %v3976 = vunpack.c.l.b16 %v3942
    %v3977 = vunpack.c.l.b16 %v3943
    %v3978 = vunpack.c.l.b16 %v3944
    %v3979 = vunpack.c.l.b16 %v3945
    %v3980 = vunpack.c.l.b16 %v3946
    %v3981 = vunpack.c.l.b16 %v3947
    %v3982 = vunpack.c.l.b16 %v3948
    %v3983 = vunpack.c.l.b16 %v3949
    %v3984 = vunpack.c.l.b16 %v3950
    %v3985 = vunpack.c.l.b16 %v3951
    %v3986 = vunpack.c.l.b16 %v3952
    %v3987 = vunpack.c.l.b16 %v3953
    %v3988 = vunpack.c.l.b16 %v3954
    %v3989 = vunpack.c.l.b16 %v3955
    %v3990 = vunpack.c.l.b16 %v3956
    %v3991 = vpack.c.b16 %v3976, %v3975
    %v3992 = vpack.c.b16 %v3978, %v3977
    %v3993 = vpack.c.b16 %v3980, %v3979
    %v3994 = vpack.c.b16 %v3982, %v3981
    %v3995 = vpack.c.b16 %v3984, %v3983
    %v3996 = vpack.c.b16 %v3986, %v3985
    %v3997 = vpack.c.b16 %v3988, %v3987
    %v3998 = vpack.c.b16 %v3990, %v3989
    %4007 = vmatprep.subr.bf16.mxu0 0
    %4008 = vmatpush1.bf16.msra.mxu0 %v3991
    %4009 = vmatprep.subr.bf16.mxu0 0
    %4010 = vmatpush1.bf16.msra.mxu0 %v3992
    %4011 = vmatprep.subr.bf16.mxu0 0
    %4012 = vmatpush1.bf16.msra.mxu0 %v3993
    %4013 = vmatprep.subr.bf16.mxu0 0
    %4014 = vmatpush1.bf16.msra.mxu0 %v3994
    %4015 = vmatprep.subr.bf16.mxu0 0
    %4016 = vmatpush1.bf16.msra.mxu0 %v3995
    %4017 = vmatprep.subr.bf16.mxu0 0
    %4018 = vmatpush1.bf16.msra.mxu0 %v3996
    %4019 = vmatprep.subr.bf16.mxu0 0
    %4020 = vmatpush1.bf16.msra.mxu0 %v3997
    %4021 = vmatprep.subr.bf16.mxu0 0
    %4022 = vmatpush1.bf16.msra.mxu0 %v3998
    %4023 = vmatprep.subr.bf16.mxu0 0
    %4024 = vmatpush1.bf16.msra.mxu0 0
    %4025 = vmatprep.subr.bf16.mxu0 0
    %4026 = vmatpush1.bf16.msra.mxu0 0
    %4027 = vmatprep.subr.bf16.mxu0 0
    %4028 = vmatpush1.bf16.msra.mxu0 0
    %4029 = vmatprep.subr.bf16.mxu0 0
    %4030 = vmatpush1.bf16.msra.mxu0 0
    %4031 = vmatprep.subr.bf16.mxu0 0
    %4032 = vmatpush1.bf16.msra.mxu0 0
    %4033 = vmatprep.subr.bf16.mxu0 0
    %4034 = vmatpush1.bf16.msra.mxu0 0
    %4035 = vmatprep.subr.bf16.mxu0 0
    %4036 = vmatpush1.bf16.msra.mxu0 0
    %4037 = vmatprep.subr.bf16.mxu0 0
    %4038 = vmatpush1.bf16.msra.mxu0 0
    %4039 = vmatprep.mubr.bf16.mxu0 0
    %4040 = vmatmul.mubr.bf16.gmra.mrb[0].mxu0 %v3957
    %v4041 = vpop.f32.mrb[0].mxu0
    %v4042 = vadd.f32 0.0, %v4041
    %v4043 = vpop.f32.mrb[0].mxu0
    %v4044 = vpop.f32.mrb[0].mxu0
    %v4045 = vpop.f32.mrb[0].mxu0
    %4046 = vdwg.mxu0
    %v4047 = vadd.f32 %v3940, %v4042
    %v4048 = vld [vmem:[%s3 + $0x800] sm:$0xf]
    %v4049 = vld [vmem:[%s3 + $0x804] sm:$0xf]
    %v4050 = vld [vmem:[%s3 + $0x808] sm:$0xf]
    %v4051 = vld [vmem:[%s3 + $0x80c] sm:$0xf]
    %v4052 = vld [vmem:[%s3 + $0x810] sm:$0xf]
    %v4053 = vld [vmem:[%s3 + $0x814] sm:$0xf]
    %v4054 = vld [vmem:[%s3 + $0x818] sm:$0xf]
    %v4055 = vld [vmem:[%s3 + $0x81c] sm:$0xf]
    %v4056 = vld [vmem:[%s3 + $0x820] sm:$0xf]
    %v4057 = vld [vmem:[%s3 + $0x824] sm:$0xf]
    %v4058 = vld [vmem:[%s3 + $0x828] sm:$0xf]
    %v4059 = vld [vmem:[%s3 + $0x82c] sm:$0xf]
    %v4060 = vld [vmem:[%s3 + $0x830] sm:$0xf]
    %v4061 = vld [vmem:[%s3 + $0x834] sm:$0xf]
    %v4062 = vld [vmem:[%s3 + $0x838] sm:$0xf]
    %v4063 = vld [vmem:[%s3 + $0x83c] sm:$0xf]
    %v4080 = vunpack.c.l.b16 %v4048
    %v4081 = vunpack.c.l.b16 %v4049
    %v4082 = vunpack.c.l.b16 %v4050
    %v4083 = vunpack.c.l.b16 %v4051
    %v4084 = vunpack.c.l.b16 %v4052
    %v4085 = vunpack.c.l.b16 %v4053
    %v4086 = vunpack.c.l.b16 %v4054
    %v4087 = vunpack.c.l.b16 %v4055
    %v4088 = vunpack.c.l.b16 %v4056
    %v4089 = vunpack.c.l.b16 %v4057
    %v4090 = vunpack.c.l.b16 %v4058
    %v4091 = vunpack.c.l.b16 %v4059
    %v4092 = vunpack.c.l.b16 %v4060
    %v4093 = vunpack.c.l.b16 %v4061
    %v4094 = vunpack.c.l.b16 %v4062
    %v4095 = vunpack.c.l.b16 %v4063
    %v4096 = vpack.c.b16 %v4081, %v4080
    %v4097 = vpack.c.b16 %v4083, %v4082
    %v4098 = vpack.c.b16 %v4085, %v4084
    %v4099 = vpack.c.b16 %v4087, %v4086
    %v4100 = vpack.c.b16 %v4089, %v4088
    %v4101 = vpack.c.b16 %v4091, %v4090
    %v4102 = vpack.c.b16 %v4093, %v4092
    %v4103 = vpack.c.b16 %v4095, %v4094
    %4112 = vmatprep.subr.bf16.mxu0 0
    %4113 = vmatpush1.bf16.msra.mxu0 %v4096
    %4114 = vmatprep.subr.bf16.mxu0 0
    %4115 = vmatpush1.bf16.msra.mxu0 %v4097
    %4116 = vmatprep.subr.bf16.mxu0 0
    %4117 = vmatpush1.bf16.msra.mxu0 %v4098
    %4118 = vmatprep.subr.bf16.mxu0 0
    %4119 = vmatpush1.bf16.msra.mxu0 %v4099
    %4120 = vmatprep.subr.bf16.mxu0 0
    %4121 = vmatpush1.bf16.msra.mxu0 %v4100
    %4122 = vmatprep.subr.bf16.mxu0 0
    %4123 = vmatpush1.bf16.msra.mxu0 %v4101
    %4124 = vmatprep.subr.bf16.mxu0 0
    %4125 = vmatpush1.bf16.msra.mxu0 %v4102
    %4126 = vmatprep.subr.bf16.mxu0 0
    %4127 = vmatpush1.bf16.msra.mxu0 %v4103
    %4128 = vmatprep.subr.bf16.mxu0 0
    %4129 = vmatpush1.bf16.msra.mxu0 0
    %4130 = vmatprep.subr.bf16.mxu0 0
    %4131 = vmatpush1.bf16.msra.mxu0 0
    %4132 = vmatprep.subr.bf16.mxu0 0
    %4133 = vmatpush1.bf16.msra.mxu0 0
    %4134 = vmatprep.subr.bf16.mxu0 0
    %4135 = vmatpush1.bf16.msra.mxu0 0
    %4136 = vmatprep.subr.bf16.mxu0 0
    %4137 = vmatpush1.bf16.msra.mxu0 0
    %4138 = vmatprep.subr.bf16.mxu0 0
    %4139 = vmatpush1.bf16.msra.mxu0 0
    %4140 = vmatprep.subr.bf16.mxu0 0
    %4141 = vmatpush1.bf16.msra.mxu0 0
    %4142 = vmatprep.subr.bf16.mxu0 0
    %4143 = vmatpush1.bf16.msra.mxu0 0
    %4144 = vmatprep.mubr.bf16.mxu0 0
    %4145 = vmatmul.mubr.bf16.gmra.mrb[0].mxu0 %v629
    %v4146 = vpop.f32.mrb[0].mxu0
    %v4147 = vadd.f32 0.0, %v4146
    %v4148 = vpop.f32.mrb[0].mxu0
    %v4149 = vpop.f32.mrb[0].mxu0
    %v4150 = vpop.f32.mrb[0].mxu0
    %4151 = vdwg.mxu0
    %v4152 = vadd.f32 %v4047, %v4147
    %v4153 = vld [vmem:[%s3 + $0x840] sm:$0xf]
    %v4154 = vld [vmem:[%s3 + $0x844] sm:$0xf]
    %v4155 = vld [vmem:[%s3 + $0x848] sm:$0xf]
    %v4156 = vld [vmem:[%s3 + $0x84c] sm:$0xf]
    %v4157 = vld [vmem:[%s3 + $0x850] sm:$0xf]
    %v4158 = vld [vmem:[%s3 + $0x854] sm:$0xf]
    %v4159 = vld [vmem:[%s3 + $0x858] sm:$0xf]
    %v4160 = vld [vmem:[%s3 + $0x85c] sm:$0xf]
    %v4161 = vld [vmem:[%s3 + $0x860] sm:$0xf]
    %v4162 = vld [vmem:[%s3 + $0x864] sm:$0xf]
    %v4163 = vld [vmem:[%s3 + $0x868] sm:$0xf]
    %v4164 = vld [vmem:[%s3 + $0x86c] sm:$0xf]
    %v4165 = vld [vmem:[%s3 + $0x870] sm:$0xf]
    %v4166 = vld [vmem:[%s3 + $0x874] sm:$0xf]
    %v4167 = vld [vmem:[%s3 + $0x878] sm:$0xf]
    %v4168 = vld [vmem:[%s3 + $0x87c] sm:$0xf]
    %v4170 = vrot.slane %v629, 1
    %v4188 = vunpack.c.l.b16 %v4153
    %v4189 = vunpack.c.l.b16 %v4154
    %v4190 = vunpack.c.l.b16 %v4155
    %v4191 = vunpack.c.l.b16 %v4156
    %v4192 = vunpack.c.l.b16 %v4157
    %v4193 = vunpack.c.l.b16 %v4158
    %v4194 = vunpack.c.l.b16 %v4159
    %v4195 = vunpack.c.l.b16 %v4160
    %v4196 = vunpack.c.l.b16 %v4161
    %v4197 = vunpack.c.l.b16 %v4162
    %v4198 = vunpack.c.l.b16 %v4163
    %v4199 = vunpack.c.l.b16 %v4164
    %v4200 = vunpack.c.l.b16 %v4165
    %v4201 = vunpack.c.l.b16 %v4166
    %v4202 = vunpack.c.l.b16 %v4167
    %v4203 = vunpack.c.l.b16 %v4168
    %v4204 = vpack.c.b16 %v4189, %v4188
    %v4205 = vpack.c.b16 %v4191, %v4190
    %v4206 = vpack.c.b16 %v4193, %v4192
    %v4207 = vpack.c.b16 %v4195, %v4194
    %v4208 = vpack.c.b16 %v4197, %v4196
    %v4209 = vpack.c.b16 %v4199, %v4198
    %v4210 = vpack.c.b16 %v4201, %v4200
    %v4211 = vpack.c.b16 %v4203, %v4202
    %4220 = vmatprep.subr.bf16.mxu0 0
    %4221 = vmatpush1.bf16.msra.mxu0 %v4204
    %4222 = vmatprep.subr.bf16.mxu0 0
    %4223 = vmatpush1.bf16.msra.mxu0 %v4205
    %4224 = vmatprep.subr.bf16.mxu0 0
    %4225 = vmatpush1.bf16.msra.mxu0 %v4206
    %4226 = vmatprep.subr.bf16.mxu0 0
    %4227 = vmatpush1.bf16.msra.mxu0 %v4207
    %4228 = vmatprep.subr.bf16.mxu0 0
    %4229 = vmatpush1.bf16.msra.mxu0 %v4208
    %4230 = vmatprep.subr.bf16.mxu0 0
    %4231 = vmatpush1.bf16.msra.mxu0 %v4209
    %4232 = vmatprep.subr.bf16.mxu0 0
    %4233 = vmatpush1.bf16.msra.mxu0 %v4210
    %4234 = vmatprep.subr.bf16.mxu0 0
    %4235 = vmatpush1.bf16.msra.mxu0 %v4211
    %4236 = vmatprep.subr.bf16.mxu0 0
    %4237 = vmatpush1.bf16.msra.mxu0 0
    %4238 = vmatprep.subr.bf16.mxu0 0
    %4239 = vmatpush1.bf16.msra.mxu0 0
    %4240 = vmatprep.subr.bf16.mxu0 0
    %4241 = vmatpush1.bf16.msra.mxu0 0
    %4242 = vmatprep.subr.bf16.mxu0 0
    %4243 = vmatpush1.bf16.msra.mxu0 0
    %4244 = vmatprep.subr.bf16.mxu0 0
    %4245 = vmatpush1.bf16.msra.mxu0 0
    %4246 = vmatprep.subr.bf16.mxu0 0
    %4247 = vmatpush1.bf16.msra.mxu0 0
    %4248 = vmatprep.subr.bf16.mxu0 0
    %4249 = vmatpush1.bf16.msra.mxu0 0
    %4250 = vmatprep.subr.bf16.mxu0 0
    %4251 = vmatpush1.bf16.msra.mxu0 0
    %4252 = vmatprep.mubr.bf16.mxu0 0
    %4253 = vmatmul.mubr.bf16.gmra.mrb[0].mxu0 %v4170
    %v4254 = vpop.f32.mrb[0].mxu0
    %v4255 = vadd.f32 0.0, %v4254
    %v4256 = vpop.f32.mrb[0].mxu0
    %v4257 = vpop.f32.mrb[0].mxu0
    %v4258 = vpop.f32.mrb[0].mxu0
    %4259 = vdwg.mxu0
    %v4260 = vadd.f32 %v4152, %v4255
    %v4261 = vld [vmem:[%s3 + $0x880] sm:$0xf]
    %v4262 = vld [vmem:[%s3 + $0x884] sm:$0xf]
    %v4263 = vld [vmem:[%s3 + $0x888] sm:$0xf]
    %v4264 = vld [vmem:[%s3 + $0x88c] sm:$0xf]
    %v4265 = vld [vmem:[%s3 + $0x890] sm:$0xf]
    %v4266 = vld [vmem:[%s3 + $0x894] sm:$0xf]
    %v4267 = vld [vmem:[%s3 + $0x898] sm:$0xf]
    %v4268 = vld [vmem:[%s3 + $0x89c] sm:$0xf]
    %v4269 = vld [vmem:[%s3 + $0x8a0] sm:$0xf]
    %v4270 = vld [vmem:[%s3 + $0x8a4] sm:$0xf]
    %v4271 = vld [vmem:[%s3 + $0x8a8] sm:$0xf]
    %v4272 = vld [vmem:[%s3 + $0x8ac] sm:$0xf]
    %v4273 = vld [vmem:[%s3 + $0x8b0] sm:$0xf]
    %v4274 = vld [vmem:[%s3 + $0x8b4] sm:$0xf]
    %v4275 = vld [vmem:[%s3 + $0x8b8] sm:$0xf]
    %v4276 = vld [vmem:[%s3 + $0x8bc] sm:$0xf]
    %v4277 = vrot.slane %v629, 2
    %v4295 = vunpack.c.l.b16 %v4261
    %v4296 = vunpack.c.l.b16 %v4262
    %v4297 = vunpack.c.l.b16 %v4263
    %v4298 = vunpack.c.l.b16 %v4264
    %v4299 = vunpack.c.l.b16 %v4265
    %v4300 = vunpack.c.l.b16 %v4266
    %v4301 = vunpack.c.l.b16 %v4267
    %v4302 = vunpack.c.l.b16 %v4268
    %v4303 = vunpack.c.l.b16 %v4269
    %v4304 = vunpack.c.l.b16 %v4270
    %v4305 = vunpack.c.l.b16 %v4271
    %v4306 = vunpack.c.l.b16 %v4272
    %v4307 = vunpack.c.l.b16 %v4273
    %v4308 = vunpack.c.l.b16 %v4274
    %v4309 = vunpack.c.l.b16 %v4275
    %v4310 = vunpack.c.l.b16 %v4276
    %v4311 = vpack.c.b16 %v4296, %v4295
    %v4312 = vpack.c.b16 %v4298, %v4297
    %v4313 = vpack.c.b16 %v4300, %v4299
    %v4314 = vpack.c.b16 %v4302, %v4301
    %v4315 = vpack.c.b16 %v4304, %v4303
    %v4316 = vpack.c.b16 %v4306, %v4305
    %v4317 = vpack.c.b16 %v4308, %v4307
    %v4318 = vpack.c.b16 %v4310, %v4309
    %4327 = vmatprep.subr.bf16.mxu0 0
    %4328 = vmatpush1.bf16.msra.mxu0 %v4311
    %4329 = vmatprep.subr.bf16.mxu0 0
    %4330 = vmatpush1.bf16.msra.mxu0 %v4312
    %4331 = vmatprep.subr.bf16.mxu0 0
    %4332 = vmatpush1.bf16.msra.mxu0 %v4313
    %4333 = vmatprep.subr.bf16.mxu0 0
    %4334 = vmatpush1.bf16.msra.mxu0 %v4314
    %4335 = vmatprep.subr.bf16.mxu0 0
    %4336 = vmatpush1.bf16.msra.mxu0 %v4315
    %4337 = vmatprep.subr.bf16.mxu0 0
    %4338 = vmatpush1.bf16.msra.mxu0 %v4316
    %4339 = vmatprep.subr.bf16.mxu0 0
    %4340 = vmatpush1.bf16.msra.mxu0 %v4317
    %4341 = vmatprep.subr.bf16.mxu0 0
    %4342 = vmatpush1.bf16.msra.mxu0 %v4318
    %4343 = vmatprep.subr.bf16.mxu0 0
    %4344 = vmatpush1.bf16.msra.mxu0 0
    %4345 = vmatprep.subr.bf16.mxu0 0
    %4346 = vmatpush1.bf16.msra.mxu0 0
    %4347 = vmatprep.subr.bf16.mxu0 0
    %4348 = vmatpush1.bf16.msra.mxu0 0
    %4349 = vmatprep.subr.bf16.mxu0 0
    %4350 = vmatpush1.bf16.msra.mxu0 0
    %4351 = vmatprep.subr.bf16.mxu0 0
    %4352 = vmatpush1.bf16.msra.mxu0 0
    %4353 = vmatprep.subr.bf16.mxu0 0
    %4354 = vmatpush1.bf16.msra.mxu0 0
    %4355 = vmatprep.subr.bf16.mxu0 0
    %4356 = vmatpush1.bf16.msra.mxu0 0
    %4357 = vmatprep.subr.bf16.mxu0 0
    %4358 = vmatpush1.bf16.msra.mxu0 0
    %4359 = vmatprep.mubr.bf16.mxu0 0
    %4360 = vmatmul.mubr.bf16.gmra.mrb[0].mxu0 %v4277
    %v4361 = vpop.f32.mrb[0].mxu0
    %v4362 = vadd.f32 0.0, %v4361
    %v4363 = vpop.f32.mrb[0].mxu0
    %v4364 = vpop.f32.mrb[0].mxu0
    %v4365 = vpop.f32.mrb[0].mxu0
    %4366 = vdwg.mxu0
    %v4367 = vadd.f32 %v4260, %v4362
    %v4368 = vld [vmem:[%s3 + $0x8c0] sm:$0xf]
    %v4369 = vld [vmem:[%s3 + $0x8c4] sm:$0xf]
    %v4370 = vld [vmem:[%s3 + $0x8c8] sm:$0xf]
    %v4371 = vld [vmem:[%s3 + $0x8cc] sm:$0xf]
    %v4372 = vld [vmem:[%s3 + $0x8d0] sm:$0xf]
    %v4373 = vld [vmem:[%s3 + $0x8d4] sm:$0xf]
    %v4374 = vld [vmem:[%s3 + $0x8d8] sm:$0xf]
    %v4375 = vld [vmem:[%s3 + $0x8dc] sm:$0xf]
    %v4376 = vld [vmem:[%s3 + $0x8e0] sm:$0xf]
    %v4377 = vld [vmem:[%s3 + $0x8e4] sm:$0xf]
    %v4378 = vld [vmem:[%s3 + $0x8e8] sm:$0xf]
    %v4379 = vld [vmem:[%s3 + $0x8ec] sm:$0xf]
    %v4380 = vld [vmem:[%s3 + $0x8f0] sm:$0xf]
    %v4381 = vld [vmem:[%s3 + $0x8f4] sm:$0xf]
    %v4382 = vld [vmem:[%s3 + $0x8f8] sm:$0xf]
    %v4383 = vld [vmem:[%s3 + $0x8fc] sm:$0xf]
    %v4384 = vrot.slane %v629, 3
    %v4402 = vunpack.c.l.b16 %v4368
    %v4403 = vunpack.c.l.b16 %v4369
    %v4404 = vunpack.c.l.b16 %v4370
    %v4405 = vunpack.c.l.b16 %v4371
    %v4406 = vunpack.c.l.b16 %v4372
    %v4407 = vunpack.c.l.b16 %v4373
    %v4408 = vunpack.c.l.b16 %v4374
    %v4409 = vunpack.c.l.b16 %v4375
    %v4410 = vunpack.c.l.b16 %v4376
    %v4411 = vunpack.c.l.b16 %v4377
    %v4412 = vunpack.c.l.b16 %v4378
    %v4413 = vunpack.c.l.b16 %v4379
    %v4414 = vunpack.c.l.b16 %v4380
    %v4415 = vunpack.c.l.b16 %v4381
    %v4416 = vunpack.c.l.b16 %v4382
    %v4417 = vunpack.c.l.b16 %v4383
    %v4418 = vpack.c.b16 %v4403, %v4402
    %v4419 = vpack.c.b16 %v4405, %v4404
    %v4420 = vpack.c.b16 %v4407, %v4406
    %v4421 = vpack.c.b16 %v4409, %v4408
    %v4422 = vpack.c.b16 %v4411, %v4410
    %v4423 = vpack.c.b16 %v4413, %v4412
    %v4424 = vpack.c.b16 %v4415, %v4414
    %v4425 = vpack.c.b16 %v4417, %v4416
    %4434 = vmatprep.subr.bf16.mxu0 0
    %4435 = vmatpush1.bf16.msra.mxu0 %v4418
    %4436 = vmatprep.subr.bf16.mxu0 0
    %4437 = vmatpush1.bf16.msra.mxu0 %v4419
    %4438 = vmatprep.subr.bf16.mxu0 0
    %4439 = vmatpush1.bf16.msra.mxu0 %v4420
    %4440 = vmatprep.subr.bf16.mxu0 0
    %4441 = vmatpush1.bf16.msra.mxu0 %v4421
    %4442 = vmatprep.subr.bf16.mxu0 0
    %4443 = vmatpush1.bf16.msra.mxu0 %v4422
    %4444 = vmatprep.subr.bf16.mxu0 0
    %4445 = vmatpush1.bf16.msra.mxu0 %v4423
    %4446 = vmatprep.subr.bf16.mxu0 0
    %4447 = vmatpush1.bf16.msra.mxu0 %v4424
    %4448 = vmatprep.subr.bf16.mxu0 0
    %4449 = vmatpush1.bf16.msra.mxu0 %v4425
    %4450 = vmatprep.subr.bf16.mxu0 0
    %4451 = vmatpush1.bf16.msra.mxu0 0
    %4452 = vmatprep.subr.bf16.mxu0 0
    %4453 = vmatpush1.bf16.msra.mxu0 0
    %4454 = vmatprep.subr.bf16.mxu0 0
    %4455 = vmatpush1.bf16.msra.mxu0 0
    %4456 = vmatprep.subr.bf16.mxu0 0
    %4457 = vmatpush1.bf16.msra.mxu0 0
    %4458 = vmatprep.subr.bf16.mxu0 0
    %4459 = vmatpush1.bf16.msra.mxu0 0
    %4460 = vmatprep.subr.bf16.mxu0 0
    %4461 = vmatpush1.bf16.msra.mxu0 0
    %4462 = vmatprep.subr.bf16.mxu0 0
    %4463 = vmatpush1.bf16.msra.mxu0 0
    %4464 = vmatprep.subr.bf16.mxu0 0
    %4465 = vmatpush1.bf16.msra.mxu0 0
    %4466 = vmatprep.mubr.bf16.mxu0 0
    %4467 = vmatmul.mubr.bf16.gmra.mrb[0].mxu0 %v4384
    %v4468 = vpop.f32.mrb[0].mxu0
    %v4469 = vadd.f32 0.0, %v4468
    %v4470 = vpop.f32.mrb[0].mxu0
    %v4471 = vpop.f32.mrb[0].mxu0
    %v4472 = vpop.f32.mrb[0].mxu0
    %4473 = vdwg.mxu0
    %v4474 = vadd.f32 %v4367, %v4469
    %v4475 = vld [vmem:[%s4] sm:$0x1]
    %v4477 = vlaneseq
    %v4478 = vshrl.u32 %v4477, 7
    %v4479 = vsub.s32 0, %v4478
    %v4480 = vrot.slane %v4475, %v4479
    %v4482 = vadd.f32 %v4474, %v4480
    %v4483 = vmax.f32 %v4482, 0.0
    %v4484 = vpack.c.bf16 %v4483, %v4483
    %v4485 = vld [vmem:[%s5] sm:$0xf]
    %v4486 = vld [vmem:[%s5 + $0x4] sm:$0xf]
    %v4487 = vld [vmem:[%s5 + $0x8] sm:$0xf]
    %v4488 = vld [vmem:[%s5 + $0xc] sm:$0xf]
    %v4489 = vld [vmem:[%s5 + $0x10] sm:$0xf]
    %v4490 = vld [vmem:[%s5 + $0x14] sm:$0xf]
    %v4491 = vld [vmem:[%s5 + $0x18] sm:$0xf]
    %v4492 = vld [vmem:[%s5 + $0x1c] sm:$0xf]
    %v4493 = vld [vmem:[%s5 + $0x20] sm:$0xf]
    %v4494 = vld [vmem:[%s5 + $0x24] sm:$0xf]
    %v4495 = vld [vmem:[%s5 + $0x28] sm:$0xf]
    %v4496 = vld [vmem:[%s5 + $0x2c] sm:$0xf]
    %v4497 = vld [vmem:[%s5 + $0x30] sm:$0xf]
    %v4498 = vld [vmem:[%s5 + $0x34] sm:$0xf]
    %v4499 = vld [vmem:[%s5 + $0x38] sm:$0xf]
    %v4500 = vld [vmem:[%s5 + $0x3c] sm:$0xf]
    %v4501 = vld [vmem:[%s6] sm:$0x1]
    %v4503 = vlaneseq
    %v4504 = vshrl.u32 %v4503, 7
    %v4505 = vsub.s32 0, %v4504
    %v4506 = vrot.slane %v4501, %v4505
    %v4524 = vunpack.c.l.b16 %v4485
    %v4525 = vunpack.c.l.b16 %v4486
    %v4526 = vunpack.c.l.b16 %v4487
    %v4527 = vunpack.c.l.b16 %v4488
    %v4528 = vunpack.c.l.b16 %v4489
    %v4529 = vunpack.c.l.b16 %v4490
    %v4530 = vunpack.c.l.b16 %v4491
    %v4531 = vunpack.c.l.b16 %v4492
    %v4532 = vunpack.c.l.b16 %v4493
    %v4533 = vunpack.c.l.b16 %v4494
    %v4534 = vunpack.c.l.b16 %v4495
    %v4535 = vunpack.c.l.b16 %v4496
    %v4536 = vunpack.c.l.b16 %v4497
    %v4537 = vunpack.c.l.b16 %v4498
    %v4538 = vunpack.c.l.b16 %v4499
    %v4539 = vunpack.c.l.b16 %v4500
    %v4540 = vpack.c.b16 %v4525, %v4524
    %v4541 = vpack.c.b16 %v4527, %v4526
    %v4542 = vpack.c.b16 %v4529, %v4528
    %v4543 = vpack.c.b16 %v4531, %v4530
    %v4544 = vpack.c.b16 %v4533, %v4532
    %v4545 = vpack.c.b16 %v4535, %v4534
    %v4546 = vpack.c.b16 %v4537, %v4536
    %v4547 = vpack.c.b16 %v4539, %v4538
    %4556 = vmatprep.subr.bf16.mxu0 0
    %4557 = vmatpush1.bf16.msra.mxu0 %v4540
    %4558 = vmatprep.subr.bf16.mxu0 0
    %4559 = vmatpush1.bf16.msra.mxu0 %v4541
    %4560 = vmatprep.subr.bf16.mxu0 0
    %4561 = vmatpush1.bf16.msra.mxu0 %v4542
    %4562 = vmatprep.subr.bf16.mxu0 0
    %4563 = vmatpush1.bf16.msra.mxu0 %v4543
    %4564 = vmatprep.subr.bf16.mxu0 0
    %4565 = vmatpush1.bf16.msra.mxu0 %v4544
    %4566 = vmatprep.subr.bf16.mxu0 0
    %4567 = vmatpush1.bf16.msra.mxu0 %v4545
    %4568 = vmatprep.subr.bf16.mxu0 0
    %4569 = vmatpush1.bf16.msra.mxu0 %v4546
    %4570 = vmatprep.subr.bf16.mxu0 0
    %4571 = vmatpush1.bf16.msra.mxu0 %v4547
    %4572 = vmatprep.subr.bf16.mxu0 0
    %4573 = vmatpush1.bf16.msra.mxu0 0
    %4574 = vmatprep.subr.bf16.mxu0 0
    %4575 = vmatpush1.bf16.msra.mxu0 0
    %4576 = vmatprep.subr.bf16.mxu0 0
    %4577 = vmatpush1.bf16.msra.mxu0 0
    %4578 = vmatprep.subr.bf16.mxu0 0
    %4579 = vmatpush1.bf16.msra.mxu0 0
    %4580 = vmatprep.subr.bf16.mxu0 0
    %4581 = vmatpush1.bf16.msra.mxu0 0
    %4582 = vmatprep.subr.bf16.mxu0 0
    %4583 = vmatpush1.bf16.msra.mxu0 0
    %4584 = vmatprep.subr.bf16.mxu0 0
    %4585 = vmatpush1.bf16.msra.mxu0 0
    %4586 = vmatprep.subr.bf16.mxu0 0
    %4587 = vmatpush1.bf16.msra.mxu0 0
    %4588 = vmatprep.mubr.bf16.mxu0 0
    %4589 = vmatmul.mubr.bf16.gmra.mrb[0].mxu0 %v4484
    %v4590 = vpop.f32.mrb[0].mxu0
    %v4591 = vadd.f32 %v4506, %v4590
    %v4592 = vpop.f32.mrb[0].mxu0
    %v4593 = vpop.f32.mrb[0].mxu0
    %v4594 = vpop.f32.mrb[0].mxu0
    %4595 = vdwg.mxu0
    %v4596 = vmax.f32 %v4591, 0.0
    %v4597 = vpack.c.bf16 %v4596, %v4596
    %v4598 = vld [vmem:[%s7] sm:$0xf]
    %v4599 = vld [vmem:[%s7 + $0x4] sm:$0xf]
    %v4600 = vld [vmem:[%s7 + $0x8] sm:$0xf]
    %v4601 = vld [vmem:[%s7 + $0xc] sm:$0xf]
    %v4602 = vld [vmem:[%s7 + $0x10] sm:$0xf]
    %v4603 = vld [vmem:[%s7 + $0x14] sm:$0xf]
    %v4604 = vld [vmem:[%s7 + $0x18] sm:$0xf]
    %v4605 = vld [vmem:[%s7 + $0x1c] sm:$0xf]
    %v4606 = vld [vmem:[%s7 + $0x20] sm:$0xf]
    %v4607 = vld [vmem:[%s7 + $0x24] sm:$0xf]
    %v4608 = vld [vmem:[%s7 + $0x28] sm:$0xf]
    %v4609 = vld [vmem:[%s7 + $0x2c] sm:$0xf]
    %v4610 = vld [vmem:[%s7 + $0x30] sm:$0xf]
    %v4611 = vld [vmem:[%s7 + $0x34] sm:$0xf]
    %v4612 = vld [vmem:[%s7 + $0x38] sm:$0xf]
    %v4613 = vld [vmem:[%s7 + $0x3c] sm:$0xf]
    %v4614 = vld [vmem:[%s8] sm:$0x1]
    %v4616 = vlaneseq
    %v4617 = vshrl.u32 %v4616, 7
    %v4618 = vsub.s32 0, %v4617
    %v4619 = vrot.slane %v4614, %v4618
    %v4637 = vunpack.c.l.b16 %v4598
    %v4638 = vunpack.c.l.b16 %v4599
    %v4639 = vunpack.c.l.b16 %v4600
    %v4640 = vunpack.c.l.b16 %v4601
    %v4641 = vunpack.c.l.b16 %v4602
    %v4642 = vunpack.c.l.b16 %v4603
    %v4643 = vunpack.c.l.b16 %v4604
    %v4644 = vunpack.c.l.b16 %v4605
    %v4645 = vunpack.c.l.b16 %v4606
    %v4646 = vunpack.c.l.b16 %v4607
    %v4647 = vunpack.c.l.b16 %v4608
    %v4648 = vunpack.c.l.b16 %v4609
    %v4649 = vunpack.c.l.b16 %v4610
    %v4650 = vunpack.c.l.b16 %v4611
    %v4651 = vunpack.c.l.b16 %v4612
    %v4652 = vunpack.c.l.b16 %v4613
    %v4653 = vpack.c.b16 %v4638, %v4637
    %v4654 = vpack.c.b16 %v4640, %v4639
    %v4655 = vpack.c.b16 %v4642, %v4641
    %v4656 = vpack.c.b16 %v4644, %v4643
    %v4657 = vpack.c.b16 %v4646, %v4645
    %v4658 = vpack.c.b16 %v4648, %v4647
    %v4659 = vpack.c.b16 %v4650, %v4649
    %v4660 = vpack.c.b16 %v4652, %v4651
    %4669 = vmatprep.subr.bf16.mxu0 0
    %4670 = vmatpush1.bf16.msra.mxu0 %v4653
    %4671 = vmatprep.subr.bf16.mxu0 0
    %4672 = vmatpush1.bf16.msra.mxu0 %v4654
    %4673 = vmatprep.subr.bf16.mxu0 0
    %4674 = vmatpush1.bf16.msra.mxu0 %v4655
    %4675 = vmatprep.subr.bf16.mxu0 0
    %4676 = vmatpush1.bf16.msra.mxu0 %v4656
    %4677 = vmatprep.subr.bf16.mxu0 0
    %4678 = vmatpush1.bf16.msra.mxu0 %v4657
    %4679 = vmatprep.subr.bf16.mxu0 0
    %4680 = vmatpush1.bf16.msra.mxu0 %v4658
    %4681 = vmatprep.subr.bf16.mxu0 0
    %4682 = vmatpush1.bf16.msra.mxu0 %v4659
    %4683 = vmatprep.subr.bf16.mxu0 0
    %4684 = vmatpush1.bf16.msra.mxu0 %v4660
    %4685 = vmatprep.subr.bf16.mxu0 0
    %4686 = vmatpush1.bf16.msra.mxu0 0
    %4687 = vmatprep.subr.bf16.mxu0 0
    %4688 = vmatpush1.bf16.msra.mxu0 0
    %4689 = vmatprep.subr.bf16.mxu0 0
    %4690 = vmatpush1.bf16.msra.mxu0 0
    %4691 = vmatprep.subr.bf16.mxu0 0
    %4692 = vmatpush1.bf16.msra.mxu0 0
    %4693 = vmatprep.subr.bf16.mxu0 0
    %4694 = vmatpush1.bf16.msra.mxu0 0
    %4695 = vmatprep.subr.bf16.mxu0 0
    %4696 = vmatpush1.bf16.msra.mxu0 0
    %4697 = vmatprep.subr.bf16.mxu0 0
    %4698 = vmatpush1.bf16.msra.mxu0 0
    %4699 = vmatprep.subr.bf16.mxu0 0
    %4700 = vmatpush1.bf16.msra.mxu0 0
    %4701 = vmatprep.mubr.bf16.mxu0 0
    %4702 = vmatmul.mubr.bf16.gmra.mrb[0].mxu0 %v4597
    %v4703 = vpop.f32.mrb[0].mxu0
    %v4704 = vadd.f32 %v4619, %v4703
    %v4705 = vpop.f32.mrb[0].mxu0
    %v4706 = vpop.f32.mrb[0].mxu0
    %v4707 = vpop.f32.mrb[0].mxu0
    %4708 = vdwg.mxu0
    %vm4709 = vcmask 1041408
    %v4710 = vsel %vm4709, %v4704, -inf
    %4711 = vmax.xlane.f32.xlu0 %v4710
    %v4712 = vpop.xlane.xlu0 %4711
    %v4713 = vsub.f32 %v4704, %v4712
    %v4714 = vmul.f32 %v4713, 1.442695
    %v4715 = vpow.pop %v4714
    %v4716 = vsel %vm4709, %v4715, 0.0
    %4717 = vadd.xlane.f32.xlu0 %v4716
    %v4718 = vpop.xlane.xlu0 %4717
    %v4719 = vlog2.pop %v4718
    %v4720 = vmul.f32 %v4719, 0.6931472
    %v4721 = vadd.f32 %v4720, %v4712
    %v4722 = vsub.f32 %v4704, %v4721
    %4723 = vst [vmem:[#allocation2] sm:$0x3] %v4722
    // Predicated region
    $region38: #{simple_cnn_forward.3} parent=1 // pred_check
      _
    $region39: #{simple_cnn_forward.3} parent=1 // pred_check_branch
      %4725 = sbr.rel (0) target = $region41
    $region40: #{simple_cnn_forward.3} parent=1 // pred_region
      %s4727 = ssub.s32 32, 32
      %4728 = vsyncadd [#allocation3], %s4727
      %s4730 = sshll.u32 [#allocation2], 4
      %s4731 = int_to_ptr.vmem [resolvable:$true] %s4730
      %4733 = dma.vmem_to_hbm [thread:$0]  %s4731, 32, %s9, [#allocation3]
    $region41: #{simple_cnn_forward.3} parent=1 // pred_fallthru
      _
    // Predicated region
    $region42: #{simple_cnn_forward.3} parent=1 // pred_check
      _
    $region43: #{simple_cnn_forward.3} parent=1 // pred_check_branch
      %4735 = sbr.rel (0) target = $region45
    $region44: #{simple_cnn_forward.3} parent=1 // pred_region
      %4736 = dma.done [#allocation3], 32
    $region45: #{simple_cnn_forward.3} parent=1 // pred_fallthru
      _
    %4737 = vsyncpa [#allocation3], 1

</llo_original>
